<compile_context>
chip_gen: v6e
topology: v6e:2x2x1
jax: 0.10.0
libtpu: 0.0.40
codegen_flags: <defaults>
</compile_context>

<pallas_src>
import jax
import jax.numpy as jnp
from jax.experimental import pallas as pl
from jax.experimental.pallas import tpu as pltpu

# ----------------------------- configuration --------------------------------
N_DIMS = 3                        # spatial dims
IN_NODE_NF = 6                    # invariant node features in xh (5 classes + charge)
CONTEXT_NF = 2                    # context_node_nf
HIDDEN = 32                       # hidden_nf
N_LAYERS = 2                      # n_layers (EquivariantBlocks)
INV_SUBLAYERS = 2                 # GCLs per block
OUT_NODE_NF = 2                   # encoder latent size
OUT_MLP_NF = 2 * OUT_NODE_NF + 1  # final_mlp output width
NORM_FACTOR = 100.0               # normalization_factor (aggregation='sum')
NORM_CONSTANT = 0.0               # norm_constant
F_IN = IN_NODE_NF + CONTEXT_NF    # EGNN embedding input width

# bf16 MXU operands (review item 5): set to jnp.bfloat16 on v6e/v7x when the
# accuracy budget allows; default f32 keeps the equivariant x-update and the
# 1e-2 reference tolerance safe.
MATMUL_DTYPE = jnp.float32


# ----------------------------- Pallas kernel --------------------------------
def _make_kernel(tb, n, mm_dtype):
    """Kernel over one batch tile of `tb` molecules with `n` (padded) nodes each."""
    H = HIDDEN
    L = N_LAYERS * INV_SUBLAYERS
    M = tb * n          # node rows in this tile
    ME = M * n          # edge rows in this tile (edge e = (b*n + i)*n + j)
    GOFF = 4            # first GCL row in the bias/scale table
    QOFF = 4 + 6 * L    # first EquivariantUpdate row

    def dot(a, b):
        if mm_dtype is not None and mm_dtype != jnp.float32:
            a = a.astype(mm_dtype)
            b = b.astype(mm_dtype)
        return jnp.dot(a, b, preferred_element_type=jnp.float32)

    def silu(v):
        # SiLU via the EUP: sigmoid(x) = 0.5*(tanh(x/2)+1); avoids the VPU divide.
        return v * (0.5 * (jnp.tanh(0.5 * v) + 1.0))

    # gather of the edge *source* node: repeat each node row n times (sublane
    # broadcast + tile-aligned reshape; replaces dot(R, v)).
    def edge_i(v):
        c = v.shape[-1]
        return jnp.broadcast_to(v[:, None, :], (M, n, c)).reshape(ME, c)

    # gather of the edge *target* node: tile each molecule's block (replaces dot(C, v)).
    def edge_j(v):
        c = v.shape[-1]
        return jnp.broadcast_to(v.reshape(tb, 1, n, c), (tb, n, n, c)).reshape(ME, c)

    # segment-sum over the source node (sum over j; replaces dot(Rt, m)).
    def seg_sum(v):
        c = v.shape[-1]
        return jnp.sum(v.reshape(M, n, c), axis=1)

    def kernel(h0_ref, x0_ref, nm_ref, em_ref,
               emb_w_ref, gcl_hw_ref, gcl_ew2_ref, gcl_nwb_ref, gcl_nw2_ref,
               eq_hw_ref, eq_w2_ref, embo_w_ref, fin_w1_ref, fin_w2_ref, btab_ref,
               out_ref):
        h0 = h0_ref[...]            # (M, F_IN)
        x0 = x0_ref[...]            # (M, 3)
        nm = nm_ref[...]            # (M, 1)   node mask
        em = em_ref[...]            # (ME, 1)  edge mask
        btab = btab_ref[...]        # (rows, H) bias / edge-feature-weight / scale table

        def brow(r):                # one (1, H) row of the table
            return btab[r:r + 1, :]

        # shared edge attribute d0 = ||x0_i - x0_j||^2 (fixed across all blocks)
        d0f = edge_i(x0) - edge_j(x0)
        d0 = jnp.sum(d0f * d0f, axis=-1, keepdims=True)          # (ME, 1)

        # h = embedding(h)
        h = dot(h0, emb_w_ref[...]) + brow(0)                     # (M, H)
        x = x0
        l = 0
        for blk in range(N_LAYERS):
            # coord2diff(x, edges, norm_constant)
            dfe = edge_i(x) - edge_j(x)                           # (ME, 3)
            rad = jnp.sum(dfe * dfe, axis=-1, keepdims=True)      # (ME, 1)
            cdiff = dfe / (jnp.sqrt(rad + 1e-8) + NORM_CONSTANT)  # (ME, 3)

            for _ in range(INV_SUBLAYERS):
                b0 = GOFF + 6 * l
                # fused projection of h for edge-i, edge-j and node-model terms
                hp = dot(h, gcl_hw_ref[l])                        # (M, 3H)
                # GCL edge model: edge_mlp(cat([h_i, h_j, rad, d0]))
                pre = (edge_i(hp[:, :H]) + edge_j(hp[:, H:2 * H])
                       + rad * brow(b0) + d0 * brow(b0 + 1) + brow(b0 + 2))
                m = silu(pre)
                m = silu(dot(m, gcl_ew2_ref[l]) + brow(b0 + 3))   # (ME, H)
                m = m * em
                # segment-sum over source node / normalization_factor
                agg = seg_sum(m) * (1.0 / NORM_FACTOR)            # (M, H)
                # GCL node model: h + node_mlp(cat([h, agg]))
                nh = silu(hp[:, 2 * H:] + dot(agg, gcl_nwb_ref[l]) + brow(b0 + 4))
                nh = dot(nh, gcl_nw2_ref[l]) + brow(b0 + 5)
                h = (h + nh) * nm
                l += 1

            # EquivariantUpdate: coord_mlp(cat([h_i, h_j, rad, d0]))
            q0 = QOFF + 5 * blk
            hq = dot(h, eq_hw_ref[blk])                           # (M, 2H)
            pre = (edge_i(hq[:, :H]) + edge_j(hq[:, H:])
                   + rad * brow(q0) + d0 * brow(q0 + 1) + brow(q0 + 2))
            a = silu(pre)
            a = silu(dot(a, eq_w2_ref[blk]) + brow(q0 + 3))       # (ME, H)
            s = jnp.sum(a * brow(q0 + 4), axis=-1, keepdims=True)  # (ME, 1)
            trans = cdiff * s * em                                # (ME, 3)
            x = (x + seg_sum(trans) * (1.0 / NORM_FACTOR)) * nm
            h = h * nm

        # EGNN embedding_out + mask, then encoder final_mlp + mask
        h = (dot(h, embo_w_ref[...]) + brow(1)) * nm              # (M, H)
        f = silu(dot(h, fin_w1_ref[...]) + brow(2))
        f = dot(f, fin_w2_ref[...]) + btab[3:4, :OUT_MLP_NF]      # (M, 2*out+1)
        f = f * nm

        # single output slab per node: [x_final (3) | final_mlp(h_final) (2*out+1)]
        out_ref[...] = jnp.concatenate([x, f], axis=-1)

    return kernel


# ----------------------------- wrapper ---------------------------------------
def _pick_tb(bs, n_pad):
    # review items 1/7: target TB*n ~ 256 sublanes, capped so the (TB*n*n, H)
    # f32 edge intermediates (~6 live) stay well inside v7x's 64 MiB VMEM.
    tb = max(1, 256 // max(n_pad, 1))
    edge_bytes = n_pad * n_pad * HIDDEN * 4
    tb = min(tb, max(1, (8 * 1024 * 1024) // (6 * edge_bytes)))
    return max(1, min(tb, bs))


def egnn_encoder_forward(params, xh, node_mask, edge_mask, context=None):
    """Returns (vel_mean, vel_std, h_mean, h_std) like EGNN_encoder_QM9._forward."""
    bs, n, dims = xh.shape
    assert dims - N_DIMS == IN_NODE_NF
    H = HIDDEN
    L = N_LAYERS * INV_SUBLAYERS
    K = N_LAYERS

    nm3 = node_mask.reshape(bs, n, 1).astype(jnp.float32)
    em3 = edge_mask.reshape(bs, n, n).astype(jnp.float32)
    xh_f = xh.astype(jnp.float32) * nm3
    x0 = xh_f[..., :N_DIMS]
    h0 = xh_f[..., N_DIMS:]
    if context is not None:
        h0 = jnp.concatenate(
            [h0, context.reshape(bs, n, -1).astype(jnp.float32)], axis=-1)
    F = h0.shape[-1]

    # pad nodes to a multiple of 8 (keeps in-kernel reshapes tile-aligned) and the
    # batch to a multiple of the batch tile; padded nodes/molecules have zero masks.
    n_p = max(8, ((n + 7) // 8) * 8)
    tb = _pick_tb(bs, n_p)
    bs_p = ((bs + tb - 1) // tb) * tb

    def pad_nodes(a):
        return jnp.pad(a, ((0, bs_p - bs), (0, n_p - n), (0, 0)))

    h0p = pad_nodes(h0).reshape(bs_p * n_p, F)
    x0p = pad_nodes(x0).reshape(bs_p * n_p, N_DIMS)
    nmp = pad_nodes(nm3).reshape(bs_p * n_p, 1)
    emp = jnp.pad(em3, ((0, bs_p - bs), (0, n_p - n), (0, n_p - n)))
    emp = emp.reshape(bs_p * n_p * n_p, 1)

    # ---- fused / consolidated weights (review items 3/8) ----
    p = params
    gcl_hw = jnp.concatenate(
        [p['gcl_ew1'][:, :H, :], p['gcl_ew1'][:, H:2 * H, :], p['gcl_nw1'][:, :H, :]],
        axis=-1)                                   # (L, H, 3H)  [Wi | Wj | Wa]
    gcl_nwb = p['gcl_nw1'][:, H:, :]               # (L, H, H)   agg weight
    eq_hw = jnp.concatenate(
        [p['eq_w1'][:, :H, :], p['eq_w1'][:, H:2 * H, :]], axis=-1)  # (K, H, 2H)

    rows = [p['emb_b'], p['embo_b'], p['fin_b1'],
            jnp.pad(p['fin_b2'], (0, H - OUT_MLP_NF))]
    for l in range(L):
        rows += [p['gcl_ew1'][l, 2 * H, :], p['gcl_ew1'][l, 2 * H + 1, :],
                 p['gcl_eb1'][l], p['gcl_eb2'][l], p['gcl_nb1'][l], p['gcl_nb2'][l]]
    for k in range(K):
        rows += [p['eq_w1'][k, 2 * H, :], p['eq_w1'][k, 2 * H + 1, :],
                 p['eq_b1'][k], p['eq_b2'][k], p['eq_w3'][k]]
    btab = jnp.stack(rows, axis=0)                 # (4 + 6L + 5K, H)

    ins = [h0p, x0p, nmp, emp,
           p['emb_w'], gcl_hw, p['gcl_ew2'], gcl_nwb, p['gcl_nw2'],
           eq_hw, p['eq_w2'], p['embo_w'], p['fin_w1'], p['fin_w2'], btab]

    def node_spec(width):
        return pl.BlockSpec((tb * n_p, width), lambda b: (b, 0))

    def edge_spec(width):
        return pl.BlockSpec((tb * n_p * n_p, width), lambda b: (b, 0))

    def weight_spec(a):
        nd = a.ndim
        return pl.BlockSpec(tuple(a.shape), lambda b, _nd=nd: (0,) * _nd)

    in_specs = [node_spec(F), node_spec(N_DIMS), node_spec(1), edge_spec(1)] + \
               [weight_spec(a) for a in ins[4:]]

    out_w = N_DIMS + OUT_MLP_NF
    out_specs = pl.BlockSpec((tb * n_p, out_w), lambda b: (b, 0))
    out_shape = jax.ShapeDtypeStruct((bs_p * n_p, out_w), jnp.float32)

    out = pl.pallas_call(
        _make_kernel(tb, n_p, MATMUL_DTYPE),
        out_shape=out_shape,
        grid_spec=pltpu.PrefetchScalarGridSpec(
            num_scalar_prefetch=0, grid=(bs_p // tb,),
            in_specs=in_specs, out_specs=out_specs),
        compiler_params=pltpu.CompilerParams(
            dimension_semantics=("parallel",)),      # batch tiles are independent
    )(*ins)

    out = out.reshape(bs_p, n_p, out_w)[:bs, :n]
    x_final = out[..., :N_DIMS]
    h_mlp = out[..., N_DIMS:]

    # encoder head (cheap per-molecule reductions, kept in the wrapper)
    vel = x_final * nm3
    vel = jnp.where(jnp.any(jnp.isnan(vel)), jnp.zeros_like(vel), vel)  # nan guard
    n_act = jnp.sum(nm3, axis=1, keepdims=True)
    vel = vel - (jnp.sum(vel, axis=1, keepdims=True) / n_act) * nm3     # remove_mean_with_mask

    vel_mean = vel
    vel_std = jnp.exp(0.5 * jnp.sum(h_mlp[:, :, :1], axis=1, keepdims=True))
    vel_std = jnp.broadcast_to(vel_std, (bs, n, 1))
    h_mean = h_mlp[:, :, 1:1 + OUT_NODE_NF]
    h_std = jnp.exp(0.5 * h_mlp[:, :, 1 + OUT_NODE_NF:])
    vel_std = jnp.where(jnp.any(jnp.isnan(vel_std)), jnp.ones_like(vel_std), vel_std)
    h_std = jnp.where(jnp.any(jnp.isnan(h_std)), jnp.ones_like(h_std), h_std)
    return vel_mean, vel_std, h_mean, h_std


# ----------------------------- pure-JAX reference ----------------------------
def reference_forward(params, xh, node_mask, edge_mask, context=None):
    bs, n, dims = xh.shape
    H = HIDDEN
    silu = jax.nn.silu
    nm = node_mask.reshape(bs, n, 1).astype(jnp.float32)
    em = edge_mask.reshape(bs, n, n, 1).astype(jnp.float32)
    xh = xh.astype(jnp.float32) * nm
    x0 = xh[..., :N_DIMS]
    h = xh[..., N_DIMS:]
    if context is not None:
        h = jnp.concatenate(
            [h, context.reshape(bs, n, -1).astype(jnp.float32)], -1)

    diff0 = x0[:, :, None, :] - x0[:, None, :, :]
    d0 = jnp.sum(diff0 ** 2, -1, keepdims=True)

    p = params
    h = h @ p['emb_w'] + p['emb_b']
    x = x0
    l = 0
    for blk in range(N_LAYERS):
        diff = x[:, :, None, :] - x[:, None, :, :]
        rad = jnp.sum(diff ** 2, -1, keepdims=True)
        cdiff = diff / (jnp.sqrt(rad + 1e-8) + NORM_CONSTANT)
        eattr = jnp.concatenate([rad, d0], -1)
        for _ in range(INV_SUBLAYERS):
            hi = jnp.broadcast_to(h[:, :, None, :], (bs, n, n, H))
            hj = jnp.broadcast_to(h[:, None, :, :], (bs, n, n, H))
            inp = jnp.concatenate([hi, hj, eattr], -1)
            m = silu(inp @ p['gcl_ew1'][l] + p['gcl_eb1'][l])
            m = silu(m @ p['gcl_ew2'][l] + p['gcl_eb2'][l])
            m = m * em
            agg = jnp.sum(m, axis=2) / NORM_FACTOR
            nin = jnp.concatenate([h, agg], -1)
            nh = silu(nin @ p['gcl_nw1'][l] + p['gcl_nb1'][l])
            nh = nh @ p['gcl_nw2'][l] + p['gcl_nb2'][l]
            h = (h + nh) * nm
            l += 1
        hi = jnp.broadcast_to(h[:, :, None, :], (bs, n, n, H))
        hj = jnp.broadcast_to(h[:, None, :, :], (bs, n, n, H))
        inp = jnp.concatenate([hi, hj, eattr], -1)
        a = silu(inp @ p['eq_w1'][blk] + p['eq_b1'][blk])
        a = silu(a @ p['eq_w2'][blk] + p['eq_b2'][blk])
        s = a @ p['eq_w3'][blk][:, None]
        trans = cdiff * s * em
        x = (x + jnp.sum(trans, axis=2) / NORM_FACTOR) * nm
        h = h * nm

    h = (h @ p['embo_w'] + p['embo_b']) * nm          # EGNN embedding_out

    vel = x * nm
    vel = jnp.where(jnp.any(jnp.isnan(vel)), jnp.zeros_like(vel), vel)
    n_act = jnp.sum(nm, axis=1, keepdims=True)
    vel = vel - (jnp.sum(vel, axis=1, keepdims=True) / n_act) * nm

    hf = silu(h @ p['fin_w1'] + p['fin_b1'])
    hf = (hf @ p['fin_w2'] + p['fin_b2']) * nm

    vel_mean = vel
    vel_std = jnp.exp(0.5 * jnp.sum(hf[:, :, :1], axis=1, keepdims=True))
    vel_std = jnp.broadcast_to(vel_std, (bs, n, 1))
    h_mean = hf[:, :, 1:1 + OUT_NODE_NF]
    h_std = jnp.exp(0.5 * hf[:, :, 1 + OUT_NODE_NF:])
    vel_std = jnp.where(jnp.any(jnp.isnan(vel_std)), jnp.ones_like(vel_std), vel_std)
    h_std = jnp.where(jnp.any(jnp.isnan(h_std)), jnp.ones_like(h_std), h_std)
    return vel_mean, vel_std, h_mean, h_std


# ----------------------------- deterministic params --------------------------
def init_params(key):
    keys = iter(jax.random.split(key, 64))
    L = N_LAYERS * INV_SUBLAYERS
    K = N_LAYERS
    F = F_IN
    H = HIDDEN

    def lin_w(shape):
        return (jax.random.normal(next(keys), shape, jnp.float32)
                / jnp.sqrt(jnp.float32(shape[-2])))

    def lin_b(shape):
        return 0.1 * jax.random.normal(next(keys), shape, jnp.float32)

    return dict(
        emb_w=lin_w((F, H)), emb_b=lin_b((H,)),
        gcl_ew1=lin_w((L, 2 * H + 2, H)), gcl_eb1=lin_b((L, H)),
        gcl_ew2=lin_w((L, H, H)), gcl_eb2=lin_b((L, H)),
        gcl_nw1=lin_w((L, 2 * H, H)), gcl_nb1=lin_b((L, H)),
        gcl_nw2=lin_w((L, H, H)), gcl_nb2=lin_b((L, H)),
        eq_w1=lin_w((K, 2 * H + 2, H)), eq_b1=lin_b((K, H)),
        eq_w2=lin_w((K, H, H)), eq_b2=lin_b((K, H)),
        # last coord layer: Linear(H, 1, bias=False) with xavier gain 0.001
        eq_w3=0.001 * jax.random.normal(next(keys), (K, H), jnp.float32),
        embo_w=lin_w((H, H)), embo_b=lin_b((H,)),
        fin_w1=lin_w((H, H)), fin_b1=lin_b((H,)),
        fin_w2=lin_w((H, OUT_MLP_NF)), fin_b2=lin_b((OUT_MLP_NF,)),
    )


# ----------------------------- main -------------------------------------------
if __name__ == "__main__":
    key = jax.random.PRNGKey(0)
    k_par, k_xh, k_ctx = jax.random.split(key, 3)
    params = init_params(k_par)

    bs, n = 2, 8
    xh = jax.random.normal(k_xh, (bs, n, N_DIMS + IN_NODE_NF), jnp.float32)

    # node mask: second sample has 2 padded nodes
    n_active = jnp.array([n, n - 2])
    node_mask = (jnp.arange(n)[None, :] < n_active[:, None]).astype(jnp.float32)
    node_mask = node_mask.reshape(bs, n, 1)

    # edge mask as in EDM: mask_i * mask_j with self-edges removed, flat (bs*n*n, 1)
    nm2 = node_mask[:, :, 0]
    edge_mask = nm2[:, :, None] * nm2[:, None, :]
    edge_mask = edge_mask * (1.0 - jnp.eye(n))[None]
    edge_mask = edge_mask.reshape(bs * n * n, 1)

    context = jax.random.normal(k_ctx, (bs, n, CONTEXT_NF), jnp.float32) * node_mask

    outs = egnn_encoder_forward(params, xh, node_mask, edge_mask, context)
    outs = jax.block_until_ready(outs)

    refs = reference_forward(params, xh, node_mask, edge_mask, context)

    vel_mean, vel_std, h_mean, h_std = outs
    assert vel_mean.shape == (bs, n, N_DIMS)
    assert vel_std.shape == (bs, n, 1)
    assert h_mean.shape == (bs, n, OUT_NODE_NF)
    assert h_std.shape == (bs, n, OUT_NODE_NF)

    max_err = 0.0
    for a, b in zip(outs, refs):
        assert a.shape == b.shape
        assert bool(jnp.all(jnp.isfinite(a)))
        max_err = max(max_err, float(jnp.max(jnp.abs(a - b))))
    assert max_err < 1e-2, f"kernel/reference mismatch: {max_err}"

    print("KERNEL_OK")
</pallas_src>

<mosaic_0001>
module attributes {stable_mosaic.version = 11 : i64} {
  func.func @kernel(%arg0: i32, %arg1: memref<16x8xf32, #tpu.memory_space<vmem>>, %arg2: memref<16x3xf32, #tpu.memory_space<vmem>>, %arg3: memref<16x1xf32, #tpu.memory_space<vmem>>, %arg4: memref<128x1xf32, #tpu.memory_space<vmem>>, %arg5: memref<8x32xf32, #tpu.memory_space<vmem>>, %arg6: memref<4x32x96xf32, #tpu.memory_space<vmem>>, %arg7: memref<4x32x32xf32, #tpu.memory_space<vmem>>, %arg8: memref<4x32x32xf32, #tpu.memory_space<vmem>>, %arg9: memref<4x32x32xf32, #tpu.memory_space<vmem>>, %arg10: memref<2x32x64xf32, #tpu.memory_space<vmem>>, %arg11: memref<2x32x32xf32, #tpu.memory_space<vmem>>, %arg12: memref<32x32xf32, #tpu.memory_space<vmem>>, %arg13: memref<32x32xf32, #tpu.memory_space<vmem>>, %arg14: memref<32x5xf32, #tpu.memory_space<vmem>>, %arg15: memref<38x32xf32, #tpu.memory_space<vmem>>, %arg16: memref<16x8xf32, #tpu.memory_space<vmem>>) attributes {dimension_semantics = [#tpu.dimension_semantics<parallel>], iteration_bounds = array<i64: 1>, scalar_prefetch = 0 : i64, scratch_operands = 0 : i64, tpu.core_type = #tpu.core_type<tc>, window_params = [{transform_indices = @transform_0, window_bounds = array<i64: 16, 8>}, {transform_indices = @transform_1, window_bounds = array<i64: 16, 3>}, {transform_indices = @transform_2, window_bounds = array<i64: 16, 1>}, {transform_indices = @transform_3, window_bounds = array<i64: 128, 1>}, {pipeline_mode = #tpu.pipeline_mode<synchronous>, transform_indices = @transform_4, window_bounds = array<i64: 8, 32>}, {pipeline_mode = #tpu.pipeline_mode<synchronous>, transform_indices = @transform_5, window_bounds = array<i64: 4, 32, 96>}, {pipeline_mode = #tpu.pipeline_mode<synchronous>, transform_indices = @transform_6, window_bounds = array<i64: 4, 32, 32>}, {pipeline_mode = #tpu.pipeline_mode<synchronous>, transform_indices = @transform_7, window_bounds = array<i64: 4, 32, 32>}, {pipeline_mode = #tpu.pipeline_mode<synchronous>, transform_indices = @transform_8, window_bounds = array<i64: 4, 32, 32>}, {pipeline_mode = #tpu.pipeline_mode<synchronous>, transform_indices = @transform_9, window_bounds = array<i64: 2, 32, 64>}, {pipeline_mode = #tpu.pipeline_mode<synchronous>, transform_indices = @transform_10, window_bounds = array<i64: 2, 32, 32>}, {pipeline_mode = #tpu.pipeline_mode<synchronous>, transform_indices = @transform_11, window_bounds = array<i64: 32, 32>}, {pipeline_mode = #tpu.pipeline_mode<synchronous>, transform_indices = @transform_12, window_bounds = array<i64: 32, 32>}, {pipeline_mode = #tpu.pipeline_mode<synchronous>, transform_indices = @transform_13, window_bounds = array<i64: 32, 5>}, {pipeline_mode = #tpu.pipeline_mode<synchronous>, transform_indices = @transform_14, window_bounds = array<i64: 38, 32>}, {transform_indices = @transform_15, window_bounds = array<i64: 16, 8>}]} {
    %c0 = arith.constant 0 : index
    %c0_0 = arith.constant 0 : index
    %0 = vector.load %arg1[%c0, %c0_0] : memref<16x8xf32, #tpu.memory_space<vmem>>, vector<16x8xf32>
    %c0_1 = arith.constant 0 : index
    %c0_2 = arith.constant 0 : index
    %1 = vector.load %arg2[%c0_1, %c0_2] : memref<16x3xf32, #tpu.memory_space<vmem>>, vector<16x3xf32>
    %c0_3 = arith.constant 0 : index
    %c0_4 = arith.constant 0 : index
    %2 = vector.load %arg3[%c0_3, %c0_4] : memref<16x1xf32, #tpu.memory_space<vmem>>, vector<16x1xf32>
    %c0_5 = arith.constant 0 : index
    %c0_6 = arith.constant 0 : index
    %3 = vector.load %arg4[%c0_5, %c0_6] : memref<128x1xf32, #tpu.memory_space<vmem>>, vector<128x1xf32>
    %c0_7 = arith.constant 0 : index
    %c0_8 = arith.constant 0 : index
    %4 = vector.load %arg15[%c0_7, %c0_8] : memref<38x32xf32, #tpu.memory_space<vmem>>, vector<38x32xf32>
    %5 = vector.shape_cast %1 : vector<16x3xf32> to vector<16x1x3xf32>
    %6 = vector.shape_cast %5 : vector<16x1x3xf32> to vector<16x1x3xf32>
    %7 = vector.broadcast %6 : vector<16x1x3xf32> to vector<16x8x3xf32>
    %8 = vector.shape_cast %7 : vector<16x8x3xf32> to vector<128x3xf32>
    %9 = vector.shape_cast %1 : vector<16x3xf32> to vector<2x1x8x3xf32>
    %10 = vector.shape_cast %9 : vector<2x1x8x3xf32> to vector<2x1x8x3xf32>
    %11 = vector.broadcast %10 : vector<2x1x8x3xf32> to vector<2x8x8x3xf32>
    %12 = vector.shape_cast %11 : vector<2x8x8x3xf32> to vector<128x3xf32>
    %13 = arith.subf %8, %12 : vector<128x3xf32>
    %14 = arith.mulf %13, %13 : vector<128x3xf32>
    %cst = arith.constant dense<0.000000e+00> : vector<128xf32>
    %15 = vector.multi_reduction <add>, %14, %cst [1] : vector<128x3xf32> to vector<128xf32>
    %16 = vector.shape_cast %15 : vector<128xf32> to vector<128x1xf32>
    %c0_9 = arith.constant 0 : index
    %c0_10 = arith.constant 0 : index
    %17 = vector.load %arg5[%c0_9, %c0_10] : memref<8x32xf32, #tpu.memory_space<vmem>>, vector<8x32xf32>
    %cst_11 = arith.constant dense<0.000000e+00> : vector<16x32xf32>
    %18 = tpu.matmul %0, %17, %cst_11 {dimension_numbers = #tpu.dot_dimension_numbers<[1], [0], [0], [1], [0, 0, 1, 1], [], []>} : vector<16x8xf32>, vector<8x32xf32>, vector<16x32xf32> -> vector<16x32xf32>
    %19 = vector.extract_strided_slice %4 {offsets = [0, 0], sizes = [1, 32], strides = [1, 1]} : vector<38x32xf32> to vector<1x32xf32>
    %20 = vector.broadcast %19 : vector<1x32xf32> to vector<16x32xf32>
    %21 = arith.addf %18, %20 : vector<16x32xf32>
    %22 = vector.shape_cast %1 : vector<16x3xf32> to vector<16x1x3xf32>
    %23 = vector.shape_cast %22 : vector<16x1x3xf32> to vector<16x1x3xf32>
    %24 = vector.broadcast %23 : vector<16x1x3xf32> to vector<16x8x3xf32>
    %25 = vector.shape_cast %24 : vector<16x8x3xf32> to vector<128x3xf32>
    %26 = vector.shape_cast %1 : vector<16x3xf32> to vector<2x1x8x3xf32>
    %27 = vector.shape_cast %26 : vector<2x1x8x3xf32> to vector<2x1x8x3xf32>
    %28 = vector.broadcast %27 : vector<2x1x8x3xf32> to vector<2x8x8x3xf32>
    %29 = vector.shape_cast %28 : vector<2x8x8x3xf32> to vector<128x3xf32>
    %30 = arith.subf %25, %29 : vector<128x3xf32>
    %31 = arith.mulf %30, %30 : vector<128x3xf32>
    %cst_12 = arith.constant dense<0.000000e+00> : vector<128xf32>
    %32 = vector.multi_reduction <add>, %31, %cst_12 [1] : vector<128x3xf32> to vector<128xf32>
    %33 = vector.shape_cast %32 : vector<128xf32> to vector<128x1xf32>
    %cst_13 = arith.constant 9.99999993E-9 : f32
    %34 = vector.broadcast %cst_13 : f32 to vector<128x1xf32>
    %35 = arith.addf %33, %34 : vector<128x1xf32>
    %36 = math.sqrt %35 : vector<128x1xf32>
    %cst_14 = arith.constant 0.000000e+00 : f32
    %37 = vector.broadcast %cst_14 : f32 to vector<128x1xf32>
    %38 = arith.addf %36, %37 : vector<128x1xf32>
    %39 = vector.broadcast %38 : vector<128x1xf32> to vector<128x3xf32>
    %40 = arith.divf %30, %39 : vector<128x3xf32>
    %c0_15 = arith.constant 0 : index
    %c0_16 = arith.constant 0 : index
    %c0_17 = arith.constant 0 : index
    %41 = vector.load %arg6[%c0_15, %c0_16, %c0_17] : memref<4x32x96xf32, #tpu.memory_space<vmem>>, vector<1x32x96xf32>
    %42 = vector.shape_cast %41 : vector<1x32x96xf32> to vector<32x96xf32>
    %cst_18 = arith.constant dense<0.000000e+00> : vector<16x96xf32>
    %43 = tpu.matmul %21, %42, %cst_18 {dimension_numbers = #tpu.dot_dimension_numbers<[1], [0], [0], [1], [0, 0, 1, 1], [], []>} : vector<16x32xf32>, vector<32x96xf32>, vector<16x96xf32> -> vector<16x96xf32>
    %44 = vector.extract_strided_slice %43 {offsets = [0, 0], sizes = [16, 32], strides = [1, 1]} : vector<16x96xf32> to vector<16x32xf32>
    %45 = vector.shape_cast %44 : vector<16x32xf32> to vector<16x1x32xf32>
    %46 = vector.shape_cast %45 : vector<16x1x32xf32> to vector<16x1x32xf32>
    %47 = vector.broadcast %46 : vector<16x1x32xf32> to vector<16x8x32xf32>
    %48 = vector.shape_cast %47 : vector<16x8x32xf32> to vector<128x32xf32>
    %49 = vector.extract_strided_slice %43 {offsets = [0, 32], sizes = [16, 32], strides = [1, 1]} : vector<16x96xf32> to vector<16x32xf32>
    %50 = vector.shape_cast %49 : vector<16x32xf32> to vector<2x1x8x32xf32>
    %51 = vector.shape_cast %50 : vector<2x1x8x32xf32> to vector<2x1x8x32xf32>
    %52 = vector.broadcast %51 : vector<2x1x8x32xf32> to vector<2x8x8x32xf32>
    %53 = vector.shape_cast %52 : vector<2x8x8x32xf32> to vector<128x32xf32>
    %54 = arith.addf %48, %53 : vector<128x32xf32>
    %55 = vector.extract_strided_slice %4 {offsets = [4, 0], sizes = [1, 32], strides = [1, 1]} : vector<38x32xf32> to vector<1x32xf32>
    %56 = vector.broadcast %33 : vector<128x1xf32> to vector<128x32xf32>
    %57 = vector.broadcast %55 : vector<1x32xf32> to vector<128x32xf32>
    %58 = arith.mulf %56, %57 : vector<128x32xf32>
    %59 = arith.addf %54, %58 : vector<128x32xf32>
    %60 = vector.extract_strided_slice %4 {offsets = [5, 0], sizes = [1, 32], strides = [1, 1]} : vector<38x32xf32> to vector<1x32xf32>
    %61 = vector.broadcast %16 : vector<128x1xf32> to vector<128x32xf32>
    %62 = vector.broadcast %60 : vector<1x32xf32> to vector<128x32xf32>
    %63 = arith.mulf %61, %62 : vector<128x32xf32>
    %64 = arith.addf %59, %63 : vector<128x32xf32>
    %65 = vector.extract_strided_slice %4 {offsets = [6, 0], sizes = [1, 32], strides = [1, 1]} : vector<38x32xf32> to vector<1x32xf32>
    %66 = vector.broadcast %65 : vector<1x32xf32> to vector<128x32xf32>
    %67 = arith.addf %64, %66 : vector<128x32xf32>
    %cst_19 = arith.constant 5.000000e-01 : f32
    %68 = vector.broadcast %cst_19 : f32 to vector<128x32xf32>
    %69 = arith.mulf %68, %67 : vector<128x32xf32>
    %70 = math.tanh %69 : vector<128x32xf32>
    %cst_20 = arith.constant 1.000000e+00 : f32
    %71 = vector.broadcast %cst_20 : f32 to vector<128x32xf32>
    %72 = arith.addf %70, %71 : vector<128x32xf32>
    %cst_21 = arith.constant 5.000000e-01 : f32
    %73 = vector.broadcast %cst_21 : f32 to vector<128x32xf32>
    %74 = arith.mulf %73, %72 : vector<128x32xf32>
    %75 = arith.mulf %67, %74 : vector<128x32xf32>
    %c0_22 = arith.constant 0 : index
    %c0_23 = arith.constant 0 : index
    %c0_24 = arith.constant 0 : index
    %76 = vector.load %arg7[%c0_22, %c0_23, %c0_24] : memref<4x32x32xf32, #tpu.memory_space<vmem>>, vector<1x32x32xf32>
    %77 = vector.shape_cast %76 : vector<1x32x32xf32> to vector<32x32xf32>
    %cst_25 = arith.constant dense<0.000000e+00> : vector<128x32xf32>
    %78 = tpu.matmul %75, %77, %cst_25 {dimension_numbers = #tpu.dot_dimension_numbers<[1], [0], [0], [1], [0, 0, 1, 1], [], []>} : vector<128x32xf32>, vector<32x32xf32>, vector<128x32xf32> -> vector<128x32xf32>
    %79 = vector.extract_strided_slice %4 {offsets = [7, 0], sizes = [1, 32], strides = [1, 1]} : vector<38x32xf32> to vector<1x32xf32>
    %80 = vector.broadcast %79 : vector<1x32xf32> to vector<128x32xf32>
    %81 = arith.addf %78, %80 : vector<128x32xf32>
    %cst_26 = arith.constant 5.000000e-01 : f32
    %82 = vector.broadcast %cst_26 : f32 to vector<128x32xf32>
    %83 = arith.mulf %82, %81 : vector<128x32xf32>
    %84 = math.tanh %83 : vector<128x32xf32>
    %cst_27 = arith.constant 1.000000e+00 : f32
    %85 = vector.broadcast %cst_27 : f32 to vector<128x32xf32>
    %86 = arith.addf %84, %85 : vector<128x32xf32>
    %cst_28 = arith.constant 5.000000e-01 : f32
    %87 = vector.broadcast %cst_28 : f32 to vector<128x32xf32>
    %88 = arith.mulf %87, %86 : vector<128x32xf32>
    %89 = arith.mulf %81, %88 : vector<128x32xf32>
    %90 = vector.broadcast %3 : vector<128x1xf32> to vector<128x32xf32>
    %91 = arith.mulf %89, %90 : vector<128x32xf32>
    %92 = vector.shape_cast %91 : vector<128x32xf32> to vector<16x8x32xf32>
    %cst_29 = arith.constant dense<0.000000e+00> : vector<16x32xf32>
    %93 = vector.multi_reduction <add>, %92, %cst_29 [1] : vector<16x8x32xf32> to vector<16x32xf32>
    %cst_30 = arith.constant 0.00999999977 : f32
    %94 = vector.broadcast %cst_30 : f32 to vector<16x32xf32>
    %95 = arith.mulf %93, %94 : vector<16x32xf32>
    %96 = vector.extract_strided_slice %43 {offsets = [0, 64], sizes = [16, 32], strides = [1, 1]} : vector<16x96xf32> to vector<16x32xf32>
    %c0_31 = arith.constant 0 : index
    %c0_32 = arith.constant 0 : index
    %c0_33 = arith.constant 0 : index
    %97 = vector.load %arg8[%c0_31, %c0_32, %c0_33] : memref<4x32x32xf32, #tpu.memory_space<vmem>>, vector<1x32x32xf32>
    %98 = vector.shape_cast %97 : vector<1x32x32xf32> to vector<32x32xf32>
    %cst_34 = arith.constant dense<0.000000e+00> : vector<16x32xf32>
    %99 = tpu.matmul %95, %98, %cst_34 {dimension_numbers = #tpu.dot_dimension_numbers<[1], [0], [0], [1], [0, 0, 1, 1], [], []>} : vector<16x32xf32>, vector<32x32xf32>, vector<16x32xf32> -> vector<16x32xf32>
    %100 = arith.addf %96, %99 : vector<16x32xf32>
    %101 = vector.extract_strided_slice %4 {offsets = [8, 0], sizes = [1, 32], strides = [1, 1]} : vector<38x32xf32> to vector<1x32xf32>
    %102 = vector.broadcast %101 : vector<1x32xf32> to vector<16x32xf32>
    %103 = arith.addf %100, %102 : vector<16x32xf32>
    %cst_35 = arith.constant 5.000000e-01 : f32
    %104 = vector.broadcast %cst_35 : f32 to vector<16x32xf32>
    %105 = arith.mulf %104, %103 : vector<16x32xf32>
    %106 = math.tanh %105 : vector<16x32xf32>
    %cst_36 = arith.constant 1.000000e+00 : f32
    %107 = vector.broadcast %cst_36 : f32 to vector<16x32xf32>
    %108 = arith.addf %106, %107 : vector<16x32xf32>
    %cst_37 = arith.constant 5.000000e-01 : f32
    %109 = vector.broadcast %cst_37 : f32 to vector<16x32xf32>
    %110 = arith.mulf %109, %108 : vector<16x32xf32>
    %111 = arith.mulf %103, %110 : vector<16x32xf32>
    %c0_38 = arith.constant 0 : index
    %c0_39 = arith.constant 0 : index
    %c0_40 = arith.constant 0 : index
    %112 = vector.load %arg9[%c0_38, %c0_39, %c0_40] : memref<4x32x32xf32, #tpu.memory_space<vmem>>, vector<1x32x32xf32>
    %113 = vector.shape_cast %112 : vector<1x32x32xf32> to vector<32x32xf32>
    %cst_41 = arith.constant dense<0.000000e+00> : vector<16x32xf32>
    %114 = tpu.matmul %111, %113, %cst_41 {dimension_numbers = #tpu.dot_dimension_numbers<[1], [0], [0], [1], [0, 0, 1, 1], [], []>} : vector<16x32xf32>, vector<32x32xf32>, vector<16x32xf32> -> vector<16x32xf32>
    %115 = vector.extract_strided_slice %4 {offsets = [9, 0], sizes = [1, 32], strides = [1, 1]} : vector<38x32xf32> to vector<1x32xf32>
    %116 = vector.broadcast %115 : vector<1x32xf32> to vector<16x32xf32>
    %117 = arith.addf %114, %116 : vector<16x32xf32>
    %118 = arith.addf %21, %117 : vector<16x32xf32>
    %119 = vector.broadcast %2 : vector<16x1xf32> to vector<16x32xf32>
    %120 = arith.mulf %118, %119 : vector<16x32xf32>
    %c1 = arith.constant 1 : index
    %c0_42 = arith.constant 0 : index
    %c0_43 = arith.constant 0 : index
    %121 = vector.load %arg6[%c1, %c0_42, %c0_43] : memref<4x32x96xf32, #tpu.memory_space<vmem>>, vector<1x32x96xf32>
    %122 = vector.shape_cast %121 : vector<1x32x96xf32> to vector<32x96xf32>
    %cst_44 = arith.constant dense<0.000000e+00> : vector<16x96xf32>
    %123 = tpu.matmul %120, %122, %cst_44 {dimension_numbers = #tpu.dot_dimension_numbers<[1], [0], [0], [1], [0, 0, 1, 1], [], []>} : vector<16x32xf32>, vector<32x96xf32>, vector<16x96xf32> -> vector<16x96xf32>
    %124 = vector.extract_strided_slice %123 {offsets = [0, 0], sizes = [16, 32], strides = [1, 1]} : vector<16x96xf32> to vector<16x32xf32>
    %125 = vector.shape_cast %124 : vector<16x32xf32> to vector<16x1x32xf32>
    %126 = vector.shape_cast %125 : vector<16x1x32xf32> to vector<16x1x32xf32>
    %127 = vector.broadcast %126 : vector<16x1x32xf32> to vector<16x8x32xf32>
    %128 = vector.shape_cast %127 : vector<16x8x32xf32> to vector<128x32xf32>
    %129 = vector.extract_strided_slice %123 {offsets = [0, 32], sizes = [16, 32], strides = [1, 1]} : vector<16x96xf32> to vector<16x32xf32>
    %130 = vector.shape_cast %129 : vector<16x32xf32> to vector<2x1x8x32xf32>
    %131 = vector.shape_cast %130 : vector<2x1x8x32xf32> to vector<2x1x8x32xf32>
    %132 = vector.broadcast %131 : vector<2x1x8x32xf32> to vector<2x8x8x32xf32>
    %133 = vector.shape_cast %132 : vector<2x8x8x32xf32> to vector<128x32xf32>
    %134 = arith.addf %128, %133 : vector<128x32xf32>
    %135 = vector.extract_strided_slice %4 {offsets = [10, 0], sizes = [1, 32], strides = [1, 1]} : vector<38x32xf32> to vector<1x32xf32>
    %136 = vector.broadcast %33 : vector<128x1xf32> to vector<128x32xf32>
    %137 = vector.broadcast %135 : vector<1x32xf32> to vector<128x32xf32>
    %138 = arith.mulf %136, %137 : vector<128x32xf32>
    %139 = arith.addf %134, %138 : vector<128x32xf32>
    %140 = vector.extract_strided_slice %4 {offsets = [11, 0], sizes = [1, 32], strides = [1, 1]} : vector<38x32xf32> to vector<1x32xf32>
    %141 = vector.broadcast %16 : vector<128x1xf32> to vector<128x32xf32>
    %142 = vector.broadcast %140 : vector<1x32xf32> to vector<128x32xf32>
    %143 = arith.mulf %141, %142 : vector<128x32xf32>
    %144 = arith.addf %139, %143 : vector<128x32xf32>
    %145 = vector.extract_strided_slice %4 {offsets = [12, 0], sizes = [1, 32], strides = [1, 1]} : vector<38x32xf32> to vector<1x32xf32>
    %146 = vector.broadcast %145 : vector<1x32xf32> to vector<128x32xf32>
    %147 = arith.addf %144, %146 : vector<128x32xf32>
    %cst_45 = arith.constant 5.000000e-01 : f32
    %148 = vector.broadcast %cst_45 : f32 to vector<128x32xf32>
    %149 = arith.mulf %148, %147 : vector<128x32xf32>
    %150 = math.tanh %149 : vector<128x32xf32>
    %cst_46 = arith.constant 1.000000e+00 : f32
    %151 = vector.broadcast %cst_46 : f32 to vector<128x32xf32>
    %152 = arith.addf %150, %151 : vector<128x32xf32>
    %cst_47 = arith.constant 5.000000e-01 : f32
    %153 = vector.broadcast %cst_47 : f32 to vector<128x32xf32>
    %154 = arith.mulf %153, %152 : vector<128x32xf32>
    %155 = arith.mulf %147, %154 : vector<128x32xf32>
    %c1_48 = arith.constant 1 : index
    %c0_49 = arith.constant 0 : index
    %c0_50 = arith.constant 0 : index
    %156 = vector.load %arg7[%c1_48, %c0_49, %c0_50] : memref<4x32x32xf32, #tpu.memory_space<vmem>>, vector<1x32x32xf32>
    %157 = vector.shape_cast %156 : vector<1x32x32xf32> to vector<32x32xf32>
    %cst_51 = arith.constant dense<0.000000e+00> : vector<128x32xf32>
    %158 = tpu.matmul %155, %157, %cst_51 {dimension_numbers = #tpu.dot_dimension_numbers<[1], [0], [0], [1], [0, 0, 1, 1], [], []>} : vector<128x32xf32>, vector<32x32xf32>, vector<128x32xf32> -> vector<128x32xf32>
    %159 = vector.extract_strided_slice %4 {offsets = [13, 0], sizes = [1, 32], strides = [1, 1]} : vector<38x32xf32> to vector<1x32xf32>
    %160 = vector.broadcast %159 : vector<1x32xf32> to vector<128x32xf32>
    %161 = arith.addf %158, %160 : vector<128x32xf32>
    %cst_52 = arith.constant 5.000000e-01 : f32
    %162 = vector.broadcast %cst_52 : f32 to vector<128x32xf32>
    %163 = arith.mulf %162, %161 : vector<128x32xf32>
    %164 = math.tanh %163 : vector<128x32xf32>
    %cst_53 = arith.constant 1.000000e+00 : f32
    %165 = vector.broadcast %cst_53 : f32 to vector<128x32xf32>
    %166 = arith.addf %164, %165 : vector<128x32xf32>
    %cst_54 = arith.constant 5.000000e-01 : f32
    %167 = vector.broadcast %cst_54 : f32 to vector<128x32xf32>
    %168 = arith.mulf %167, %166 : vector<128x32xf32>
    %169 = arith.mulf %161, %168 : vector<128x32xf32>
    %170 = vector.broadcast %3 : vector<128x1xf32> to vector<128x32xf32>
    %171 = arith.mulf %169, %170 : vector<128x32xf32>
    %172 = vector.shape_cast %171 : vector<128x32xf32> to vector<16x8x32xf32>
    %cst_55 = arith.constant dense<0.000000e+00> : vector<16x32xf32>
    %173 = vector.multi_reduction <add>, %172, %cst_55 [1] : vector<16x8x32xf32> to vector<16x32xf32>
    %cst_56 = arith.constant 0.00999999977 : f32
    %174 = vector.broadcast %cst_56 : f32 to vector<16x32xf32>
    %175 = arith.mulf %173, %174 : vector<16x32xf32>
    %176 = vector.extract_strided_slice %123 {offsets = [0, 64], sizes = [16, 32], strides = [1, 1]} : vector<16x96xf32> to vector<16x32xf32>
    %c1_57 = arith.constant 1 : index
    %c0_58 = arith.constant 0 : index
    %c0_59 = arith.constant 0 : index
    %177 = vector.load %arg8[%c1_57, %c0_58, %c0_59] : memref<4x32x32xf32, #tpu.memory_space<vmem>>, vector<1x32x32xf32>
    %178 = vector.shape_cast %177 : vector<1x32x32xf32> to vector<32x32xf32>
    %cst_60 = arith.constant dense<0.000000e+00> : vector<16x32xf32>
    %179 = tpu.matmul %175, %178, %cst_60 {dimension_numbers = #tpu.dot_dimension_numbers<[1], [0], [0], [1], [0, 0, 1, 1], [], []>} : vector<16x32xf32>, vector<32x32xf32>, vector<16x32xf32> -> vector<16x32xf32>
    %180 = arith.addf %176, %179 : vector<16x32xf32>
    %181 = vector.extract_strided_slice %4 {offsets = [14, 0], sizes = [1, 32], strides = [1, 1]} : vector<38x32xf32> to vector<1x32xf32>
    %182 = vector.broadcast %181 : vector<1x32xf32> to vector<16x32xf32>
    %183 = arith.addf %180, %182 : vector<16x32xf32>
    %cst_61 = arith.constant 5.000000e-01 : f32
    %184 = vector.broadcast %cst_61 : f32 to vector<16x32xf32>
    %185 = arith.mulf %184, %183 : vector<16x32xf32>
    %186 = math.tanh %185 : vector<16x32xf32>
    %cst_62 = arith.constant 1.000000e+00 : f32
    %187 = vector.broadcast %cst_62 : f32 to vector<16x32xf32>
    %188 = arith.addf %186, %187 : vector<16x32xf32>
    %cst_63 = arith.constant 5.000000e-01 : f32
    %189 = vector.broadcast %cst_63 : f32 to vector<16x32xf32>
    %190 = arith.mulf %189, %188 : vector<16x32xf32>
    %191 = arith.mulf %183, %190 : vector<16x32xf32>
    %c1_64 = arith.constant 1 : index
    %c0_65 = arith.constant 0 : index
    %c0_66 = arith.constant 0 : index
    %192 = vector.load %arg9[%c1_64, %c0_65, %c0_66] : memref<4x32x32xf32, #tpu.memory_space<vmem>>, vector<1x32x32xf32>
    %193 = vector.shape_cast %192 : vector<1x32x32xf32> to vector<32x32xf32>
    %cst_67 = arith.constant dense<0.000000e+00> : vector<16x32xf32>
    %194 = tpu.matmul %191, %193, %cst_67 {dimension_numbers = #tpu.dot_dimension_numbers<[1], [0], [0], [1], [0, 0, 1, 1], [], []>} : vector<16x32xf32>, vector<32x32xf32>, vector<16x32xf32> -> vector<16x32xf32>
    %195 = vector.extract_strided_slice %4 {offsets = [15, 0], sizes = [1, 32], strides = [1, 1]} : vector<38x32xf32> to vector<1x32xf32>
    %196 = vector.broadcast %195 : vector<1x32xf32> to vector<16x32xf32>
    %197 = arith.addf %194, %196 : vector<16x32xf32>
    %198 = arith.addf %120, %197 : vector<16x32xf32>
    %199 = vector.broadcast %2 : vector<16x1xf32> to vector<16x32xf32>
    %200 = arith.mulf %198, %199 : vector<16x32xf32>
    %c0_68 = arith.constant 0 : index
    %c0_69 = arith.constant 0 : index
    %c0_70 = arith.constant 0 : index
    %201 = vector.load %arg10[%c0_68, %c0_69, %c0_70] : memref<2x32x64xf32, #tpu.memory_space<vmem>>, vector<1x32x64xf32>
    %202 = vector.shape_cast %201 : vector<1x32x64xf32> to vector<32x64xf32>
    %cst_71 = arith.constant dense<0.000000e+00> : vector<16x64xf32>
    %203 = tpu.matmul %200, %202, %cst_71 {dimension_numbers = #tpu.dot_dimension_numbers<[1], [0], [0], [1], [0, 0, 1, 1], [], []>} : vector<16x32xf32>, vector<32x64xf32>, vector<16x64xf32> -> vector<16x64xf32>
    %204 = vector.extract_strided_slice %203 {offsets = [0, 0], sizes = [16, 32], strides = [1, 1]} : vector<16x64xf32> to vector<16x32xf32>
    %205 = vector.shape_cast %204 : vector<16x32xf32> to vector<16x1x32xf32>
    %206 = vector.shape_cast %205 : vector<16x1x32xf32> to vector<16x1x32xf32>
    %207 = vector.broadcast %206 : vector<16x1x32xf32> to vector<16x8x32xf32>
    %208 = vector.shape_cast %207 : vector<16x8x32xf32> to vector<128x32xf32>
    %209 = vector.extract_strided_slice %203 {offsets = [0, 32], sizes = [16, 32], strides = [1, 1]} : vector<16x64xf32> to vector<16x32xf32>
    %210 = vector.shape_cast %209 : vector<16x32xf32> to vector<2x1x8x32xf32>
    %211 = vector.shape_cast %210 : vector<2x1x8x32xf32> to vector<2x1x8x32xf32>
    %212 = vector.broadcast %211 : vector<2x1x8x32xf32> to vector<2x8x8x32xf32>
    %213 = vector.shape_cast %212 : vector<2x8x8x32xf32> to vector<128x32xf32>
    %214 = arith.addf %208, %213 : vector<128x32xf32>
    %215 = vector.extract_strided_slice %4 {offsets = [28, 0], sizes = [1, 32], strides = [1, 1]} : vector<38x32xf32> to vector<1x32xf32>
    %216 = vector.broadcast %33 : vector<128x1xf32> to vector<128x32xf32>
    %217 = vector.broadcast %215 : vector<1x32xf32> to vector<128x32xf32>
    %218 = arith.mulf %216, %217 : vector<128x32xf32>
    %219 = arith.addf %214, %218 : vector<128x32xf32>
    %220 = vector.extract_strided_slice %4 {offsets = [29, 0], sizes = [1, 32], strides = [1, 1]} : vector<38x32xf32> to vector<1x32xf32>
    %221 = vector.broadcast %16 : vector<128x1xf32> to vector<128x32xf32>
    %222 = vector.broadcast %220 : vector<1x32xf32> to vector<128x32xf32>
    %223 = arith.mulf %221, %222 : vector<128x32xf32>
    %224 = arith.addf %219, %223 : vector<128x32xf32>
    %225 = vector.extract_strided_slice %4 {offsets = [30, 0], sizes = [1, 32], strides = [1, 1]} : vector<38x32xf32> to vector<1x32xf32>
    %226 = vector.broadcast %225 : vector<1x32xf32> to vector<128x32xf32>
    %227 = arith.addf %224, %226 : vector<128x32xf32>
    %cst_72 = arith.constant 5.000000e-01 : f32
    %228 = vector.broadcast %cst_72 : f32 to vector<128x32xf32>
    %229 = arith.mulf %228, %227 : vector<128x32xf32>
    %230 = math.tanh %229 : vector<128x32xf32>
    %cst_73 = arith.constant 1.000000e+00 : f32
    %231 = vector.broadcast %cst_73 : f32 to vector<128x32xf32>
    %232 = arith.addf %230, %231 : vector<128x32xf32>
    %cst_74 = arith.constant 5.000000e-01 : f32
    %233 = vector.broadcast %cst_74 : f32 to vector<128x32xf32>
    %234 = arith.mulf %233, %232 : vector<128x32xf32>
    %235 = arith.mulf %227, %234 : vector<128x32xf32>
    %c0_75 = arith.constant 0 : index
    %c0_76 = arith.constant 0 : index
    %c0_77 = arith.constant 0 : index
    %236 = vector.load %arg11[%c0_75, %c0_76, %c0_77] : memref<2x32x32xf32, #tpu.memory_space<vmem>>, vector<1x32x32xf32>
    %237 = vector.shape_cast %236 : vector<1x32x32xf32> to vector<32x32xf32>
    %cst_78 = arith.constant dense<0.000000e+00> : vector<128x32xf32>
    %238 = tpu.matmul %235, %237, %cst_78 {dimension_numbers = #tpu.dot_dimension_numbers<[1], [0], [0], [1], [0, 0, 1, 1], [], []>} : vector<128x32xf32>, vector<32x32xf32>, vector<128x32xf32> -> vector<128x32xf32>
    %239 = vector.extract_strided_slice %4 {offsets = [31, 0], sizes = [1, 32], strides = [1, 1]} : vector<38x32xf32> to vector<1x32xf32>
    %240 = vector.broadcast %239 : vector<1x32xf32> to vector<128x32xf32>
    %241 = arith.addf %238, %240 : vector<128x32xf32>
    %cst_79 = arith.constant 5.000000e-01 : f32
    %242 = vector.broadcast %cst_79 : f32 to vector<128x32xf32>
    %243 = arith.mulf %242, %241 : vector<128x32xf32>
    %244 = math.tanh %243 : vector<128x32xf32>
    %cst_80 = arith.constant 1.000000e+00 : f32
    %245 = vector.broadcast %cst_80 : f32 to vector<128x32xf32>
    %246 = arith.addf %244, %245 : vector<128x32xf32>
    %cst_81 = arith.constant 5.000000e-01 : f32
    %247 = vector.broadcast %cst_81 : f32 to vector<128x32xf32>
    %248 = arith.mulf %247, %246 : vector<128x32xf32>
    %249 = arith.mulf %241, %248 : vector<128x32xf32>
    %250 = vector.extract_strided_slice %4 {offsets = [32, 0], sizes = [1, 32], strides = [1, 1]} : vector<38x32xf32> to vector<1x32xf32>
    %251 = vector.broadcast %250 : vector<1x32xf32> to vector<128x32xf32>
    %252 = arith.mulf %249, %251 : vector<128x32xf32>
    %cst_82 = arith.constant dense<0.000000e+00> : vector<128xf32>
    %253 = vector.multi_reduction <add>, %252, %cst_82 [1] : vector<128x32xf32> to vector<128xf32>
    %254 = vector.shape_cast %253 : vector<128xf32> to vector<128x1xf32>
    %255 = vector.broadcast %254 : vector<128x1xf32> to vector<128x3xf32>
    %256 = arith.mulf %40, %255 : vector<128x3xf32>
    %257 = vector.broadcast %3 : vector<128x1xf32> to vector<128x3xf32>
    %258 = arith.mulf %256, %257 : vector<128x3xf32>
    %259 = vector.shape_cast %258 : vector<128x3xf32> to vector<16x8x3xf32>
    %cst_83 = arith.constant dense<0.000000e+00> : vector<16x3xf32>
    %260 = vector.multi_reduction <add>, %259, %cst_83 [1] : vector<16x8x3xf32> to vector<16x3xf32>
    %cst_84 = arith.constant 0.00999999977 : f32
    %261 = vector.broadcast %cst_84 : f32 to vector<16x3xf32>
    %262 = arith.mulf %260, %261 : vector<16x3xf32>
    %263 = arith.addf %1, %262 : vector<16x3xf32>
    %264 = vector.broadcast %2 : vector<16x1xf32> to vector<16x3xf32>
    %265 = arith.mulf %263, %264 : vector<16x3xf32>
    %266 = vector.broadcast %2 : vector<16x1xf32> to vector<16x32xf32>
    %267 = arith.mulf %200, %266 : vector<16x32xf32>
    %268 = vector.shape_cast %265 : vector<16x3xf32> to vector<16x1x3xf32>
    %269 = vector.shape_cast %268 : vector<16x1x3xf32> to vector<16x1x3xf32>
    %270 = vector.broadcast %269 : vector<16x1x3xf32> to vector<16x8x3xf32>
    %271 = vector.shape_cast %270 : vector<16x8x3xf32> to vector<128x3xf32>
    %272 = vector.shape_cast %265 : vector<16x3xf32> to vector<2x1x8x3xf32>
    %273 = vector.shape_cast %272 : vector<2x1x8x3xf32> to vector<2x1x8x3xf32>
    %274 = vector.broadcast %273 : vector<2x1x8x3xf32> to vector<2x8x8x3xf32>
    %275 = vector.shape_cast %274 : vector<2x8x8x3xf32> to vector<128x3xf32>
    %276 = arith.subf %271, %275 : vector<128x3xf32>
    %277 = arith.mulf %276, %276 : vector<128x3xf32>
    %cst_85 = arith.constant dense<0.000000e+00> : vector<128xf32>
    %278 = vector.multi_reduction <add>, %277, %cst_85 [1] : vector<128x3xf32> to vector<128xf32>
    %279 = vector.shape_cast %278 : vector<128xf32> to vector<128x1xf32>
    %cst_86 = arith.constant 9.99999993E-9 : f32
    %280 = vector.broadcast %cst_86 : f32 to vector<128x1xf32>
    %281 = arith.addf %279, %280 : vector<128x1xf32>
    %282 = math.sqrt %281 : vector<128x1xf32>
    %cst_87 = arith.constant 0.000000e+00 : f32
    %283 = vector.broadcast %cst_87 : f32 to vector<128x1xf32>
    %284 = arith.addf %282, %283 : vector<128x1xf32>
    %285 = vector.broadcast %284 : vector<128x1xf32> to vector<128x3xf32>
    %286 = arith.divf %276, %285 : vector<128x3xf32>
    %c2 = arith.constant 2 : index
    %c0_88 = arith.constant 0 : index
    %c0_89 = arith.constant 0 : index
    %287 = vector.load %arg6[%c2, %c0_88, %c0_89] : memref<4x32x96xf32, #tpu.memory_space<vmem>>, vector<1x32x96xf32>
    %288 = vector.shape_cast %287 : vector<1x32x96xf32> to vector<32x96xf32>
    %cst_90 = arith.constant dense<0.000000e+00> : vector<16x96xf32>
    %289 = tpu.matmul %267, %288, %cst_90 {dimension_numbers = #tpu.dot_dimension_numbers<[1], [0], [0], [1], [0, 0, 1, 1], [], []>} : vector<16x32xf32>, vector<32x96xf32>, vector<16x96xf32> -> vector<16x96xf32>
    %290 = vector.extract_strided_slice %289 {offsets = [0, 0], sizes = [16, 32], strides = [1, 1]} : vector<16x96xf32> to vector<16x32xf32>
    %291 = vector.shape_cast %290 : vector<16x32xf32> to vector<16x1x32xf32>
    %292 = vector.shape_cast %291 : vector<16x1x32xf32> to vector<16x1x32xf32>
    %293 = vector.broadcast %292 : vector<16x1x32xf32> to vector<16x8x32xf32>
    %294 = vector.shape_cast %293 : vector<16x8x32xf32> to vector<128x32xf32>
    %295 = vector.extract_strided_slice %289 {offsets = [0, 32], sizes = [16, 32], strides = [1, 1]} : vector<16x96xf32> to vector<16x32xf32>
    %296 = vector.shape_cast %295 : vector<16x32xf32> to vector<2x1x8x32xf32>
    %297 = vector.shape_cast %296 : vector<2x1x8x32xf32> to vector<2x1x8x32xf32>
    %298 = vector.broadcast %297 : vector<2x1x8x32xf32> to vector<2x8x8x32xf32>
    %299 = vector.shape_cast %298 : vector<2x8x8x32xf32> to vector<128x32xf32>
    %300 = arith.addf %294, %299 : vector<128x32xf32>
    %301 = vector.extract_strided_slice %4 {offsets = [16, 0], sizes = [1, 32], strides = [1, 1]} : vector<38x32xf32> to vector<1x32xf32>
    %302 = vector.broadcast %279 : vector<128x1xf32> to vector<128x32xf32>
    %303 = vector.broadcast %301 : vector<1x32xf32> to vector<128x32xf32>
    %304 = arith.mulf %302, %303 : vector<128x32xf32>
    %305 = arith.addf %300, %304 : vector<128x32xf32>
    %306 = vector.extract_strided_slice %4 {offsets = [17, 0], sizes = [1, 32], strides = [1, 1]} : vector<38x32xf32> to vector<1x32xf32>
    %307 = vector.broadcast %16 : vector<128x1xf32> to vector<128x32xf32>
    %308 = vector.broadcast %306 : vector<1x32xf32> to vector<128x32xf32>
    %309 = arith.mulf %307, %308 : vector<128x32xf32>
    %310 = arith.addf %305, %309 : vector<128x32xf32>
    %311 = vector.extract_strided_slice %4 {offsets = [18, 0], sizes = [1, 32], strides = [1, 1]} : vector<38x32xf32> to vector<1x32xf32>
    %312 = vector.broadcast %311 : vector<1x32xf32> to vector<128x32xf32>
    %313 = arith.addf %310, %312 : vector<128x32xf32>
    %cst_91 = arith.constant 5.000000e-01 : f32
    %314 = vector.broadcast %cst_91 : f32 to vector<128x32xf32>
    %315 = arith.mulf %314, %313 : vector<128x32xf32>
    %316 = math.tanh %315 : vector<128x32xf32>
    %cst_92 = arith.constant 1.000000e+00 : f32
    %317 = vector.broadcast %cst_92 : f32 to vector<128x32xf32>
    %318 = arith.addf %316, %317 : vector<128x32xf32>
    %cst_93 = arith.constant 5.000000e-01 : f32
    %319 = vector.broadcast %cst_93 : f32 to vector<128x32xf32>
    %320 = arith.mulf %319, %318 : vector<128x32xf32>
    %321 = arith.mulf %313, %320 : vector<128x32xf32>
    %c2_94 = arith.constant 2 : index
    %c0_95 = arith.constant 0 : index
    %c0_96 = arith.constant 0 : index
    %322 = vector.load %arg7[%c2_94, %c0_95, %c0_96] : memref<4x32x32xf32, #tpu.memory_space<vmem>>, vector<1x32x32xf32>
    %323 = vector.shape_cast %322 : vector<1x32x32xf32> to vector<32x32xf32>
    %cst_97 = arith.constant dense<0.000000e+00> : vector<128x32xf32>
    %324 = tpu.matmul %321, %323, %cst_97 {dimension_numbers = #tpu.dot_dimension_numbers<[1], [0], [0], [1], [0, 0, 1, 1], [], []>} : vector<128x32xf32>, vector<32x32xf32>, vector<128x32xf32> -> vector<128x32xf32>
    %325 = vector.extract_strided_slice %4 {offsets = [19, 0], sizes = [1, 32], strides = [1, 1]} : vector<38x32xf32> to vector<1x32xf32>
    %326 = vector.broadcast %325 : vector<1x32xf32> to vector<128x32xf32>
    %327 = arith.addf %324, %326 : vector<128x32xf32>
    %cst_98 = arith.constant 5.000000e-01 : f32
    %328 = vector.broadcast %cst_98 : f32 to vector<128x32xf32>
    %329 = arith.mulf %328, %327 : vector<128x32xf32>
    %330 = math.tanh %329 : vector<128x32xf32>
    %cst_99 = arith.constant 1.000000e+00 : f32
    %331 = vector.broadcast %cst_99 : f32 to vector<128x32xf32>
    %332 = arith.addf %330, %331 : vector<128x32xf32>
    %cst_100 = arith.constant 5.000000e-01 : f32
    %333 = vector.broadcast %cst_100 : f32 to vector<128x32xf32>
    %334 = arith.mulf %333, %332 : vector<128x32xf32>
    %335 = arith.mulf %327, %334 : vector<128x32xf32>
    %336 = vector.broadcast %3 : vector<128x1xf32> to vector<128x32xf32>
    %337 = arith.mulf %335, %336 : vector<128x32xf32>
    %338 = vector.shape_cast %337 : vector<128x32xf32> to vector<16x8x32xf32>
    %cst_101 = arith.constant dense<0.000000e+00> : vector<16x32xf32>
    %339 = vector.multi_reduction <add>, %338, %cst_101 [1] : vector<16x8x32xf32> to vector<16x32xf32>
    %cst_102 = arith.constant 0.00999999977 : f32
    %340 = vector.broadcast %cst_102 : f32 to vector<16x32xf32>
    %341 = arith.mulf %339, %340 : vector<16x32xf32>
    %342 = vector.extract_strided_slice %289 {offsets = [0, 64], sizes = [16, 32], strides = [1, 1]} : vector<16x96xf32> to vector<16x32xf32>
    %c2_103 = arith.constant 2 : index
    %c0_104 = arith.constant 0 : index
    %c0_105 = arith.constant 0 : index
    %343 = vector.load %arg8[%c2_103, %c0_104, %c0_105] : memref<4x32x32xf32, #tpu.memory_space<vmem>>, vector<1x32x32xf32>
    %344 = vector.shape_cast %343 : vector<1x32x32xf32> to vector<32x32xf32>
    %cst_106 = arith.constant dense<0.000000e+00> : vector<16x32xf32>
    %345 = tpu.matmul %341, %344, %cst_106 {dimension_numbers = #tpu.dot_dimension_numbers<[1], [0], [0], [1], [0, 0, 1, 1], [], []>} : vector<16x32xf32>, vector<32x32xf32>, vector<16x32xf32> -> vector<16x32xf32>
    %346 = arith.addf %342, %345 : vector<16x32xf32>
    %347 = vector.extract_strided_slice %4 {offsets = [20, 0], sizes = [1, 32], strides = [1, 1]} : vector<38x32xf32> to vector<1x32xf32>
    %348 = vector.broadcast %347 : vector<1x32xf32> to vector<16x32xf32>
    %349 = arith.addf %346, %348 : vector<16x32xf32>
    %cst_107 = arith.constant 5.000000e-01 : f32
    %350 = vector.broadcast %cst_107 : f32 to vector<16x32xf32>
    %351 = arith.mulf %350, %349 : vector<16x32xf32>
    %352 = math.tanh %351 : vector<16x32xf32>
    %cst_108 = arith.constant 1.000000e+00 : f32
    %353 = vector.broadcast %cst_108 : f32 to vector<16x32xf32>
    %354 = arith.addf %352, %353 : vector<16x32xf32>
    %cst_109 = arith.constant 5.000000e-01 : f32
    %355 = vector.broadcast %cst_109 : f32 to vector<16x32xf32>
    %356 = arith.mulf %355, %354 : vector<16x32xf32>
    %357 = arith.mulf %349, %356 : vector<16x32xf32>
    %c2_110 = arith.constant 2 : index
    %c0_111 = arith.constant 0 : index
    %c0_112 = arith.constant 0 : index
    %358 = vector.load %arg9[%c2_110, %c0_111, %c0_112] : memref<4x32x32xf32, #tpu.memory_space<vmem>>, vector<1x32x32xf32>
    %359 = vector.shape_cast %358 : vector<1x32x32xf32> to vector<32x32xf32>
    %cst_113 = arith.constant dense<0.000000e+00> : vector<16x32xf32>
    %360 = tpu.matmul %357, %359, %cst_113 {dimension_numbers = #tpu.dot_dimension_numbers<[1], [0], [0], [1], [0, 0, 1, 1], [], []>} : vector<16x32xf32>, vector<32x32xf32>, vector<16x32xf32> -> vector<16x32xf32>
    %361 = vector.extract_strided_slice %4 {offsets = [21, 0], sizes = [1, 32], strides = [1, 1]} : vector<38x32xf32> to vector<1x32xf32>
    %362 = vector.broadcast %361 : vector<1x32xf32> to vector<16x32xf32>
    %363 = arith.addf %360, %362 : vector<16x32xf32>
    %364 = arith.addf %267, %363 : vector<16x32xf32>
    %365 = vector.broadcast %2 : vector<16x1xf32> to vector<16x32xf32>
    %366 = arith.mulf %364, %365 : vector<16x32xf32>
    %c3 = arith.constant 3 : index
    %c0_114 = arith.constant 0 : index
    %c0_115 = arith.constant 0 : index
    %367 = vector.load %arg6[%c3, %c0_114, %c0_115] : memref<4x32x96xf32, #tpu.memory_space<vmem>>, vector<1x32x96xf32>
    %368 = vector.shape_cast %367 : vector<1x32x96xf32> to vector<32x96xf32>
    %cst_116 = arith.constant dense<0.000000e+00> : vector<16x96xf32>
    %369 = tpu.matmul %366, %368, %cst_116 {dimension_numbers = #tpu.dot_dimension_numbers<[1], [0], [0], [1], [0, 0, 1, 1], [], []>} : vector<16x32xf32>, vector<32x96xf32>, vector<16x96xf32> -> vector<16x96xf32>
    %370 = vector.extract_strided_slice %369 {offsets = [0, 0], sizes = [16, 32], strides = [1, 1]} : vector<16x96xf32> to vector<16x32xf32>
    %371 = vector.shape_cast %370 : vector<16x32xf32> to vector<16x1x32xf32>
    %372 = vector.shape_cast %371 : vector<16x1x32xf32> to vector<16x1x32xf32>
    %373 = vector.broadcast %372 : vector<16x1x32xf32> to vector<16x8x32xf32>
    %374 = vector.shape_cast %373 : vector<16x8x32xf32> to vector<128x32xf32>
    %375 = vector.extract_strided_slice %369 {offsets = [0, 32], sizes = [16, 32], strides = [1, 1]} : vector<16x96xf32> to vector<16x32xf32>
    %376 = vector.shape_cast %375 : vector<16x32xf32> to vector<2x1x8x32xf32>
    %377 = vector.shape_cast %376 : vector<2x1x8x32xf32> to vector<2x1x8x32xf32>
    %378 = vector.broadcast %377 : vector<2x1x8x32xf32> to vector<2x8x8x32xf32>
    %379 = vector.shape_cast %378 : vector<2x8x8x32xf32> to vector<128x32xf32>
    %380 = arith.addf %374, %379 : vector<128x32xf32>
    %381 = vector.extract_strided_slice %4 {offsets = [22, 0], sizes = [1, 32], strides = [1, 1]} : vector<38x32xf32> to vector<1x32xf32>
    %382 = vector.broadcast %279 : vector<128x1xf32> to vector<128x32xf32>
    %383 = vector.broadcast %381 : vector<1x32xf32> to vector<128x32xf32>
    %384 = arith.mulf %382, %383 : vector<128x32xf32>
    %385 = arith.addf %380, %384 : vector<128x32xf32>
    %386 = vector.extract_strided_slice %4 {offsets = [23, 0], sizes = [1, 32], strides = [1, 1]} : vector<38x32xf32> to vector<1x32xf32>
    %387 = vector.broadcast %16 : vector<128x1xf32> to vector<128x32xf32>
    %388 = vector.broadcast %386 : vector<1x32xf32> to vector<128x32xf32>
    %389 = arith.mulf %387, %388 : vector<128x32xf32>
    %390 = arith.addf %385, %389 : vector<128x32xf32>
    %391 = vector.extract_strided_slice %4 {offsets = [24, 0], sizes = [1, 32], strides = [1, 1]} : vector<38x32xf32> to vector<1x32xf32>
    %392 = vector.broadcast %391 : vector<1x32xf32> to vector<128x32xf32>
    %393 = arith.addf %390, %392 : vector<128x32xf32>
    %cst_117 = arith.constant 5.000000e-01 : f32
    %394 = vector.broadcast %cst_117 : f32 to vector<128x32xf32>
    %395 = arith.mulf %394, %393 : vector<128x32xf32>
    %396 = math.tanh %395 : vector<128x32xf32>
    %cst_118 = arith.constant 1.000000e+00 : f32
    %397 = vector.broadcast %cst_118 : f32 to vector<128x32xf32>
    %398 = arith.addf %396, %397 : vector<128x32xf32>
    %cst_119 = arith.constant 5.000000e-01 : f32
    %399 = vector.broadcast %cst_119 : f32 to vector<128x32xf32>
    %400 = arith.mulf %399, %398 : vector<128x32xf32>
    %401 = arith.mulf %393, %400 : vector<128x32xf32>
    %c3_120 = arith.constant 3 : index
    %c0_121 = arith.constant 0 : index
    %c0_122 = arith.constant 0 : index
    %402 = vector.load %arg7[%c3_120, %c0_121, %c0_122] : memref<4x32x32xf32, #tpu.memory_space<vmem>>, vector<1x32x32xf32>
    %403 = vector.shape_cast %402 : vector<1x32x32xf32> to vector<32x32xf32>
    %cst_123 = arith.constant dense<0.000000e+00> : vector<128x32xf32>
    %404 = tpu.matmul %401, %403, %cst_123 {dimension_numbers = #tpu.dot_dimension_numbers<[1], [0], [0], [1], [0, 0, 1, 1], [], []>} : vector<128x32xf32>, vector<32x32xf32>, vector<128x32xf32> -> vector<128x32xf32>
    %405 = vector.extract_strided_slice %4 {offsets = [25, 0], sizes = [1, 32], strides = [1, 1]} : vector<38x32xf32> to vector<1x32xf32>
    %406 = vector.broadcast %405 : vector<1x32xf32> to vector<128x32xf32>
    %407 = arith.addf %404, %406 : vector<128x32xf32>
    %cst_124 = arith.constant 5.000000e-01 : f32
    %408 = vector.broadcast %cst_124 : f32 to vector<128x32xf32>
    %409 = arith.mulf %408, %407 : vector<128x32xf32>
    %410 = math.tanh %409 : vector<128x32xf32>
    %cst_125 = arith.constant 1.000000e+00 : f32
    %411 = vector.broadcast %cst_125 : f32 to vector<128x32xf32>
    %412 = arith.addf %410, %411 : vector<128x32xf32>
    %cst_126 = arith.constant 5.000000e-01 : f32
    %413 = vector.broadcast %cst_126 : f32 to vector<128x32xf32>
    %414 = arith.mulf %413, %412 : vector<128x32xf32>
    %415 = arith.mulf %407, %414 : vector<128x32xf32>
    %416 = vector.broadcast %3 : vector<128x1xf32> to vector<128x32xf32>
    %417 = arith.mulf %415, %416 : vector<128x32xf32>
    %418 = vector.shape_cast %417 : vector<128x32xf32> to vector<16x8x32xf32>
    %cst_127 = arith.constant dense<0.000000e+00> : vector<16x32xf32>
    %419 = vector.multi_reduction <add>, %418, %cst_127 [1] : vector<16x8x32xf32> to vector<16x32xf32>
    %cst_128 = arith.constant 0.00999999977 : f32
    %420 = vector.broadcast %cst_128 : f32 to vector<16x32xf32>
    %421 = arith.mulf %419, %420 : vector<16x32xf32>
    %422 = vector.extract_strided_slice %369 {offsets = [0, 64], sizes = [16, 32], strides = [1, 1]} : vector<16x96xf32> to vector<16x32xf32>
    %c3_129 = arith.constant 3 : index
    %c0_130 = arith.constant 0 : index
    %c0_131 = arith.constant 0 : index
    %423 = vector.load %arg8[%c3_129, %c0_130, %c0_131] : memref<4x32x32xf32, #tpu.memory_space<vmem>>, vector<1x32x32xf32>
    %424 = vector.shape_cast %423 : vector<1x32x32xf32> to vector<32x32xf32>
    %cst_132 = arith.constant dense<0.000000e+00> : vector<16x32xf32>
    %425 = tpu.matmul %421, %424, %cst_132 {dimension_numbers = #tpu.dot_dimension_numbers<[1], [0], [0], [1], [0, 0, 1, 1], [], []>} : vector<16x32xf32>, vector<32x32xf32>, vector<16x32xf32> -> vector<16x32xf32>
    %426 = arith.addf %422, %425 : vector<16x32xf32>
    %427 = vector.extract_strided_slice %4 {offsets = [26, 0], sizes = [1, 32], strides = [1, 1]} : vector<38x32xf32> to vector<1x32xf32>
    %428 = vector.broadcast %427 : vector<1x32xf32> to vector<16x32xf32>
    %429 = arith.addf %426, %428 : vector<16x32xf32>
    %cst_133 = arith.constant 5.000000e-01 : f32
    %430 = vector.broadcast %cst_133 : f32 to vector<16x32xf32>
    %431 = arith.mulf %430, %429 : vector<16x32xf32>
    %432 = math.tanh %431 : vector<16x32xf32>
    %cst_134 = arith.constant 1.000000e+00 : f32
    %433 = vector.broadcast %cst_134 : f32 to vector<16x32xf32>
    %434 = arith.addf %432, %433 : vector<16x32xf32>
    %cst_135 = arith.constant 5.000000e-01 : f32
    %435 = vector.broadcast %cst_135 : f32 to vector<16x32xf32>
    %436 = arith.mulf %435, %434 : vector<16x32xf32>
    %437 = arith.mulf %429, %436 : vector<16x32xf32>
    %c3_136 = arith.constant 3 : index
    %c0_137 = arith.constant 0 : index
    %c0_138 = arith.constant 0 : index
    %438 = vector.load %arg9[%c3_136, %c0_137, %c0_138] : memref<4x32x32xf32, #tpu.memory_space<vmem>>, vector<1x32x32xf32>
    %439 = vector.shape_cast %438 : vector<1x32x32xf32> to vector<32x32xf32>
    %cst_139 = arith.constant dense<0.000000e+00> : vector<16x32xf32>
    %440 = tpu.matmul %437, %439, %cst_139 {dimension_numbers = #tpu.dot_dimension_numbers<[1], [0], [0], [1], [0, 0, 1, 1], [], []>} : vector<16x32xf32>, vector<32x32xf32>, vector<16x32xf32> -> vector<16x32xf32>
    %441 = vector.extract_strided_slice %4 {offsets = [27, 0], sizes = [1, 32], strides = [1, 1]} : vector<38x32xf32> to vector<1x32xf32>
    %442 = vector.broadcast %441 : vector<1x32xf32> to vector<16x32xf32>
    %443 = arith.addf %440, %442 : vector<16x32xf32>
    %444 = arith.addf %366, %443 : vector<16x32xf32>
    %445 = vector.broadcast %2 : vector<16x1xf32> to vector<16x32xf32>
    %446 = arith.mulf %444, %445 : vector<16x32xf32>
    %c1_140 = arith.constant 1 : index
    %c0_141 = arith.constant 0 : index
    %c0_142 = arith.constant 0 : index
    %447 = vector.load %arg10[%c1_140, %c0_141, %c0_142] : memref<2x32x64xf32, #tpu.memory_space<vmem>>, vector<1x32x64xf32>
    %448 = vector.shape_cast %447 : vector<1x32x64xf32> to vector<32x64xf32>
    %cst_143 = arith.constant dense<0.000000e+00> : vector<16x64xf32>
    %449 = tpu.matmul %446, %448, %cst_143 {dimension_numbers = #tpu.dot_dimension_numbers<[1], [0], [0], [1], [0, 0, 1, 1], [], []>} : vector<16x32xf32>, vector<32x64xf32>, vector<16x64xf32> -> vector<16x64xf32>
    %450 = vector.extract_strided_slice %449 {offsets = [0, 0], sizes = [16, 32], strides = [1, 1]} : vector<16x64xf32> to vector<16x32xf32>
    %451 = vector.shape_cast %450 : vector<16x32xf32> to vector<16x1x32xf32>
    %452 = vector.shape_cast %451 : vector<16x1x32xf32> to vector<16x1x32xf32>
    %453 = vector.broadcast %452 : vector<16x1x32xf32> to vector<16x8x32xf32>
    %454 = vector.shape_cast %453 : vector<16x8x32xf32> to vector<128x32xf32>
    %455 = vector.extract_strided_slice %449 {offsets = [0, 32], sizes = [16, 32], strides = [1, 1]} : vector<16x64xf32> to vector<16x32xf32>
    %456 = vector.shape_cast %455 : vector<16x32xf32> to vector<2x1x8x32xf32>
    %457 = vector.shape_cast %456 : vector<2x1x8x32xf32> to vector<2x1x8x32xf32>
    %458 = vector.broadcast %457 : vector<2x1x8x32xf32> to vector<2x8x8x32xf32>
    %459 = vector.shape_cast %458 : vector<2x8x8x32xf32> to vector<128x32xf32>
    %460 = arith.addf %454, %459 : vector<128x32xf32>
    %461 = vector.extract_strided_slice %4 {offsets = [33, 0], sizes = [1, 32], strides = [1, 1]} : vector<38x32xf32> to vector<1x32xf32>
    %462 = vector.broadcast %279 : vector<128x1xf32> to vector<128x32xf32>
    %463 = vector.broadcast %461 : vector<1x32xf32> to vector<128x32xf32>
    %464 = arith.mulf %462, %463 : vector<128x32xf32>
    %465 = arith.addf %460, %464 : vector<128x32xf32>
    %466 = vector.extract_strided_slice %4 {offsets = [34, 0], sizes = [1, 32], strides = [1, 1]} : vector<38x32xf32> to vector<1x32xf32>
    %467 = vector.broadcast %16 : vector<128x1xf32> to vector<128x32xf32>
    %468 = vector.broadcast %466 : vector<1x32xf32> to vector<128x32xf32>
    %469 = arith.mulf %467, %468 : vector<128x32xf32>
    %470 = arith.addf %465, %469 : vector<128x32xf32>
    %471 = vector.extract_strided_slice %4 {offsets = [35, 0], sizes = [1, 32], strides = [1, 1]} : vector<38x32xf32> to vector<1x32xf32>
    %472 = vector.broadcast %471 : vector<1x32xf32> to vector<128x32xf32>
    %473 = arith.addf %470, %472 : vector<128x32xf32>
    %cst_144 = arith.constant 5.000000e-01 : f32
    %474 = vector.broadcast %cst_144 : f32 to vector<128x32xf32>
    %475 = arith.mulf %474, %473 : vector<128x32xf32>
    %476 = math.tanh %475 : vector<128x32xf32>
    %cst_145 = arith.constant 1.000000e+00 : f32
    %477 = vector.broadcast %cst_145 : f32 to vector<128x32xf32>
    %478 = arith.addf %476, %477 : vector<128x32xf32>
    %cst_146 = arith.constant 5.000000e-01 : f32
    %479 = vector.broadcast %cst_146 : f32 to vector<128x32xf32>
    %480 = arith.mulf %479, %478 : vector<128x32xf32>
    %481 = arith.mulf %473, %480 : vector<128x32xf32>
    %c1_147 = arith.constant 1 : index
    %c0_148 = arith.constant 0 : index
    %c0_149 = arith.constant 0 : index
    %482 = vector.load %arg11[%c1_147, %c0_148, %c0_149] : memref<2x32x32xf32, #tpu.memory_space<vmem>>, vector<1x32x32xf32>
    %483 = vector.shape_cast %482 : vector<1x32x32xf32> to vector<32x32xf32>
    %cst_150 = arith.constant dense<0.000000e+00> : vector<128x32xf32>
    %484 = tpu.matmul %481, %483, %cst_150 {dimension_numbers = #tpu.dot_dimension_numbers<[1], [0], [0], [1], [0, 0, 1, 1], [], []>} : vector<128x32xf32>, vector<32x32xf32>, vector<128x32xf32> -> vector<128x32xf32>
    %485 = vector.extract_strided_slice %4 {offsets = [36, 0], sizes = [1, 32], strides = [1, 1]} : vector<38x32xf32> to vector<1x32xf32>
    %486 = vector.broadcast %485 : vector<1x32xf32> to vector<128x32xf32>
    %487 = arith.addf %484, %486 : vector<128x32xf32>
    %cst_151 = arith.constant 5.000000e-01 : f32
    %488 = vector.broadcast %cst_151 : f32 to vector<128x32xf32>
    %489 = arith.mulf %488, %487 : vector<128x32xf32>
    %490 = math.tanh %489 : vector<128x32xf32>
    %cst_152 = arith.constant 1.000000e+00 : f32
    %491 = vector.broadcast %cst_152 : f32 to vector<128x32xf32>
    %492 = arith.addf %490, %491 : vector<128x32xf32>
    %cst_153 = arith.constant 5.000000e-01 : f32
    %493 = vector.broadcast %cst_153 : f32 to vector<128x32xf32>
    %494 = arith.mulf %493, %492 : vector<128x32xf32>
    %495 = arith.mulf %487, %494 : vector<128x32xf32>
    %496 = vector.extract_strided_slice %4 {offsets = [37, 0], sizes = [1, 32], strides = [1, 1]} : vector<38x32xf32> to vector<1x32xf32>
    %497 = vector.broadcast %496 : vector<1x32xf32> to vector<128x32xf32>
    %498 = arith.mulf %495, %497 : vector<128x32xf32>
    %cst_154 = arith.constant dense<0.000000e+00> : vector<128xf32>
    %499 = vector.multi_reduction <add>, %498, %cst_154 [1] : vector<128x32xf32> to vector<128xf32>
    %500 = vector.shape_cast %499 : vector<128xf32> to vector<128x1xf32>
    %501 = vector.broadcast %500 : vector<128x1xf32> to vector<128x3xf32>
    %502 = arith.mulf %286, %501 : vector<128x3xf32>
    %503 = vector.broadcast %3 : vector<128x1xf32> to vector<128x3xf32>
    %504 = arith.mulf %502, %503 : vector<128x3xf32>
    %505 = vector.shape_cast %504 : vector<128x3xf32> to vector<16x8x3xf32>
    %cst_155 = arith.constant dense<0.000000e+00> : vector<16x3xf32>
    %506 = vector.multi_reduction <add>, %505, %cst_155 [1] : vector<16x8x3xf32> to vector<16x3xf32>
    %cst_156 = arith.constant 0.00999999977 : f32
    %507 = vector.broadcast %cst_156 : f32 to vector<16x3xf32>
    %508 = arith.mulf %506, %507 : vector<16x3xf32>
    %509 = arith.addf %265, %508 : vector<16x3xf32>
    %510 = vector.broadcast %2 : vector<16x1xf32> to vector<16x3xf32>
    %511 = arith.mulf %509, %510 : vector<16x3xf32>
    %512 = vector.broadcast %2 : vector<16x1xf32> to vector<16x32xf32>
    %513 = arith.mulf %446, %512 : vector<16x32xf32>
    %c0_157 = arith.constant 0 : index
    %c0_158 = arith.constant 0 : index
    %514 = vector.load %arg12[%c0_157, %c0_158] : memref<32x32xf32, #tpu.memory_space<vmem>>, vector<32x32xf32>
    %cst_159 = arith.constant dense<0.000000e+00> : vector<16x32xf32>
    %515 = tpu.matmul %513, %514, %cst_159 {dimension_numbers = #tpu.dot_dimension_numbers<[1], [0], [0], [1], [0, 0, 1, 1], [], []>} : vector<16x32xf32>, vector<32x32xf32>, vector<16x32xf32> -> vector<16x32xf32>
    %516 = vector.extract_strided_slice %4 {offsets = [1, 0], sizes = [1, 32], strides = [1, 1]} : vector<38x32xf32> to vector<1x32xf32>
    %517 = vector.broadcast %516 : vector<1x32xf32> to vector<16x32xf32>
    %518 = arith.addf %515, %517 : vector<16x32xf32>
    %519 = vector.broadcast %2 : vector<16x1xf32> to vector<16x32xf32>
    %520 = arith.mulf %518, %519 : vector<16x32xf32>
    %c0_160 = arith.constant 0 : index
    %c0_161 = arith.constant 0 : index
    %521 = vector.load %arg13[%c0_160, %c0_161] : memref<32x32xf32, #tpu.memory_space<vmem>>, vector<32x32xf32>
    %cst_162 = arith.constant dense<0.000000e+00> : vector<16x32xf32>
    %522 = tpu.matmul %520, %521, %cst_162 {dimension_numbers = #tpu.dot_dimension_numbers<[1], [0], [0], [1], [0, 0, 1, 1], [], []>} : vector<16x32xf32>, vector<32x32xf32>, vector<16x32xf32> -> vector<16x32xf32>
    %523 = vector.extract_strided_slice %4 {offsets = [2, 0], sizes = [1, 32], strides = [1, 1]} : vector<38x32xf32> to vector<1x32xf32>
    %524 = vector.broadcast %523 : vector<1x32xf32> to vector<16x32xf32>
    %525 = arith.addf %522, %524 : vector<16x32xf32>
    %cst_163 = arith.constant 5.000000e-01 : f32
    %526 = vector.broadcast %cst_163 : f32 to vector<16x32xf32>
    %527 = arith.mulf %526, %525 : vector<16x32xf32>
    %528 = math.tanh %527 : vector<16x32xf32>
    %cst_164 = arith.constant 1.000000e+00 : f32
    %529 = vector.broadcast %cst_164 : f32 to vector<16x32xf32>
    %530 = arith.addf %528, %529 : vector<16x32xf32>
    %cst_165 = arith.constant 5.000000e-01 : f32
    %531 = vector.broadcast %cst_165 : f32 to vector<16x32xf32>
    %532 = arith.mulf %531, %530 : vector<16x32xf32>
    %533 = arith.mulf %525, %532 : vector<16x32xf32>
    %c0_166 = arith.constant 0 : index
    %c0_167 = arith.constant 0 : index
    %534 = vector.load %arg14[%c0_166, %c0_167] : memref<32x5xf32, #tpu.memory_space<vmem>>, vector<32x5xf32>
    %cst_168 = arith.constant dense<0.000000e+00> : vector<16x5xf32>
    %535 = tpu.matmul %533, %534, %cst_168 {dimension_numbers = #tpu.dot_dimension_numbers<[1], [0], [0], [1], [0, 0, 1, 1], [], []>} : vector<16x32xf32>, vector<32x5xf32>, vector<16x5xf32> -> vector<16x5xf32>
    %536 = vector.extract_strided_slice %4 {offsets = [3, 0], sizes = [1, 5], strides = [1, 1]} : vector<38x32xf32> to vector<1x5xf32>
    %537 = vector.broadcast %536 : vector<1x5xf32> to vector<16x5xf32>
    %538 = arith.addf %535, %537 : vector<16x5xf32>
    %539 = vector.broadcast %2 : vector<16x1xf32> to vector<16x5xf32>
    %540 = arith.mulf %538, %539 : vector<16x5xf32>
    %541 = tpu.concatenate %511, %540 in 1 : vector<16x3xf32>, vector<16x5xf32> -> vector<16x8xf32>
    %c0_169 = arith.constant 0 : index
    %c0_170 = arith.constant 0 : index
    %542 = vector.load %arg16[%c0_169, %c0_170] : memref<16x8xf32, #tpu.memory_space<vmem>>, vector<16x8xf32>
    tpu.vector_store %arg16[%c0_169, %c0_170], %541 {strides = array<i32>} : memref<16x8xf32, #tpu.memory_space<vmem>>, vector<16x8xf32>,
    return
  }
  func.func @transform_0(%arg0: i32) -> (i32, i32) {
    %c0_i32 = arith.constant 0 : i32
    %c0_i32_0 = arith.constant 0 : i32
    return %arg0, %c0_i32 : i32, i32
  }
  func.func @transform_1(%arg0: i32) -> (i32, i32) {
    %c0_i32 = arith.constant 0 : i32
    %c0_i32_0 = arith.constant 0 : i32
    return %arg0, %c0_i32 : i32, i32
  }
  func.func @transform_2(%arg0: i32) -> (i32, i32) {
    %c0_i32 = arith.constant 0 : i32
    %c0_i32_0 = arith.constant 0 : i32
    return %arg0, %c0_i32 : i32, i32
  }
  func.func @transform_3(%arg0: i32) -> (i32, i32) {
    %c0_i32 = arith.constant 0 : i32
    %c0_i32_0 = arith.constant 0 : i32
    return %arg0, %c0_i32 : i32, i32
  }
  func.func @transform_4(%arg0: i32) -> (i32, i32) {
    %c0_i32 = arith.constant 0 : i32
    %c0_i32_0 = arith.constant 0 : i32
    %c0_i32_1 = arith.constant 0 : i32
    return %c0_i32, %c0_i32_0 : i32, i32
  }
  func.func @transform_5(%arg0: i32) -> (i32, i32, i32) {
    %c0_i32 = arith.constant 0 : i32
    %c0_i32_0 = arith.constant 0 : i32
    %c0_i32_1 = arith.constant 0 : i32
    %c0_i32_2 = arith.constant 0 : i32
    return %c0_i32, %c0_i32_0, %c0_i32_1 : i32, i32, i32
  }
  func.func @transform_6(%arg0: i32) -> (i32, i32, i32) {
    %c0_i32 = arith.constant 0 : i32
    %c0_i32_0 = arith.constant 0 : i32
    %c0_i32_1 = arith.constant 0 : i32
    %c0_i32_2 = arith.constant 0 : i32
    return %c0_i32, %c0_i32_0, %c0_i32_1 : i32, i32, i32
  }
  func.func @transform_7(%arg0: i32) -> (i32, i32, i32) {
    %c0_i32 = arith.constant 0 : i32
    %c0_i32_0 = arith.constant 0 : i32
    %c0_i32_1 = arith.constant 0 : i32
    %c0_i32_2 = arith.constant 0 : i32
    return %c0_i32, %c0_i32_0, %c0_i32_1 : i32, i32, i32
  }
  func.func @transform_8(%arg0: i32) -> (i32, i32, i32) {
    %c0_i32 = arith.constant 0 : i32
    %c0_i32_0 = arith.constant 0 : i32
    %c0_i32_1 = arith.constant 0 : i32
    %c0_i32_2 = arith.constant 0 : i32
    return %c0_i32, %c0_i32_0, %c0_i32_1 : i32, i32, i32
  }
  func.func @transform_9(%arg0: i32) -> (i32, i32, i32) {
    %c0_i32 = arith.constant 0 : i32
    %c0_i32_0 = arith.constant 0 : i32
    %c0_i32_1 = arith.constant 0 : i32
    %c0_i32_2 = arith.constant 0 : i32
    return %c0_i32, %c0_i32_0, %c0_i32_1 : i32, i32, i32
  }
  func.func @transform_10(%arg0: i32) -> (i32, i32, i32) {
    %c0_i32 = arith.constant 0 : i32
    %c0_i32_0 = arith.constant 0 : i32
    %c0_i32_1 = arith.constant 0 : i32
    %c0_i32_2 = arith.constant 0 : i32
    return %c0_i32, %c0_i32_0, %c0_i32_1 : i32, i32, i32
  }
  func.func @transform_11(%arg0: i32) -> (i32, i32) {
    %c0_i32 = arith.constant 0 : i32
    %c0_i32_0 = arith.constant 0 : i32
    %c0_i32_1 = arith.constant 0 : i32
    return %c0_i32, %c0_i32_0 : i32, i32
  }
  func.func @transform_12(%arg0: i32) -> (i32, i32) {
    %c0_i32 = arith.constant 0 : i32
    %c0_i32_0 = arith.constant 0 : i32
    %c0_i32_1 = arith.constant 0 : i32
    return %c0_i32, %c0_i32_0 : i32, i32
  }
  func.func @transform_13(%arg0: i32) -> (i32, i32) {
    %c0_i32 = arith.constant 0 : i32
    %c0_i32_0 = arith.constant 0 : i32
    %c0_i32_1 = arith.constant 0 : i32
    return %c0_i32, %c0_i32_0 : i32, i32
  }
  func.func @transform_14(%arg0: i32) -> (i32, i32) {
    %c0_i32 = arith.constant 0 : i32
    %c0_i32_0 = arith.constant 0 : i32
    %c0_i32_1 = arith.constant 0 : i32
    return %c0_i32, %c0_i32_0 : i32, i32
  }
  func.func @transform_15(%arg0: i32) -> (i32, i32) {
    %c0_i32 = arith.constant 0 : i32
    %c0_i32_0 = arith.constant 0 : i32
    return %arg0, %c0_i32 : i32, i32
  }
}

</mosaic_0001>

<llo_original>
// kernel: tpu_custom_call.1
$region0: #{tpu_custom_call.1}
  #allocation0 [shape = 'u32[]', space=smem, size = 0x4, offset = 0x4, fixed_abs, tag = 'smem constant byte address 0x4 - core index']
  #allocation1 [shape = 'u32[144,128]{1,0:T(1,128)}', space=vmem, size = 0x12000, scoped, tag = 'internal scratch']
  %s0 = inlined_call_operand.vmem [shape: f32[16,8], index: 0, kind: input, shape index: {}]
  %s1 = inlined_call_operand.vmem [shape: f32[16,3], index: 1, kind: input, shape index: {}]
  %s2 = inlined_call_operand.vmem [shape: f32[16,1], index: 2, kind: input, shape index: {}]
  %s3 = inlined_call_operand.vmem [shape: f32[128,1], index: 3, kind: input, shape index: {}]
  %s4 = inlined_call_operand.hbm [shape: f32[8,32], index: 4, kind: input, shape index: {}]
  %s5 = inlined_call_operand.vmem [shape: f32[4,32,96], index: 5, kind: input, shape index: {}]
  %s6 = inlined_call_operand.vmem [shape: f32[4,32,32], index: 6, kind: input, shape index: {}]
  %s7 = inlined_call_operand.hbm [shape: f32[4,32,32], index: 7, kind: input, shape index: {}]
  %s8 = inlined_call_operand.hbm [shape: f32[4,32,32], index: 8, kind: input, shape index: {}]
  %s9 = inlined_call_operand.hbm [shape: f32[2,32,64], index: 9, kind: input, shape index: {}]
  %s10 = inlined_call_operand.vmem [shape: f32[2,32,32], index: 10, kind: input, shape index: {}]
  %s11 = inlined_call_operand.hbm [shape: f32[32,32], index: 11, kind: input, shape index: {}]
  %s12 = inlined_call_operand.hbm [shape: f32[32,32], index: 12, kind: input, shape index: {}]
  %s13 = inlined_call_operand.vmem [shape: f32[32,5], index: 13, kind: input, shape index: {}]
  %s14 = inlined_call_operand.vmem [shape: f32[38,32], index: 14, kind: input, shape index: {}]
  %s15 = inlined_call_operand.vmem [shape: f32[16,8], index: 15, kind: output, shape index: {}]
  %s16 = sld [smem:[#allocation0]]
  $region94: #{tpu_custom_call.1} parent=0
    _
  %s18 = ssub.s32 1, %s16
  %s19 = scalar_select 0, %s18, %s16
  $region1: #{tpu_custom_call.1} parent=0
    #allocation2 [shape = 'u8[4096]{0}', space=vmem, size = 0x1000, scoped, tag = 'input window, operand 4, single buffered']
    #allocation3 [shape = 's32[1]{0}', space=sflag, size = 0x4, scoped, tag = 'scoped memory for tpu_custom_call.1']
    #allocation4 [shape = 'u8[65536]{0}', space=vmem, size = 0x10000, scoped, tag = 'input window, operand 7, single buffered']
    #allocation5 [shape = 's32[1]{0}', space=sflag, size = 0x4, scoped, tag = 'scoped memory for tpu_custom_call.1']
    #allocation6 [shape = 'u8[65536]{0}', space=vmem, size = 0x10000, scoped, tag = 'input window, operand 8, single buffered']
    #allocation7 [shape = 'u8[32768]{0}', space=vmem, size = 0x8000, scoped, tag = 'input window, operand 9, single buffered']
    #allocation8 [shape = 's32[1]{0}', space=sflag, size = 0x4, scoped, tag = 'scoped memory for tpu_custom_call.1']
    #allocation9 [shape = 'u8[16384]{0}', space=vmem, size = 0x4000, scoped, tag = 'input window, operand 11, single buffered']
    #allocation10 [shape = 'u8[16384]{0}', space=vmem, size = 0x4000, scoped, tag = 'input window, operand 12, single buffered']
    #allocation11 [shape = 's32[1]{0}', space=sflag, size = 0x4, scoped, tag = 'scoped memory for tpu_custom_call.1']
    %20 = vsyncpa [#allocation3], 0
    %21 = vsyncpa [#allocation5], 0
    %22 = vsyncpa [#allocation8], 0
    %23 = vsyncpa [#allocation11], 0
    // Predicated region
    $region2: #{tpu_custom_call.1} parent=1 // pred_check
      _
    $region3: #{tpu_custom_call.1} parent=1 // pred_check_branch
      %25 = sbr.rel (0) target = $region5
    $region4: #{tpu_custom_call.1} parent=1 // pred_region
      _
    $region5: #{tpu_custom_call.1} parent=1 // pred_fallthru
      _
    // Predicated region
    $region6: #{tpu_custom_call.1} parent=1 // pred_check
      _
    $region7: #{tpu_custom_call.1} parent=1 // pred_check_branch
      %27 = sbr.rel (0) target = $region9
    $region8: #{tpu_custom_call.1} parent=1 // pred_region
      _
    $region9: #{tpu_custom_call.1} parent=1 // pred_fallthru
      _
    // Predicated region
    $region10: #{tpu_custom_call.1} parent=1 // pred_check
      _
    $region11: #{tpu_custom_call.1} parent=1 // pred_check_branch
      %29 = sbr.rel (0) target = $region13
    $region12: #{tpu_custom_call.1} parent=1 // pred_region
      _
    $region13: #{tpu_custom_call.1} parent=1 // pred_fallthru
      _
    // Predicated region
    $region14: #{tpu_custom_call.1} parent=1 // pred_check
      _
    $region15: #{tpu_custom_call.1} parent=1 // pred_check_branch
      %31 = sbr.rel (0) target = $region17
    $region16: #{tpu_custom_call.1} parent=1 // pred_region
      _
    $region17: #{tpu_custom_call.1} parent=1 // pred_fallthru
      _
    // Predicated region
    $region18: #{tpu_custom_call.1} parent=1 // pred_check
      _
    $region19: #{tpu_custom_call.1} parent=1 // pred_check_branch
      %33 = sbr.rel (0) target = $region21
    $region20: #{tpu_custom_call.1} parent=1 // pred_region
      %s35 = ssub.s32 128, 128
      %36 = vsyncadd [#allocation3], %s35
      %s38 = sshll.u32 [#allocation2], 4
      %s39 = int_to_ptr.vmem [resolvable:$true] %s38
      %41 = dma.hbm_to_vmem [thread:$0]  %s4, 128, %s39, [#allocation3]
    $region21: #{tpu_custom_call.1} parent=1 // pred_fallthru
      _
    // Predicated region
    $region22: #{tpu_custom_call.1} parent=1 // pred_check
      _
    $region23: #{tpu_custom_call.1} parent=1 // pred_check_branch
      %43 = sbr.rel (0) target = $region25
    $region24: #{tpu_custom_call.1} parent=1 // pred_region
      _
    $region25: #{tpu_custom_call.1} parent=1 // pred_fallthru
      _
    // Predicated region
    $region26: #{tpu_custom_call.1} parent=1 // pred_check
      _
    $region27: #{tpu_custom_call.1} parent=1 // pred_check_branch
      %45 = sbr.rel (0) target = $region29
    $region28: #{tpu_custom_call.1} parent=1 // pred_region
      _
    $region29: #{tpu_custom_call.1} parent=1 // pred_fallthru
      _
    // Predicated region
    $region30: #{tpu_custom_call.1} parent=1 // pred_check
      _
    $region31: #{tpu_custom_call.1} parent=1 // pred_check_branch
      %47 = sbr.rel (0) target = $region33
    $region32: #{tpu_custom_call.1} parent=1 // pred_region
      %s49 = ssub.s32 2048, 2048
      %50 = vsyncadd [#allocation5], %s49
      %s51 = sshll.u32 [#allocation4], 4
      %s52 = int_to_ptr.vmem [resolvable:$true] %s51
      %57 = dma.hbm_to_vmem [thread:$0]  %s7, 2048, %s52, [#allocation5], 128, 128, 8
    $region33: #{tpu_custom_call.1} parent=1 // pred_fallthru
      _
    // Predicated region
    $region34: #{tpu_custom_call.1} parent=1 // pred_check
      _
    $region35: #{tpu_custom_call.1} parent=1 // pred_check_branch
      %59 = sbr.rel (0) target = $region37
    $region36: #{tpu_custom_call.1} parent=1 // pred_region
      %s61 = ssub.s32 2048, 2048
      %62 = vsyncadd [#allocation5], %s61
      %s63 = sshll.u32 [#allocation6], 4
      %s64 = int_to_ptr.vmem [resolvable:$true] %s63
      %69 = dma.hbm_to_vmem [thread:$0]  %s8, 2048, %s64, [#allocation5], 128, 128, 8
    $region37: #{tpu_custom_call.1} parent=1 // pred_fallthru
      _
    // Predicated region
    $region38: #{tpu_custom_call.1} parent=1 // pred_check
      _
    $region39: #{tpu_custom_call.1} parent=1 // pred_check_branch
      %71 = sbr.rel (0) target = $region41
    $region40: #{tpu_custom_call.1} parent=1 // pred_region
      %s73 = ssub.s32 1024, 1024
      %74 = vsyncadd [#allocation8], %s73
      %s75 = sshll.u32 [#allocation7], 4
      %s76 = int_to_ptr.vmem [resolvable:$true] %s75
      %81 = dma.hbm_to_vmem [thread:$0]  %s9, 1024, %s76, [#allocation8], 128, 128, 8
    $region41: #{tpu_custom_call.1} parent=1 // pred_fallthru
      _
    // Predicated region
    $region42: #{tpu_custom_call.1} parent=1 // pred_check
      _
    $region43: #{tpu_custom_call.1} parent=1 // pred_check_branch
      %83 = sbr.rel (0) target = $region45
    $region44: #{tpu_custom_call.1} parent=1 // pred_region
      _
    $region45: #{tpu_custom_call.1} parent=1 // pred_fallthru
      _
    // Predicated region
    $region46: #{tpu_custom_call.1} parent=1 // pred_check
      _
    $region47: #{tpu_custom_call.1} parent=1 // pred_check_branch
      %85 = sbr.rel (0) target = $region49
    $region48: #{tpu_custom_call.1} parent=1 // pred_region
      %s87 = ssub.s32 512, 512
      %88 = vsyncadd [#allocation8], %s87
      %s89 = sshll.u32 [#allocation9], 4
      %s90 = int_to_ptr.vmem [resolvable:$true] %s89
      %95 = dma.hbm_to_vmem [thread:$0]  %s11, 512, %s90, [#allocation8], 128, 128, 8
    $region49: #{tpu_custom_call.1} parent=1 // pred_fallthru
      _
    // Predicated region
    $region50: #{tpu_custom_call.1} parent=1 // pred_check
      _
    $region51: #{tpu_custom_call.1} parent=1 // pred_check_branch
      %97 = sbr.rel (0) target = $region53
    $region52: #{tpu_custom_call.1} parent=1 // pred_region
      %s99 = ssub.s32 512, 512
      %100 = vsyncadd [#allocation11], %s99
      %s101 = sshll.u32 [#allocation10], 4
      %s102 = int_to_ptr.vmem [resolvable:$true] %s101
      %107 = dma.hbm_to_vmem [thread:$0]  %s12, 512, %s102, [#allocation11], 128, 128, 8
    $region53: #{tpu_custom_call.1} parent=1 // pred_fallthru
      _
    // Predicated region
    $region54: #{tpu_custom_call.1} parent=1 // pred_check
      _
    $region55: #{tpu_custom_call.1} parent=1 // pred_check_branch
      %109 = sbr.rel (0) target = $region57
    $region56: #{tpu_custom_call.1} parent=1 // pred_region
      _
    $region57: #{tpu_custom_call.1} parent=1 // pred_fallthru
      _
    // Predicated region
    $region58: #{tpu_custom_call.1} parent=1 // pred_check
      _
    $region59: #{tpu_custom_call.1} parent=1 // pred_check_branch
      %111 = sbr.rel (0) target = $region61
    $region60: #{tpu_custom_call.1} parent=1 // pred_region
      _
    $region61: #{tpu_custom_call.1} parent=1 // pred_fallthru
      _
    // Predicated region
    $region62: #{tpu_custom_call.1} parent=1 // pred_check
      _
    $region63: #{tpu_custom_call.1} parent=1 // pred_check_branch
      %113 = sbr.rel (0) target = $region65
    $region64: #{tpu_custom_call.1} parent=1 // pred_region
      %114 = dma.done [#allocation3], 128
    $region65: #{tpu_custom_call.1} parent=1 // pred_fallthru
      _
    // Predicated region
    $region66: #{tpu_custom_call.1} parent=1 // pred_check
      _
    $region67: #{tpu_custom_call.1} parent=1 // pred_check_branch
      %116 = sbr.rel (0) target = $region69
    $region68: #{tpu_custom_call.1} parent=1 // pred_region
      %117 = dma.done [#allocation5], 2048
    $region69: #{tpu_custom_call.1} parent=1 // pred_fallthru
      _
    // Predicated region
    $region70: #{tpu_custom_call.1} parent=1 // pred_check
      _
    $region71: #{tpu_custom_call.1} parent=1 // pred_check_branch
      %119 = sbr.rel (0) target = $region73
    $region72: #{tpu_custom_call.1} parent=1 // pred_region
      %120 = dma.done [#allocation5], 2048
    $region73: #{tpu_custom_call.1} parent=1 // pred_fallthru
      _
    // Predicated region
    $region74: #{tpu_custom_call.1} parent=1 // pred_check
      _
    $region75: #{tpu_custom_call.1} parent=1 // pred_check_branch
      %122 = sbr.rel (0) target = $region77
    $region76: #{tpu_custom_call.1} parent=1 // pred_region
      %123 = dma.done [#allocation8], 1024
    $region77: #{tpu_custom_call.1} parent=1 // pred_fallthru
      _
    // Predicated region
    $region78: #{tpu_custom_call.1} parent=1 // pred_check
      _
    $region79: #{tpu_custom_call.1} parent=1 // pred_check_branch
      %125 = sbr.rel (0) target = $region81
    $region80: #{tpu_custom_call.1} parent=1 // pred_region
      %126 = dma.done [#allocation8], 512
    $region81: #{tpu_custom_call.1} parent=1 // pred_fallthru
      _
    // Predicated region
    $region82: #{tpu_custom_call.1} parent=1 // pred_check
      _
    $region83: #{tpu_custom_call.1} parent=1 // pred_check_branch
      %128 = sbr.rel (0) target = $region85
    $region84: #{tpu_custom_call.1} parent=1 // pred_region
      %129 = dma.done [#allocation11], 512
    $region85: #{tpu_custom_call.1} parent=1 // pred_fallthru
      _
    %v130 = vld [vmem:[%s0] sm:$0xff]
    %v131 = vld [vmem:[%s0 + $0x8] sm:$0xff]
    %v132 = vld [vmem:[%s1] sm:$0xff]
    %v133 = vld [vmem:[%s1 + $0x8] sm:$0xff]
    %v134 = vld [vmem:[%s2] sm:$0xff]
    %v135 = vld [vmem:[%s2 + $0x8] sm:$0xff]
    %v136 = vld [vmem:[%s3] sm:$0xff]
    %v137 = vld [vmem:[%s3 + $0x8] sm:$0xff]
    %v138 = vld [vmem:[%s3 + $0x10] sm:$0xff]
    %v139 = vld [vmem:[%s3 + $0x18] sm:$0xff]
    %v140 = vld [vmem:[%s3 + $0x20] sm:$0xff]
    %v141 = vld [vmem:[%s3 + $0x28] sm:$0xff]
    %v142 = vld [vmem:[%s3 + $0x30] sm:$0xff]
    %v143 = vld [vmem:[%s3 + $0x38] sm:$0xff]
    %v144 = vld [vmem:[%s3 + $0x40] sm:$0xff]
    %v145 = vld [vmem:[%s3 + $0x48] sm:$0xff]
    %v146 = vld [vmem:[%s3 + $0x50] sm:$0xff]
    %v147 = vld [vmem:[%s3 + $0x58] sm:$0xff]
    %v148 = vld [vmem:[%s3 + $0x60] sm:$0xff]
    %v149 = vld [vmem:[%s3 + $0x68] sm:$0xff]
    %v150 = vld [vmem:[%s3 + $0x70] sm:$0xff]
    %v151 = vld [vmem:[%s3 + $0x78] sm:$0xff]
    %v152 = vld [vmem:[%s14] sm:$0xff]
    %v153 = vld [vmem:[%s14 + $0x8] sm:$0xff]
    %v154 = vld [vmem:[%s14 + $0x10] sm:$0xff]
    %v155 = vld [vmem:[%s14 + $0x18] sm:$0xff]
    %v156 = vld [vmem:[%s14 + $0x20] sm:$0x3f]
    %v159 = vcombine.high %v132, %v132
    %v161 = vunpack.c.l.s4 1966171168
    %v162 = vunpack.c.0.s8 %v161
    %v163 = vlaneseq
    %v164 = vshrl.u32 %v163, 7
    %v165 = vsub.s32 %v162, %v164
    %v166 = vrot.slane %v132, %v165
    %v168 = vunpack.c.l.s4 1966171168
    %v169 = vunpack.c.0.s8 %v168
    %v170 = vlaneseq
    %v171 = vshrl.u32 %v170, 7
    %v172 = vsub.s32 %v169, %v171
    %v173 = vrot.slane %v159, %v172
    %v174 = vcombine.high %v166, %v166
    %v175 = vcombine.high %v173, %v173
    %v177 = vunpack.c.l.s4 1966171168
    %v178 = vunpack.c.0.s8 %v177
    %v179 = vlaneseq
    %v180 = vshrl.u32 %v179, 7
    %v181 = vsub.s32 %v178, %v180
    %v182 = vrot.slane %v166, %v181
    %v184 = vunpack.c.l.s4 1966171168
    %v185 = vunpack.c.0.s8 %v184
    %v186 = vlaneseq
    %v187 = vshrl.u32 %v186, 7
    %v188 = vsub.s32 %v185, %v187
    %v189 = vrot.slane %v173, %v188
    %v191 = vunpack.c.l.s4 1966171168
    %v192 = vunpack.c.0.s8 %v191
    %v193 = vlaneseq
    %v194 = vshrl.u32 %v193, 7
    %v195 = vsub.s32 %v192, %v194
    %v196 = vrot.slane %v174, %v195
    %v198 = vunpack.c.l.s4 1966171168
    %v199 = vunpack.c.0.s8 %v198
    %v200 = vlaneseq
    %v201 = vshrl.u32 %v200, 7
    %v202 = vsub.s32 %v199, %v201
    %v203 = vrot.slane %v175, %v202
    %v204 = vcombine.high %v182, %v182
    %v205 = vcombine.high %v189, %v189
    %v206 = vcombine.high %v196, %v196
    %v207 = vcombine.high %v203, %v203
    %v208 = vcombine.high %v133, %v133
    %v210 = vunpack.c.l.s4 1966171168
    %v211 = vunpack.c.0.s8 %v210
    %v212 = vlaneseq
    %v213 = vshrl.u32 %v212, 7
    %v214 = vsub.s32 %v211, %v213
    %v215 = vrot.slane %v133, %v214
    %v217 = vunpack.c.l.s4 1966171168
    %v218 = vunpack.c.0.s8 %v217
    %v219 = vlaneseq
    %v220 = vshrl.u32 %v219, 7
    %v221 = vsub.s32 %v218, %v220
    %v222 = vrot.slane %v208, %v221
    %v223 = vcombine.high %v215, %v215
    %v224 = vcombine.high %v222, %v222
    %v226 = vunpack.c.l.s4 1966171168
    %v227 = vunpack.c.0.s8 %v226
    %v228 = vlaneseq
    %v229 = vshrl.u32 %v228, 7
    %v230 = vsub.s32 %v227, %v229
    %v231 = vrot.slane %v215, %v230
    %v233 = vunpack.c.l.s4 1966171168
    %v234 = vunpack.c.0.s8 %v233
    %v235 = vlaneseq
    %v236 = vshrl.u32 %v235, 7
    %v237 = vsub.s32 %v234, %v236
    %v238 = vrot.slane %v222, %v237
    %v240 = vunpack.c.l.s4 1966171168
    %v241 = vunpack.c.0.s8 %v240
    %v242 = vlaneseq
    %v243 = vshrl.u32 %v242, 7
    %v244 = vsub.s32 %v241, %v243
    %v245 = vrot.slane %v223, %v244
    %v247 = vunpack.c.l.s4 1966171168
    %v248 = vunpack.c.0.s8 %v247
    %v249 = vlaneseq
    %v250 = vshrl.u32 %v249, 7
    %v251 = vsub.s32 %v248, %v250
    %v252 = vrot.slane %v224, %v251
    %v253 = vcombine.high %v231, %v231
    %v254 = vcombine.high %v238, %v238
    %v255 = vcombine.high %v245, %v245
    %v256 = vcombine.high %v252, %v252
    %v257 = vlaneseq
    %v258 = vshrl.u32 %v257, 7
    %v259 = vsub.s32 0, %v258
    %v260 = vrot.slane %v182, %v259
    %v261 = vlaneseq
    %v262 = vshrl.u32 %v261, 7
    %v263 = vsub.s32 0, %v262
    %v264 = vrot.slane %v196, %v263
    %v265 = vlaneseq
    %v266 = vshrl.u32 %v265, 7
    %v267 = vsub.s32 0, %v266
    %v268 = vrot.slane %v204, %v267
    %v269 = vlaneseq
    %v270 = vshrl.u32 %v269, 7
    %v271 = vsub.s32 0, %v270
    %v272 = vrot.slane %v206, %v271
    %v273 = vlaneseq
    %v274 = vshrl.u32 %v273, 7
    %v275 = vsub.s32 0, %v274
    %v276 = vrot.slane %v189, %v275
    %v277 = vlaneseq
    %v278 = vshrl.u32 %v277, 7
    %v279 = vsub.s32 0, %v278
    %v280 = vrot.slane %v203, %v279
    %v281 = vlaneseq
    %v282 = vshrl.u32 %v281, 7
    %v283 = vsub.s32 0, %v282
    %v284 = vrot.slane %v205, %v283
    %v285 = vlaneseq
    %v286 = vshrl.u32 %v285, 7
    %v287 = vsub.s32 0, %v286
    %v288 = vrot.slane %v207, %v287
    %v289 = vlaneseq
    %v290 = vshrl.u32 %v289, 7
    %v291 = vsub.s32 0, %v290
    %v292 = vrot.slane %v231, %v291
    %v293 = vlaneseq
    %v294 = vshrl.u32 %v293, 7
    %v295 = vsub.s32 0, %v294
    %v296 = vrot.slane %v245, %v295
    %v297 = vlaneseq
    %v298 = vshrl.u32 %v297, 7
    %v299 = vsub.s32 0, %v298
    %v300 = vrot.slane %v253, %v299
    %v301 = vlaneseq
    %v302 = vshrl.u32 %v301, 7
    %v303 = vsub.s32 0, %v302
    %v304 = vrot.slane %v255, %v303
    %v305 = vlaneseq
    %v306 = vshrl.u32 %v305, 7
    %v307 = vsub.s32 0, %v306
    %v308 = vrot.slane %v238, %v307
    %v309 = vlaneseq
    %v310 = vshrl.u32 %v309, 7
    %v311 = vsub.s32 0, %v310
    %v312 = vrot.slane %v252, %v311
    %v313 = vlaneseq
    %v314 = vshrl.u32 %v313, 7
    %v315 = vsub.s32 0, %v314
    %v316 = vrot.slane %v254, %v315
    %v317 = vlaneseq
    %v318 = vshrl.u32 %v317, 7
    %v319 = vsub.s32 0, %v318
    %v320 = vrot.slane %v256, %v319
    %v337 = vsub.f32 %v260, %v132
    %v338 = vsub.f32 %v264, %v132
    %v339 = vsub.f32 %v268, %v132
    %v340 = vsub.f32 %v272, %v132
    %v341 = vsub.f32 %v276, %v132
    %v342 = vsub.f32 %v280, %v132
    %v343 = vsub.f32 %v284, %v132
    %v344 = vsub.f32 %v288, %v132
    %v345 = vsub.f32 %v292, %v133
    %v346 = vsub.f32 %v296, %v133
    %v347 = vsub.f32 %v300, %v133
    %v348 = vsub.f32 %v304, %v133
    %v349 = vsub.f32 %v308, %v133
    %v350 = vsub.f32 %v312, %v133
    %v351 = vsub.f32 %v316, %v133
    %v352 = vsub.f32 %v320, %v133
    %v353 = vmul.f32 %v337, %v337
    %v354 = vmul.f32 %v338, %v338
    %v355 = vmul.f32 %v339, %v339
    %v356 = vmul.f32 %v340, %v340
    %v357 = vmul.f32 %v341, %v341
    %v358 = vmul.f32 %v342, %v342
    %v359 = vmul.f32 %v343, %v343
    %v360 = vmul.f32 %v344, %v344
    %v361 = vmul.f32 %v345, %v345
    %v362 = vmul.f32 %v346, %v346
    %v363 = vmul.f32 %v347, %v347
    %v364 = vmul.f32 %v348, %v348
    %v365 = vmul.f32 %v349, %v349
    %v366 = vmul.f32 %v350, %v350
    %v367 = vmul.f32 %v351, %v351
    %v368 = vmul.f32 %v352, %v352
    %vm369 = vcmask 23552
    %v370 = vsel %vm369, %v353, 0.0
    %371 = vadd.xlane.f32.xlu0 %v370
    %v372 = vpop.xlane.xlu0 %371
    %v373 = vsel %vm369, %v354, 0.0
    %374 = vadd.xlane.f32.xlu0 %v373
    %v375 = vpop.xlane.xlu0 %374
    %v376 = vsel %vm369, %v355, 0.0
    %377 = vadd.xlane.f32.xlu0 %v376
    %v378 = vpop.xlane.xlu0 %377
    %v379 = vsel %vm369, %v356, 0.0
    %380 = vadd.xlane.f32.xlu0 %v379
    %v381 = vpop.xlane.xlu0 %380
    %v382 = vsel %vm369, %v357, 0.0
    %383 = vadd.xlane.f32.xlu0 %v382
    %v384 = vpop.xlane.xlu0 %383
    %v385 = vsel %vm369, %v358, 0.0
    %386 = vadd.xlane.f32.xlu0 %v385
    %v387 = vpop.xlane.xlu0 %386
    %v388 = vsel %vm369, %v359, 0.0
    %389 = vadd.xlane.f32.xlu0 %v388
    %v390 = vpop.xlane.xlu0 %389
    %v391 = vsel %vm369, %v360, 0.0
    %392 = vadd.xlane.f32.xlu0 %v391
    %v393 = vpop.xlane.xlu0 %392
    %v394 = vsel %vm369, %v361, 0.0
    %395 = vadd.xlane.f32.xlu0 %v394
    %v396 = vpop.xlane.xlu0 %395
    %v397 = vsel %vm369, %v362, 0.0
    %398 = vadd.xlane.f32.xlu0 %v397
    %v399 = vpop.xlane.xlu0 %398
    %v400 = vsel %vm369, %v363, 0.0
    %401 = vadd.xlane.f32.xlu0 %v400
    %v402 = vpop.xlane.xlu0 %401
    %v403 = vsel %vm369, %v364, 0.0
    %404 = vadd.xlane.f32.xlu0 %v403
    %v405 = vpop.xlane.xlu0 %404
    %v406 = vsel %vm369, %v365, 0.0
    %407 = vadd.xlane.f32.xlu0 %v406
    %v408 = vpop.xlane.xlu0 %407
    %v409 = vsel %vm369, %v366, 0.0
    %410 = vadd.xlane.f32.xlu0 %v409
    %v411 = vpop.xlane.xlu0 %410
    %v412 = vsel %vm369, %v367, 0.0
    %413 = vadd.xlane.f32.xlu0 %v412
    %v414 = vpop.xlane.xlu0 %413
    %v415 = vsel %vm369, %v368, 0.0
    %416 = vadd.xlane.f32.xlu0 %v415
    %v417 = vpop.xlane.xlu0 %416
    %v418 = vld [vmem:[#allocation2] sm:$0xff]
    %v419 = vlaneseq
    %v420 = vshrl.u32 %v419, 7
    %v421 = vsub.s32 0, %v420
    %v422 = vrot.slane %v152, %v421
    %vm423 = vcmask 64512
    %v425 = vsel %vm423, %v130, 0
    %v428 = vsel %vm423, %v131, 0
    %430 = vmatprep.subr.mxu0 0.0
    %431 = vmatpush1.msra.mxu0 0.0
    %432 = vmatprep.subr.mxu0 0.0
    %433 = vmatpush1.msra.mxu0 0.0
    %434 = vmatprep.subr.mxu0 0.0
    %435 = vmatpush1.msra.mxu0 0.0
    %436 = vmatprep.subr.mxu0 0.0
    %437 = vmatpush1.msra.mxu0 0.0
    %438 = vmatprep.subr.mxu0 0.0
    %439 = vmatpush1.msra.mxu0 0.0
    %440 = vmatprep.subr.mxu0 0.0
    %441 = vmatpush1.msra.mxu0 0.0
    %442 = vmatprep.subr.mxu0 0.0
    %443 = vmatpush1.msra.mxu0 0.0
    %444 = vmatprep.subr.mxu0 0.0
    %445 = vmatpush1.msra.mxu0 0.0
    %446 = vmatprep.subr.mxu0 0.0
    %447 = vmatpush1.msra.mxu0 0.0
    %448 = vmatprep.subr.mxu0 0.0
    %449 = vmatpush1.msra.mxu0 0.0
    %450 = vmatprep.subr.mxu0 0.0
    %451 = vmatpush1.msra.mxu0 0.0
    %452 = vmatprep.subr.mxu0 0.0
    %453 = vmatpush1.msra.mxu0 0.0
    %454 = vmatprep.subr.mxu0 0.0
    %455 = vmatpush1.msra.mxu0 0.0
    %456 = vmatprep.subr.mxu0 0.0
    %457 = vmatpush1.msra.mxu0 0.0
    %458 = vmatprep.subr.mxu0 0.0
    %459 = vmatpush1.msra.mxu0 0.0
    %460 = vmatprep.subr.mxu0 0.0
    %461 = vmatpush1.msra.mxu0 %v418
    %462 = vmatprep.subr.mxu0 0.0
    %463 = vmatpush2.msra.mxu0 0.0
    %464 = vmatprep.subr.mxu0 0.0
    %465 = vmatpush2.msra.mxu0 0.0
    %466 = vmatprep.subr.mxu0 0.0
    %467 = vmatpush2.msra.mxu0 0.0
    %468 = vmatprep.subr.mxu0 0.0
    %469 = vmatpush2.msra.mxu0 0.0
    %470 = vmatprep.subr.mxu0 0.0
    %471 = vmatpush2.msra.mxu0 0.0
    %472 = vmatprep.subr.mxu0 0.0
    %473 = vmatpush2.msra.mxu0 0.0
    %474 = vmatprep.subr.mxu0 0.0
    %475 = vmatpush2.msra.mxu0 0.0
    %476 = vmatprep.subr.mxu0 0.0
    %477 = vmatpush2.msra.mxu0 0.0
    %478 = vmatprep.subr.mxu0 0.0
    %479 = vmatpush2.msra.mxu0 0.0
    %480 = vmatprep.subr.mxu0 0.0
    %481 = vmatpush2.msra.mxu0 0.0
    %482 = vmatprep.subr.mxu0 0.0
    %483 = vmatpush2.msra.mxu0 0.0
    %484 = vmatprep.subr.mxu0 0.0
    %485 = vmatpush2.msra.mxu0 0.0
    %486 = vmatprep.subr.mxu0 0.0
    %487 = vmatpush2.msra.mxu0 0.0
    %488 = vmatprep.subr.mxu0 0.0
    %489 = vmatpush2.msra.mxu0 0.0
    %490 = vmatprep.subr.mxu0 0.0
    %491 = vmatpush2.msra.mxu0 0.0
    %492 = vmatprep.subr.mxu0 0.0
    %493 = vmatpush2.msra.mxu0 0.0
    %494 = vmatprep.mubr.f32.mxu0 0.0
    %495 = vmatmul.mubr.f32.gmra.mxu0 %v425
    %v496 = vpop.f32.mrf.mxu0
    %v497 = vadd.f32 %v422, %v496
    %v498 = vpop.f32.mrf.mxu0
    %499 = vmatprep.mubr.f32.mxu0 0.0
    %500 = vmatmul.mubr.f32.gmra.mxu0 %v428
    %v501 = vpop.f32.mrf.mxu0
    %v502 = vadd.f32 %v422, %v501
    %v503 = vpop.f32.mrf.mxu0
    %504 = vdwg.mxu0
    %v505 = vadd.f32 %v372, 1e-08
    %v506 = vadd.f32 %v375, 1e-08
    %v507 = vadd.f32 %v378, 1e-08
    %v508 = vadd.f32 %v381, 1e-08
    %v509 = vadd.f32 %v384, 1e-08
    %v510 = vadd.f32 %v387, 1e-08
    %v511 = vadd.f32 %v390, 1e-08
    %v512 = vadd.f32 %v393, 1e-08
    %v513 = vadd.f32 %v396, 1e-08
    %v514 = vadd.f32 %v399, 1e-08
    %v515 = vadd.f32 %v402, 1e-08
    %v516 = vadd.f32 %v405, 1e-08
    %v517 = vadd.f32 %v408, 1e-08
    %v518 = vadd.f32 %v411, 1e-08
    %v519 = vadd.f32 %v414, 1e-08
    %v520 = vadd.f32 %v417, 1e-08
    %v521 = vrsqrt.pop %v505
    %v522 = vmul.f32 %v505, %v521
    %vm523 = vcmp.eq.f32.partialorder %v505, inf
    %v524 = vsel %vm523, %v505, %v522
    %vm525 = vcmp.eq.f32.partialorder %v505, 0.0
    %v526 = vand.u32 %v505, 2147483648
    %v527 = vsel %vm525, %v526, %v524
    %v528 = vrsqrt.pop %v506
    %v529 = vmul.f32 %v506, %v528
    %vm530 = vcmp.eq.f32.partialorder %v506, inf
    %v531 = vsel %vm530, %v506, %v529
    %vm532 = vcmp.eq.f32.partialorder %v506, 0.0
    %v533 = vand.u32 %v506, 2147483648
    %v534 = vsel %vm532, %v533, %v531
    %v535 = vrsqrt.pop %v507
    %v536 = vmul.f32 %v507, %v535
    %vm537 = vcmp.eq.f32.partialorder %v507, inf
    %v538 = vsel %vm537, %v507, %v536
    %vm539 = vcmp.eq.f32.partialorder %v507, 0.0
    %v540 = vand.u32 %v507, 2147483648
    %v541 = vsel %vm539, %v540, %v538
    %v542 = vrsqrt.pop %v508
    %v543 = vmul.f32 %v508, %v542
    %vm544 = vcmp.eq.f32.partialorder %v508, inf
    %v545 = vsel %vm544, %v508, %v543
    %vm546 = vcmp.eq.f32.partialorder %v508, 0.0
    %v547 = vand.u32 %v508, 2147483648
    %v548 = vsel %vm546, %v547, %v545
    %v549 = vrsqrt.pop %v509
    %v550 = vmul.f32 %v509, %v549
    %vm551 = vcmp.eq.f32.partialorder %v509, inf
    %v552 = vsel %vm551, %v509, %v550
    %vm553 = vcmp.eq.f32.partialorder %v509, 0.0
    %v554 = vand.u32 %v509, 2147483648
    %v555 = vsel %vm553, %v554, %v552
    %v556 = vrsqrt.pop %v510
    %v557 = vmul.f32 %v510, %v556
    %vm558 = vcmp.eq.f32.partialorder %v510, inf
    %v559 = vsel %vm558, %v510, %v557
    %vm560 = vcmp.eq.f32.partialorder %v510, 0.0
    %v561 = vand.u32 %v510, 2147483648
    %v562 = vsel %vm560, %v561, %v559
    %v563 = vrsqrt.pop %v511
    %v564 = vmul.f32 %v511, %v563
    %vm565 = vcmp.eq.f32.partialorder %v511, inf
    %v566 = vsel %vm565, %v511, %v564
    %vm567 = vcmp.eq.f32.partialorder %v511, 0.0
    %v568 = vand.u32 %v511, 2147483648
    %v569 = vsel %vm567, %v568, %v566
    %v570 = vrsqrt.pop %v512
    %v571 = vmul.f32 %v512, %v570
    %vm572 = vcmp.eq.f32.partialorder %v512, inf
    %v573 = vsel %vm572, %v512, %v571
    %vm574 = vcmp.eq.f32.partialorder %v512, 0.0
    %v575 = vand.u32 %v512, 2147483648
    %v576 = vsel %vm574, %v575, %v573
    %v577 = vrsqrt.pop %v513
    %v578 = vmul.f32 %v513, %v577
    %vm579 = vcmp.eq.f32.partialorder %v513, inf
    %v580 = vsel %vm579, %v513, %v578
    %vm581 = vcmp.eq.f32.partialorder %v513, 0.0
    %v582 = vand.u32 %v513, 2147483648
    %v583 = vsel %vm581, %v582, %v580
    %v584 = vrsqrt.pop %v514
    %v585 = vmul.f32 %v514, %v584
    %vm586 = vcmp.eq.f32.partialorder %v514, inf
    %v587 = vsel %vm586, %v514, %v585
    %vm588 = vcmp.eq.f32.partialorder %v514, 0.0
    %v589 = vand.u32 %v514, 2147483648
    %v590 = vsel %vm588, %v589, %v587
    %v591 = vrsqrt.pop %v515
    %v592 = vmul.f32 %v515, %v591
    %vm593 = vcmp.eq.f32.partialorder %v515, inf
    %v594 = vsel %vm593, %v515, %v592
    %vm595 = vcmp.eq.f32.partialorder %v515, 0.0
    %v596 = vand.u32 %v515, 2147483648
    %v597 = vsel %vm595, %v596, %v594
    %v598 = vrsqrt.pop %v516
    %v599 = vmul.f32 %v516, %v598
    %vm600 = vcmp.eq.f32.partialorder %v516, inf
    %v601 = vsel %vm600, %v516, %v599
    %vm602 = vcmp.eq.f32.partialorder %v516, 0.0
    %v603 = vand.u32 %v516, 2147483648
    %v604 = vsel %vm602, %v603, %v601
    %v605 = vrsqrt.pop %v517
    %v606 = vmul.f32 %v517, %v605
    %vm607 = vcmp.eq.f32.partialorder %v517, inf
    %v608 = vsel %vm607, %v517, %v606
    %vm609 = vcmp.eq.f32.partialorder %v517, 0.0
    %v610 = vand.u32 %v517, 2147483648
    %v611 = vsel %vm609, %v610, %v608
    %v612 = vrsqrt.pop %v518
    %v613 = vmul.f32 %v518, %v612
    %vm614 = vcmp.eq.f32.partialorder %v518, inf
    %v615 = vsel %vm614, %v518, %v613
    %vm616 = vcmp.eq.f32.partialorder %v518, 0.0
    %v617 = vand.u32 %v518, 2147483648
    %v618 = vsel %vm616, %v617, %v615
    %v619 = vrsqrt.pop %v519
    %v620 = vmul.f32 %v519, %v619
    %vm621 = vcmp.eq.f32.partialorder %v519, inf
    %v622 = vsel %vm621, %v519, %v620
    %vm623 = vcmp.eq.f32.partialorder %v519, 0.0
    %v624 = vand.u32 %v519, 2147483648
    %v625 = vsel %vm623, %v624, %v622
    %v626 = vrsqrt.pop %v520
    %v627 = vmul.f32 %v520, %v626
    %vm628 = vcmp.eq.f32.partialorder %v520, inf
    %v629 = vsel %vm628, %v520, %v627
    %vm630 = vcmp.eq.f32.partialorder %v520, 0.0
    %v631 = vand.u32 %v520, 2147483648
    %v632 = vsel %vm630, %v631, %v629
    %v633 = vadd.f32 %v527, 0.0
    %v634 = vadd.f32 %v534, 0.0
    %v635 = vadd.f32 %v541, 0.0
    %v636 = vadd.f32 %v548, 0.0
    %v637 = vadd.f32 %v555, 0.0
    %v638 = vadd.f32 %v562, 0.0
    %v639 = vadd.f32 %v569, 0.0
    %v640 = vadd.f32 %v576, 0.0
    %v641 = vadd.f32 %v583, 0.0
    %v642 = vadd.f32 %v590, 0.0
    %v643 = vadd.f32 %v597, 0.0
    %v644 = vadd.f32 %v604, 0.0
    %v645 = vadd.f32 %v611, 0.0
    %v646 = vadd.f32 %v618, 0.0
    %v647 = vadd.f32 %v625, 0.0
    %v648 = vadd.f32 %v632, 0.0
    %v649 = vrcp.pop %v633
    %v650 = vmul.f32 %v337, %v649
    %v651 = vrcp.pop %v634
    %v652 = vmul.f32 %v338, %v651
    %v653 = vrcp.pop %v635
    %v654 = vmul.f32 %v339, %v653
    %v655 = vrcp.pop %v636
    %v656 = vmul.f32 %v340, %v655
    %v657 = vrcp.pop %v637
    %v658 = vmul.f32 %v341, %v657
    %v659 = vrcp.pop %v638
    %v660 = vmul.f32 %v342, %v659
    %v661 = vrcp.pop %v639
    %v662 = vmul.f32 %v343, %v661
    %v663 = vrcp.pop %v640
    %v664 = vmul.f32 %v344, %v663
    %v665 = vrcp.pop %v641
    %v666 = vmul.f32 %v345, %v665
    %v667 = vrcp.pop %v642
    %v668 = vmul.f32 %v346, %v667
    %v669 = vrcp.pop %v643
    %v670 = vmul.f32 %v347, %v669
    %v671 = vrcp.pop %v644
    %v672 = vmul.f32 %v348, %v671
    %v673 = vrcp.pop %v645
    %v674 = vmul.f32 %v349, %v673
    %v675 = vrcp.pop %v646
    %v676 = vmul.f32 %v350, %v675
    %v677 = vrcp.pop %v647
    %v678 = vmul.f32 %v351, %v677
    %v679 = vrcp.pop %v648
    %v680 = vmul.f32 %v352, %v679
    %v681 = vld [vmem:[%s5] sm:$0xff]
    %v682 = vld [vmem:[%s5 + $0x8] sm:$0xff]
    %v683 = vld [vmem:[%s5 + $0x10] sm:$0xff]
    %v684 = vld [vmem:[%s5 + $0x18] sm:$0xff]
    %vm685 = vcmask 261120
    %v687 = vsel %vm685, %v497, 0
    %v690 = vsel %vm685, %v502, 0
    %692 = vmatprep.subr.mxu0 0.0
    %693 = vmatpush1.msra.mxu0 0.0
    %694 = vmatprep.subr.mxu0 0.0
    %695 = vmatpush1.msra.mxu0 0.0
    %696 = vmatprep.subr.mxu0 0.0
    %697 = vmatpush1.msra.mxu0 0.0
    %698 = vmatprep.subr.mxu0 0.0
    %699 = vmatpush1.msra.mxu0 0.0
    %700 = vmatprep.subr.mxu0 0.0
    %701 = vmatpush1.msra.mxu0 0.0
    %702 = vmatprep.subr.mxu0 0.0
    %703 = vmatpush1.msra.mxu0 0.0
    %704 = vmatprep.subr.mxu0 0.0
    %705 = vmatpush1.msra.mxu0 0.0
    %706 = vmatprep.subr.mxu0 0.0
    %707 = vmatpush1.msra.mxu0 0.0
    %708 = vmatprep.subr.mxu0 0.0
    %709 = vmatpush1.msra.mxu0 0.0
    %710 = vmatprep.subr.mxu0 0.0
    %711 = vmatpush1.msra.mxu0 0.0
    %712 = vmatprep.subr.mxu0 0.0
    %713 = vmatpush1.msra.mxu0 0.0
    %714 = vmatprep.subr.mxu0 0.0
    %715 = vmatpush1.msra.mxu0 0.0
    %716 = vmatprep.subr.mxu0 0.0
    %717 = vmatpush1.msra.mxu0 %v684
    %718 = vmatprep.subr.mxu0 0.0
    %719 = vmatpush1.msra.mxu0 %v683
    %720 = vmatprep.subr.mxu0 0.0
    %721 = vmatpush1.msra.mxu0 %v682
    %722 = vmatprep.subr.mxu0 0.0
    %723 = vmatpush1.msra.mxu0 %v681
    %724 = vmatprep.subr.mxu0 0.0
    %725 = vmatpush2.msra.mxu0 0.0
    %726 = vmatprep.subr.mxu0 0.0
    %727 = vmatpush2.msra.mxu0 0.0
    %728 = vmatprep.subr.mxu0 0.0
    %729 = vmatpush2.msra.mxu0 0.0
    %730 = vmatprep.subr.mxu0 0.0
    %731 = vmatpush2.msra.mxu0 0.0
    %732 = vmatprep.subr.mxu0 0.0
    %733 = vmatpush2.msra.mxu0 0.0
    %734 = vmatprep.subr.mxu0 0.0
    %735 = vmatpush2.msra.mxu0 0.0
    %736 = vmatprep.subr.mxu0 0.0
    %737 = vmatpush2.msra.mxu0 0.0
    %738 = vmatprep.subr.mxu0 0.0
    %739 = vmatpush2.msra.mxu0 0.0
    %740 = vmatprep.subr.mxu0 0.0
    %741 = vmatpush2.msra.mxu0 0.0
    %742 = vmatprep.subr.mxu0 0.0
    %743 = vmatpush2.msra.mxu0 0.0
    %744 = vmatprep.subr.mxu0 0.0
    %745 = vmatpush2.msra.mxu0 0.0
    %746 = vmatprep.subr.mxu0 0.0
    %747 = vmatpush2.msra.mxu0 0.0
    %748 = vmatprep.subr.mxu0 0.0
    %749 = vmatpush2.msra.mxu0 0.0
    %750 = vmatprep.subr.mxu0 0.0
    %751 = vmatpush2.msra.mxu0 0.0
    %752 = vmatprep.subr.mxu0 0.0
    %753 = vmatpush2.msra.mxu0 0.0
    %754 = vmatprep.subr.mxu0 0.0
    %755 = vmatpush2.msra.mxu0 0.0
    %756 = vmatprep.mubr.f32.mxu0 0.0
    %757 = vmatmul.mubr.f32.gmra.mxu0 %v687
    %v758 = vpop.f32.mrf.mxu0
    %v759 = vadd.f32 0.0, %v758
    %v760 = vpop.f32.mrf.mxu0
    %761 = vmatprep.mubr.f32.mxu0 0.0
    %762 = vmatmul.mubr.f32.gmra.mxu0 %v690
    %v763 = vpop.f32.mrf.mxu0
    %v764 = vadd.f32 0.0, %v763
    %v765 = vpop.f32.mrf.mxu0
    %766 = vdwg.mxu0
    %v769 = vcombine.high %v759, %v759
    %v771 = vunpack.c.l.s4 1966171168
    %v772 = vunpack.c.0.s8 %v771
    %v773 = vlaneseq
    %v774 = vshrl.u32 %v773, 7
    %v775 = vsub.s32 %v772, %v774
    %v776 = vrot.slane %v759, %v775
    %v778 = vunpack.c.l.s4 1966171168
    %v779 = vunpack.c.0.s8 %v778
    %v780 = vlaneseq
    %v781 = vshrl.u32 %v780, 7
    %v782 = vsub.s32 %v779, %v781
    %v783 = vrot.slane %v769, %v782
    %v784 = vcombine.high %v776, %v776
    %v785 = vcombine.high %v783, %v783
    %v787 = vunpack.c.l.s4 1966171168
    %v788 = vunpack.c.0.s8 %v787
    %v789 = vlaneseq
    %v790 = vshrl.u32 %v789, 7
    %v791 = vsub.s32 %v788, %v790
    %v792 = vrot.slane %v776, %v791
    %v794 = vunpack.c.l.s4 1966171168
    %v795 = vunpack.c.0.s8 %v794
    %v796 = vlaneseq
    %v797 = vshrl.u32 %v796, 7
    %v798 = vsub.s32 %v795, %v797
    %v799 = vrot.slane %v783, %v798
    %v801 = vunpack.c.l.s4 1966171168
    %v802 = vunpack.c.0.s8 %v801
    %v803 = vlaneseq
    %v804 = vshrl.u32 %v803, 7
    %v805 = vsub.s32 %v802, %v804
    %v806 = vrot.slane %v784, %v805
    %v808 = vunpack.c.l.s4 1966171168
    %v809 = vunpack.c.0.s8 %v808
    %v810 = vlaneseq
    %v811 = vshrl.u32 %v810, 7
    %v812 = vsub.s32 %v809, %v811
    %v813 = vrot.slane %v785, %v812
    %v814 = vcombine.high %v792, %v792
    %v815 = vcombine.high %v799, %v799
    %v816 = vcombine.high %v806, %v806
    %v817 = vcombine.high %v813, %v813
    %v818 = vcombine.high %v764, %v764
    %v820 = vunpack.c.l.s4 1966171168
    %v821 = vunpack.c.0.s8 %v820
    %v822 = vlaneseq
    %v823 = vshrl.u32 %v822, 7
    %v824 = vsub.s32 %v821, %v823
    %v825 = vrot.slane %v764, %v824
    %v827 = vunpack.c.l.s4 1966171168
    %v828 = vunpack.c.0.s8 %v827
    %v829 = vlaneseq
    %v830 = vshrl.u32 %v829, 7
    %v831 = vsub.s32 %v828, %v830
    %v832 = vrot.slane %v818, %v831
    %v833 = vcombine.high %v825, %v825
    %v834 = vcombine.high %v832, %v832
    %v836 = vunpack.c.l.s4 1966171168
    %v837 = vunpack.c.0.s8 %v836
    %v838 = vlaneseq
    %v839 = vshrl.u32 %v838, 7
    %v840 = vsub.s32 %v837, %v839
    %v841 = vrot.slane %v825, %v840
    %v843 = vunpack.c.l.s4 1966171168
    %v844 = vunpack.c.0.s8 %v843
    %v845 = vlaneseq
    %v846 = vshrl.u32 %v845, 7
    %v847 = vsub.s32 %v844, %v846
    %v848 = vrot.slane %v832, %v847
    %v850 = vunpack.c.l.s4 1966171168
    %v851 = vunpack.c.0.s8 %v850
    %v852 = vlaneseq
    %v853 = vshrl.u32 %v852, 7
    %v854 = vsub.s32 %v851, %v853
    %v855 = vrot.slane %v833, %v854
    %v857 = vunpack.c.l.s4 1966171168
    %v858 = vunpack.c.0.s8 %v857
    %v859 = vlaneseq
    %v860 = vshrl.u32 %v859, 7
    %v861 = vsub.s32 %v858, %v860
    %v862 = vrot.slane %v834, %v861
    %v863 = vcombine.high %v841, %v841
    %v864 = vcombine.high %v848, %v848
    %v865 = vcombine.high %v855, %v855
    %v866 = vcombine.high %v862, %v862
    %v867 = vlaneseq
    %v868 = vshrl.u32 %v867, 7
    %v869 = vsub.s32 0, %v868
    %v870 = vrot.slane %v792, %v869
    %v871 = vlaneseq
    %v872 = vshrl.u32 %v871, 7
    %v873 = vsub.s32 0, %v872
    %v874 = vrot.slane %v806, %v873
    %v875 = vlaneseq
    %v876 = vshrl.u32 %v875, 7
    %v877 = vsub.s32 0, %v876
    %v878 = vrot.slane %v814, %v877
    %v879 = vlaneseq
    %v880 = vshrl.u32 %v879, 7
    %v881 = vsub.s32 0, %v880
    %v882 = vrot.slane %v816, %v881
    %v883 = vlaneseq
    %v884 = vshrl.u32 %v883, 7
    %v885 = vsub.s32 0, %v884
    %v886 = vrot.slane %v799, %v885
    %v887 = vlaneseq
    %v888 = vshrl.u32 %v887, 7
    %v889 = vsub.s32 0, %v888
    %v890 = vrot.slane %v813, %v889
    %v891 = vlaneseq
    %v892 = vshrl.u32 %v891, 7
    %v893 = vsub.s32 0, %v892
    %v894 = vrot.slane %v815, %v893
    %v895 = vlaneseq
    %v896 = vshrl.u32 %v895, 7
    %v897 = vsub.s32 0, %v896
    %v898 = vrot.slane %v817, %v897
    %v899 = vlaneseq
    %v900 = vshrl.u32 %v899, 7
    %v901 = vsub.s32 0, %v900
    %v902 = vrot.slane %v841, %v901
    %v903 = vlaneseq
    %v904 = vshrl.u32 %v903, 7
    %v905 = vsub.s32 0, %v904
    %v906 = vrot.slane %v855, %v905
    %v907 = vlaneseq
    %v908 = vshrl.u32 %v907, 7
    %v909 = vsub.s32 0, %v908
    %v910 = vrot.slane %v863, %v909
    %v911 = vlaneseq
    %v912 = vshrl.u32 %v911, 7
    %v913 = vsub.s32 0, %v912
    %v914 = vrot.slane %v865, %v913
    %v915 = vlaneseq
    %v916 = vshrl.u32 %v915, 7
    %v917 = vsub.s32 0, %v916
    %v918 = vrot.slane %v848, %v917
    %v919 = vlaneseq
    %v920 = vshrl.u32 %v919, 7
    %v921 = vsub.s32 0, %v920
    %v922 = vrot.slane %v862, %v921
    %v923 = vlaneseq
    %v924 = vshrl.u32 %v923, 7
    %v925 = vsub.s32 0, %v924
    %v926 = vrot.slane %v864, %v925
    %v927 = vlaneseq
    %v928 = vshrl.u32 %v927, 7
    %v929 = vsub.s32 0, %v928
    %v930 = vrot.slane %v866, %v929
    %947 = vrot.lane.b32.xlu0 %v759, 96
    %v948 = vpop.permute.xlu0 %947
    %949 = vrot.lane.b32.xlu0 %v764, 96
    %v950 = vpop.permute.xlu0 %949
    %v953 = vadd.f32 %v870, %v948
    %v954 = vadd.f32 %v874, %v948
    %v955 = vadd.f32 %v878, %v948
    %v956 = vadd.f32 %v882, %v948
    %v957 = vadd.f32 %v886, %v948
    %v958 = vadd.f32 %v890, %v948
    %v959 = vadd.f32 %v894, %v948
    %v960 = vadd.f32 %v898, %v948
    %v961 = vadd.f32 %v902, %v950
    %v962 = vadd.f32 %v906, %v950
    %v963 = vadd.f32 %v910, %v950
    %v964 = vadd.f32 %v914, %v950
    %v965 = vadd.f32 %v918, %v950
    %v966 = vadd.f32 %v922, %v950
    %v967 = vadd.f32 %v926, %v950
    %v968 = vadd.f32 %v930, %v950
    %v969 = vlaneseq
    %v970 = vshrl.u32 %v969, 7
    %v971 = vsub.s32 4, %v970
    %v972 = vrot.slane %v152, %v971
    %v973 = vmul.f32 %v372, %v972
    %v974 = vmul.f32 %v375, %v972
    %v975 = vmul.f32 %v378, %v972
    %v976 = vmul.f32 %v381, %v972
    %v977 = vmul.f32 %v384, %v972
    %v978 = vmul.f32 %v387, %v972
    %v979 = vmul.f32 %v390, %v972
    %v980 = vmul.f32 %v393, %v972
    %v981 = vmul.f32 %v396, %v972
    %v982 = vmul.f32 %v399, %v972
    %v983 = vmul.f32 %v402, %v972
    %v984 = vmul.f32 %v405, %v972
    %v985 = vmul.f32 %v408, %v972
    %v986 = vmul.f32 %v411, %v972
    %v987 = vmul.f32 %v414, %v972
    %v988 = vmul.f32 %v417, %v972
    %v989 = vadd.f32 %v953, %v973
    %v990 = vadd.f32 %v954, %v974
    %v991 = vadd.f32 %v955, %v975
    %v992 = vadd.f32 %v956, %v976
    %v993 = vadd.f32 %v957, %v977
    %v994 = vadd.f32 %v958, %v978
    %v995 = vadd.f32 %v959, %v979
    %v996 = vadd.f32 %v960, %v980
    %v997 = vadd.f32 %v961, %v981
    %v998 = vadd.f32 %v962, %v982
    %v999 = vadd.f32 %v963, %v983
    %v1000 = vadd.f32 %v964, %v984
    %v1001 = vadd.f32 %v965, %v985
    %v1002 = vadd.f32 %v966, %v986
    %v1003 = vadd.f32 %v967, %v987
    %v1004 = vadd.f32 %v968, %v988
    %v1005 = vlaneseq
    %v1006 = vshrl.u32 %v1005, 7
    %v1007 = vsub.s32 5, %v1006
    %v1008 = vrot.slane %v152, %v1007
    %v1009 = vmul.f32 %v372, %v1008
    %v1010 = vmul.f32 %v375, %v1008
    %v1011 = vmul.f32 %v378, %v1008
    %v1012 = vmul.f32 %v381, %v1008
    %v1013 = vmul.f32 %v384, %v1008
    %v1014 = vmul.f32 %v387, %v1008
    %v1015 = vmul.f32 %v390, %v1008
    %v1016 = vmul.f32 %v393, %v1008
    %v1017 = vmul.f32 %v396, %v1008
    %v1018 = vmul.f32 %v399, %v1008
    %v1019 = vmul.f32 %v402, %v1008
    %v1020 = vmul.f32 %v405, %v1008
    %v1021 = vmul.f32 %v408, %v1008
    %v1022 = vmul.f32 %v411, %v1008
    %v1023 = vmul.f32 %v414, %v1008
    %v1024 = vmul.f32 %v417, %v1008
    %v1025 = vadd.f32 %v989, %v1009
    %v1026 = vadd.f32 %v990, %v1010
    %v1027 = vadd.f32 %v991, %v1011
    %v1028 = vadd.f32 %v992, %v1012
    %v1029 = vadd.f32 %v993, %v1013
    %v1030 = vadd.f32 %v994, %v1014
    %v1031 = vadd.f32 %v995, %v1015
    %v1032 = vadd.f32 %v996, %v1016
    %v1033 = vadd.f32 %v997, %v1017
    %v1034 = vadd.f32 %v998, %v1018
    %v1035 = vadd.f32 %v999, %v1019
    %v1036 = vadd.f32 %v1000, %v1020
    %v1037 = vadd.f32 %v1001, %v1021
    %v1038 = vadd.f32 %v1002, %v1022
    %v1039 = vadd.f32 %v1003, %v1023
    %v1040 = vadd.f32 %v1004, %v1024
    %v1041 = vlaneseq
    %v1042 = vshrl.u32 %v1041, 7
    %v1043 = vsub.s32 6, %v1042
    %v1044 = vrot.slane %v152, %v1043
    %v1045 = vadd.f32 %v1025, %v1044
    %v1046 = vadd.f32 %v1026, %v1044
    %v1047 = vadd.f32 %v1027, %v1044
    %v1048 = vadd.f32 %v1028, %v1044
    %v1049 = vadd.f32 %v1029, %v1044
    %v1050 = vadd.f32 %v1030, %v1044
    %v1051 = vadd.f32 %v1031, %v1044
    %v1052 = vadd.f32 %v1032, %v1044
    %v1053 = vadd.f32 %v1033, %v1044
    %v1054 = vadd.f32 %v1034, %v1044
    %v1055 = vadd.f32 %v1035, %v1044
    %v1056 = vadd.f32 %v1036, %v1044
    %v1057 = vadd.f32 %v1037, %v1044
    %v1058 = vadd.f32 %v1038, %v1044
    %v1059 = vadd.f32 %v1039, %v1044
    %v1060 = vadd.f32 %v1040, %v1044
    %v1061 = vmul.f32 %v1045, 0.5
    %v1062 = vmul.f32 %v1046, 0.5
    %v1063 = vmul.f32 %v1047, 0.5
    %v1064 = vmul.f32 %v1048, 0.5
    %v1065 = vmul.f32 %v1049, 0.5
    %v1066 = vmul.f32 %v1050, 0.5
    %v1067 = vmul.f32 %v1051, 0.5
    %v1068 = vmul.f32 %v1052, 0.5
    %v1069 = vmul.f32 %v1053, 0.5
    %v1070 = vmul.f32 %v1054, 0.5
    %v1071 = vmul.f32 %v1055, 0.5
    %v1072 = vmul.f32 %v1056, 0.5
    %v1073 = vmul.f32 %v1057, 0.5
    %v1074 = vmul.f32 %v1058, 0.5
    %v1075 = vmul.f32 %v1059, 0.5
    %v1076 = vmul.f32 %v1060, 0.5
    %v1077 = vtanh.pop %v1061
    %v1078 = vtanh.pop %v1062
    %v1079 = vtanh.pop %v1063
    %v1080 = vtanh.pop %v1064
    %v1081 = vtanh.pop %v1065
    %v1082 = vtanh.pop %v1066
    %v1083 = vtanh.pop %v1067
    %v1084 = vtanh.pop %v1068
    %v1085 = vtanh.pop %v1069
    %v1086 = vtanh.pop %v1070
    %v1087 = vtanh.pop %v1071
    %v1088 = vtanh.pop %v1072
    %v1089 = vtanh.pop %v1073
    %v1090 = vtanh.pop %v1074
    %v1091 = vtanh.pop %v1075
    %v1092 = vtanh.pop %v1076
    %v1093 = vadd.f32 %v1077, 1.0
    %v1094 = vadd.f32 %v1078, 1.0
    %v1095 = vadd.f32 %v1079, 1.0
    %v1096 = vadd.f32 %v1080, 1.0
    %v1097 = vadd.f32 %v1081, 1.0
    %v1098 = vadd.f32 %v1082, 1.0
    %v1099 = vadd.f32 %v1083, 1.0
    %v1100 = vadd.f32 %v1084, 1.0
    %v1101 = vadd.f32 %v1085, 1.0
    %v1102 = vadd.f32 %v1086, 1.0
    %v1103 = vadd.f32 %v1087, 1.0
    %v1104 = vadd.f32 %v1088, 1.0
    %v1105 = vadd.f32 %v1089, 1.0
    %v1106 = vadd.f32 %v1090, 1.0
    %v1107 = vadd.f32 %v1091, 1.0
    %v1108 = vadd.f32 %v1092, 1.0
    %v1109 = vmul.f32 %v1093, 0.5
    %v1110 = vmul.f32 %v1094, 0.5
    %v1111 = vmul.f32 %v1095, 0.5
    %v1112 = vmul.f32 %v1096, 0.5
    %v1113 = vmul.f32 %v1097, 0.5
    %v1114 = vmul.f32 %v1098, 0.5
    %v1115 = vmul.f32 %v1099, 0.5
    %v1116 = vmul.f32 %v1100, 0.5
    %v1117 = vmul.f32 %v1101, 0.5
    %v1118 = vmul.f32 %v1102, 0.5
    %v1119 = vmul.f32 %v1103, 0.5
    %v1120 = vmul.f32 %v1104, 0.5
    %v1121 = vmul.f32 %v1105, 0.5
    %v1122 = vmul.f32 %v1106, 0.5
    %v1123 = vmul.f32 %v1107, 0.5
    %v1124 = vmul.f32 %v1108, 0.5
    %v1125 = vmul.f32 %v1045, %v1109
    %v1126 = vmul.f32 %v1046, %v1110
    %v1127 = vmul.f32 %v1047, %v1111
    %v1128 = vmul.f32 %v1048, %v1112
    %v1129 = vmul.f32 %v1049, %v1113
    %v1130 = vmul.f32 %v1050, %v1114
    %v1131 = vmul.f32 %v1051, %v1115
    %v1132 = vmul.f32 %v1052, %v1116
    %v1133 = vmul.f32 %v1053, %v1117
    %v1134 = vmul.f32 %v1054, %v1118
    %v1135 = vmul.f32 %v1055, %v1119
    %v1136 = vmul.f32 %v1056, %v1120
    %v1137 = vmul.f32 %v1057, %v1121
    %v1138 = vmul.f32 %v1058, %v1122
    %v1139 = vmul.f32 %v1059, %v1123
    %v1140 = vmul.f32 %v1060, %v1124
    %v1141 = vld [vmem:[%s6] sm:$0xff]
    %v1142 = vld [vmem:[%s6 + $0x8] sm:$0xff]
    %v1143 = vld [vmem:[%s6 + $0x10] sm:$0xff]
    %v1144 = vld [vmem:[%s6 + $0x18] sm:$0xff]
    %v1145 = vlaneseq
    %v1146 = vshrl.u32 %v1145, 7
    %v1147 = vsub.s32 7, %v1146
    %v1148 = vrot.slane %v152, %v1147
    %v1150 = vsel %vm685, %v1125, 0
    %v1153 = vsel %vm685, %v1126, 0
    %v1156 = vsel %vm685, %v1127, 0
    %v1159 = vsel %vm685, %v1128, 0
    %v1162 = vsel %vm685, %v1129, 0
    %v1165 = vsel %vm685, %v1130, 0
    %v1168 = vsel %vm685, %v1131, 0
    %v1171 = vsel %vm685, %v1132, 0
    %v1174 = vsel %vm685, %v1133, 0
    %v1177 = vsel %vm685, %v1134, 0
    %v1180 = vsel %vm685, %v1135, 0
    %v1183 = vsel %vm685, %v1136, 0
    %v1186 = vsel %vm685, %v1137, 0
    %v1189 = vsel %vm685, %v1138, 0
    %v1192 = vsel %vm685, %v1139, 0
    %v1195 = vsel %vm685, %v1140, 0
    %1197 = vmatprep.subr.mxu0 0.0
    %1198 = vmatpush1.msra.mxu0 0.0
    %1199 = vmatprep.subr.mxu0 0.0
    %1200 = vmatpush1.msra.mxu0 0.0
    %1201 = vmatprep.subr.mxu0 0.0
    %1202 = vmatpush1.msra.mxu0 0.0
    %1203 = vmatprep.subr.mxu0 0.0
    %1204 = vmatpush1.msra.mxu0 0.0
    %1205 = vmatprep.subr.mxu0 0.0
    %1206 = vmatpush1.msra.mxu0 0.0
    %1207 = vmatprep.subr.mxu0 0.0
    %1208 = vmatpush1.msra.mxu0 0.0
    %1209 = vmatprep.subr.mxu0 0.0
    %1210 = vmatpush1.msra.mxu0 0.0
    %1211 = vmatprep.subr.mxu0 0.0
    %1212 = vmatpush1.msra.mxu0 0.0
    %1213 = vmatprep.subr.mxu0 0.0
    %1214 = vmatpush1.msra.mxu0 0.0
    %1215 = vmatprep.subr.mxu0 0.0
    %1216 = vmatpush1.msra.mxu0 0.0
    %1217 = vmatprep.subr.mxu0 0.0
    %1218 = vmatpush1.msra.mxu0 0.0
    %1219 = vmatprep.subr.mxu0 0.0
    %1220 = vmatpush1.msra.mxu0 0.0
    %1221 = vmatprep.subr.mxu0 0.0
    %1222 = vmatpush1.msra.mxu0 %v1144
    %1223 = vmatprep.subr.mxu0 0.0
    %1224 = vmatpush1.msra.mxu0 %v1143
    %1225 = vmatprep.subr.mxu0 0.0
    %1226 = vmatpush1.msra.mxu0 %v1142
    %1227 = vmatprep.subr.mxu0 0.0
    %1228 = vmatpush1.msra.mxu0 %v1141
    %1229 = vmatprep.subr.mxu0 0.0
    %1230 = vmatpush2.msra.mxu0 0.0
    %1231 = vmatprep.subr.mxu0 0.0
    %1232 = vmatpush2.msra.mxu0 0.0
    %1233 = vmatprep.subr.mxu0 0.0
    %1234 = vmatpush2.msra.mxu0 0.0
    %1235 = vmatprep.subr.mxu0 0.0
    %1236 = vmatpush2.msra.mxu0 0.0
    %1237 = vmatprep.subr.mxu0 0.0
    %1238 = vmatpush2.msra.mxu0 0.0
    %1239 = vmatprep.subr.mxu0 0.0
    %1240 = vmatpush2.msra.mxu0 0.0
    %1241 = vmatprep.subr.mxu0 0.0
    %1242 = vmatpush2.msra.mxu0 0.0
    %1243 = vmatprep.subr.mxu0 0.0
    %1244 = vmatpush2.msra.mxu0 0.0
    %1245 = vmatprep.subr.mxu0 0.0
    %1246 = vmatpush2.msra.mxu0 0.0
    %1247 = vmatprep.subr.mxu0 0.0
    %1248 = vmatpush2.msra.mxu0 0.0
    %1249 = vmatprep.subr.mxu0 0.0
    %1250 = vmatpush2.msra.mxu0 0.0
    %1251 = vmatprep.subr.mxu0 0.0
    %1252 = vmatpush2.msra.mxu0 0.0
    %1253 = vmatprep.subr.mxu0 0.0
    %1254 = vmatpush2.msra.mxu0 0.0
    %1255 = vmatprep.subr.mxu0 0.0
    %1256 = vmatpush2.msra.mxu0 0.0
    %1257 = vmatprep.subr.mxu0 0.0
    %1258 = vmatpush2.msra.mxu0 0.0
    %1259 = vmatprep.subr.mxu0 0.0
    %1260 = vmatpush2.msra.mxu0 0.0
    %1261 = vmatprep.mubr.f32.mxu0 0.0
    %1262 = vmatmul.mubr.f32.gmra.mxu0 %v1150
    %v1263 = vpop.f32.mrf.mxu0
    %v1264 = vadd.f32 %v1148, %v1263
    %v1265 = vpop.f32.mrf.mxu0
    %1266 = vmatprep.mubr.f32.mxu0 0.0
    %1267 = vmatmul.mubr.f32.gmra.mxu0 %v1153
    %v1268 = vpop.f32.mrf.mxu0
    %v1269 = vadd.f32 %v1148, %v1268
    %v1270 = vpop.f32.mrf.mxu0
    %1271 = vmatprep.mubr.f32.mxu0 0.0
    %1272 = vmatmul.mubr.f32.gmra.mxu0 %v1156
    %v1273 = vpop.f32.mrf.mxu0
    %v1274 = vadd.f32 %v1148, %v1273
    %v1275 = vpop.f32.mrf.mxu0
    %1276 = vmatprep.mubr.f32.mxu0 0.0
    %1277 = vmatmul.mubr.f32.gmra.mxu0 %v1159
    %v1278 = vpop.f32.mrf.mxu0
    %v1279 = vadd.f32 %v1148, %v1278
    %v1280 = vpop.f32.mrf.mxu0
    %1281 = vmatprep.mubr.f32.mxu0 0.0
    %1282 = vmatmul.mubr.f32.gmra.mxu0 %v1162
    %v1283 = vpop.f32.mrf.mxu0
    %v1284 = vadd.f32 %v1148, %v1283
    %v1285 = vpop.f32.mrf.mxu0
    %1286 = vmatprep.mubr.f32.mxu0 0.0
    %1287 = vmatmul.mubr.f32.gmra.mxu0 %v1165
    %v1288 = vpop.f32.mrf.mxu0
    %v1289 = vadd.f32 %v1148, %v1288
    %v1290 = vpop.f32.mrf.mxu0
    %1291 = vmatprep.mubr.f32.mxu0 0.0
    %1292 = vmatmul.mubr.f32.gmra.mxu0 %v1168
    %v1293 = vpop.f32.mrf.mxu0
    %v1294 = vadd.f32 %v1148, %v1293
    %v1295 = vpop.f32.mrf.mxu0
    %1296 = vmatprep.mubr.f32.mxu0 0.0
    %1297 = vmatmul.mubr.f32.gmra.mxu0 %v1171
    %v1298 = vpop.f32.mrf.mxu0
    %v1299 = vadd.f32 %v1148, %v1298
    %v1300 = vpop.f32.mrf.mxu0
    %1301 = vmatprep.mubr.f32.mxu0 0.0
    %1302 = vmatmul.mubr.f32.gmra.mxu0 %v1174
    %v1303 = vpop.f32.mrf.mxu0
    %v1304 = vadd.f32 %v1148, %v1303
    %v1305 = vpop.f32.mrf.mxu0
    %1306 = vmatprep.mubr.f32.mxu0 0.0
    %1307 = vmatmul.mubr.f32.gmra.mxu0 %v1177
    %v1308 = vpop.f32.mrf.mxu0
    %v1309 = vadd.f32 %v1148, %v1308
    %v1310 = vpop.f32.mrf.mxu0
    %1311 = vmatprep.mubr.f32.mxu0 0.0
    %1312 = vmatmul.mubr.f32.gmra.mxu0 %v1180
    %v1313 = vpop.f32.mrf.mxu0
    %v1314 = vadd.f32 %v1148, %v1313
    %v1315 = vpop.f32.mrf.mxu0
    %1316 = vmatprep.mubr.f32.mxu0 0.0
    %1317 = vmatmul.mubr.f32.gmra.mxu0 %v1183
    %v1318 = vpop.f32.mrf.mxu0
    %v1319 = vadd.f32 %v1148, %v1318
    %v1320 = vpop.f32.mrf.mxu0
    %1321 = vmatprep.mubr.f32.mxu0 0.0
    %1322 = vmatmul.mubr.f32.gmra.mxu0 %v1186
    %v1323 = vpop.f32.mrf.mxu0
    %v1324 = vadd.f32 %v1148, %v1323
    %v1325 = vpop.f32.mrf.mxu0
    %1326 = vmatprep.mubr.f32.mxu0 0.0
    %1327 = vmatmul.mubr.f32.gmra.mxu0 %v1189
    %v1328 = vpop.f32.mrf.mxu0
    %v1329 = vadd.f32 %v1148, %v1328
    %v1330 = vpop.f32.mrf.mxu0
    %1331 = vmatprep.mubr.f32.mxu0 0.0
    %1332 = vmatmul.mubr.f32.gmra.mxu0 %v1192
    %v1333 = vpop.f32.mrf.mxu0
    %v1334 = vadd.f32 %v1148, %v1333
    %v1335 = vpop.f32.mrf.mxu0
    %1336 = vmatprep.mubr.f32.mxu0 0.0
    %1337 = vmatmul.mubr.f32.gmra.mxu0 %v1195
    %v1338 = vpop.f32.mrf.mxu0
    %v1339 = vadd.f32 %v1148, %v1338
    %v1340 = vpop.f32.mrf.mxu0
    %1341 = vdwg.mxu0
    %v1342 = vmul.f32 %v1264, 0.5
    %v1343 = vmul.f32 %v1269, 0.5
    %v1344 = vmul.f32 %v1274, 0.5
    %v1345 = vmul.f32 %v1279, 0.5
    %v1346 = vmul.f32 %v1284, 0.5
    %v1347 = vmul.f32 %v1289, 0.5
    %v1348 = vmul.f32 %v1294, 0.5
    %v1349 = vmul.f32 %v1299, 0.5
    %v1350 = vmul.f32 %v1304, 0.5
    %v1351 = vmul.f32 %v1309, 0.5
    %v1352 = vmul.f32 %v1314, 0.5
    %v1353 = vmul.f32 %v1319, 0.5
    %v1354 = vmul.f32 %v1324, 0.5
    %v1355 = vmul.f32 %v1329, 0.5
    %v1356 = vmul.f32 %v1334, 0.5
    %v1357 = vmul.f32 %v1339, 0.5
    %v1358 = vtanh.pop %v1342
    %v1359 = vtanh.pop %v1343
    %v1360 = vtanh.pop %v1344
    %v1361 = vtanh.pop %v1345
    %v1362 = vtanh.pop %v1346
    %v1363 = vtanh.pop %v1347
    %v1364 = vtanh.pop %v1348
    %v1365 = vtanh.pop %v1349
    %v1366 = vtanh.pop %v1350
    %v1367 = vtanh.pop %v1351
    %v1368 = vtanh.pop %v1352
    %v1369 = vtanh.pop %v1353
    %v1370 = vtanh.pop %v1354
    %v1371 = vtanh.pop %v1355
    %v1372 = vtanh.pop %v1356
    %v1373 = vtanh.pop %v1357
    %v1374 = vadd.f32 %v1358, 1.0
    %v1375 = vadd.f32 %v1359, 1.0
    %v1376 = vadd.f32 %v1360, 1.0
    %v1377 = vadd.f32 %v1361, 1.0
    %v1378 = vadd.f32 %v1362, 1.0
    %v1379 = vadd.f32 %v1363, 1.0
    %v1380 = vadd.f32 %v1364, 1.0
    %v1381 = vadd.f32 %v1365, 1.0
    %v1382 = vadd.f32 %v1366, 1.0
    %v1383 = vadd.f32 %v1367, 1.0
    %v1384 = vadd.f32 %v1368, 1.0
    %v1385 = vadd.f32 %v1369, 1.0
    %v1386 = vadd.f32 %v1370, 1.0
    %v1387 = vadd.f32 %v1371, 1.0
    %v1388 = vadd.f32 %v1372, 1.0
    %v1389 = vadd.f32 %v1373, 1.0
    %v1390 = vmul.f32 %v1374, 0.5
    %v1391 = vmul.f32 %v1375, 0.5
    %v1392 = vmul.f32 %v1376, 0.5
    %v1393 = vmul.f32 %v1377, 0.5
    %v1394 = vmul.f32 %v1378, 0.5
    %v1395 = vmul.f32 %v1379, 0.5
    %v1396 = vmul.f32 %v1380, 0.5
    %v1397 = vmul.f32 %v1381, 0.5
    %v1398 = vmul.f32 %v1382, 0.5
    %v1399 = vmul.f32 %v1383, 0.5
    %v1400 = vmul.f32 %v1384, 0.5
    %v1401 = vmul.f32 %v1385, 0.5
    %v1402 = vmul.f32 %v1386, 0.5
    %v1403 = vmul.f32 %v1387, 0.5
    %v1404 = vmul.f32 %v1388, 0.5
    %v1405 = vmul.f32 %v1389, 0.5
    %v1406 = vmul.f32 %v1264, %v1390
    %v1407 = vmul.f32 %v1269, %v1391
    %v1408 = vmul.f32 %v1274, %v1392
    %v1409 = vmul.f32 %v1279, %v1393
    %v1410 = vmul.f32 %v1284, %v1394
    %v1411 = vmul.f32 %v1289, %v1395
    %v1412 = vmul.f32 %v1294, %v1396
    %v1413 = vmul.f32 %v1299, %v1397
    %v1414 = vmul.f32 %v1304, %v1398
    %v1415 = vmul.f32 %v1309, %v1399
    %v1416 = vmul.f32 %v1314, %v1400
    %v1417 = vmul.f32 %v1319, %v1401
    %v1418 = vmul.f32 %v1324, %v1402
    %v1419 = vmul.f32 %v1329, %v1403
    %v1420 = vmul.f32 %v1334, %v1404
    %v1421 = vmul.f32 %v1339, %v1405
    %1423 = vset.pattern.permute.xlu0 0
    %1424 = vperm.xlu0 %1423, %v136
    %v1425 = vpop.permute.xlu0 %1424
    %1428 = vset.pattern.permute.xlu0 0
    %1429 = vperm.xlu0 %1428, %v137
    %v1430 = vpop.permute.xlu0 %1429
    %1433 = vset.pattern.permute.xlu0 0
    %1434 = vperm.xlu0 %1433, %v138
    %v1435 = vpop.permute.xlu0 %1434
    %1438 = vset.pattern.permute.xlu0 0
    %1439 = vperm.xlu0 %1438, %v139
    %v1440 = vpop.permute.xlu0 %1439
    %1443 = vset.pattern.permute.xlu0 0
    %1444 = vperm.xlu0 %1443, %v140
    %v1445 = vpop.permute.xlu0 %1444
    %1448 = vset.pattern.permute.xlu0 0
    %1449 = vperm.xlu0 %1448, %v141
    %v1450 = vpop.permute.xlu0 %1449
    %1453 = vset.pattern.permute.xlu0 0
    %1454 = vperm.xlu0 %1453, %v142
    %v1455 = vpop.permute.xlu0 %1454
    %1458 = vset.pattern.permute.xlu0 0
    %1459 = vperm.xlu0 %1458, %v143
    %v1460 = vpop.permute.xlu0 %1459
    %1463 = vset.pattern.permute.xlu0 0
    %1464 = vperm.xlu0 %1463, %v144
    %v1465 = vpop.permute.xlu0 %1464
    %1468 = vset.pattern.permute.xlu0 0
    %1469 = vperm.xlu0 %1468, %v145
    %v1470 = vpop.permute.xlu0 %1469
    %1473 = vset.pattern.permute.xlu0 0
    %1474 = vperm.xlu0 %1473, %v146
    %v1475 = vpop.permute.xlu0 %1474
    %1478 = vset.pattern.permute.xlu0 0
    %1479 = vperm.xlu0 %1478, %v147
    %v1480 = vpop.permute.xlu0 %1479
    %1483 = vset.pattern.permute.xlu0 0
    %1484 = vperm.xlu0 %1483, %v148
    %v1485 = vpop.permute.xlu0 %1484
    %1488 = vset.pattern.permute.xlu0 0
    %1489 = vperm.xlu0 %1488, %v149
    %v1490 = vpop.permute.xlu0 %1489
    %1493 = vset.pattern.permute.xlu0 0
    %1494 = vperm.xlu0 %1493, %v150
    %v1495 = vpop.permute.xlu0 %1494
    %1498 = vset.pattern.permute.xlu0 0
    %1499 = vperm.xlu0 %1498, %v151
    %v1500 = vpop.permute.xlu0 %1499
    %v1502 = vmul.f32 %v1406, %v1425
    %v1503 = vmul.f32 %v1407, %v1430
    %v1504 = vmul.f32 %v1408, %v1435
    %v1505 = vmul.f32 %v1409, %v1440
    %v1506 = vmul.f32 %v1410, %v1445
    %v1507 = vmul.f32 %v1411, %v1450
    %v1508 = vmul.f32 %v1412, %v1455
    %v1509 = vmul.f32 %v1413, %v1460
    %v1510 = vmul.f32 %v1414, %v1465
    %v1511 = vmul.f32 %v1415, %v1470
    %v1512 = vmul.f32 %v1416, %v1475
    %v1513 = vmul.f32 %v1417, %v1480
    %v1514 = vmul.f32 %v1418, %v1485
    %v1515 = vmul.f32 %v1419, %v1490
    %v1516 = vmul.f32 %v1420, %v1495
    %v1517 = vmul.f32 %v1421, %v1500
    %v1518 = vsel %vm685, %v1502, 0.0
    %v1519 = vrot.slane %v1518, 4
    %v1520 = vadd.f32 %v1518, %v1519
    %v1521 = vrot.slane %v1520, 2
    %v1522 = vadd.f32 %v1520, %v1521
    %v1523 = vrot.slane %v1522, 1
    %v1524 = vadd.f32 %v1522, %v1523
    %v1525 = vsel %vm685, %v1503, 0.0
    %v1526 = vrot.slane %v1525, 4
    %v1527 = vadd.f32 %v1525, %v1526
    %v1528 = vrot.slane %v1527, 2
    %v1529 = vadd.f32 %v1527, %v1528
    %v1530 = vrot.slane %v1529, 1
    %v1531 = vadd.f32 %v1529, %v1530
    %v1532 = vsel %vm685, %v1504, 0.0
    %v1533 = vrot.slane %v1532, 4
    %v1534 = vadd.f32 %v1532, %v1533
    %v1535 = vrot.slane %v1534, 2
    %v1536 = vadd.f32 %v1534, %v1535
    %v1537 = vrot.slane %v1536, 1
    %v1538 = vadd.f32 %v1536, %v1537
    %v1539 = vsel %vm685, %v1505, 0.0
    %v1540 = vrot.slane %v1539, 4
    %v1541 = vadd.f32 %v1539, %v1540
    %v1542 = vrot.slane %v1541, 2
    %v1543 = vadd.f32 %v1541, %v1542
    %v1544 = vrot.slane %v1543, 1
    %v1545 = vadd.f32 %v1543, %v1544
    %v1546 = vsel %vm685, %v1506, 0.0
    %v1547 = vrot.slane %v1546, 4
    %v1548 = vadd.f32 %v1546, %v1547
    %v1549 = vrot.slane %v1548, 2
    %v1550 = vadd.f32 %v1548, %v1549
    %v1551 = vrot.slane %v1550, 1
    %v1552 = vadd.f32 %v1550, %v1551
    %v1553 = vsel %vm685, %v1507, 0.0
    %v1554 = vrot.slane %v1553, 4
    %v1555 = vadd.f32 %v1553, %v1554
    %v1556 = vrot.slane %v1555, 2
    %v1557 = vadd.f32 %v1555, %v1556
    %v1558 = vrot.slane %v1557, 1
    %v1559 = vadd.f32 %v1557, %v1558
    %v1560 = vsel %vm685, %v1508, 0.0
    %v1561 = vrot.slane %v1560, 4
    %v1562 = vadd.f32 %v1560, %v1561
    %v1563 = vrot.slane %v1562, 2
    %v1564 = vadd.f32 %v1562, %v1563
    %v1565 = vrot.slane %v1564, 1
    %v1566 = vadd.f32 %v1564, %v1565
    %v1567 = vsel %vm685, %v1509, 0.0
    %v1568 = vrot.slane %v1567, 4
    %v1569 = vadd.f32 %v1567, %v1568
    %v1570 = vrot.slane %v1569, 2
    %v1571 = vadd.f32 %v1569, %v1570
    %v1572 = vrot.slane %v1571, 1
    %v1573 = vadd.f32 %v1571, %v1572
    %v1574 = vsel %vm685, %v1510, 0.0
    %v1575 = vrot.slane %v1574, 4
    %v1576 = vadd.f32 %v1574, %v1575
    %v1577 = vrot.slane %v1576, 2
    %v1578 = vadd.f32 %v1576, %v1577
    %v1579 = vrot.slane %v1578, 1
    %v1580 = vadd.f32 %v1578, %v1579
    %v1581 = vsel %vm685, %v1511, 0.0
    %v1582 = vrot.slane %v1581, 4
    %v1583 = vadd.f32 %v1581, %v1582
    %v1584 = vrot.slane %v1583, 2
    %v1585 = vadd.f32 %v1583, %v1584
    %v1586 = vrot.slane %v1585, 1
    %v1587 = vadd.f32 %v1585, %v1586
    %v1588 = vsel %vm685, %v1512, 0.0
    %v1589 = vrot.slane %v1588, 4
    %v1590 = vadd.f32 %v1588, %v1589
    %v1591 = vrot.slane %v1590, 2
    %v1592 = vadd.f32 %v1590, %v1591
    %v1593 = vrot.slane %v1592, 1
    %v1594 = vadd.f32 %v1592, %v1593
    %v1595 = vsel %vm685, %v1513, 0.0
    %v1596 = vrot.slane %v1595, 4
    %v1597 = vadd.f32 %v1595, %v1596
    %v1598 = vrot.slane %v1597, 2
    %v1599 = vadd.f32 %v1597, %v1598
    %v1600 = vrot.slane %v1599, 1
    %v1601 = vadd.f32 %v1599, %v1600
    %v1602 = vsel %vm685, %v1514, 0.0
    %v1603 = vrot.slane %v1602, 4
    %v1604 = vadd.f32 %v1602, %v1603
    %v1605 = vrot.slane %v1604, 2
    %v1606 = vadd.f32 %v1604, %v1605
    %v1607 = vrot.slane %v1606, 1
    %v1608 = vadd.f32 %v1606, %v1607
    %v1609 = vsel %vm685, %v1515, 0.0
    %v1610 = vrot.slane %v1609, 4
    %v1611 = vadd.f32 %v1609, %v1610
    %v1612 = vrot.slane %v1611, 2
    %v1613 = vadd.f32 %v1611, %v1612
    %v1614 = vrot.slane %v1613, 1
    %v1615 = vadd.f32 %v1613, %v1614
    %v1616 = vsel %vm685, %v1516, 0.0
    %v1617 = vrot.slane %v1616, 4
    %v1618 = vadd.f32 %v1616, %v1617
    %v1619 = vrot.slane %v1618, 2
    %v1620 = vadd.f32 %v1618, %v1619
    %v1621 = vrot.slane %v1620, 1
    %v1622 = vadd.f32 %v1620, %v1621
    %v1623 = vsel %vm685, %v1517, 0.0
    %v1624 = vrot.slane %v1623, 4
    %v1625 = vadd.f32 %v1623, %v1624
    %v1626 = vrot.slane %v1625, 2
    %v1627 = vadd.f32 %v1625, %v1626
    %v1628 = vrot.slane %v1627, 1
    %v1629 = vadd.f32 %v1627, %v1628
    %v1630 = vmul.f32 %v1524, 0.01
    %v1631 = vmul.f32 %v1531, 0.01
    %v1632 = vmul.f32 %v1538, 0.01
    %v1633 = vmul.f32 %v1545, 0.01
    %v1634 = vmul.f32 %v1552, 0.01
    %v1635 = vmul.f32 %v1559, 0.01
    %v1636 = vmul.f32 %v1566, 0.01
    %v1637 = vmul.f32 %v1573, 0.01
    %v1638 = vmul.f32 %v1580, 0.01
    %v1639 = vmul.f32 %v1587, 0.01
    %v1640 = vmul.f32 %v1594, 0.01
    %v1641 = vmul.f32 %v1601, 0.01
    %v1642 = vmul.f32 %v1608, 0.01
    %v1643 = vmul.f32 %v1615, 0.01
    %v1644 = vmul.f32 %v1622, 0.01
    %v1645 = vmul.f32 %v1629, 0.01
    %v1646 = vld [vmem:[#allocation4] sm:$0xff]
    %v1647 = vld [vmem:[#allocation4 + $0x8] sm:$0xff]
    %v1648 = vld [vmem:[#allocation4 + $0x10] sm:$0xff]
    %v1649 = vld [vmem:[#allocation4 + $0x18] sm:$0xff]
    %vm1666 = vcmask 1041409
    %v1667 = vsel %vm1666, %v1631, %v1630
    %vm1668 = vcmask 1042434
    %v1669 = vsel %vm1668, %v1632, %v1667
    %vm1670 = vcmask 1043459
    %v1671 = vsel %vm1670, %v1633, %v1669
    %vm1672 = vcmask 1044484
    %v1673 = vsel %vm1672, %v1634, %v1671
    %vm1674 = vcmask 1045509
    %v1675 = vsel %vm1674, %v1635, %v1673
    %vm1676 = vcmask 1046534
    %v1677 = vsel %vm1676, %v1636, %v1675
    %vm1678 = vcmask 1047559
    %v1679 = vsel %vm1678, %v1637, %v1677
    %v1680 = vsel %vm1666, %v1639, %v1638
    %v1681 = vsel %vm1668, %v1640, %v1680
    %v1682 = vsel %vm1670, %v1641, %v1681
    %v1683 = vsel %vm1672, %v1642, %v1682
    %v1684 = vsel %vm1674, %v1643, %v1683
    %v1685 = vsel %vm1676, %v1644, %v1684
    %v1686 = vsel %vm1678, %v1645, %v1685
    %v1687 = vsel %vm685, %v1679, 0
    %v1689 = vsel %vm685, %v1686, 0
    %1691 = vmatprep.subr.mxu0 0.0
    %1692 = vmatpush1.msra.mxu0 0.0
    %1693 = vmatprep.subr.mxu0 0.0
    %1694 = vmatpush1.msra.mxu0 0.0
    %1695 = vmatprep.subr.mxu0 0.0
    %1696 = vmatpush1.msra.mxu0 0.0
    %1697 = vmatprep.subr.mxu0 0.0
    %1698 = vmatpush1.msra.mxu0 0.0
    %1699 = vmatprep.subr.mxu0 0.0
    %1700 = vmatpush1.msra.mxu0 0.0
    %1701 = vmatprep.subr.mxu0 0.0
    %1702 = vmatpush1.msra.mxu0 0.0
    %1703 = vmatprep.subr.mxu0 0.0
    %1704 = vmatpush1.msra.mxu0 0.0
    %1705 = vmatprep.subr.mxu0 0.0
    %1706 = vmatpush1.msra.mxu0 0.0
    %1707 = vmatprep.subr.mxu0 0.0
    %1708 = vmatpush1.msra.mxu0 0.0
    %1709 = vmatprep.subr.mxu0 0.0
    %1710 = vmatpush1.msra.mxu0 0.0
    %1711 = vmatprep.subr.mxu0 0.0
    %1712 = vmatpush1.msra.mxu0 0.0
    %1713 = vmatprep.subr.mxu0 0.0
    %1714 = vmatpush1.msra.mxu0 0.0
    %1715 = vmatprep.subr.mxu0 0.0
    %1716 = vmatpush1.msra.mxu0 %v1649
    %1717 = vmatprep.subr.mxu0 0.0
    %1718 = vmatpush1.msra.mxu0 %v1648
    %1719 = vmatprep.subr.mxu0 0.0
    %1720 = vmatpush1.msra.mxu0 %v1647
    %1721 = vmatprep.subr.mxu0 0.0
    %1722 = vmatpush1.msra.mxu0 %v1646
    %1723 = vmatprep.subr.mxu0 0.0
    %1724 = vmatpush2.msra.mxu0 0.0
    %1725 = vmatprep.subr.mxu0 0.0
    %1726 = vmatpush2.msra.mxu0 0.0
    %1727 = vmatprep.subr.mxu0 0.0
    %1728 = vmatpush2.msra.mxu0 0.0
    %1729 = vmatprep.subr.mxu0 0.0
    %1730 = vmatpush2.msra.mxu0 0.0
    %1731 = vmatprep.subr.mxu0 0.0
    %1732 = vmatpush2.msra.mxu0 0.0
    %1733 = vmatprep.subr.mxu0 0.0
    %1734 = vmatpush2.msra.mxu0 0.0
    %1735 = vmatprep.subr.mxu0 0.0
    %1736 = vmatpush2.msra.mxu0 0.0
    %1737 = vmatprep.subr.mxu0 0.0
    %1738 = vmatpush2.msra.mxu0 0.0
    %1739 = vmatprep.subr.mxu0 0.0
    %1740 = vmatpush2.msra.mxu0 0.0
    %1741 = vmatprep.subr.mxu0 0.0
    %1742 = vmatpush2.msra.mxu0 0.0
    %1743 = vmatprep.subr.mxu0 0.0
    %1744 = vmatpush2.msra.mxu0 0.0
    %1745 = vmatprep.subr.mxu0 0.0
    %1746 = vmatpush2.msra.mxu0 0.0
    %1747 = vmatprep.subr.mxu0 0.0
    %1748 = vmatpush2.msra.mxu0 0.0
    %1749 = vmatprep.subr.mxu0 0.0
    %1750 = vmatpush2.msra.mxu0 0.0
    %1751 = vmatprep.subr.mxu0 0.0
    %1752 = vmatpush2.msra.mxu0 0.0
    %1753 = vmatprep.subr.mxu0 0.0
    %1754 = vmatpush2.msra.mxu0 0.0
    %1755 = vmatprep.mubr.f32.mxu0 0.0
    %1756 = vmatmul.mubr.f32.gmra.mxu0 %v1687
    %v1757 = vpop.f32.mrf.mxu0
    %v1758 = vadd.f32 0.0, %v1757
    %v1759 = vpop.f32.mrf.mxu0
    %1760 = vmatprep.mubr.f32.mxu0 0.0
    %1761 = vmatmul.mubr.f32.gmra.mxu0 %v1689
    %v1762 = vpop.f32.mrf.mxu0
    %v1763 = vadd.f32 0.0, %v1762
    %v1764 = vpop.f32.mrf.mxu0
    %1765 = vdwg.mxu0
    %1768 = vrot.lane.b32.xlu0 %v1758, 64
    %v1769 = vpop.permute.xlu0 %1768
    %1770 = vrot.lane.b32.xlu0 %v1763, 64
    %v1771 = vpop.permute.xlu0 %1770
    %v1774 = vadd.f32 %v759, %v1769
    %v1775 = vadd.f32 %v764, %v1771
    %v1776 = vlaneseq
    %v1777 = vshrl.u32 %v1776, 7
    %v1778 = vsub.s32 0, %v1777
    %v1779 = vrot.slane %v153, %v1778
    %1781 = vrot.lane.b32.xlu0 %v1779, 64
    %v1782 = vpop.permute.xlu0 %1781
    %v1784 = vadd.f32 %v1774, %v1782
    %v1785 = vadd.f32 %v1775, %v1782
    %v1786 = vmul.f32 %v1784, 0.5
    %v1787 = vmul.f32 %v1785, 0.5
    %v1788 = vtanh.pop %v1786
    %v1789 = vtanh.pop %v1787
    %v1790 = vadd.f32 %v1788, 1.0
    %v1791 = vadd.f32 %v1789, 1.0
    %v1792 = vmul.f32 %v1790, 0.5
    %v1793 = vmul.f32 %v1791, 0.5
    %v1794 = vmul.f32 %v1784, %v1792
    %v1795 = vmul.f32 %v1785, %v1793
    %v1796 = vld [vmem:[#allocation6] sm:$0xff]
    %v1797 = vld [vmem:[#allocation6 + $0x8] sm:$0xff]
    %v1798 = vld [vmem:[#allocation6 + $0x10] sm:$0xff]
    %v1799 = vld [vmem:[#allocation6 + $0x18] sm:$0xff]
    %v1800 = vlaneseq
    %v1801 = vshrl.u32 %v1800, 7
    %v1802 = vsub.s32 1, %v1801
    %v1803 = vrot.slane %v153, %v1802
    %1806 = vrot.lane.b32.xlu0 %v1794, 64
    %v1807 = vpop.permute.xlu0 %1806
    %1808 = vrot.lane.b32.xlu0 %v1795, 64
    %v1809 = vpop.permute.xlu0 %1808
    %v1810 = vsel %vm685, %v1807, 0
    %v1812 = vsel %vm685, %v1809, 0
    %1814 = vmatprep.subr.mxu0 0.0
    %1815 = vmatpush1.msra.mxu0 0.0
    %1816 = vmatprep.subr.mxu0 0.0
    %1817 = vmatpush1.msra.mxu0 0.0
    %1818 = vmatprep.subr.mxu0 0.0
    %1819 = vmatpush1.msra.mxu0 0.0
    %1820 = vmatprep.subr.mxu0 0.0
    %1821 = vmatpush1.msra.mxu0 0.0
    %1822 = vmatprep.subr.mxu0 0.0
    %1823 = vmatpush1.msra.mxu0 0.0
    %1824 = vmatprep.subr.mxu0 0.0
    %1825 = vmatpush1.msra.mxu0 0.0
    %1826 = vmatprep.subr.mxu0 0.0
    %1827 = vmatpush1.msra.mxu0 0.0
    %1828 = vmatprep.subr.mxu0 0.0
    %1829 = vmatpush1.msra.mxu0 0.0
    %1830 = vmatprep.subr.mxu0 0.0
    %1831 = vmatpush1.msra.mxu0 0.0
    %1832 = vmatprep.subr.mxu0 0.0
    %1833 = vmatpush1.msra.mxu0 0.0
    %1834 = vmatprep.subr.mxu0 0.0
    %1835 = vmatpush1.msra.mxu0 0.0
    %1836 = vmatprep.subr.mxu0 0.0
    %1837 = vmatpush1.msra.mxu0 0.0
    %1838 = vmatprep.subr.mxu0 0.0
    %1839 = vmatpush1.msra.mxu0 %v1799
    %1840 = vmatprep.subr.mxu0 0.0
    %1841 = vmatpush1.msra.mxu0 %v1798
    %1842 = vmatprep.subr.mxu0 0.0
    %1843 = vmatpush1.msra.mxu0 %v1797
    %1844 = vmatprep.subr.mxu0 0.0
    %1845 = vmatpush1.msra.mxu0 %v1796
    %1846 = vmatprep.subr.mxu0 0.0
    %1847 = vmatpush2.msra.mxu0 0.0
    %1848 = vmatprep.subr.mxu0 0.0
    %1849 = vmatpush2.msra.mxu0 0.0
    %1850 = vmatprep.subr.mxu0 0.0
    %1851 = vmatpush2.msra.mxu0 0.0
    %1852 = vmatprep.subr.mxu0 0.0
    %1853 = vmatpush2.msra.mxu0 0.0
    %1854 = vmatprep.subr.mxu0 0.0
    %1855 = vmatpush2.msra.mxu0 0.0
    %1856 = vmatprep.subr.mxu0 0.0
    %1857 = vmatpush2.msra.mxu0 0.0
    %1858 = vmatprep.subr.mxu0 0.0
    %1859 = vmatpush2.msra.mxu0 0.0
    %1860 = vmatprep.subr.mxu0 0.0
    %1861 = vmatpush2.msra.mxu0 0.0
    %1862 = vmatprep.subr.mxu0 0.0
    %1863 = vmatpush2.msra.mxu0 0.0
    %1864 = vmatprep.subr.mxu0 0.0
    %1865 = vmatpush2.msra.mxu0 0.0
    %1866 = vmatprep.subr.mxu0 0.0
    %1867 = vmatpush2.msra.mxu0 0.0
    %1868 = vmatprep.subr.mxu0 0.0
    %1869 = vmatpush2.msra.mxu0 0.0
    %1870 = vmatprep.subr.mxu0 0.0
    %1871 = vmatpush2.msra.mxu0 0.0
    %1872 = vmatprep.subr.mxu0 0.0
    %1873 = vmatpush2.msra.mxu0 0.0
    %1874 = vmatprep.subr.mxu0 0.0
    %1875 = vmatpush2.msra.mxu0 0.0
    %1876 = vmatprep.subr.mxu0 0.0
    %1877 = vmatpush2.msra.mxu0 0.0
    %1878 = vmatprep.mubr.f32.mxu0 0.0
    %1879 = vmatmul.mubr.f32.gmra.mxu0 %v1810
    %v1880 = vpop.f32.mrf.mxu0
    %v1881 = vadd.f32 %v1803, %v1880
    %v1882 = vpop.f32.mrf.mxu0
    %1883 = vmatprep.mubr.f32.mxu0 0.0
    %1884 = vmatmul.mubr.f32.gmra.mxu0 %v1812
    %v1885 = vpop.f32.mrf.mxu0
    %v1886 = vadd.f32 %v1803, %v1885
    %v1887 = vpop.f32.mrf.mxu0
    %1888 = vdwg.mxu0
    %v1889 = vadd.f32 %v497, %v1881
    %v1890 = vadd.f32 %v502, %v1886
    %1892 = vset.pattern.permute.xlu0 0
    %1893 = vperm.xlu0 %1892, %v134
    %v1894 = vpop.permute.xlu0 %1893
    %1897 = vset.pattern.permute.xlu0 0
    %1898 = vperm.xlu0 %1897, %v135
    %v1899 = vpop.permute.xlu0 %1898
    %v1901 = vmul.f32 %v1889, %v1894
    %v1902 = vmul.f32 %v1890, %v1899
    %s1903 = scalar_lea.vmem %s5, 32
    %v1904 = vld [vmem:[%s1903] sm:$0xff]
    %v1905 = vld [vmem:[%s1903 + $0x8] sm:$0xff]
    %v1906 = vld [vmem:[%s1903 + $0x10] sm:$0xff]
    %v1907 = vld [vmem:[%s1903 + $0x18] sm:$0xff]
    %v1909 = vsel %vm685, %v1901, 0
    %v1912 = vsel %vm685, %v1902, 0
    %1914 = vmatprep.subr.mxu0 0.0
    %1915 = vmatpush1.msra.mxu0 0.0
    %1916 = vmatprep.subr.mxu0 0.0
    %1917 = vmatpush1.msra.mxu0 0.0
    %1918 = vmatprep.subr.mxu0 0.0
    %1919 = vmatpush1.msra.mxu0 0.0
    %1920 = vmatprep.subr.mxu0 0.0
    %1921 = vmatpush1.msra.mxu0 0.0
    %1922 = vmatprep.subr.mxu0 0.0
    %1923 = vmatpush1.msra.mxu0 0.0
    %1924 = vmatprep.subr.mxu0 0.0
    %1925 = vmatpush1.msra.mxu0 0.0
    %1926 = vmatprep.subr.mxu0 0.0
    %1927 = vmatpush1.msra.mxu0 0.0
    %1928 = vmatprep.subr.mxu0 0.0
    %1929 = vmatpush1.msra.mxu0 0.0
    %1930 = vmatprep.subr.mxu0 0.0
    %1931 = vmatpush1.msra.mxu0 0.0
    %1932 = vmatprep.subr.mxu0 0.0
    %1933 = vmatpush1.msra.mxu0 0.0
    %1934 = vmatprep.subr.mxu0 0.0
    %1935 = vmatpush1.msra.mxu0 0.0
    %1936 = vmatprep.subr.mxu0 0.0
    %1937 = vmatpush1.msra.mxu0 0.0
    %1938 = vmatprep.subr.mxu0 0.0
    %1939 = vmatpush1.msra.mxu0 %v1907
    %1940 = vmatprep.subr.mxu0 0.0
    %1941 = vmatpush1.msra.mxu0 %v1906
    %1942 = vmatprep.subr.mxu0 0.0
    %1943 = vmatpush1.msra.mxu0 %v1905
    %1944 = vmatprep.subr.mxu0 0.0
    %1945 = vmatpush1.msra.mxu0 %v1904
    %1946 = vmatprep.subr.mxu0 0.0
    %1947 = vmatpush2.msra.mxu0 0.0
    %1948 = vmatprep.subr.mxu0 0.0
    %1949 = vmatpush2.msra.mxu0 0.0
    %1950 = vmatprep.subr.mxu0 0.0
    %1951 = vmatpush2.msra.mxu0 0.0
    %1952 = vmatprep.subr.mxu0 0.0
    %1953 = vmatpush2.msra.mxu0 0.0
    %1954 = vmatprep.subr.mxu0 0.0
    %1955 = vmatpush2.msra.mxu0 0.0
    %1956 = vmatprep.subr.mxu0 0.0
    %1957 = vmatpush2.msra.mxu0 0.0
    %1958 = vmatprep.subr.mxu0 0.0
    %1959 = vmatpush2.msra.mxu0 0.0
    %1960 = vmatprep.subr.mxu0 0.0
    %1961 = vmatpush2.msra.mxu0 0.0
    %1962 = vmatprep.subr.mxu0 0.0
    %1963 = vmatpush2.msra.mxu0 0.0
    %1964 = vmatprep.subr.mxu0 0.0
    %1965 = vmatpush2.msra.mxu0 0.0
    %1966 = vmatprep.subr.mxu0 0.0
    %1967 = vmatpush2.msra.mxu0 0.0
    %1968 = vmatprep.subr.mxu0 0.0
    %1969 = vmatpush2.msra.mxu0 0.0
    %1970 = vmatprep.subr.mxu0 0.0
    %1971 = vmatpush2.msra.mxu0 0.0
    %1972 = vmatprep.subr.mxu0 0.0
    %1973 = vmatpush2.msra.mxu0 0.0
    %1974 = vmatprep.subr.mxu0 0.0
    %1975 = vmatpush2.msra.mxu0 0.0
    %1976 = vmatprep.subr.mxu0 0.0
    %1977 = vmatpush2.msra.mxu0 0.0
    %1978 = vmatprep.mubr.f32.mxu0 0.0
    %1979 = vmatmul.mubr.f32.gmra.mxu0 %v1909
    %v1980 = vpop.f32.mrf.mxu0
    %v1981 = vadd.f32 0.0, %v1980
    %v1982 = vpop.f32.mrf.mxu0
    %1983 = vmatprep.mubr.f32.mxu0 0.0
    %1984 = vmatmul.mubr.f32.gmra.mxu0 %v1912
    %v1985 = vpop.f32.mrf.mxu0
    %v1986 = vadd.f32 0.0, %v1985
    %v1987 = vpop.f32.mrf.mxu0
    %1988 = vdwg.mxu0
    %v1991 = vcombine.high %v1981, %v1981
    %v1993 = vunpack.c.l.s4 1966171168
    %v1994 = vunpack.c.0.s8 %v1993
    %v1995 = vlaneseq
    %v1996 = vshrl.u32 %v1995, 7
    %v1997 = vsub.s32 %v1994, %v1996
    %v1998 = vrot.slane %v1981, %v1997
    %v2000 = vunpack.c.l.s4 1966171168
    %v2001 = vunpack.c.0.s8 %v2000
    %v2002 = vlaneseq
    %v2003 = vshrl.u32 %v2002, 7
    %v2004 = vsub.s32 %v2001, %v2003
    %v2005 = vrot.slane %v1991, %v2004
    %v2006 = vcombine.high %v1998, %v1998
    %v2007 = vcombine.high %v2005, %v2005
    %v2009 = vunpack.c.l.s4 1966171168
    %v2010 = vunpack.c.0.s8 %v2009
    %v2011 = vlaneseq
    %v2012 = vshrl.u32 %v2011, 7
    %v2013 = vsub.s32 %v2010, %v2012
    %v2014 = vrot.slane %v1998, %v2013
    %v2016 = vunpack.c.l.s4 1966171168
    %v2017 = vunpack.c.0.s8 %v2016
    %v2018 = vlaneseq
    %v2019 = vshrl.u32 %v2018, 7
    %v2020 = vsub.s32 %v2017, %v2019
    %v2021 = vrot.slane %v2005, %v2020
    %v2023 = vunpack.c.l.s4 1966171168
    %v2024 = vunpack.c.0.s8 %v2023
    %v2025 = vlaneseq
    %v2026 = vshrl.u32 %v2025, 7
    %v2027 = vsub.s32 %v2024, %v2026
    %v2028 = vrot.slane %v2006, %v2027
    %v2030 = vunpack.c.l.s4 1966171168
    %v2031 = vunpack.c.0.s8 %v2030
    %v2032 = vlaneseq
    %v2033 = vshrl.u32 %v2032, 7
    %v2034 = vsub.s32 %v2031, %v2033
    %v2035 = vrot.slane %v2007, %v2034
    %v2036 = vcombine.high %v2014, %v2014
    %v2037 = vcombine.high %v2021, %v2021
    %v2038 = vcombine.high %v2028, %v2028
    %v2039 = vcombine.high %v2035, %v2035
    %v2040 = vcombine.high %v1986, %v1986
    %v2042 = vunpack.c.l.s4 1966171168
    %v2043 = vunpack.c.0.s8 %v2042
    %v2044 = vlaneseq
    %v2045 = vshrl.u32 %v2044, 7
    %v2046 = vsub.s32 %v2043, %v2045
    %v2047 = vrot.slane %v1986, %v2046
    %v2049 = vunpack.c.l.s4 1966171168
    %v2050 = vunpack.c.0.s8 %v2049
    %v2051 = vlaneseq
    %v2052 = vshrl.u32 %v2051, 7
    %v2053 = vsub.s32 %v2050, %v2052
    %v2054 = vrot.slane %v2040, %v2053
    %v2055 = vcombine.high %v2047, %v2047
    %v2056 = vcombine.high %v2054, %v2054
    %v2058 = vunpack.c.l.s4 1966171168
    %v2059 = vunpack.c.0.s8 %v2058
    %v2060 = vlaneseq
    %v2061 = vshrl.u32 %v2060, 7
    %v2062 = vsub.s32 %v2059, %v2061
    %v2063 = vrot.slane %v2047, %v2062
    %v2065 = vunpack.c.l.s4 1966171168
    %v2066 = vunpack.c.0.s8 %v2065
    %v2067 = vlaneseq
    %v2068 = vshrl.u32 %v2067, 7
    %v2069 = vsub.s32 %v2066, %v2068
    %v2070 = vrot.slane %v2054, %v2069
    %v2072 = vunpack.c.l.s4 1966171168
    %v2073 = vunpack.c.0.s8 %v2072
    %v2074 = vlaneseq
    %v2075 = vshrl.u32 %v2074, 7
    %v2076 = vsub.s32 %v2073, %v2075
    %v2077 = vrot.slane %v2055, %v2076
    %v2079 = vunpack.c.l.s4 1966171168
    %v2080 = vunpack.c.0.s8 %v2079
    %v2081 = vlaneseq
    %v2082 = vshrl.u32 %v2081, 7
    %v2083 = vsub.s32 %v2080, %v2082
    %v2084 = vrot.slane %v2056, %v2083
    %v2085 = vcombine.high %v2063, %v2063
    %v2086 = vcombine.high %v2070, %v2070
    %v2087 = vcombine.high %v2077, %v2077
    %v2088 = vcombine.high %v2084, %v2084
    %v2089 = vlaneseq
    %v2090 = vshrl.u32 %v2089, 7
    %v2091 = vsub.s32 0, %v2090
    %v2092 = vrot.slane %v2014, %v2091
    %v2093 = vlaneseq
    %v2094 = vshrl.u32 %v2093, 7
    %v2095 = vsub.s32 0, %v2094
    %v2096 = vrot.slane %v2028, %v2095
    %v2097 = vlaneseq
    %v2098 = vshrl.u32 %v2097, 7
    %v2099 = vsub.s32 0, %v2098
    %v2100 = vrot.slane %v2036, %v2099
    %v2101 = vlaneseq
    %v2102 = vshrl.u32 %v2101, 7
    %v2103 = vsub.s32 0, %v2102
    %v2104 = vrot.slane %v2038, %v2103
    %v2105 = vlaneseq
    %v2106 = vshrl.u32 %v2105, 7
    %v2107 = vsub.s32 0, %v2106
    %v2108 = vrot.slane %v2021, %v2107
    %v2109 = vlaneseq
    %v2110 = vshrl.u32 %v2109, 7
    %v2111 = vsub.s32 0, %v2110
    %v2112 = vrot.slane %v2035, %v2111
    %v2113 = vlaneseq
    %v2114 = vshrl.u32 %v2113, 7
    %v2115 = vsub.s32 0, %v2114
    %v2116 = vrot.slane %v2037, %v2115
    %v2117 = vlaneseq
    %v2118 = vshrl.u32 %v2117, 7
    %v2119 = vsub.s32 0, %v2118
    %v2120 = vrot.slane %v2039, %v2119
    %v2121 = vlaneseq
    %v2122 = vshrl.u32 %v2121, 7
    %v2123 = vsub.s32 0, %v2122
    %v2124 = vrot.slane %v2063, %v2123
    %v2125 = vlaneseq
    %v2126 = vshrl.u32 %v2125, 7
    %v2127 = vsub.s32 0, %v2126
    %v2128 = vrot.slane %v2077, %v2127
    %v2129 = vlaneseq
    %v2130 = vshrl.u32 %v2129, 7
    %v2131 = vsub.s32 0, %v2130
    %v2132 = vrot.slane %v2085, %v2131
    %v2133 = vlaneseq
    %v2134 = vshrl.u32 %v2133, 7
    %v2135 = vsub.s32 0, %v2134
    %v2136 = vrot.slane %v2087, %v2135
    %v2137 = vlaneseq
    %v2138 = vshrl.u32 %v2137, 7
    %v2139 = vsub.s32 0, %v2138
    %v2140 = vrot.slane %v2070, %v2139
    %v2141 = vlaneseq
    %v2142 = vshrl.u32 %v2141, 7
    %v2143 = vsub.s32 0, %v2142
    %v2144 = vrot.slane %v2084, %v2143
    %v2145 = vlaneseq
    %v2146 = vshrl.u32 %v2145, 7
    %v2147 = vsub.s32 0, %v2146
    %v2148 = vrot.slane %v2086, %v2147
    %v2149 = vlaneseq
    %v2150 = vshrl.u32 %v2149, 7
    %v2151 = vsub.s32 0, %v2150
    %v2152 = vrot.slane %v2088, %v2151
    %2169 = vrot.lane.b32.xlu0 %v1981, 96
    %v2170 = vpop.permute.xlu0 %2169
    %2171 = vrot.lane.b32.xlu0 %v1986, 96
    %v2172 = vpop.permute.xlu0 %2171
    %v2175 = vadd.f32 %v2092, %v2170
    %v2176 = vadd.f32 %v2096, %v2170
    %v2177 = vadd.f32 %v2100, %v2170
    %v2178 = vadd.f32 %v2104, %v2170
    %v2179 = vadd.f32 %v2108, %v2170
    %v2180 = vadd.f32 %v2112, %v2170
    %v2181 = vadd.f32 %v2116, %v2170
    %v2182 = vadd.f32 %v2120, %v2170
    %v2183 = vadd.f32 %v2124, %v2172
    %v2184 = vadd.f32 %v2128, %v2172
    %v2185 = vadd.f32 %v2132, %v2172
    %v2186 = vadd.f32 %v2136, %v2172
    %v2187 = vadd.f32 %v2140, %v2172
    %v2188 = vadd.f32 %v2144, %v2172
    %v2189 = vadd.f32 %v2148, %v2172
    %v2190 = vadd.f32 %v2152, %v2172
    %v2191 = vlaneseq
    %v2192 = vshrl.u32 %v2191, 7
    %v2193 = vsub.s32 2, %v2192
    %v2194 = vrot.slane %v153, %v2193
    %v2195 = vmul.f32 %v372, %v2194
    %v2196 = vmul.f32 %v375, %v2194
    %v2197 = vmul.f32 %v378, %v2194
    %v2198 = vmul.f32 %v381, %v2194
    %v2199 = vmul.f32 %v384, %v2194
    %v2200 = vmul.f32 %v387, %v2194
    %v2201 = vmul.f32 %v390, %v2194
    %v2202 = vmul.f32 %v393, %v2194
    %v2203 = vmul.f32 %v396, %v2194
    %v2204 = vmul.f32 %v399, %v2194
    %v2205 = vmul.f32 %v402, %v2194
    %v2206 = vmul.f32 %v405, %v2194
    %v2207 = vmul.f32 %v408, %v2194
    %v2208 = vmul.f32 %v411, %v2194
    %v2209 = vmul.f32 %v414, %v2194
    %v2210 = vmul.f32 %v417, %v2194
    %v2211 = vadd.f32 %v2175, %v2195
    %v2212 = vadd.f32 %v2176, %v2196
    %v2213 = vadd.f32 %v2177, %v2197
    %v2214 = vadd.f32 %v2178, %v2198
    %v2215 = vadd.f32 %v2179, %v2199
    %v2216 = vadd.f32 %v2180, %v2200
    %v2217 = vadd.f32 %v2181, %v2201
    %v2218 = vadd.f32 %v2182, %v2202
    %v2219 = vadd.f32 %v2183, %v2203
    %v2220 = vadd.f32 %v2184, %v2204
    %v2221 = vadd.f32 %v2185, %v2205
    %v2222 = vadd.f32 %v2186, %v2206
    %v2223 = vadd.f32 %v2187, %v2207
    %v2224 = vadd.f32 %v2188, %v2208
    %v2225 = vadd.f32 %v2189, %v2209
    %v2226 = vadd.f32 %v2190, %v2210
    %v2227 = vlaneseq
    %v2228 = vshrl.u32 %v2227, 7
    %v2229 = vsub.s32 3, %v2228
    %v2230 = vrot.slane %v153, %v2229
    %v2231 = vmul.f32 %v372, %v2230
    %v2232 = vmul.f32 %v375, %v2230
    %v2233 = vmul.f32 %v378, %v2230
    %v2234 = vmul.f32 %v381, %v2230
    %v2235 = vmul.f32 %v384, %v2230
    %v2236 = vmul.f32 %v387, %v2230
    %v2237 = vmul.f32 %v390, %v2230
    %v2238 = vmul.f32 %v393, %v2230
    %v2239 = vmul.f32 %v396, %v2230
    %v2240 = vmul.f32 %v399, %v2230
    %v2241 = vmul.f32 %v402, %v2230
    %v2242 = vmul.f32 %v405, %v2230
    %v2243 = vmul.f32 %v408, %v2230
    %v2244 = vmul.f32 %v411, %v2230
    %v2245 = vmul.f32 %v414, %v2230
    %v2246 = vmul.f32 %v417, %v2230
    %v2247 = vadd.f32 %v2211, %v2231
    %v2248 = vadd.f32 %v2212, %v2232
    %v2249 = vadd.f32 %v2213, %v2233
    %v2250 = vadd.f32 %v2214, %v2234
    %v2251 = vadd.f32 %v2215, %v2235
    %v2252 = vadd.f32 %v2216, %v2236
    %v2253 = vadd.f32 %v2217, %v2237
    %v2254 = vadd.f32 %v2218, %v2238
    %v2255 = vadd.f32 %v2219, %v2239
    %v2256 = vadd.f32 %v2220, %v2240
    %v2257 = vadd.f32 %v2221, %v2241
    %v2258 = vadd.f32 %v2222, %v2242
    %v2259 = vadd.f32 %v2223, %v2243
    %v2260 = vadd.f32 %v2224, %v2244
    %v2261 = vadd.f32 %v2225, %v2245
    %v2262 = vadd.f32 %v2226, %v2246
    %v2263 = vlaneseq
    %v2264 = vshrl.u32 %v2263, 7
    %v2265 = vsub.s32 4, %v2264
    %v2266 = vrot.slane %v153, %v2265
    %v2267 = vadd.f32 %v2247, %v2266
    %v2268 = vadd.f32 %v2248, %v2266
    %v2269 = vadd.f32 %v2249, %v2266
    %v2270 = vadd.f32 %v2250, %v2266
    %v2271 = vadd.f32 %v2251, %v2266
    %v2272 = vadd.f32 %v2252, %v2266
    %v2273 = vadd.f32 %v2253, %v2266
    %v2274 = vadd.f32 %v2254, %v2266
    %v2275 = vadd.f32 %v2255, %v2266
    %v2276 = vadd.f32 %v2256, %v2266
    %v2277 = vadd.f32 %v2257, %v2266
    %v2278 = vadd.f32 %v2258, %v2266
    %v2279 = vadd.f32 %v2259, %v2266
    %v2280 = vadd.f32 %v2260, %v2266
    %v2281 = vadd.f32 %v2261, %v2266
    %v2282 = vadd.f32 %v2262, %v2266
    %v2283 = vmul.f32 %v2267, 0.5
    %v2284 = vmul.f32 %v2268, 0.5
    %v2285 = vmul.f32 %v2269, 0.5
    %v2286 = vmul.f32 %v2270, 0.5
    %v2287 = vmul.f32 %v2271, 0.5
    %v2288 = vmul.f32 %v2272, 0.5
    %v2289 = vmul.f32 %v2273, 0.5
    %v2290 = vmul.f32 %v2274, 0.5
    %v2291 = vmul.f32 %v2275, 0.5
    %v2292 = vmul.f32 %v2276, 0.5
    %v2293 = vmul.f32 %v2277, 0.5
    %v2294 = vmul.f32 %v2278, 0.5
    %v2295 = vmul.f32 %v2279, 0.5
    %v2296 = vmul.f32 %v2280, 0.5
    %v2297 = vmul.f32 %v2281, 0.5
    %v2298 = vmul.f32 %v2282, 0.5
    %v2299 = vtanh.pop %v2283
    %v2300 = vtanh.pop %v2284
    %v2301 = vtanh.pop %v2285
    %v2302 = vtanh.pop %v2286
    %v2303 = vtanh.pop %v2287
    %v2304 = vtanh.pop %v2288
    %v2305 = vtanh.pop %v2289
    %v2306 = vtanh.pop %v2290
    %v2307 = vtanh.pop %v2291
    %v2308 = vtanh.pop %v2292
    %v2309 = vtanh.pop %v2293
    %v2310 = vtanh.pop %v2294
    %v2311 = vtanh.pop %v2295
    %v2312 = vtanh.pop %v2296
    %v2313 = vtanh.pop %v2297
    %v2314 = vtanh.pop %v2298
    %v2315 = vadd.f32 %v2299, 1.0
    %v2316 = vadd.f32 %v2300, 1.0
    %v2317 = vadd.f32 %v2301, 1.0
    %v2318 = vadd.f32 %v2302, 1.0
    %v2319 = vadd.f32 %v2303, 1.0
    %v2320 = vadd.f32 %v2304, 1.0
    %v2321 = vadd.f32 %v2305, 1.0
    %v2322 = vadd.f32 %v2306, 1.0
    %v2323 = vadd.f32 %v2307, 1.0
    %v2324 = vadd.f32 %v2308, 1.0
    %v2325 = vadd.f32 %v2309, 1.0
    %v2326 = vadd.f32 %v2310, 1.0
    %v2327 = vadd.f32 %v2311, 1.0
    %v2328 = vadd.f32 %v2312, 1.0
    %v2329 = vadd.f32 %v2313, 1.0
    %v2330 = vadd.f32 %v2314, 1.0
    %v2331 = vmul.f32 %v2315, 0.5
    %v2332 = vmul.f32 %v2316, 0.5
    %v2333 = vmul.f32 %v2317, 0.5
    %v2334 = vmul.f32 %v2318, 0.5
    %v2335 = vmul.f32 %v2319, 0.5
    %v2336 = vmul.f32 %v2320, 0.5
    %v2337 = vmul.f32 %v2321, 0.5
    %v2338 = vmul.f32 %v2322, 0.5
    %v2339 = vmul.f32 %v2323, 0.5
    %v2340 = vmul.f32 %v2324, 0.5
    %v2341 = vmul.f32 %v2325, 0.5
    %v2342 = vmul.f32 %v2326, 0.5
    %v2343 = vmul.f32 %v2327, 0.5
    %v2344 = vmul.f32 %v2328, 0.5
    %v2345 = vmul.f32 %v2329, 0.5
    %v2346 = vmul.f32 %v2330, 0.5
    %v2347 = vmul.f32 %v2267, %v2331
    %v2348 = vmul.f32 %v2268, %v2332
    %v2349 = vmul.f32 %v2269, %v2333
    %v2350 = vmul.f32 %v2270, %v2334
    %v2351 = vmul.f32 %v2271, %v2335
    %v2352 = vmul.f32 %v2272, %v2336
    %v2353 = vmul.f32 %v2273, %v2337
    %v2354 = vmul.f32 %v2274, %v2338
    %v2355 = vmul.f32 %v2275, %v2339
    %v2356 = vmul.f32 %v2276, %v2340
    %v2357 = vmul.f32 %v2277, %v2341
    %v2358 = vmul.f32 %v2278, %v2342
    %v2359 = vmul.f32 %v2279, %v2343
    %v2360 = vmul.f32 %v2280, %v2344
    %v2361 = vmul.f32 %v2281, %v2345
    %v2362 = vmul.f32 %v2282, %v2346
    %s2363 = scalar_lea.vmem %s6, 32
    %v2364 = vld [vmem:[%s2363] sm:$0xff]
    %v2365 = vld [vmem:[%s2363 + $0x8] sm:$0xff]
    %v2366 = vld [vmem:[%s2363 + $0x10] sm:$0xff]
    %v2367 = vld [vmem:[%s2363 + $0x18] sm:$0xff]
    %v2368 = vlaneseq
    %v2369 = vshrl.u32 %v2368, 7
    %v2370 = vsub.s32 5, %v2369
    %v2371 = vrot.slane %v153, %v2370
    %v2373 = vsel %vm685, %v2347, 0
    %v2376 = vsel %vm685, %v2348, 0
    %v2379 = vsel %vm685, %v2349, 0
    %v2382 = vsel %vm685, %v2350, 0
    %v2385 = vsel %vm685, %v2351, 0
    %v2388 = vsel %vm685, %v2352, 0
    %v2391 = vsel %vm685, %v2353, 0
    %v2394 = vsel %vm685, %v2354, 0
    %v2397 = vsel %vm685, %v2355, 0
    %v2400 = vsel %vm685, %v2356, 0
    %v2403 = vsel %vm685, %v2357, 0
    %v2406 = vsel %vm685, %v2358, 0
    %v2409 = vsel %vm685, %v2359, 0
    %v2412 = vsel %vm685, %v2360, 0
    %v2415 = vsel %vm685, %v2361, 0
    %v2418 = vsel %vm685, %v2362, 0
    %2420 = vmatprep.subr.mxu0 0.0
    %2421 = vmatpush1.msra.mxu0 0.0
    %2422 = vmatprep.subr.mxu0 0.0
    %2423 = vmatpush1.msra.mxu0 0.0
    %2424 = vmatprep.subr.mxu0 0.0
    %2425 = vmatpush1.msra.mxu0 0.0
    %2426 = vmatprep.subr.mxu0 0.0
    %2427 = vmatpush1.msra.mxu0 0.0
    %2428 = vmatprep.subr.mxu0 0.0
    %2429 = vmatpush1.msra.mxu0 0.0
    %2430 = vmatprep.subr.mxu0 0.0
    %2431 = vmatpush1.msra.mxu0 0.0
    %2432 = vmatprep.subr.mxu0 0.0
    %2433 = vmatpush1.msra.mxu0 0.0
    %2434 = vmatprep.subr.mxu0 0.0
    %2435 = vmatpush1.msra.mxu0 0.0
    %2436 = vmatprep.subr.mxu0 0.0
    %2437 = vmatpush1.msra.mxu0 0.0
    %2438 = vmatprep.subr.mxu0 0.0
    %2439 = vmatpush1.msra.mxu0 0.0
    %2440 = vmatprep.subr.mxu0 0.0
    %2441 = vmatpush1.msra.mxu0 0.0
    %2442 = vmatprep.subr.mxu0 0.0
    %2443 = vmatpush1.msra.mxu0 0.0
    %2444 = vmatprep.subr.mxu0 0.0
    %2445 = vmatpush1.msra.mxu0 %v2367
    %2446 = vmatprep.subr.mxu0 0.0
    %2447 = vmatpush1.msra.mxu0 %v2366
    %2448 = vmatprep.subr.mxu0 0.0
    %2449 = vmatpush1.msra.mxu0 %v2365
    %2450 = vmatprep.subr.mxu0 0.0
    %2451 = vmatpush1.msra.mxu0 %v2364
    %2452 = vmatprep.subr.mxu0 0.0
    %2453 = vmatpush2.msra.mxu0 0.0
    %2454 = vmatprep.subr.mxu0 0.0
    %2455 = vmatpush2.msra.mxu0 0.0
    %2456 = vmatprep.subr.mxu0 0.0
    %2457 = vmatpush2.msra.mxu0 0.0
    %2458 = vmatprep.subr.mxu0 0.0
    %2459 = vmatpush2.msra.mxu0 0.0
    %2460 = vmatprep.subr.mxu0 0.0
    %2461 = vmatpush2.msra.mxu0 0.0
    %2462 = vmatprep.subr.mxu0 0.0
    %2463 = vmatpush2.msra.mxu0 0.0
    %2464 = vmatprep.subr.mxu0 0.0
    %2465 = vmatpush2.msra.mxu0 0.0
    %2466 = vmatprep.subr.mxu0 0.0
    %2467 = vmatpush2.msra.mxu0 0.0
    %2468 = vmatprep.subr.mxu0 0.0
    %2469 = vmatpush2.msra.mxu0 0.0
    %2470 = vmatprep.subr.mxu0 0.0
    %2471 = vmatpush2.msra.mxu0 0.0
    %2472 = vmatprep.subr.mxu0 0.0
    %2473 = vmatpush2.msra.mxu0 0.0
    %2474 = vmatprep.subr.mxu0 0.0
    %2475 = vmatpush2.msra.mxu0 0.0
    %2476 = vmatprep.subr.mxu0 0.0
    %2477 = vmatpush2.msra.mxu0 0.0
    %2478 = vmatprep.subr.mxu0 0.0
    %2479 = vmatpush2.msra.mxu0 0.0
    %2480 = vmatprep.subr.mxu0 0.0
    %2481 = vmatpush2.msra.mxu0 0.0
    %2482 = vmatprep.subr.mxu0 0.0
    %2483 = vmatpush2.msra.mxu0 0.0
    %2484 = vmatprep.mubr.f32.mxu0 0.0
    %2485 = vmatmul.mubr.f32.gmra.mxu0 %v2373
    %v2486 = vpop.f32.mrf.mxu0
    %v2487 = vadd.f32 %v2371, %v2486
    %v2488 = vpop.f32.mrf.mxu0
    %2489 = vmatprep.mubr.f32.mxu0 0.0
    %2490 = vmatmul.mubr.f32.gmra.mxu0 %v2376
    %v2491 = vpop.f32.mrf.mxu0
    %v2492 = vadd.f32 %v2371, %v2491
    %v2493 = vpop.f32.mrf.mxu0
    %2494 = vmatprep.mubr.f32.mxu0 0.0
    %2495 = vmatmul.mubr.f32.gmra.mxu0 %v2379
    %v2496 = vpop.f32.mrf.mxu0
    %v2497 = vadd.f32 %v2371, %v2496
    %v2498 = vpop.f32.mrf.mxu0
    %2499 = vmatprep.mubr.f32.mxu0 0.0
    %2500 = vmatmul.mubr.f32.gmra.mxu0 %v2382
    %v2501 = vpop.f32.mrf.mxu0
    %v2502 = vadd.f32 %v2371, %v2501
    %v2503 = vpop.f32.mrf.mxu0
    %2504 = vmatprep.mubr.f32.mxu0 0.0
    %2505 = vmatmul.mubr.f32.gmra.mxu0 %v2385
    %v2506 = vpop.f32.mrf.mxu0
    %v2507 = vadd.f32 %v2371, %v2506
    %v2508 = vpop.f32.mrf.mxu0
    %2509 = vmatprep.mubr.f32.mxu0 0.0
    %2510 = vmatmul.mubr.f32.gmra.mxu0 %v2388
    %v2511 = vpop.f32.mrf.mxu0
    %v2512 = vadd.f32 %v2371, %v2511
    %v2513 = vpop.f32.mrf.mxu0
    %2514 = vmatprep.mubr.f32.mxu0 0.0
    %2515 = vmatmul.mubr.f32.gmra.mxu0 %v2391
    %v2516 = vpop.f32.mrf.mxu0
    %v2517 = vadd.f32 %v2371, %v2516
    %v2518 = vpop.f32.mrf.mxu0
    %2519 = vmatprep.mubr.f32.mxu0 0.0
    %2520 = vmatmul.mubr.f32.gmra.mxu0 %v2394
    %v2521 = vpop.f32.mrf.mxu0
    %v2522 = vadd.f32 %v2371, %v2521
    %v2523 = vpop.f32.mrf.mxu0
    %2524 = vmatprep.mubr.f32.mxu0 0.0
    %2525 = vmatmul.mubr.f32.gmra.mxu0 %v2397
    %v2526 = vpop.f32.mrf.mxu0
    %v2527 = vadd.f32 %v2371, %v2526
    %v2528 = vpop.f32.mrf.mxu0
    %2529 = vmatprep.mubr.f32.mxu0 0.0
    %2530 = vmatmul.mubr.f32.gmra.mxu0 %v2400
    %v2531 = vpop.f32.mrf.mxu0
    %v2532 = vadd.f32 %v2371, %v2531
    %v2533 = vpop.f32.mrf.mxu0
    %2534 = vmatprep.mubr.f32.mxu0 0.0
    %2535 = vmatmul.mubr.f32.gmra.mxu0 %v2403
    %v2536 = vpop.f32.mrf.mxu0
    %v2537 = vadd.f32 %v2371, %v2536
    %v2538 = vpop.f32.mrf.mxu0
    %2539 = vmatprep.mubr.f32.mxu0 0.0
    %2540 = vmatmul.mubr.f32.gmra.mxu0 %v2406
    %v2541 = vpop.f32.mrf.mxu0
    %v2542 = vadd.f32 %v2371, %v2541
    %v2543 = vpop.f32.mrf.mxu0
    %2544 = vmatprep.mubr.f32.mxu0 0.0
    %2545 = vmatmul.mubr.f32.gmra.mxu0 %v2409
    %v2546 = vpop.f32.mrf.mxu0
    %v2547 = vadd.f32 %v2371, %v2546
    %v2548 = vpop.f32.mrf.mxu0
    %2549 = vmatprep.mubr.f32.mxu0 0.0
    %2550 = vmatmul.mubr.f32.gmra.mxu0 %v2412
    %v2551 = vpop.f32.mrf.mxu0
    %v2552 = vadd.f32 %v2371, %v2551
    %v2553 = vpop.f32.mrf.mxu0
    %2554 = vmatprep.mubr.f32.mxu0 0.0
    %2555 = vmatmul.mubr.f32.gmra.mxu0 %v2415
    %v2556 = vpop.f32.mrf.mxu0
    %v2557 = vadd.f32 %v2371, %v2556
    %v2558 = vpop.f32.mrf.mxu0
    %2559 = vmatprep.mubr.f32.mxu0 0.0
    %2560 = vmatmul.mubr.f32.gmra.mxu0 %v2418
    %v2561 = vpop.f32.mrf.mxu0
    %v2562 = vadd.f32 %v2371, %v2561
    %v2563 = vpop.f32.mrf.mxu0
    %2564 = vdwg.mxu0
    %v2565 = vmul.f32 %v2487, 0.5
    %v2566 = vmul.f32 %v2492, 0.5
    %v2567 = vmul.f32 %v2497, 0.5
    %v2568 = vmul.f32 %v2502, 0.5
    %v2569 = vmul.f32 %v2507, 0.5
    %v2570 = vmul.f32 %v2512, 0.5
    %v2571 = vmul.f32 %v2517, 0.5
    %v2572 = vmul.f32 %v2522, 0.5
    %v2573 = vmul.f32 %v2527, 0.5
    %v2574 = vmul.f32 %v2532, 0.5
    %v2575 = vmul.f32 %v2537, 0.5
    %v2576 = vmul.f32 %v2542, 0.5
    %v2577 = vmul.f32 %v2547, 0.5
    %v2578 = vmul.f32 %v2552, 0.5
    %v2579 = vmul.f32 %v2557, 0.5
    %v2580 = vmul.f32 %v2562, 0.5
    %v2581 = vtanh.pop %v2565
    %v2582 = vtanh.pop %v2566
    %v2583 = vtanh.pop %v2567
    %v2584 = vtanh.pop %v2568
    %v2585 = vtanh.pop %v2569
    %v2586 = vtanh.pop %v2570
    %v2587 = vtanh.pop %v2571
    %v2588 = vtanh.pop %v2572
    %v2589 = vtanh.pop %v2573
    %v2590 = vtanh.pop %v2574
    %v2591 = vtanh.pop %v2575
    %v2592 = vtanh.pop %v2576
    %v2593 = vtanh.pop %v2577
    %v2594 = vtanh.pop %v2578
    %v2595 = vtanh.pop %v2579
    %v2596 = vtanh.pop %v2580
    %v2597 = vadd.f32 %v2581, 1.0
    %v2598 = vadd.f32 %v2582, 1.0
    %v2599 = vadd.f32 %v2583, 1.0
    %v2600 = vadd.f32 %v2584, 1.0
    %v2601 = vadd.f32 %v2585, 1.0
    %v2602 = vadd.f32 %v2586, 1.0
    %v2603 = vadd.f32 %v2587, 1.0
    %v2604 = vadd.f32 %v2588, 1.0
    %v2605 = vadd.f32 %v2589, 1.0
    %v2606 = vadd.f32 %v2590, 1.0
    %v2607 = vadd.f32 %v2591, 1.0
    %v2608 = vadd.f32 %v2592, 1.0
    %v2609 = vadd.f32 %v2593, 1.0
    %v2610 = vadd.f32 %v2594, 1.0
    %v2611 = vadd.f32 %v2595, 1.0
    %v2612 = vadd.f32 %v2596, 1.0
    %v2613 = vmul.f32 %v2597, 0.5
    %v2614 = vmul.f32 %v2598, 0.5
    %v2615 = vmul.f32 %v2599, 0.5
    %v2616 = vmul.f32 %v2600, 0.5
    %v2617 = vmul.f32 %v2601, 0.5
    %v2618 = vmul.f32 %v2602, 0.5
    %v2619 = vmul.f32 %v2603, 0.5
    %v2620 = vmul.f32 %v2604, 0.5
    %v2621 = vmul.f32 %v2605, 0.5
    %v2622 = vmul.f32 %v2606, 0.5
    %v2623 = vmul.f32 %v2607, 0.5
    %v2624 = vmul.f32 %v2608, 0.5
    %v2625 = vmul.f32 %v2609, 0.5
    %v2626 = vmul.f32 %v2610, 0.5
    %v2627 = vmul.f32 %v2611, 0.5
    %v2628 = vmul.f32 %v2612, 0.5
    %v2629 = vmul.f32 %v2487, %v2613
    %v2630 = vmul.f32 %v2492, %v2614
    %v2631 = vmul.f32 %v2497, %v2615
    %v2632 = vmul.f32 %v2502, %v2616
    %v2633 = vmul.f32 %v2507, %v2617
    %v2634 = vmul.f32 %v2512, %v2618
    %v2635 = vmul.f32 %v2517, %v2619
    %v2636 = vmul.f32 %v2522, %v2620
    %v2637 = vmul.f32 %v2527, %v2621
    %v2638 = vmul.f32 %v2532, %v2622
    %v2639 = vmul.f32 %v2537, %v2623
    %v2640 = vmul.f32 %v2542, %v2624
    %v2641 = vmul.f32 %v2547, %v2625
    %v2642 = vmul.f32 %v2552, %v2626
    %v2643 = vmul.f32 %v2557, %v2627
    %v2644 = vmul.f32 %v2562, %v2628
    %v2645 = vmul.f32 %v2629, %v1425
    %v2646 = vmul.f32 %v2630, %v1430
    %v2647 = vmul.f32 %v2631, %v1435
    %v2648 = vmul.f32 %v2632, %v1440
    %v2649 = vmul.f32 %v2633, %v1445
    %v2650 = vmul.f32 %v2634, %v1450
    %v2651 = vmul.f32 %v2635, %v1455
    %v2652 = vmul.f32 %v2636, %v1460
    %v2653 = vmul.f32 %v2637, %v1465
    %v2654 = vmul.f32 %v2638, %v1470
    %v2655 = vmul.f32 %v2639, %v1475
    %v2656 = vmul.f32 %v2640, %v1480
    %v2657 = vmul.f32 %v2641, %v1485
    %v2658 = vmul.f32 %v2642, %v1490
    %v2659 = vmul.f32 %v2643, %v1495
    %v2660 = vmul.f32 %v2644, %v1500
    %v2661 = vsel %vm685, %v2645, 0.0
    %v2662 = vrot.slane %v2661, 4
    %v2663 = vadd.f32 %v2661, %v2662
    %v2664 = vrot.slane %v2663, 2
    %v2665 = vadd.f32 %v2663, %v2664
    %v2666 = vrot.slane %v2665, 1
    %v2667 = vadd.f32 %v2665, %v2666
    %v2668 = vsel %vm685, %v2646, 0.0
    %v2669 = vrot.slane %v2668, 4
    %v2670 = vadd.f32 %v2668, %v2669
    %v2671 = vrot.slane %v2670, 2
    %v2672 = vadd.f32 %v2670, %v2671
    %v2673 = vrot.slane %v2672, 1
    %v2674 = vadd.f32 %v2672, %v2673
    %v2675 = vsel %vm685, %v2647, 0.0
    %v2676 = vrot.slane %v2675, 4
    %v2677 = vadd.f32 %v2675, %v2676
    %v2678 = vrot.slane %v2677, 2
    %v2679 = vadd.f32 %v2677, %v2678
    %v2680 = vrot.slane %v2679, 1
    %v2681 = vadd.f32 %v2679, %v2680
    %v2682 = vsel %vm685, %v2648, 0.0
    %v2683 = vrot.slane %v2682, 4
    %v2684 = vadd.f32 %v2682, %v2683
    %v2685 = vrot.slane %v2684, 2
    %v2686 = vadd.f32 %v2684, %v2685
    %v2687 = vrot.slane %v2686, 1
    %v2688 = vadd.f32 %v2686, %v2687
    %v2689 = vsel %vm685, %v2649, 0.0
    %v2690 = vrot.slane %v2689, 4
    %v2691 = vadd.f32 %v2689, %v2690
    %v2692 = vrot.slane %v2691, 2
    %v2693 = vadd.f32 %v2691, %v2692
    %v2694 = vrot.slane %v2693, 1
    %v2695 = vadd.f32 %v2693, %v2694
    %v2696 = vsel %vm685, %v2650, 0.0
    %v2697 = vrot.slane %v2696, 4
    %v2698 = vadd.f32 %v2696, %v2697
    %v2699 = vrot.slane %v2698, 2
    %v2700 = vadd.f32 %v2698, %v2699
    %v2701 = vrot.slane %v2700, 1
    %v2702 = vadd.f32 %v2700, %v2701
    %v2703 = vsel %vm685, %v2651, 0.0
    %v2704 = vrot.slane %v2703, 4
    %v2705 = vadd.f32 %v2703, %v2704
    %v2706 = vrot.slane %v2705, 2
    %v2707 = vadd.f32 %v2705, %v2706
    %v2708 = vrot.slane %v2707, 1
    %v2709 = vadd.f32 %v2707, %v2708
    %v2710 = vsel %vm685, %v2652, 0.0
    %v2711 = vrot.slane %v2710, 4
    %v2712 = vadd.f32 %v2710, %v2711
    %v2713 = vrot.slane %v2712, 2
    %v2714 = vadd.f32 %v2712, %v2713
    %v2715 = vrot.slane %v2714, 1
    %v2716 = vadd.f32 %v2714, %v2715
    %v2717 = vsel %vm685, %v2653, 0.0
    %v2718 = vrot.slane %v2717, 4
    %v2719 = vadd.f32 %v2717, %v2718
    %v2720 = vrot.slane %v2719, 2
    %v2721 = vadd.f32 %v2719, %v2720
    %v2722 = vrot.slane %v2721, 1
    %v2723 = vadd.f32 %v2721, %v2722
    %v2724 = vsel %vm685, %v2654, 0.0
    %v2725 = vrot.slane %v2724, 4
    %v2726 = vadd.f32 %v2724, %v2725
    %v2727 = vrot.slane %v2726, 2
    %v2728 = vadd.f32 %v2726, %v2727
    %v2729 = vrot.slane %v2728, 1
    %v2730 = vadd.f32 %v2728, %v2729
    %v2731 = vsel %vm685, %v2655, 0.0
    %v2732 = vrot.slane %v2731, 4
    %v2733 = vadd.f32 %v2731, %v2732
    %v2734 = vrot.slane %v2733, 2
    %v2735 = vadd.f32 %v2733, %v2734
    %v2736 = vrot.slane %v2735, 1
    %v2737 = vadd.f32 %v2735, %v2736
    %v2738 = vsel %vm685, %v2656, 0.0
    %v2739 = vrot.slane %v2738, 4
    %v2740 = vadd.f32 %v2738, %v2739
    %v2741 = vrot.slane %v2740, 2
    %v2742 = vadd.f32 %v2740, %v2741
    %v2743 = vrot.slane %v2742, 1
    %v2744 = vadd.f32 %v2742, %v2743
    %v2745 = vsel %vm685, %v2657, 0.0
    %v2746 = vrot.slane %v2745, 4
    %v2747 = vadd.f32 %v2745, %v2746
    %v2748 = vrot.slane %v2747, 2
    %v2749 = vadd.f32 %v2747, %v2748
    %v2750 = vrot.slane %v2749, 1
    %v2751 = vadd.f32 %v2749, %v2750
    %v2752 = vsel %vm685, %v2658, 0.0
    %v2753 = vrot.slane %v2752, 4
    %v2754 = vadd.f32 %v2752, %v2753
    %v2755 = vrot.slane %v2754, 2
    %v2756 = vadd.f32 %v2754, %v2755
    %v2757 = vrot.slane %v2756, 1
    %v2758 = vadd.f32 %v2756, %v2757
    %v2759 = vsel %vm685, %v2659, 0.0
    %v2760 = vrot.slane %v2759, 4
    %v2761 = vadd.f32 %v2759, %v2760
    %v2762 = vrot.slane %v2761, 2
    %v2763 = vadd.f32 %v2761, %v2762
    %v2764 = vrot.slane %v2763, 1
    %v2765 = vadd.f32 %v2763, %v2764
    %v2766 = vsel %vm685, %v2660, 0.0
    %v2767 = vrot.slane %v2766, 4
    %v2768 = vadd.f32 %v2766, %v2767
    %v2769 = vrot.slane %v2768, 2
    %v2770 = vadd.f32 %v2768, %v2769
    %v2771 = vrot.slane %v2770, 1
    %v2772 = vadd.f32 %v2770, %v2771
    %v2773 = vmul.f32 %v2667, 0.01
    %v2774 = vmul.f32 %v2674, 0.01
    %v2775 = vmul.f32 %v2681, 0.01
    %v2776 = vmul.f32 %v2688, 0.01
    %v2777 = vmul.f32 %v2695, 0.01
    %v2778 = vmul.f32 %v2702, 0.01
    %v2779 = vmul.f32 %v2709, 0.01
    %v2780 = vmul.f32 %v2716, 0.01
    %v2781 = vmul.f32 %v2723, 0.01
    %v2782 = vmul.f32 %v2730, 0.01
    %v2783 = vmul.f32 %v2737, 0.01
    %v2784 = vmul.f32 %v2744, 0.01
    %v2785 = vmul.f32 %v2751, 0.01
    %v2786 = vmul.f32 %v2758, 0.01
    %v2787 = vmul.f32 %v2765, 0.01
    %v2788 = vmul.f32 %v2772, 0.01
    %s2789 = scalar_lea.vmem [#allocation4], 32
    %v2790 = vld [vmem:[%s2789] sm:$0xff]
    %v2791 = vld [vmem:[%s2789 + $0x8] sm:$0xff]
    %v2792 = vld [vmem:[%s2789 + $0x10] sm:$0xff]
    %v2793 = vld [vmem:[%s2789 + $0x18] sm:$0xff]
    %v2810 = vsel %vm1666, %v2774, %v2773
    %v2811 = vsel %vm1668, %v2775, %v2810
    %v2812 = vsel %vm1670, %v2776, %v2811
    %v2813 = vsel %vm1672, %v2777, %v2812
    %v2814 = vsel %vm1674, %v2778, %v2813
    %v2815 = vsel %vm1676, %v2779, %v2814
    %v2816 = vsel %vm1678, %v2780, %v2815
    %v2817 = vsel %vm1666, %v2782, %v2781
    %v2818 = vsel %vm1668, %v2783, %v2817
    %v2819 = vsel %vm1670, %v2784, %v2818
    %v2820 = vsel %vm1672, %v2785, %v2819
    %v2821 = vsel %vm1674, %v2786, %v2820
    %v2822 = vsel %vm1676, %v2787, %v2821
    %v2823 = vsel %vm1678, %v2788, %v2822
    %v2824 = vsel %vm685, %v2816, 0
    %v2826 = vsel %vm685, %v2823, 0
    %2828 = vmatprep.subr.mxu0 0.0
    %2829 = vmatpush1.msra.mxu0 0.0
    %2830 = vmatprep.subr.mxu0 0.0
    %2831 = vmatpush1.msra.mxu0 0.0
    %2832 = vmatprep.subr.mxu0 0.0
    %2833 = vmatpush1.msra.mxu0 0.0
    %2834 = vmatprep.subr.mxu0 0.0
    %2835 = vmatpush1.msra.mxu0 0.0
    %2836 = vmatprep.subr.mxu0 0.0
    %2837 = vmatpush1.msra.mxu0 0.0
    %2838 = vmatprep.subr.mxu0 0.0
    %2839 = vmatpush1.msra.mxu0 0.0
    %2840 = vmatprep.subr.mxu0 0.0
    %2841 = vmatpush1.msra.mxu0 0.0
    %2842 = vmatprep.subr.mxu0 0.0
    %2843 = vmatpush1.msra.mxu0 0.0
    %2844 = vmatprep.subr.mxu0 0.0
    %2845 = vmatpush1.msra.mxu0 0.0
    %2846 = vmatprep.subr.mxu0 0.0
    %2847 = vmatpush1.msra.mxu0 0.0
    %2848 = vmatprep.subr.mxu0 0.0
    %2849 = vmatpush1.msra.mxu0 0.0
    %2850 = vmatprep.subr.mxu0 0.0
    %2851 = vmatpush1.msra.mxu0 0.0
    %2852 = vmatprep.subr.mxu0 0.0
    %2853 = vmatpush1.msra.mxu0 %v2793
    %2854 = vmatprep.subr.mxu0 0.0
    %2855 = vmatpush1.msra.mxu0 %v2792
    %2856 = vmatprep.subr.mxu0 0.0
    %2857 = vmatpush1.msra.mxu0 %v2791
    %2858 = vmatprep.subr.mxu0 0.0
    %2859 = vmatpush1.msra.mxu0 %v2790
    %2860 = vmatprep.subr.mxu0 0.0
    %2861 = vmatpush2.msra.mxu0 0.0
    %2862 = vmatprep.subr.mxu0 0.0
    %2863 = vmatpush2.msra.mxu0 0.0
    %2864 = vmatprep.subr.mxu0 0.0
    %2865 = vmatpush2.msra.mxu0 0.0
    %2866 = vmatprep.subr.mxu0 0.0
    %2867 = vmatpush2.msra.mxu0 0.0
    %2868 = vmatprep.subr.mxu0 0.0
    %2869 = vmatpush2.msra.mxu0 0.0
    %2870 = vmatprep.subr.mxu0 0.0
    %2871 = vmatpush2.msra.mxu0 0.0
    %2872 = vmatprep.subr.mxu0 0.0
    %2873 = vmatpush2.msra.mxu0 0.0
    %2874 = vmatprep.subr.mxu0 0.0
    %2875 = vmatpush2.msra.mxu0 0.0
    %2876 = vmatprep.subr.mxu0 0.0
    %2877 = vmatpush2.msra.mxu0 0.0
    %2878 = vmatprep.subr.mxu0 0.0
    %2879 = vmatpush2.msra.mxu0 0.0
    %2880 = vmatprep.subr.mxu0 0.0
    %2881 = vmatpush2.msra.mxu0 0.0
    %2882 = vmatprep.subr.mxu0 0.0
    %2883 = vmatpush2.msra.mxu0 0.0
    %2884 = vmatprep.subr.mxu0 0.0
    %2885 = vmatpush2.msra.mxu0 0.0
    %2886 = vmatprep.subr.mxu0 0.0
    %2887 = vmatpush2.msra.mxu0 0.0
    %2888 = vmatprep.subr.mxu0 0.0
    %2889 = vmatpush2.msra.mxu0 0.0
    %2890 = vmatprep.subr.mxu0 0.0
    %2891 = vmatpush2.msra.mxu0 0.0
    %2892 = vmatprep.mubr.f32.mxu0 0.0
    %2893 = vmatmul.mubr.f32.gmra.mxu0 %v2824
    %v2894 = vpop.f32.mrf.mxu0
    %v2895 = vadd.f32 0.0, %v2894
    %v2896 = vpop.f32.mrf.mxu0
    %2897 = vmatprep.mubr.f32.mxu0 0.0
    %2898 = vmatmul.mubr.f32.gmra.mxu0 %v2826
    %v2899 = vpop.f32.mrf.mxu0
    %v2900 = vadd.f32 0.0, %v2899
    %v2901 = vpop.f32.mrf.mxu0
    %2902 = vdwg.mxu0
    %2905 = vrot.lane.b32.xlu0 %v2895, 64
    %v2906 = vpop.permute.xlu0 %2905
    %2907 = vrot.lane.b32.xlu0 %v2900, 64
    %v2908 = vpop.permute.xlu0 %2907
    %v2911 = vadd.f32 %v1981, %v2906
    %v2912 = vadd.f32 %v1986, %v2908
    %v2913 = vlaneseq
    %v2914 = vshrl.u32 %v2913, 7
    %v2915 = vsub.s32 6, %v2914
    %v2916 = vrot.slane %v153, %v2915
    %2918 = vrot.lane.b32.xlu0 %v2916, 64
    %v2919 = vpop.permute.xlu0 %2918
    %v2921 = vadd.f32 %v2911, %v2919
    %v2922 = vadd.f32 %v2912, %v2919
    %v2923 = vmul.f32 %v2921, 0.5
    %v2924 = vmul.f32 %v2922, 0.5
    %v2925 = vtanh.pop %v2923
    %v2926 = vtanh.pop %v2924
    %v2927 = vadd.f32 %v2925, 1.0
    %v2928 = vadd.f32 %v2926, 1.0
    %v2929 = vmul.f32 %v2927, 0.5
    %v2930 = vmul.f32 %v2928, 0.5
    %v2931 = vmul.f32 %v2921, %v2929
    %v2932 = vmul.f32 %v2922, %v2930
    %s2933 = scalar_lea.vmem [#allocation6], 32
    %v2934 = vld [vmem:[%s2933] sm:$0xff]
    %v2935 = vld [vmem:[%s2933 + $0x8] sm:$0xff]
    %v2936 = vld [vmem:[%s2933 + $0x10] sm:$0xff]
    %v2937 = vld [vmem:[%s2933 + $0x18] sm:$0xff]
    %v2938 = vlaneseq
    %v2939 = vshrl.u32 %v2938, 7
    %v2940 = vsub.s32 7, %v2939
    %v2941 = vrot.slane %v153, %v2940
    %2944 = vrot.lane.b32.xlu0 %v2931, 64
    %v2945 = vpop.permute.xlu0 %2944
    %2946 = vrot.lane.b32.xlu0 %v2932, 64
    %v2947 = vpop.permute.xlu0 %2946
    %v2948 = vsel %vm685, %v2945, 0
    %v2950 = vsel %vm685, %v2947, 0
    %2952 = vmatprep.subr.mxu0 0.0
    %2953 = vmatpush1.msra.mxu0 0.0
    %2954 = vmatprep.subr.mxu0 0.0
    %2955 = vmatpush1.msra.mxu0 0.0
    %2956 = vmatprep.subr.mxu0 0.0
    %2957 = vmatpush1.msra.mxu0 0.0
    %2958 = vmatprep.subr.mxu0 0.0
    %2959 = vmatpush1.msra.mxu0 0.0
    %2960 = vmatprep.subr.mxu0 0.0
    %2961 = vmatpush1.msra.mxu0 0.0
    %2962 = vmatprep.subr.mxu0 0.0
    %2963 = vmatpush1.msra.mxu0 0.0
    %2964 = vmatprep.subr.mxu0 0.0
    %2965 = vmatpush1.msra.mxu0 0.0
    %2966 = vmatprep.subr.mxu0 0.0
    %2967 = vmatpush1.msra.mxu0 0.0
    %2968 = vmatprep.subr.mxu0 0.0
    %2969 = vmatpush1.msra.mxu0 0.0
    %2970 = vmatprep.subr.mxu0 0.0
    %2971 = vmatpush1.msra.mxu0 0.0
    %2972 = vmatprep.subr.mxu0 0.0
    %2973 = vmatpush1.msra.mxu0 0.0
    %2974 = vmatprep.subr.mxu0 0.0
    %2975 = vmatpush1.msra.mxu0 0.0
    %2976 = vmatprep.subr.mxu0 0.0
    %2977 = vmatpush1.msra.mxu0 %v2937
    %2978 = vmatprep.subr.mxu0 0.0
    %2979 = vmatpush1.msra.mxu0 %v2936
    %2980 = vmatprep.subr.mxu0 0.0
    %2981 = vmatpush1.msra.mxu0 %v2935
    %2982 = vmatprep.subr.mxu0 0.0
    %2983 = vmatpush1.msra.mxu0 %v2934
    %2984 = vmatprep.subr.mxu0 0.0
    %2985 = vmatpush2.msra.mxu0 0.0
    %2986 = vmatprep.subr.mxu0 0.0
    %2987 = vmatpush2.msra.mxu0 0.0
    %2988 = vmatprep.subr.mxu0 0.0
    %2989 = vmatpush2.msra.mxu0 0.0
    %2990 = vmatprep.subr.mxu0 0.0
    %2991 = vmatpush2.msra.mxu0 0.0
    %2992 = vmatprep.subr.mxu0 0.0
    %2993 = vmatpush2.msra.mxu0 0.0
    %2994 = vmatprep.subr.mxu0 0.0
    %2995 = vmatpush2.msra.mxu0 0.0
    %2996 = vmatprep.subr.mxu0 0.0
    %2997 = vmatpush2.msra.mxu0 0.0
    %2998 = vmatprep.subr.mxu0 0.0
    %2999 = vmatpush2.msra.mxu0 0.0
    %3000 = vmatprep.subr.mxu0 0.0
    %3001 = vmatpush2.msra.mxu0 0.0
    %3002 = vmatprep.subr.mxu0 0.0
    %3003 = vmatpush2.msra.mxu0 0.0
    %3004 = vmatprep.subr.mxu0 0.0
    %3005 = vmatpush2.msra.mxu0 0.0
    %3006 = vmatprep.subr.mxu0 0.0
    %3007 = vmatpush2.msra.mxu0 0.0
    %3008 = vmatprep.subr.mxu0 0.0
    %3009 = vmatpush2.msra.mxu0 0.0
    %3010 = vmatprep.subr.mxu0 0.0
    %3011 = vmatpush2.msra.mxu0 0.0
    %3012 = vmatprep.subr.mxu0 0.0
    %3013 = vmatpush2.msra.mxu0 0.0
    %3014 = vmatprep.subr.mxu0 0.0
    %3015 = vmatpush2.msra.mxu0 0.0
    %3016 = vmatprep.mubr.f32.mxu0 0.0
    %3017 = vmatmul.mubr.f32.gmra.mxu0 %v2948
    %v3018 = vpop.f32.mrf.mxu0
    %v3019 = vadd.f32 %v2941, %v3018
    %v3020 = vpop.f32.mrf.mxu0
    %3021 = vmatprep.mubr.f32.mxu0 0.0
    %3022 = vmatmul.mubr.f32.gmra.mxu0 %v2950
    %v3023 = vpop.f32.mrf.mxu0
    %v3024 = vadd.f32 %v2941, %v3023
    %v3025 = vpop.f32.mrf.mxu0
    %3026 = vdwg.mxu0
    %v3027 = vadd.f32 %v1901, %v3019
    %v3028 = vadd.f32 %v1902, %v3024
    %v3029 = vmul.f32 %v3027, %v1894
    %v3030 = vmul.f32 %v3028, %v1899
    %v3031 = vld [vmem:[#allocation7] sm:$0xff]
    %v3032 = vld [vmem:[#allocation7 + $0x8] sm:$0xff]
    %v3033 = vld [vmem:[#allocation7 + $0x10] sm:$0xff]
    %v3034 = vld [vmem:[#allocation7 + $0x18] sm:$0xff]
    %v3036 = vsel %vm685, %v3029, 0
    %v3039 = vsel %vm685, %v3030, 0
    %3041 = vmatprep.subr.mxu0 0.0
    %3042 = vmatpush1.msra.mxu0 0.0
    %3043 = vmatprep.subr.mxu0 0.0
    %3044 = vmatpush1.msra.mxu0 0.0
    %3045 = vmatprep.subr.mxu0 0.0
    %3046 = vmatpush1.msra.mxu0 0.0
    %3047 = vmatprep.subr.mxu0 0.0
    %3048 = vmatpush1.msra.mxu0 0.0
    %3049 = vmatprep.subr.mxu0 0.0
    %3050 = vmatpush1.msra.mxu0 0.0
    %3051 = vmatprep.subr.mxu0 0.0
    %3052 = vmatpush1.msra.mxu0 0.0
    %3053 = vmatprep.subr.mxu0 0.0
    %3054 = vmatpush1.msra.mxu0 0.0
    %3055 = vmatprep.subr.mxu0 0.0
    %3056 = vmatpush1.msra.mxu0 0.0
    %3057 = vmatprep.subr.mxu0 0.0
    %3058 = vmatpush1.msra.mxu0 0.0
    %3059 = vmatprep.subr.mxu0 0.0
    %3060 = vmatpush1.msra.mxu0 0.0
    %3061 = vmatprep.subr.mxu0 0.0
    %3062 = vmatpush1.msra.mxu0 0.0
    %3063 = vmatprep.subr.mxu0 0.0
    %3064 = vmatpush1.msra.mxu0 0.0
    %3065 = vmatprep.subr.mxu0 0.0
    %3066 = vmatpush1.msra.mxu0 %v3034
    %3067 = vmatprep.subr.mxu0 0.0
    %3068 = vmatpush1.msra.mxu0 %v3033
    %3069 = vmatprep.subr.mxu0 0.0
    %3070 = vmatpush1.msra.mxu0 %v3032
    %3071 = vmatprep.subr.mxu0 0.0
    %3072 = vmatpush1.msra.mxu0 %v3031
    %3073 = vmatprep.subr.mxu0 0.0
    %3074 = vmatpush2.msra.mxu0 0.0
    %3075 = vmatprep.subr.mxu0 0.0
    %3076 = vmatpush2.msra.mxu0 0.0
    %3077 = vmatprep.subr.mxu0 0.0
    %3078 = vmatpush2.msra.mxu0 0.0
    %3079 = vmatprep.subr.mxu0 0.0
    %3080 = vmatpush2.msra.mxu0 0.0
    %3081 = vmatprep.subr.mxu0 0.0
    %3082 = vmatpush2.msra.mxu0 0.0
    %3083 = vmatprep.subr.mxu0 0.0
    %3084 = vmatpush2.msra.mxu0 0.0
    %3085 = vmatprep.subr.mxu0 0.0
    %3086 = vmatpush2.msra.mxu0 0.0
    %3087 = vmatprep.subr.mxu0 0.0
    %3088 = vmatpush2.msra.mxu0 0.0
    %3089 = vmatprep.subr.mxu0 0.0
    %3090 = vmatpush2.msra.mxu0 0.0
    %3091 = vmatprep.subr.mxu0 0.0
    %3092 = vmatpush2.msra.mxu0 0.0
    %3093 = vmatprep.subr.mxu0 0.0
    %3094 = vmatpush2.msra.mxu0 0.0
    %3095 = vmatprep.subr.mxu0 0.0
    %3096 = vmatpush2.msra.mxu0 0.0
    %3097 = vmatprep.subr.mxu0 0.0
    %3098 = vmatpush2.msra.mxu0 0.0
    %3099 = vmatprep.subr.mxu0 0.0
    %3100 = vmatpush2.msra.mxu0 0.0
    %3101 = vmatprep.subr.mxu0 0.0
    %3102 = vmatpush2.msra.mxu0 0.0
    %3103 = vmatprep.subr.mxu0 0.0
    %3104 = vmatpush2.msra.mxu0 0.0
    %3105 = vmatprep.mubr.f32.mxu0 0.0
    %3106 = vmatmul.mubr.f32.gmra.mxu0 %v3036
    %v3107 = vpop.f32.mrf.mxu0
    %v3108 = vadd.f32 0.0, %v3107
    %v3109 = vpop.f32.mrf.mxu0
    %3110 = vmatprep.mubr.f32.mxu0 0.0
    %3111 = vmatmul.mubr.f32.gmra.mxu0 %v3039
    %v3112 = vpop.f32.mrf.mxu0
    %v3113 = vadd.f32 0.0, %v3112
    %v3114 = vpop.f32.mrf.mxu0
    %3115 = vdwg.mxu0
    %v3118 = vcombine.high %v3108, %v3108
    %v3120 = vunpack.c.l.s4 1966171168
    %v3121 = vunpack.c.0.s8 %v3120
    %v3122 = vlaneseq
    %v3123 = vshrl.u32 %v3122, 7
    %v3124 = vsub.s32 %v3121, %v3123
    %v3125 = vrot.slane %v3108, %v3124
    %v3127 = vunpack.c.l.s4 1966171168
    %v3128 = vunpack.c.0.s8 %v3127
    %v3129 = vlaneseq
    %v3130 = vshrl.u32 %v3129, 7
    %v3131 = vsub.s32 %v3128, %v3130
    %v3132 = vrot.slane %v3118, %v3131
    %v3133 = vcombine.high %v3125, %v3125
    %v3134 = vcombine.high %v3132, %v3132
    %v3136 = vunpack.c.l.s4 1966171168
    %v3137 = vunpack.c.0.s8 %v3136
    %v3138 = vlaneseq
    %v3139 = vshrl.u32 %v3138, 7
    %v3140 = vsub.s32 %v3137, %v3139
    %v3141 = vrot.slane %v3125, %v3140
    %v3143 = vunpack.c.l.s4 1966171168
    %v3144 = vunpack.c.0.s8 %v3143
    %v3145 = vlaneseq
    %v3146 = vshrl.u32 %v3145, 7
    %v3147 = vsub.s32 %v3144, %v3146
    %v3148 = vrot.slane %v3132, %v3147
    %v3150 = vunpack.c.l.s4 1966171168
    %v3151 = vunpack.c.0.s8 %v3150
    %v3152 = vlaneseq
    %v3153 = vshrl.u32 %v3152, 7
    %v3154 = vsub.s32 %v3151, %v3153
    %v3155 = vrot.slane %v3133, %v3154
    %v3157 = vunpack.c.l.s4 1966171168
    %v3158 = vunpack.c.0.s8 %v3157
    %v3159 = vlaneseq
    %v3160 = vshrl.u32 %v3159, 7
    %v3161 = vsub.s32 %v3158, %v3160
    %v3162 = vrot.slane %v3134, %v3161
    %v3163 = vcombine.high %v3141, %v3141
    %v3164 = vcombine.high %v3148, %v3148
    %v3165 = vcombine.high %v3155, %v3155
    %v3166 = vcombine.high %v3162, %v3162
    %v3167 = vcombine.high %v3113, %v3113
    %v3169 = vunpack.c.l.s4 1966171168
    %v3170 = vunpack.c.0.s8 %v3169
    %v3171 = vlaneseq
    %v3172 = vshrl.u32 %v3171, 7
    %v3173 = vsub.s32 %v3170, %v3172
    %v3174 = vrot.slane %v3113, %v3173
    %v3176 = vunpack.c.l.s4 1966171168
    %v3177 = vunpack.c.0.s8 %v3176
    %v3178 = vlaneseq
    %v3179 = vshrl.u32 %v3178, 7
    %v3180 = vsub.s32 %v3177, %v3179
    %v3181 = vrot.slane %v3167, %v3180
    %v3182 = vcombine.high %v3174, %v3174
    %v3183 = vcombine.high %v3181, %v3181
    %v3185 = vunpack.c.l.s4 1966171168
    %v3186 = vunpack.c.0.s8 %v3185
    %v3187 = vlaneseq
    %v3188 = vshrl.u32 %v3187, 7
    %v3189 = vsub.s32 %v3186, %v3188
    %v3190 = vrot.slane %v3174, %v3189
    %v3192 = vunpack.c.l.s4 1966171168
    %v3193 = vunpack.c.0.s8 %v3192
    %v3194 = vlaneseq
    %v3195 = vshrl.u32 %v3194, 7
    %v3196 = vsub.s32 %v3193, %v3195
    %v3197 = vrot.slane %v3181, %v3196
    %v3199 = vunpack.c.l.s4 1966171168
    %v3200 = vunpack.c.0.s8 %v3199
    %v3201 = vlaneseq
    %v3202 = vshrl.u32 %v3201, 7
    %v3203 = vsub.s32 %v3200, %v3202
    %v3204 = vrot.slane %v3182, %v3203
    %v3206 = vunpack.c.l.s4 1966171168
    %v3207 = vunpack.c.0.s8 %v3206
    %v3208 = vlaneseq
    %v3209 = vshrl.u32 %v3208, 7
    %v3210 = vsub.s32 %v3207, %v3209
    %v3211 = vrot.slane %v3183, %v3210
    %v3212 = vcombine.high %v3190, %v3190
    %v3213 = vcombine.high %v3197, %v3197
    %v3214 = vcombine.high %v3204, %v3204
    %v3215 = vcombine.high %v3211, %v3211
    %v3216 = vlaneseq
    %v3217 = vshrl.u32 %v3216, 7
    %v3218 = vsub.s32 0, %v3217
    %v3219 = vrot.slane %v3141, %v3218
    %v3220 = vlaneseq
    %v3221 = vshrl.u32 %v3220, 7
    %v3222 = vsub.s32 0, %v3221
    %v3223 = vrot.slane %v3155, %v3222
    %v3224 = vlaneseq
    %v3225 = vshrl.u32 %v3224, 7
    %v3226 = vsub.s32 0, %v3225
    %v3227 = vrot.slane %v3163, %v3226
    %v3228 = vlaneseq
    %v3229 = vshrl.u32 %v3228, 7
    %v3230 = vsub.s32 0, %v3229
    %v3231 = vrot.slane %v3165, %v3230
    %v3232 = vlaneseq
    %v3233 = vshrl.u32 %v3232, 7
    %v3234 = vsub.s32 0, %v3233
    %v3235 = vrot.slane %v3148, %v3234
    %v3236 = vlaneseq
    %v3237 = vshrl.u32 %v3236, 7
    %v3238 = vsub.s32 0, %v3237
    %v3239 = vrot.slane %v3162, %v3238
    %v3240 = vlaneseq
    %v3241 = vshrl.u32 %v3240, 7
    %v3242 = vsub.s32 0, %v3241
    %v3243 = vrot.slane %v3164, %v3242
    %v3244 = vlaneseq
    %v3245 = vshrl.u32 %v3244, 7
    %v3246 = vsub.s32 0, %v3245
    %v3247 = vrot.slane %v3166, %v3246
    %v3248 = vlaneseq
    %v3249 = vshrl.u32 %v3248, 7
    %v3250 = vsub.s32 0, %v3249
    %v3251 = vrot.slane %v3190, %v3250
    %v3252 = vlaneseq
    %v3253 = vshrl.u32 %v3252, 7
    %v3254 = vsub.s32 0, %v3253
    %v3255 = vrot.slane %v3204, %v3254
    %v3256 = vlaneseq
    %v3257 = vshrl.u32 %v3256, 7
    %v3258 = vsub.s32 0, %v3257
    %v3259 = vrot.slane %v3212, %v3258
    %v3260 = vlaneseq
    %v3261 = vshrl.u32 %v3260, 7
    %v3262 = vsub.s32 0, %v3261
    %v3263 = vrot.slane %v3214, %v3262
    %v3264 = vlaneseq
    %v3265 = vshrl.u32 %v3264, 7
    %v3266 = vsub.s32 0, %v3265
    %v3267 = vrot.slane %v3197, %v3266
    %v3268 = vlaneseq
    %v3269 = vshrl.u32 %v3268, 7
    %v3270 = vsub.s32 0, %v3269
    %v3271 = vrot.slane %v3211, %v3270
    %v3272 = vlaneseq
    %v3273 = vshrl.u32 %v3272, 7
    %v3274 = vsub.s32 0, %v3273
    %v3275 = vrot.slane %v3213, %v3274
    %v3276 = vlaneseq
    %v3277 = vshrl.u32 %v3276, 7
    %v3278 = vsub.s32 0, %v3277
    %v3279 = vrot.slane %v3215, %v3278
    %3296 = vrot.lane.b32.xlu0 %v3108, 96
    %v3297 = vpop.permute.xlu0 %3296
    %3298 = vrot.lane.b32.xlu0 %v3113, 96
    %v3299 = vpop.permute.xlu0 %3298
    %v3302 = vadd.f32 %v3219, %v3297
    %v3303 = vadd.f32 %v3223, %v3297
    %v3304 = vadd.f32 %v3227, %v3297
    %v3305 = vadd.f32 %v3231, %v3297
    %v3306 = vadd.f32 %v3235, %v3297
    %v3307 = vadd.f32 %v3239, %v3297
    %v3308 = vadd.f32 %v3243, %v3297
    %v3309 = vadd.f32 %v3247, %v3297
    %v3310 = vadd.f32 %v3251, %v3299
    %v3311 = vadd.f32 %v3255, %v3299
    %v3312 = vadd.f32 %v3259, %v3299
    %v3313 = vadd.f32 %v3263, %v3299
    %v3314 = vadd.f32 %v3267, %v3299
    %v3315 = vadd.f32 %v3271, %v3299
    %v3316 = vadd.f32 %v3275, %v3299
    %v3317 = vadd.f32 %v3279, %v3299
    %v3318 = vlaneseq
    %v3319 = vshrl.u32 %v3318, 7
    %v3320 = vsub.s32 4, %v3319
    %v3321 = vrot.slane %v155, %v3320
    %v3322 = vmul.f32 %v372, %v3321
    %v3323 = vmul.f32 %v375, %v3321
    %v3324 = vmul.f32 %v378, %v3321
    %v3325 = vmul.f32 %v381, %v3321
    %v3326 = vmul.f32 %v384, %v3321
    %v3327 = vmul.f32 %v387, %v3321
    %v3328 = vmul.f32 %v390, %v3321
    %v3329 = vmul.f32 %v393, %v3321
    %v3330 = vmul.f32 %v396, %v3321
    %v3331 = vmul.f32 %v399, %v3321
    %v3332 = vmul.f32 %v402, %v3321
    %v3333 = vmul.f32 %v405, %v3321
    %v3334 = vmul.f32 %v408, %v3321
    %v3335 = vmul.f32 %v411, %v3321
    %v3336 = vmul.f32 %v414, %v3321
    %v3337 = vmul.f32 %v417, %v3321
    %v3338 = vadd.f32 %v3302, %v3322
    %v3339 = vadd.f32 %v3303, %v3323
    %v3340 = vadd.f32 %v3304, %v3324
    %v3341 = vadd.f32 %v3305, %v3325
    %v3342 = vadd.f32 %v3306, %v3326
    %v3343 = vadd.f32 %v3307, %v3327
    %v3344 = vadd.f32 %v3308, %v3328
    %v3345 = vadd.f32 %v3309, %v3329
    %v3346 = vadd.f32 %v3310, %v3330
    %v3347 = vadd.f32 %v3311, %v3331
    %v3348 = vadd.f32 %v3312, %v3332
    %v3349 = vadd.f32 %v3313, %v3333
    %v3350 = vadd.f32 %v3314, %v3334
    %v3351 = vadd.f32 %v3315, %v3335
    %v3352 = vadd.f32 %v3316, %v3336
    %v3353 = vadd.f32 %v3317, %v3337
    %v3354 = vlaneseq
    %v3355 = vshrl.u32 %v3354, 7
    %v3356 = vsub.s32 5, %v3355
    %v3357 = vrot.slane %v155, %v3356
    %v3358 = vmul.f32 %v372, %v3357
    %v3359 = vmul.f32 %v375, %v3357
    %v3360 = vmul.f32 %v378, %v3357
    %v3361 = vmul.f32 %v381, %v3357
    %v3362 = vmul.f32 %v384, %v3357
    %v3363 = vmul.f32 %v387, %v3357
    %v3364 = vmul.f32 %v390, %v3357
    %v3365 = vmul.f32 %v393, %v3357
    %v3366 = vmul.f32 %v396, %v3357
    %v3367 = vmul.f32 %v399, %v3357
    %v3368 = vmul.f32 %v402, %v3357
    %v3369 = vmul.f32 %v405, %v3357
    %v3370 = vmul.f32 %v408, %v3357
    %v3371 = vmul.f32 %v411, %v3357
    %v3372 = vmul.f32 %v414, %v3357
    %v3373 = vmul.f32 %v417, %v3357
    %v3374 = vadd.f32 %v3338, %v3358
    %v3375 = vadd.f32 %v3339, %v3359
    %v3376 = vadd.f32 %v3340, %v3360
    %v3377 = vadd.f32 %v3341, %v3361
    %v3378 = vadd.f32 %v3342, %v3362
    %v3379 = vadd.f32 %v3343, %v3363
    %v3380 = vadd.f32 %v3344, %v3364
    %v3381 = vadd.f32 %v3345, %v3365
    %v3382 = vadd.f32 %v3346, %v3366
    %v3383 = vadd.f32 %v3347, %v3367
    %v3384 = vadd.f32 %v3348, %v3368
    %v3385 = vadd.f32 %v3349, %v3369
    %v3386 = vadd.f32 %v3350, %v3370
    %v3387 = vadd.f32 %v3351, %v3371
    %v3388 = vadd.f32 %v3352, %v3372
    %v3389 = vadd.f32 %v3353, %v3373
    %v3390 = vlaneseq
    %v3391 = vshrl.u32 %v3390, 7
    %v3392 = vsub.s32 6, %v3391
    %v3393 = vrot.slane %v155, %v3392
    %v3394 = vadd.f32 %v3374, %v3393
    %v3395 = vadd.f32 %v3375, %v3393
    %v3396 = vadd.f32 %v3376, %v3393
    %v3397 = vadd.f32 %v3377, %v3393
    %v3398 = vadd.f32 %v3378, %v3393
    %v3399 = vadd.f32 %v3379, %v3393
    %v3400 = vadd.f32 %v3380, %v3393
    %v3401 = vadd.f32 %v3381, %v3393
    %v3402 = vadd.f32 %v3382, %v3393
    %v3403 = vadd.f32 %v3383, %v3393
    %v3404 = vadd.f32 %v3384, %v3393
    %v3405 = vadd.f32 %v3385, %v3393
    %v3406 = vadd.f32 %v3386, %v3393
    %v3407 = vadd.f32 %v3387, %v3393
    %v3408 = vadd.f32 %v3388, %v3393
    %v3409 = vadd.f32 %v3389, %v3393
    %v3410 = vmul.f32 %v3394, 0.5
    %v3411 = vmul.f32 %v3395, 0.5
    %v3412 = vmul.f32 %v3396, 0.5
    %v3413 = vmul.f32 %v3397, 0.5
    %v3414 = vmul.f32 %v3398, 0.5
    %v3415 = vmul.f32 %v3399, 0.5
    %v3416 = vmul.f32 %v3400, 0.5
    %v3417 = vmul.f32 %v3401, 0.5
    %v3418 = vmul.f32 %v3402, 0.5
    %v3419 = vmul.f32 %v3403, 0.5
    %v3420 = vmul.f32 %v3404, 0.5
    %v3421 = vmul.f32 %v3405, 0.5
    %v3422 = vmul.f32 %v3406, 0.5
    %v3423 = vmul.f32 %v3407, 0.5
    %v3424 = vmul.f32 %v3408, 0.5
    %v3425 = vmul.f32 %v3409, 0.5
    %v3426 = vtanh.pop %v3410
    %v3427 = vtanh.pop %v3411
    %v3428 = vtanh.pop %v3412
    %v3429 = vtanh.pop %v3413
    %v3430 = vtanh.pop %v3414
    %v3431 = vtanh.pop %v3415
    %v3432 = vtanh.pop %v3416
    %v3433 = vtanh.pop %v3417
    %v3434 = vtanh.pop %v3418
    %v3435 = vtanh.pop %v3419
    %v3436 = vtanh.pop %v3420
    %v3437 = vtanh.pop %v3421
    %v3438 = vtanh.pop %v3422
    %v3439 = vtanh.pop %v3423
    %v3440 = vtanh.pop %v3424
    %v3441 = vtanh.pop %v3425
    %v3442 = vadd.f32 %v3426, 1.0
    %v3443 = vadd.f32 %v3427, 1.0
    %v3444 = vadd.f32 %v3428, 1.0
    %v3445 = vadd.f32 %v3429, 1.0
    %v3446 = vadd.f32 %v3430, 1.0
    %v3447 = vadd.f32 %v3431, 1.0
    %v3448 = vadd.f32 %v3432, 1.0
    %v3449 = vadd.f32 %v3433, 1.0
    %v3450 = vadd.f32 %v3434, 1.0
    %v3451 = vadd.f32 %v3435, 1.0
    %v3452 = vadd.f32 %v3436, 1.0
    %v3453 = vadd.f32 %v3437, 1.0
    %v3454 = vadd.f32 %v3438, 1.0
    %v3455 = vadd.f32 %v3439, 1.0
    %v3456 = vadd.f32 %v3440, 1.0
    %v3457 = vadd.f32 %v3441, 1.0
    %v3458 = vmul.f32 %v3442, 0.5
    %v3459 = vmul.f32 %v3443, 0.5
    %v3460 = vmul.f32 %v3444, 0.5
    %v3461 = vmul.f32 %v3445, 0.5
    %v3462 = vmul.f32 %v3446, 0.5
    %v3463 = vmul.f32 %v3447, 0.5
    %v3464 = vmul.f32 %v3448, 0.5
    %v3465 = vmul.f32 %v3449, 0.5
    %v3466 = vmul.f32 %v3450, 0.5
    %v3467 = vmul.f32 %v3451, 0.5
    %v3468 = vmul.f32 %v3452, 0.5
    %v3469 = vmul.f32 %v3453, 0.5
    %v3470 = vmul.f32 %v3454, 0.5
    %v3471 = vmul.f32 %v3455, 0.5
    %v3472 = vmul.f32 %v3456, 0.5
    %v3473 = vmul.f32 %v3457, 0.5
    %v3474 = vmul.f32 %v3394, %v3458
    %v3475 = vmul.f32 %v3395, %v3459
    %v3476 = vmul.f32 %v3396, %v3460
    %v3477 = vmul.f32 %v3397, %v3461
    %v3478 = vmul.f32 %v3398, %v3462
    %v3479 = vmul.f32 %v3399, %v3463
    %v3480 = vmul.f32 %v3400, %v3464
    %v3481 = vmul.f32 %v3401, %v3465
    %v3482 = vmul.f32 %v3402, %v3466
    %v3483 = vmul.f32 %v3403, %v3467
    %v3484 = vmul.f32 %v3404, %v3468
    %v3485 = vmul.f32 %v3405, %v3469
    %v3486 = vmul.f32 %v3406, %v3470
    %v3487 = vmul.f32 %v3407, %v3471
    %v3488 = vmul.f32 %v3408, %v3472
    %v3489 = vmul.f32 %v3409, %v3473
    %v3490 = vld [vmem:[%s10] sm:$0xff]
    %v3491 = vld [vmem:[%s10 + $0x8] sm:$0xff]
    %v3492 = vld [vmem:[%s10 + $0x10] sm:$0xff]
    %v3493 = vld [vmem:[%s10 + $0x18] sm:$0xff]
    %v3494 = vlaneseq
    %v3495 = vshrl.u32 %v3494, 7
    %v3496 = vsub.s32 7, %v3495
    %v3497 = vrot.slane %v155, %v3496
    %v3499 = vsel %vm685, %v3474, 0
    %v3502 = vsel %vm685, %v3475, 0
    %v3505 = vsel %vm685, %v3476, 0
    %v3508 = vsel %vm685, %v3477, 0
    %v3511 = vsel %vm685, %v3478, 0
    %v3514 = vsel %vm685, %v3479, 0
    %v3517 = vsel %vm685, %v3480, 0
    %v3520 = vsel %vm685, %v3481, 0
    %v3523 = vsel %vm685, %v3482, 0
    %v3526 = vsel %vm685, %v3483, 0
    %v3529 = vsel %vm685, %v3484, 0
    %v3532 = vsel %vm685, %v3485, 0
    %v3535 = vsel %vm685, %v3486, 0
    %v3538 = vsel %vm685, %v3487, 0
    %v3541 = vsel %vm685, %v3488, 0
    %v3544 = vsel %vm685, %v3489, 0
    %3546 = vmatprep.subr.mxu0 0.0
    %3547 = vmatpush1.msra.mxu0 0.0
    %3548 = vmatprep.subr.mxu0 0.0
    %3549 = vmatpush1.msra.mxu0 0.0
    %3550 = vmatprep.subr.mxu0 0.0
    %3551 = vmatpush1.msra.mxu0 0.0
    %3552 = vmatprep.subr.mxu0 0.0
    %3553 = vmatpush1.msra.mxu0 0.0
    %3554 = vmatprep.subr.mxu0 0.0
    %3555 = vmatpush1.msra.mxu0 0.0
    %3556 = vmatprep.subr.mxu0 0.0
    %3557 = vmatpush1.msra.mxu0 0.0
    %3558 = vmatprep.subr.mxu0 0.0
    %3559 = vmatpush1.msra.mxu0 0.0
    %3560 = vmatprep.subr.mxu0 0.0
    %3561 = vmatpush1.msra.mxu0 0.0
    %3562 = vmatprep.subr.mxu0 0.0
    %3563 = vmatpush1.msra.mxu0 0.0
    %3564 = vmatprep.subr.mxu0 0.0
    %3565 = vmatpush1.msra.mxu0 0.0
    %3566 = vmatprep.subr.mxu0 0.0
    %3567 = vmatpush1.msra.mxu0 0.0
    %3568 = vmatprep.subr.mxu0 0.0
    %3569 = vmatpush1.msra.mxu0 0.0
    %3570 = vmatprep.subr.mxu0 0.0
    %3571 = vmatpush1.msra.mxu0 %v3493
    %3572 = vmatprep.subr.mxu0 0.0
    %3573 = vmatpush1.msra.mxu0 %v3492
    %3574 = vmatprep.subr.mxu0 0.0
    %3575 = vmatpush1.msra.mxu0 %v3491
    %3576 = vmatprep.subr.mxu0 0.0
    %3577 = vmatpush1.msra.mxu0 %v3490
    %3578 = vmatprep.subr.mxu0 0.0
    %3579 = vmatpush2.msra.mxu0 0.0
    %3580 = vmatprep.subr.mxu0 0.0
    %3581 = vmatpush2.msra.mxu0 0.0
    %3582 = vmatprep.subr.mxu0 0.0
    %3583 = vmatpush2.msra.mxu0 0.0
    %3584 = vmatprep.subr.mxu0 0.0
    %3585 = vmatpush2.msra.mxu0 0.0
    %3586 = vmatprep.subr.mxu0 0.0
    %3587 = vmatpush2.msra.mxu0 0.0
    %3588 = vmatprep.subr.mxu0 0.0
    %3589 = vmatpush2.msra.mxu0 0.0
    %3590 = vmatprep.subr.mxu0 0.0
    %3591 = vmatpush2.msra.mxu0 0.0
    %3592 = vmatprep.subr.mxu0 0.0
    %3593 = vmatpush2.msra.mxu0 0.0
    %3594 = vmatprep.subr.mxu0 0.0
    %3595 = vmatpush2.msra.mxu0 0.0
    %3596 = vmatprep.subr.mxu0 0.0
    %3597 = vmatpush2.msra.mxu0 0.0
    %3598 = vmatprep.subr.mxu0 0.0
    %3599 = vmatpush2.msra.mxu0 0.0
    %3600 = vmatprep.subr.mxu0 0.0
    %3601 = vmatpush2.msra.mxu0 0.0
    %3602 = vmatprep.subr.mxu0 0.0
    %3603 = vmatpush2.msra.mxu0 0.0
    %3604 = vmatprep.subr.mxu0 0.0
    %3605 = vmatpush2.msra.mxu0 0.0
    %3606 = vmatprep.subr.mxu0 0.0
    %3607 = vmatpush2.msra.mxu0 0.0
    %3608 = vmatprep.subr.mxu0 0.0
    %3609 = vmatpush2.msra.mxu0 0.0
    %3610 = vmatprep.mubr.f32.mxu0 0.0
    %3611 = vmatmul.mubr.f32.gmra.mxu0 %v3499
    %v3612 = vpop.f32.mrf.mxu0
    %v3613 = vadd.f32 %v3497, %v3612
    %v3614 = vpop.f32.mrf.mxu0
    %3615 = vmatprep.mubr.f32.mxu0 0.0
    %3616 = vmatmul.mubr.f32.gmra.mxu0 %v3502
    %v3617 = vpop.f32.mrf.mxu0
    %v3618 = vadd.f32 %v3497, %v3617
    %v3619 = vpop.f32.mrf.mxu0
    %3620 = vmatprep.mubr.f32.mxu0 0.0
    %3621 = vmatmul.mubr.f32.gmra.mxu0 %v3505
    %v3622 = vpop.f32.mrf.mxu0
    %v3623 = vadd.f32 %v3497, %v3622
    %v3624 = vpop.f32.mrf.mxu0
    %3625 = vmatprep.mubr.f32.mxu0 0.0
    %3626 = vmatmul.mubr.f32.gmra.mxu0 %v3508
    %v3627 = vpop.f32.mrf.mxu0
    %v3628 = vadd.f32 %v3497, %v3627
    %v3629 = vpop.f32.mrf.mxu0
    %3630 = vmatprep.mubr.f32.mxu0 0.0
    %3631 = vmatmul.mubr.f32.gmra.mxu0 %v3511
    %v3632 = vpop.f32.mrf.mxu0
    %v3633 = vadd.f32 %v3497, %v3632
    %v3634 = vpop.f32.mrf.mxu0
    %3635 = vmatprep.mubr.f32.mxu0 0.0
    %3636 = vmatmul.mubr.f32.gmra.mxu0 %v3514
    %v3637 = vpop.f32.mrf.mxu0
    %v3638 = vadd.f32 %v3497, %v3637
    %v3639 = vpop.f32.mrf.mxu0
    %3640 = vmatprep.mubr.f32.mxu0 0.0
    %3641 = vmatmul.mubr.f32.gmra.mxu0 %v3517
    %v3642 = vpop.f32.mrf.mxu0
    %v3643 = vadd.f32 %v3497, %v3642
    %v3644 = vpop.f32.mrf.mxu0
    %3645 = vmatprep.mubr.f32.mxu0 0.0
    %3646 = vmatmul.mubr.f32.gmra.mxu0 %v3520
    %v3647 = vpop.f32.mrf.mxu0
    %v3648 = vadd.f32 %v3497, %v3647
    %v3649 = vpop.f32.mrf.mxu0
    %3650 = vmatprep.mubr.f32.mxu0 0.0
    %3651 = vmatmul.mubr.f32.gmra.mxu0 %v3523
    %v3652 = vpop.f32.mrf.mxu0
    %v3653 = vadd.f32 %v3497, %v3652
    %v3654 = vpop.f32.mrf.mxu0
    %3655 = vmatprep.mubr.f32.mxu0 0.0
    %3656 = vmatmul.mubr.f32.gmra.mxu0 %v3526
    %v3657 = vpop.f32.mrf.mxu0
    %v3658 = vadd.f32 %v3497, %v3657
    %v3659 = vpop.f32.mrf.mxu0
    %3660 = vmatprep.mubr.f32.mxu0 0.0
    %3661 = vmatmul.mubr.f32.gmra.mxu0 %v3529
    %v3662 = vpop.f32.mrf.mxu0
    %v3663 = vadd.f32 %v3497, %v3662
    %v3664 = vpop.f32.mrf.mxu0
    %3665 = vmatprep.mubr.f32.mxu0 0.0
    %3666 = vmatmul.mubr.f32.gmra.mxu0 %v3532
    %v3667 = vpop.f32.mrf.mxu0
    %v3668 = vadd.f32 %v3497, %v3667
    %v3669 = vpop.f32.mrf.mxu0
    %3670 = vmatprep.mubr.f32.mxu0 0.0
    %3671 = vmatmul.mubr.f32.gmra.mxu0 %v3535
    %v3672 = vpop.f32.mrf.mxu0
    %v3673 = vadd.f32 %v3497, %v3672
    %v3674 = vpop.f32.mrf.mxu0
    %3675 = vmatprep.mubr.f32.mxu0 0.0
    %3676 = vmatmul.mubr.f32.gmra.mxu0 %v3538
    %v3677 = vpop.f32.mrf.mxu0
    %v3678 = vadd.f32 %v3497, %v3677
    %v3679 = vpop.f32.mrf.mxu0
    %3680 = vmatprep.mubr.f32.mxu0 0.0
    %3681 = vmatmul.mubr.f32.gmra.mxu0 %v3541
    %v3682 = vpop.f32.mrf.mxu0
    %v3683 = vadd.f32 %v3497, %v3682
    %v3684 = vpop.f32.mrf.mxu0
    %3685 = vmatprep.mubr.f32.mxu0 0.0
    %3686 = vmatmul.mubr.f32.gmra.mxu0 %v3544
    %v3687 = vpop.f32.mrf.mxu0
    %v3688 = vadd.f32 %v3497, %v3687
    %v3689 = vpop.f32.mrf.mxu0
    %3690 = vdwg.mxu0
    %v3691 = vmul.f32 %v3613, 0.5
    %v3692 = vmul.f32 %v3618, 0.5
    %v3693 = vmul.f32 %v3623, 0.5
    %v3694 = vmul.f32 %v3628, 0.5
    %v3695 = vmul.f32 %v3633, 0.5
    %v3696 = vmul.f32 %v3638, 0.5
    %v3697 = vmul.f32 %v3643, 0.5
    %v3698 = vmul.f32 %v3648, 0.5
    %v3699 = vmul.f32 %v3653, 0.5
    %v3700 = vmul.f32 %v3658, 0.5
    %v3701 = vmul.f32 %v3663, 0.5
    %v3702 = vmul.f32 %v3668, 0.5
    %v3703 = vmul.f32 %v3673, 0.5
    %v3704 = vmul.f32 %v3678, 0.5
    %v3705 = vmul.f32 %v3683, 0.5
    %v3706 = vmul.f32 %v3688, 0.5
    %v3707 = vtanh.pop %v3691
    %v3708 = vtanh.pop %v3692
    %v3709 = vtanh.pop %v3693
    %v3710 = vtanh.pop %v3694
    %v3711 = vtanh.pop %v3695
    %v3712 = vtanh.pop %v3696
    %v3713 = vtanh.pop %v3697
    %v3714 = vtanh.pop %v3698
    %v3715 = vtanh.pop %v3699
    %v3716 = vtanh.pop %v3700
    %v3717 = vtanh.pop %v3701
    %v3718 = vtanh.pop %v3702
    %v3719 = vtanh.pop %v3703
    %v3720 = vtanh.pop %v3704
    %v3721 = vtanh.pop %v3705
    %v3722 = vtanh.pop %v3706
    %v3723 = vadd.f32 %v3707, 1.0
    %v3724 = vadd.f32 %v3708, 1.0
    %v3725 = vadd.f32 %v3709, 1.0
    %v3726 = vadd.f32 %v3710, 1.0
    %v3727 = vadd.f32 %v3711, 1.0
    %v3728 = vadd.f32 %v3712, 1.0
    %v3729 = vadd.f32 %v3713, 1.0
    %v3730 = vadd.f32 %v3714, 1.0
    %v3731 = vadd.f32 %v3715, 1.0
    %v3732 = vadd.f32 %v3716, 1.0
    %v3733 = vadd.f32 %v3717, 1.0
    %v3734 = vadd.f32 %v3718, 1.0
    %v3735 = vadd.f32 %v3719, 1.0
    %v3736 = vadd.f32 %v3720, 1.0
    %v3737 = vadd.f32 %v3721, 1.0
    %v3738 = vadd.f32 %v3722, 1.0
    %v3739 = vmul.f32 %v3723, 0.5
    %v3740 = vmul.f32 %v3724, 0.5
    %v3741 = vmul.f32 %v3725, 0.5
    %v3742 = vmul.f32 %v3726, 0.5
    %v3743 = vmul.f32 %v3727, 0.5
    %v3744 = vmul.f32 %v3728, 0.5
    %v3745 = vmul.f32 %v3729, 0.5
    %v3746 = vmul.f32 %v3730, 0.5
    %v3747 = vmul.f32 %v3731, 0.5
    %v3748 = vmul.f32 %v3732, 0.5
    %v3749 = vmul.f32 %v3733, 0.5
    %v3750 = vmul.f32 %v3734, 0.5
    %v3751 = vmul.f32 %v3735, 0.5
    %v3752 = vmul.f32 %v3736, 0.5
    %v3753 = vmul.f32 %v3737, 0.5
    %v3754 = vmul.f32 %v3738, 0.5
    %v3755 = vmul.f32 %v3613, %v3739
    %v3756 = vmul.f32 %v3618, %v3740
    %v3757 = vmul.f32 %v3623, %v3741
    %v3758 = vmul.f32 %v3628, %v3742
    %v3759 = vmul.f32 %v3633, %v3743
    %v3760 = vmul.f32 %v3638, %v3744
    %v3761 = vmul.f32 %v3643, %v3745
    %v3762 = vmul.f32 %v3648, %v3746
    %v3763 = vmul.f32 %v3653, %v3747
    %v3764 = vmul.f32 %v3658, %v3748
    %v3765 = vmul.f32 %v3663, %v3749
    %v3766 = vmul.f32 %v3668, %v3750
    %v3767 = vmul.f32 %v3673, %v3751
    %v3768 = vmul.f32 %v3678, %v3752
    %v3769 = vmul.f32 %v3683, %v3753
    %v3770 = vmul.f32 %v3688, %v3754
    %v3771 = vlaneseq
    %v3772 = vshrl.u32 %v3771, 7
    %v3773 = vsub.s32 0, %v3772
    %v3774 = vrot.slane %v156, %v3773
    %v3775 = vmul.f32 %v3755, %v3774
    %v3776 = vmul.f32 %v3756, %v3774
    %v3777 = vmul.f32 %v3757, %v3774
    %v3778 = vmul.f32 %v3758, %v3774
    %v3779 = vmul.f32 %v3759, %v3774
    %v3780 = vmul.f32 %v3760, %v3774
    %v3781 = vmul.f32 %v3761, %v3774
    %v3782 = vmul.f32 %v3762, %v3774
    %v3783 = vmul.f32 %v3763, %v3774
    %v3784 = vmul.f32 %v3764, %v3774
    %v3785 = vmul.f32 %v3765, %v3774
    %v3786 = vmul.f32 %v3766, %v3774
    %v3787 = vmul.f32 %v3767, %v3774
    %v3788 = vmul.f32 %v3768, %v3774
    %v3789 = vmul.f32 %v3769, %v3774
    %v3790 = vmul.f32 %v3770, %v3774
    %v3791 = vsel %vm685, %v3775, 0.0
    %3792 = vadd.xlane.f32.xlu0 %v3791
    %v3793 = vpop.xlane.xlu0 %3792
    %v3794 = vsel %vm685, %v3776, 0.0
    %3795 = vadd.xlane.f32.xlu0 %v3794
    %v3796 = vpop.xlane.xlu0 %3795
    %v3797 = vsel %vm685, %v3777, 0.0
    %3798 = vadd.xlane.f32.xlu0 %v3797
    %v3799 = vpop.xlane.xlu0 %3798
    %v3800 = vsel %vm685, %v3778, 0.0
    %3801 = vadd.xlane.f32.xlu0 %v3800
    %v3802 = vpop.xlane.xlu0 %3801
    %v3803 = vsel %vm685, %v3779, 0.0
    %3804 = vadd.xlane.f32.xlu0 %v3803
    %v3805 = vpop.xlane.xlu0 %3804
    %v3806 = vsel %vm685, %v3780, 0.0
    %3807 = vadd.xlane.f32.xlu0 %v3806
    %v3808 = vpop.xlane.xlu0 %3807
    %v3809 = vsel %vm685, %v3781, 0.0
    %3810 = vadd.xlane.f32.xlu0 %v3809
    %v3811 = vpop.xlane.xlu0 %3810
    %v3812 = vsel %vm685, %v3782, 0.0
    %3813 = vadd.xlane.f32.xlu0 %v3812
    %v3814 = vpop.xlane.xlu0 %3813
    %v3815 = vsel %vm685, %v3783, 0.0
    %3816 = vadd.xlane.f32.xlu0 %v3815
    %v3817 = vpop.xlane.xlu0 %3816
    %v3818 = vsel %vm685, %v3784, 0.0
    %3819 = vadd.xlane.f32.xlu0 %v3818
    %v3820 = vpop.xlane.xlu0 %3819
    %v3821 = vsel %vm685, %v3785, 0.0
    %3822 = vadd.xlane.f32.xlu0 %v3821
    %v3823 = vpop.xlane.xlu0 %3822
    %v3824 = vsel %vm685, %v3786, 0.0
    %3825 = vadd.xlane.f32.xlu0 %v3824
    %v3826 = vpop.xlane.xlu0 %3825
    %v3827 = vsel %vm685, %v3787, 0.0
    %3828 = vadd.xlane.f32.xlu0 %v3827
    %v3829 = vpop.xlane.xlu0 %3828
    %v3830 = vsel %vm685, %v3788, 0.0
    %3831 = vadd.xlane.f32.xlu0 %v3830
    %v3832 = vpop.xlane.xlu0 %3831
    %v3833 = vsel %vm685, %v3789, 0.0
    %3834 = vadd.xlane.f32.xlu0 %v3833
    %v3835 = vpop.xlane.xlu0 %3834
    %v3836 = vsel %vm685, %v3790, 0.0
    %3837 = vadd.xlane.f32.xlu0 %v3836
    %v3838 = vpop.xlane.xlu0 %3837
    %v3839 = vmul.f32 %v650, %v3793
    %v3840 = vmul.f32 %v652, %v3796
    %v3841 = vmul.f32 %v654, %v3799
    %v3842 = vmul.f32 %v656, %v3802
    %v3843 = vmul.f32 %v658, %v3805
    %v3844 = vmul.f32 %v660, %v3808
    %v3845 = vmul.f32 %v662, %v3811
    %v3846 = vmul.f32 %v664, %v3814
    %v3847 = vmul.f32 %v666, %v3817
    %v3848 = vmul.f32 %v668, %v3820
    %v3849 = vmul.f32 %v670, %v3823
    %v3850 = vmul.f32 %v672, %v3826
    %v3851 = vmul.f32 %v674, %v3829
    %v3852 = vmul.f32 %v676, %v3832
    %v3853 = vmul.f32 %v678, %v3835
    %v3854 = vmul.f32 %v680, %v3838
    %v3855 = vmul.f32 %v3839, %v1425
    %v3856 = vmul.f32 %v3840, %v1430
    %v3857 = vmul.f32 %v3841, %v1435
    %v3858 = vmul.f32 %v3842, %v1440
    %v3859 = vmul.f32 %v3843, %v1445
    %v3860 = vmul.f32 %v3844, %v1450
    %v3861 = vmul.f32 %v3845, %v1455
    %v3862 = vmul.f32 %v3846, %v1460
    %v3863 = vmul.f32 %v3847, %v1465
    %v3864 = vmul.f32 %v3848, %v1470
    %v3865 = vmul.f32 %v3849, %v1475
    %v3866 = vmul.f32 %v3850, %v1480
    %v3867 = vmul.f32 %v3851, %v1485
    %v3868 = vmul.f32 %v3852, %v1490
    %v3869 = vmul.f32 %v3853, %v1495
    %v3870 = vmul.f32 %v3854, %v1500
    %v3871 = vsel %vm369, %v3855, 0.0
    %v3872 = vrot.slane %v3871, 4
    %v3873 = vadd.f32 %v3871, %v3872
    %v3874 = vrot.slane %v3873, 2
    %v3875 = vadd.f32 %v3873, %v3874
    %v3876 = vrot.slane %v3875, 1
    %v3877 = vadd.f32 %v3875, %v3876
    %v3878 = vsel %vm369, %v3856, 0.0
    %v3879 = vrot.slane %v3878, 4
    %v3880 = vadd.f32 %v3878, %v3879
    %v3881 = vrot.slane %v3880, 2
    %v3882 = vadd.f32 %v3880, %v3881
    %v3883 = vrot.slane %v3882, 1
    %v3884 = vadd.f32 %v3882, %v3883
    %v3885 = vsel %vm369, %v3857, 0.0
    %v3886 = vrot.slane %v3885, 4
    %v3887 = vadd.f32 %v3885, %v3886
    %v3888 = vrot.slane %v3887, 2
    %v3889 = vadd.f32 %v3887, %v3888
    %v3890 = vrot.slane %v3889, 1
    %v3891 = vadd.f32 %v3889, %v3890
    %v3892 = vsel %vm369, %v3858, 0.0
    %v3893 = vrot.slane %v3892, 4
    %v3894 = vadd.f32 %v3892, %v3893
    %v3895 = vrot.slane %v3894, 2
    %v3896 = vadd.f32 %v3894, %v3895
    %v3897 = vrot.slane %v3896, 1
    %v3898 = vadd.f32 %v3896, %v3897
    %v3899 = vsel %vm369, %v3859, 0.0
    %v3900 = vrot.slane %v3899, 4
    %v3901 = vadd.f32 %v3899, %v3900
    %v3902 = vrot.slane %v3901, 2
    %v3903 = vadd.f32 %v3901, %v3902
    %v3904 = vrot.slane %v3903, 1
    %v3905 = vadd.f32 %v3903, %v3904
    %v3906 = vsel %vm369, %v3860, 0.0
    %v3907 = vrot.slane %v3906, 4
    %v3908 = vadd.f32 %v3906, %v3907
    %v3909 = vrot.slane %v3908, 2
    %v3910 = vadd.f32 %v3908, %v3909
    %v3911 = vrot.slane %v3910, 1
    %v3912 = vadd.f32 %v3910, %v3911
    %v3913 = vsel %vm369, %v3861, 0.0
    %v3914 = vrot.slane %v3913, 4
    %v3915 = vadd.f32 %v3913, %v3914
    %v3916 = vrot.slane %v3915, 2
    %v3917 = vadd.f32 %v3915, %v3916
    %v3918 = vrot.slane %v3917, 1
    %v3919 = vadd.f32 %v3917, %v3918
    %v3920 = vsel %vm369, %v3862, 0.0
    %v3921 = vrot.slane %v3920, 4
    %v3922 = vadd.f32 %v3920, %v3921
    %v3923 = vrot.slane %v3922, 2
    %v3924 = vadd.f32 %v3922, %v3923
    %v3925 = vrot.slane %v3924, 1
    %v3926 = vadd.f32 %v3924, %v3925
    %v3927 = vsel %vm369, %v3863, 0.0
    %v3928 = vrot.slane %v3927, 4
    %v3929 = vadd.f32 %v3927, %v3928
    %v3930 = vrot.slane %v3929, 2
    %v3931 = vadd.f32 %v3929, %v3930
    %v3932 = vrot.slane %v3931, 1
    %v3933 = vadd.f32 %v3931, %v3932
    %v3934 = vsel %vm369, %v3864, 0.0
    %v3935 = vrot.slane %v3934, 4
    %v3936 = vadd.f32 %v3934, %v3935
    %v3937 = vrot.slane %v3936, 2
    %v3938 = vadd.f32 %v3936, %v3937
    %v3939 = vrot.slane %v3938, 1
    %v3940 = vadd.f32 %v3938, %v3939
    %v3941 = vsel %vm369, %v3865, 0.0
    %v3942 = vrot.slane %v3941, 4
    %v3943 = vadd.f32 %v3941, %v3942
    %v3944 = vrot.slane %v3943, 2
    %v3945 = vadd.f32 %v3943, %v3944
    %v3946 = vrot.slane %v3945, 1
    %v3947 = vadd.f32 %v3945, %v3946
    %v3948 = vsel %vm369, %v3866, 0.0
    %v3949 = vrot.slane %v3948, 4
    %v3950 = vadd.f32 %v3948, %v3949
    %v3951 = vrot.slane %v3950, 2
    %v3952 = vadd.f32 %v3950, %v3951
    %v3953 = vrot.slane %v3952, 1
    %v3954 = vadd.f32 %v3952, %v3953
    %v3955 = vsel %vm369, %v3867, 0.0
    %v3956 = vrot.slane %v3955, 4
    %v3957 = vadd.f32 %v3955, %v3956
    %v3958 = vrot.slane %v3957, 2
    %v3959 = vadd.f32 %v3957, %v3958
    %v3960 = vrot.slane %v3959, 1
    %v3961 = vadd.f32 %v3959, %v3960
    %v3962 = vsel %vm369, %v3868, 0.0
    %v3963 = vrot.slane %v3962, 4
    %v3964 = vadd.f32 %v3962, %v3963
    %v3965 = vrot.slane %v3964, 2
    %v3966 = vadd.f32 %v3964, %v3965
    %v3967 = vrot.slane %v3966, 1
    %v3968 = vadd.f32 %v3966, %v3967
    %v3969 = vsel %vm369, %v3869, 0.0
    %v3970 = vrot.slane %v3969, 4
    %v3971 = vadd.f32 %v3969, %v3970
    %v3972 = vrot.slane %v3971, 2
    %v3973 = vadd.f32 %v3971, %v3972
    %v3974 = vrot.slane %v3973, 1
    %v3975 = vadd.f32 %v3973, %v3974
    %v3976 = vsel %vm369, %v3870, 0.0
    %v3977 = vrot.slane %v3976, 4
    %v3978 = vadd.f32 %v3976, %v3977
    %v3979 = vrot.slane %v3978, 2
    %v3980 = vadd.f32 %v3978, %v3979
    %v3981 = vrot.slane %v3980, 1
    %v3982 = vadd.f32 %v3980, %v3981
    %v3983 = vmul.f32 %v3877, 0.01
    %v3984 = vmul.f32 %v3884, 0.01
    %v3985 = vmul.f32 %v3891, 0.01
    %v3986 = vmul.f32 %v3898, 0.01
    %v3987 = vmul.f32 %v3905, 0.01
    %v3988 = vmul.f32 %v3912, 0.01
    %v3989 = vmul.f32 %v3919, 0.01
    %v3990 = vmul.f32 %v3926, 0.01
    %v3991 = vmul.f32 %v3933, 0.01
    %v3992 = vmul.f32 %v3940, 0.01
    %v3993 = vmul.f32 %v3947, 0.01
    %v3994 = vmul.f32 %v3954, 0.01
    %v3995 = vmul.f32 %v3961, 0.01
    %v3996 = vmul.f32 %v3968, 0.01
    %v3997 = vmul.f32 %v3975, 0.01
    %v3998 = vmul.f32 %v3982, 0.01
    %v4015 = vsel %vm1666, %v3984, %v3983
    %v4016 = vsel %vm1668, %v3985, %v4015
    %v4017 = vsel %vm1670, %v3986, %v4016
    %v4018 = vsel %vm1672, %v3987, %v4017
    %v4019 = vsel %vm1674, %v3988, %v4018
    %v4020 = vsel %vm1676, %v3989, %v4019
    %v4021 = vsel %vm1678, %v3990, %v4020
    %v4022 = vsel %vm1666, %v3992, %v3991
    %v4023 = vsel %vm1668, %v3993, %v4022
    %v4024 = vsel %vm1670, %v3994, %v4023
    %v4025 = vsel %vm1672, %v3995, %v4024
    %v4026 = vsel %vm1674, %v3996, %v4025
    %v4027 = vsel %vm1676, %v3997, %v4026
    %v4028 = vsel %vm1678, %v3998, %v4027
    %v4031 = vadd.f32 %v132, %v4021
    %v4032 = vadd.f32 %v133, %v4028
    %v4033 = vmul.f32 %v4031, %v1894
    %v4034 = vmul.f32 %v4032, %v1899
    %v4035 = vmul.f32 %v3029, %v1894
    %v4036 = vmul.f32 %v3030, %v1899
    %v4039 = vcombine.high %v4033, %v4033
    %v4041 = vunpack.c.l.s4 1966171168
    %v4042 = vunpack.c.0.s8 %v4041
    %v4043 = vlaneseq
    %v4044 = vshrl.u32 %v4043, 7
    %v4045 = vsub.s32 %v4042, %v4044
    %v4046 = vrot.slane %v4033, %v4045
    %v4048 = vunpack.c.l.s4 1966171168
    %v4049 = vunpack.c.0.s8 %v4048
    %v4050 = vlaneseq
    %v4051 = vshrl.u32 %v4050, 7
    %v4052 = vsub.s32 %v4049, %v4051
    %v4053 = vrot.slane %v4039, %v4052
    %v4054 = vcombine.high %v4046, %v4046
    %v4055 = vcombine.high %v4053, %v4053
    %v4057 = vunpack.c.l.s4 1966171168
    %v4058 = vunpack.c.0.s8 %v4057
    %v4059 = vlaneseq
    %v4060 = vshrl.u32 %v4059, 7
    %v4061 = vsub.s32 %v4058, %v4060
    %v4062 = vrot.slane %v4046, %v4061
    %v4064 = vunpack.c.l.s4 1966171168
    %v4065 = vunpack.c.0.s8 %v4064
    %v4066 = vlaneseq
    %v4067 = vshrl.u32 %v4066, 7
    %v4068 = vsub.s32 %v4065, %v4067
    %v4069 = vrot.slane %v4053, %v4068
    %v4071 = vunpack.c.l.s4 1966171168
    %v4072 = vunpack.c.0.s8 %v4071
    %v4073 = vlaneseq
    %v4074 = vshrl.u32 %v4073, 7
    %v4075 = vsub.s32 %v4072, %v4074
    %v4076 = vrot.slane %v4054, %v4075
    %v4078 = vunpack.c.l.s4 1966171168
    %v4079 = vunpack.c.0.s8 %v4078
    %v4080 = vlaneseq
    %v4081 = vshrl.u32 %v4080, 7
    %v4082 = vsub.s32 %v4079, %v4081
    %v4083 = vrot.slane %v4055, %v4082
    %v4084 = vcombine.high %v4062, %v4062
    %v4085 = vcombine.high %v4069, %v4069
    %v4086 = vcombine.high %v4076, %v4076
    %v4087 = vcombine.high %v4083, %v4083
    %v4088 = vcombine.high %v4034, %v4034
    %v4090 = vunpack.c.l.s4 1966171168
    %v4091 = vunpack.c.0.s8 %v4090
    %v4092 = vlaneseq
    %v4093 = vshrl.u32 %v4092, 7
    %v4094 = vsub.s32 %v4091, %v4093
    %v4095 = vrot.slane %v4034, %v4094
    %v4097 = vunpack.c.l.s4 1966171168
    %v4098 = vunpack.c.0.s8 %v4097
    %v4099 = vlaneseq
    %v4100 = vshrl.u32 %v4099, 7
    %v4101 = vsub.s32 %v4098, %v4100
    %v4102 = vrot.slane %v4088, %v4101
    %v4103 = vcombine.high %v4095, %v4095
    %v4104 = vcombine.high %v4102, %v4102
    %v4106 = vunpack.c.l.s4 1966171168
    %v4107 = vunpack.c.0.s8 %v4106
    %v4108 = vlaneseq
    %v4109 = vshrl.u32 %v4108, 7
    %v4110 = vsub.s32 %v4107, %v4109
    %v4111 = vrot.slane %v4095, %v4110
    %v4113 = vunpack.c.l.s4 1966171168
    %v4114 = vunpack.c.0.s8 %v4113
    %v4115 = vlaneseq
    %v4116 = vshrl.u32 %v4115, 7
    %v4117 = vsub.s32 %v4114, %v4116
    %v4118 = vrot.slane %v4102, %v4117
    %v4120 = vunpack.c.l.s4 1966171168
    %v4121 = vunpack.c.0.s8 %v4120
    %v4122 = vlaneseq
    %v4123 = vshrl.u32 %v4122, 7
    %v4124 = vsub.s32 %v4121, %v4123
    %v4125 = vrot.slane %v4103, %v4124
    %v4127 = vunpack.c.l.s4 1966171168
    %v4128 = vunpack.c.0.s8 %v4127
    %v4129 = vlaneseq
    %v4130 = vshrl.u32 %v4129, 7
    %v4131 = vsub.s32 %v4128, %v4130
    %v4132 = vrot.slane %v4104, %v4131
    %v4133 = vcombine.high %v4111, %v4111
    %v4134 = vcombine.high %v4118, %v4118
    %v4135 = vcombine.high %v4125, %v4125
    %v4136 = vcombine.high %v4132, %v4132
    %v4137 = vlaneseq
    %v4138 = vshrl.u32 %v4137, 7
    %v4139 = vsub.s32 0, %v4138
    %v4140 = vrot.slane %v4062, %v4139
    %v4141 = vlaneseq
    %v4142 = vshrl.u32 %v4141, 7
    %v4143 = vsub.s32 0, %v4142
    %v4144 = vrot.slane %v4076, %v4143
    %v4145 = vlaneseq
    %v4146 = vshrl.u32 %v4145, 7
    %v4147 = vsub.s32 0, %v4146
    %v4148 = vrot.slane %v4084, %v4147
    %v4149 = vlaneseq
    %v4150 = vshrl.u32 %v4149, 7
    %v4151 = vsub.s32 0, %v4150
    %v4152 = vrot.slane %v4086, %v4151
    %v4153 = vlaneseq
    %v4154 = vshrl.u32 %v4153, 7
    %v4155 = vsub.s32 0, %v4154
    %v4156 = vrot.slane %v4069, %v4155
    %v4157 = vlaneseq
    %v4158 = vshrl.u32 %v4157, 7
    %v4159 = vsub.s32 0, %v4158
    %v4160 = vrot.slane %v4083, %v4159
    %v4161 = vlaneseq
    %v4162 = vshrl.u32 %v4161, 7
    %v4163 = vsub.s32 0, %v4162
    %v4164 = vrot.slane %v4085, %v4163
    %v4165 = vlaneseq
    %v4166 = vshrl.u32 %v4165, 7
    %v4167 = vsub.s32 0, %v4166
    %v4168 = vrot.slane %v4087, %v4167
    %v4169 = vlaneseq
    %v4170 = vshrl.u32 %v4169, 7
    %v4171 = vsub.s32 0, %v4170
    %v4172 = vrot.slane %v4111, %v4171
    %v4173 = vlaneseq
    %v4174 = vshrl.u32 %v4173, 7
    %v4175 = vsub.s32 0, %v4174
    %v4176 = vrot.slane %v4125, %v4175
    %v4177 = vlaneseq
    %v4178 = vshrl.u32 %v4177, 7
    %v4179 = vsub.s32 0, %v4178
    %v4180 = vrot.slane %v4133, %v4179
    %v4181 = vlaneseq
    %v4182 = vshrl.u32 %v4181, 7
    %v4183 = vsub.s32 0, %v4182
    %v4184 = vrot.slane %v4135, %v4183
    %v4185 = vlaneseq
    %v4186 = vshrl.u32 %v4185, 7
    %v4187 = vsub.s32 0, %v4186
    %v4188 = vrot.slane %v4118, %v4187
    %v4189 = vlaneseq
    %v4190 = vshrl.u32 %v4189, 7
    %v4191 = vsub.s32 0, %v4190
    %v4192 = vrot.slane %v4132, %v4191
    %v4193 = vlaneseq
    %v4194 = vshrl.u32 %v4193, 7
    %v4195 = vsub.s32 0, %v4194
    %v4196 = vrot.slane %v4134, %v4195
    %v4197 = vlaneseq
    %v4198 = vshrl.u32 %v4197, 7
    %v4199 = vsub.s32 0, %v4198
    %v4200 = vrot.slane %v4136, %v4199
    %v4217 = vsub.f32 %v4140, %v4033
    %v4218 = vsub.f32 %v4144, %v4033
    %v4219 = vsub.f32 %v4148, %v4033
    %v4220 = vsub.f32 %v4152, %v4033
    %v4221 = vsub.f32 %v4156, %v4033
    %v4222 = vsub.f32 %v4160, %v4033
    %v4223 = vsub.f32 %v4164, %v4033
    %v4224 = vsub.f32 %v4168, %v4033
    %v4225 = vsub.f32 %v4172, %v4034
    %v4226 = vsub.f32 %v4176, %v4034
    %v4227 = vsub.f32 %v4180, %v4034
    %v4228 = vsub.f32 %v4184, %v4034
    %v4229 = vsub.f32 %v4188, %v4034
    %v4230 = vsub.f32 %v4192, %v4034
    %v4231 = vsub.f32 %v4196, %v4034
    %v4232 = vsub.f32 %v4200, %v4034
    %v4233 = vmul.f32 %v4217, %v4217
    %v4234 = vmul.f32 %v4218, %v4218
    %v4235 = vmul.f32 %v4219, %v4219
    %v4236 = vmul.f32 %v4220, %v4220
    %v4237 = vmul.f32 %v4221, %v4221
    %v4238 = vmul.f32 %v4222, %v4222
    %v4239 = vmul.f32 %v4223, %v4223
    %v4240 = vmul.f32 %v4224, %v4224
    %v4241 = vmul.f32 %v4225, %v4225
    %v4242 = vmul.f32 %v4226, %v4226
    %v4243 = vmul.f32 %v4227, %v4227
    %v4244 = vmul.f32 %v4228, %v4228
    %v4245 = vmul.f32 %v4229, %v4229
    %v4246 = vmul.f32 %v4230, %v4230
    %v4247 = vmul.f32 %v4231, %v4231
    %v4248 = vmul.f32 %v4232, %v4232
    %v4249 = vsel %vm369, %v4233, 0.0
    %4250 = vadd.xlane.f32.xlu0 %v4249
    %v4251 = vpop.xlane.xlu0 %4250
    %v4252 = vsel %vm369, %v4234, 0.0
    %4253 = vadd.xlane.f32.xlu0 %v4252
    %v4254 = vpop.xlane.xlu0 %4253
    %v4255 = vsel %vm369, %v4235, 0.0
    %4256 = vadd.xlane.f32.xlu0 %v4255
    %v4257 = vpop.xlane.xlu0 %4256
    %v4258 = vsel %vm369, %v4236, 0.0
    %4259 = vadd.xlane.f32.xlu0 %v4258
    %v4260 = vpop.xlane.xlu0 %4259
    %v4261 = vsel %vm369, %v4237, 0.0
    %4262 = vadd.xlane.f32.xlu0 %v4261
    %v4263 = vpop.xlane.xlu0 %4262
    %v4264 = vsel %vm369, %v4238, 0.0
    %4265 = vadd.xlane.f32.xlu0 %v4264
    %v4266 = vpop.xlane.xlu0 %4265
    %v4267 = vsel %vm369, %v4239, 0.0
    %4268 = vadd.xlane.f32.xlu0 %v4267
    %v4269 = vpop.xlane.xlu0 %4268
    %v4270 = vsel %vm369, %v4240, 0.0
    %4271 = vadd.xlane.f32.xlu0 %v4270
    %v4272 = vpop.xlane.xlu0 %4271
    %v4273 = vsel %vm369, %v4241, 0.0
    %4274 = vadd.xlane.f32.xlu0 %v4273
    %v4275 = vpop.xlane.xlu0 %4274
    %v4276 = vsel %vm369, %v4242, 0.0
    %4277 = vadd.xlane.f32.xlu0 %v4276
    %v4278 = vpop.xlane.xlu0 %4277
    %v4279 = vsel %vm369, %v4243, 0.0
    %4280 = vadd.xlane.f32.xlu0 %v4279
    %v4281 = vpop.xlane.xlu0 %4280
    %v4282 = vsel %vm369, %v4244, 0.0
    %4283 = vadd.xlane.f32.xlu0 %v4282
    %v4284 = vpop.xlane.xlu0 %4283
    %v4285 = vsel %vm369, %v4245, 0.0
    %4286 = vadd.xlane.f32.xlu0 %v4285
    %v4287 = vpop.xlane.xlu0 %4286
    %v4288 = vsel %vm369, %v4246, 0.0
    %4289 = vadd.xlane.f32.xlu0 %v4288
    %v4290 = vpop.xlane.xlu0 %4289
    %v4291 = vsel %vm369, %v4247, 0.0
    %4292 = vadd.xlane.f32.xlu0 %v4291
    %v4293 = vpop.xlane.xlu0 %4292
    %v4294 = vsel %vm369, %v4248, 0.0
    %4295 = vadd.xlane.f32.xlu0 %v4294
    %v4296 = vpop.xlane.xlu0 %4295
    %v4297 = vadd.f32 %v4251, 1e-08
    %v4298 = vadd.f32 %v4254, 1e-08
    %v4299 = vadd.f32 %v4257, 1e-08
    %v4300 = vadd.f32 %v4260, 1e-08
    %v4301 = vadd.f32 %v4263, 1e-08
    %v4302 = vadd.f32 %v4266, 1e-08
    %v4303 = vadd.f32 %v4269, 1e-08
    %v4304 = vadd.f32 %v4272, 1e-08
    %v4305 = vadd.f32 %v4275, 1e-08
    %v4306 = vadd.f32 %v4278, 1e-08
    %v4307 = vadd.f32 %v4281, 1e-08
    %v4308 = vadd.f32 %v4284, 1e-08
    %v4309 = vadd.f32 %v4287, 1e-08
    %v4310 = vadd.f32 %v4290, 1e-08
    %v4311 = vadd.f32 %v4293, 1e-08
    %v4312 = vadd.f32 %v4296, 1e-08
    %v4313 = vrsqrt.pop %v4297
    %v4314 = vmul.f32 %v4297, %v4313
    %vm4315 = vcmp.eq.f32.partialorder %v4297, inf
    %v4316 = vsel %vm4315, %v4297, %v4314
    %vm4317 = vcmp.eq.f32.partialorder %v4297, 0.0
    %v4318 = vand.u32 %v4297, 2147483648
    %v4319 = vsel %vm4317, %v4318, %v4316
    %v4320 = vrsqrt.pop %v4298
    %v4321 = vmul.f32 %v4298, %v4320
    %vm4322 = vcmp.eq.f32.partialorder %v4298, inf
    %v4323 = vsel %vm4322, %v4298, %v4321
    %vm4324 = vcmp.eq.f32.partialorder %v4298, 0.0
    %v4325 = vand.u32 %v4298, 2147483648
    %v4326 = vsel %vm4324, %v4325, %v4323
    %v4327 = vrsqrt.pop %v4299
    %v4328 = vmul.f32 %v4299, %v4327
    %vm4329 = vcmp.eq.f32.partialorder %v4299, inf
    %v4330 = vsel %vm4329, %v4299, %v4328
    %vm4331 = vcmp.eq.f32.partialorder %v4299, 0.0
    %v4332 = vand.u32 %v4299, 2147483648
    %v4333 = vsel %vm4331, %v4332, %v4330
    %v4334 = vrsqrt.pop %v4300
    %v4335 = vmul.f32 %v4300, %v4334
    %vm4336 = vcmp.eq.f32.partialorder %v4300, inf
    %v4337 = vsel %vm4336, %v4300, %v4335
    %vm4338 = vcmp.eq.f32.partialorder %v4300, 0.0
    %v4339 = vand.u32 %v4300, 2147483648
    %v4340 = vsel %vm4338, %v4339, %v4337
    %v4341 = vrsqrt.pop %v4301
    %v4342 = vmul.f32 %v4301, %v4341
    %vm4343 = vcmp.eq.f32.partialorder %v4301, inf
    %v4344 = vsel %vm4343, %v4301, %v4342
    %vm4345 = vcmp.eq.f32.partialorder %v4301, 0.0
    %v4346 = vand.u32 %v4301, 2147483648
    %v4347 = vsel %vm4345, %v4346, %v4344
    %v4348 = vrsqrt.pop %v4302
    %v4349 = vmul.f32 %v4302, %v4348
    %vm4350 = vcmp.eq.f32.partialorder %v4302, inf
    %v4351 = vsel %vm4350, %v4302, %v4349
    %vm4352 = vcmp.eq.f32.partialorder %v4302, 0.0
    %v4353 = vand.u32 %v4302, 2147483648
    %v4354 = vsel %vm4352, %v4353, %v4351
    %v4355 = vrsqrt.pop %v4303
    %v4356 = vmul.f32 %v4303, %v4355
    %vm4357 = vcmp.eq.f32.partialorder %v4303, inf
    %v4358 = vsel %vm4357, %v4303, %v4356
    %vm4359 = vcmp.eq.f32.partialorder %v4303, 0.0
    %v4360 = vand.u32 %v4303, 2147483648
    %v4361 = vsel %vm4359, %v4360, %v4358
    %v4362 = vrsqrt.pop %v4304
    %v4363 = vmul.f32 %v4304, %v4362
    %vm4364 = vcmp.eq.f32.partialorder %v4304, inf
    %v4365 = vsel %vm4364, %v4304, %v4363
    %vm4366 = vcmp.eq.f32.partialorder %v4304, 0.0
    %v4367 = vand.u32 %v4304, 2147483648
    %v4368 = vsel %vm4366, %v4367, %v4365
    %v4369 = vrsqrt.pop %v4305
    %v4370 = vmul.f32 %v4305, %v4369
    %vm4371 = vcmp.eq.f32.partialorder %v4305, inf
    %v4372 = vsel %vm4371, %v4305, %v4370
    %vm4373 = vcmp.eq.f32.partialorder %v4305, 0.0
    %v4374 = vand.u32 %v4305, 2147483648
    %v4375 = vsel %vm4373, %v4374, %v4372
    %v4376 = vrsqrt.pop %v4306
    %v4377 = vmul.f32 %v4306, %v4376
    %vm4378 = vcmp.eq.f32.partialorder %v4306, inf
    %v4379 = vsel %vm4378, %v4306, %v4377
    %vm4380 = vcmp.eq.f32.partialorder %v4306, 0.0
    %v4381 = vand.u32 %v4306, 2147483648
    %v4382 = vsel %vm4380, %v4381, %v4379
    %v4383 = vrsqrt.pop %v4307
    %v4384 = vmul.f32 %v4307, %v4383
    %vm4385 = vcmp.eq.f32.partialorder %v4307, inf
    %v4386 = vsel %vm4385, %v4307, %v4384
    %vm4387 = vcmp.eq.f32.partialorder %v4307, 0.0
    %v4388 = vand.u32 %v4307, 2147483648
    %v4389 = vsel %vm4387, %v4388, %v4386
    %v4390 = vrsqrt.pop %v4308
    %v4391 = vmul.f32 %v4308, %v4390
    %vm4392 = vcmp.eq.f32.partialorder %v4308, inf
    %v4393 = vsel %vm4392, %v4308, %v4391
    %vm4394 = vcmp.eq.f32.partialorder %v4308, 0.0
    %v4395 = vand.u32 %v4308, 2147483648
    %v4396 = vsel %vm4394, %v4395, %v4393
    %v4397 = vrsqrt.pop %v4309
    %v4398 = vmul.f32 %v4309, %v4397
    %vm4399 = vcmp.eq.f32.partialorder %v4309, inf
    %v4400 = vsel %vm4399, %v4309, %v4398
    %vm4401 = vcmp.eq.f32.partialorder %v4309, 0.0
    %v4402 = vand.u32 %v4309, 2147483648
    %v4403 = vsel %vm4401, %v4402, %v4400
    %v4404 = vrsqrt.pop %v4310
    %v4405 = vmul.f32 %v4310, %v4404
    %vm4406 = vcmp.eq.f32.partialorder %v4310, inf
    %v4407 = vsel %vm4406, %v4310, %v4405
    %vm4408 = vcmp.eq.f32.partialorder %v4310, 0.0
    %v4409 = vand.u32 %v4310, 2147483648
    %v4410 = vsel %vm4408, %v4409, %v4407
    %v4411 = vrsqrt.pop %v4311
    %v4412 = vmul.f32 %v4311, %v4411
    %vm4413 = vcmp.eq.f32.partialorder %v4311, inf
    %v4414 = vsel %vm4413, %v4311, %v4412
    %vm4415 = vcmp.eq.f32.partialorder %v4311, 0.0
    %v4416 = vand.u32 %v4311, 2147483648
    %v4417 = vsel %vm4415, %v4416, %v4414
    %v4418 = vrsqrt.pop %v4312
    %v4419 = vmul.f32 %v4312, %v4418
    %vm4420 = vcmp.eq.f32.partialorder %v4312, inf
    %v4421 = vsel %vm4420, %v4312, %v4419
    %vm4422 = vcmp.eq.f32.partialorder %v4312, 0.0
    %v4423 = vand.u32 %v4312, 2147483648
    %v4424 = vsel %vm4422, %v4423, %v4421
    %v4425 = vadd.f32 %v4319, 0.0
    %v4426 = vadd.f32 %v4326, 0.0
    %v4427 = vadd.f32 %v4333, 0.0
    %v4428 = vadd.f32 %v4340, 0.0
    %v4429 = vadd.f32 %v4347, 0.0
    %v4430 = vadd.f32 %v4354, 0.0
    %v4431 = vadd.f32 %v4361, 0.0
    %v4432 = vadd.f32 %v4368, 0.0
    %v4433 = vadd.f32 %v4375, 0.0
    %v4434 = vadd.f32 %v4382, 0.0
    %v4435 = vadd.f32 %v4389, 0.0
    %v4436 = vadd.f32 %v4396, 0.0
    %v4437 = vadd.f32 %v4403, 0.0
    %v4438 = vadd.f32 %v4410, 0.0
    %v4439 = vadd.f32 %v4417, 0.0
    %v4440 = vadd.f32 %v4424, 0.0
    %v4441 = vrcp.pop %v4425
    %v4442 = vmul.f32 %v4217, %v4441
    %v4443 = vrcp.pop %v4426
    %v4444 = vmul.f32 %v4218, %v4443
    %v4445 = vrcp.pop %v4427
    %v4446 = vmul.f32 %v4219, %v4445
    %v4447 = vrcp.pop %v4428
    %v4448 = vmul.f32 %v4220, %v4447
    %v4449 = vrcp.pop %v4429
    %v4450 = vmul.f32 %v4221, %v4449
    %v4451 = vrcp.pop %v4430
    %v4452 = vmul.f32 %v4222, %v4451
    %v4453 = vrcp.pop %v4431
    %v4454 = vmul.f32 %v4223, %v4453
    %v4455 = vrcp.pop %v4432
    %v4456 = vmul.f32 %v4224, %v4455
    %v4457 = vrcp.pop %v4433
    %v4458 = vmul.f32 %v4225, %v4457
    %v4459 = vrcp.pop %v4434
    %v4460 = vmul.f32 %v4226, %v4459
    %v4461 = vrcp.pop %v4435
    %v4462 = vmul.f32 %v4227, %v4461
    %v4463 = vrcp.pop %v4436
    %v4464 = vmul.f32 %v4228, %v4463
    %v4465 = vrcp.pop %v4437
    %v4466 = vmul.f32 %v4229, %v4465
    %v4467 = vrcp.pop %v4438
    %v4468 = vmul.f32 %v4230, %v4467
    %v4469 = vrcp.pop %v4439
    %v4470 = vmul.f32 %v4231, %v4469
    %v4471 = vrcp.pop %v4440
    %v4472 = vmul.f32 %v4232, %v4471
    %s4473 = scalar_lea.vmem %s5, 64
    %v4474 = vld [vmem:[%s4473] sm:$0xff]
    %v4475 = vld [vmem:[%s4473 + $0x8] sm:$0xff]
    %v4476 = vld [vmem:[%s4473 + $0x10] sm:$0xff]
    %v4477 = vld [vmem:[%s4473 + $0x18] sm:$0xff]
    %v4479 = vsel %vm685, %v4035, 0
    %v4482 = vsel %vm685, %v4036, 0
    %4484 = vmatprep.subr.mxu0 0.0
    %4485 = vmatpush1.msra.mxu0 0.0
    %4486 = vmatprep.subr.mxu0 0.0
    %4487 = vmatpush1.msra.mxu0 0.0
    %4488 = vmatprep.subr.mxu0 0.0
    %4489 = vmatpush1.msra.mxu0 0.0
    %4490 = vmatprep.subr.mxu0 0.0
    %4491 = vmatpush1.msra.mxu0 0.0
    %4492 = vmatprep.subr.mxu0 0.0
    %4493 = vmatpush1.msra.mxu0 0.0
    %4494 = vmatprep.subr.mxu0 0.0
    %4495 = vmatpush1.msra.mxu0 0.0
    %4496 = vmatprep.subr.mxu0 0.0
    %4497 = vmatpush1.msra.mxu0 0.0
    %4498 = vmatprep.subr.mxu0 0.0
    %4499 = vmatpush1.msra.mxu0 0.0
    %4500 = vmatprep.subr.mxu0 0.0
    %4501 = vmatpush1.msra.mxu0 0.0
    %4502 = vmatprep.subr.mxu0 0.0
    %4503 = vmatpush1.msra.mxu0 0.0
    %4504 = vmatprep.subr.mxu0 0.0
    %4505 = vmatpush1.msra.mxu0 0.0
    %4506 = vmatprep.subr.mxu0 0.0
    %4507 = vmatpush1.msra.mxu0 0.0
    %4508 = vmatprep.subr.mxu0 0.0
    %4509 = vmatpush1.msra.mxu0 %v4477
    %4510 = vmatprep.subr.mxu0 0.0
    %4511 = vmatpush1.msra.mxu0 %v4476
    %4512 = vmatprep.subr.mxu0 0.0
    %4513 = vmatpush1.msra.mxu0 %v4475
    %4514 = vmatprep.subr.mxu0 0.0
    %4515 = vmatpush1.msra.mxu0 %v4474
    %4516 = vmatprep.subr.mxu0 0.0
    %4517 = vmatpush2.msra.mxu0 0.0
    %4518 = vmatprep.subr.mxu0 0.0
    %4519 = vmatpush2.msra.mxu0 0.0
    %4520 = vmatprep.subr.mxu0 0.0
    %4521 = vmatpush2.msra.mxu0 0.0
    %4522 = vmatprep.subr.mxu0 0.0
    %4523 = vmatpush2.msra.mxu0 0.0
    %4524 = vmatprep.subr.mxu0 0.0
    %4525 = vmatpush2.msra.mxu0 0.0
    %4526 = vmatprep.subr.mxu0 0.0
    %4527 = vmatpush2.msra.mxu0 0.0
    %4528 = vmatprep.subr.mxu0 0.0
    %4529 = vmatpush2.msra.mxu0 0.0
    %4530 = vmatprep.subr.mxu0 0.0
    %4531 = vmatpush2.msra.mxu0 0.0
    %4532 = vmatprep.subr.mxu0 0.0
    %4533 = vmatpush2.msra.mxu0 0.0
    %4534 = vmatprep.subr.mxu0 0.0
    %4535 = vmatpush2.msra.mxu0 0.0
    %4536 = vmatprep.subr.mxu0 0.0
    %4537 = vmatpush2.msra.mxu0 0.0
    %4538 = vmatprep.subr.mxu0 0.0
    %4539 = vmatpush2.msra.mxu0 0.0
    %4540 = vmatprep.subr.mxu0 0.0
    %4541 = vmatpush2.msra.mxu0 0.0
    %4542 = vmatprep.subr.mxu0 0.0
    %4543 = vmatpush2.msra.mxu0 0.0
    %4544 = vmatprep.subr.mxu0 0.0
    %4545 = vmatpush2.msra.mxu0 0.0
    %4546 = vmatprep.subr.mxu0 0.0
    %4547 = vmatpush2.msra.mxu0 0.0
    %4548 = vmatprep.mubr.f32.mxu0 0.0
    %4549 = vmatmul.mubr.f32.gmra.mxu0 %v4479
    %v4550 = vpop.f32.mrf.mxu0
    %v4551 = vadd.f32 0.0, %v4550
    %v4552 = vpop.f32.mrf.mxu0
    %4553 = vmatprep.mubr.f32.mxu0 0.0
    %4554 = vmatmul.mubr.f32.gmra.mxu0 %v4482
    %v4555 = vpop.f32.mrf.mxu0
    %v4556 = vadd.f32 0.0, %v4555
    %v4557 = vpop.f32.mrf.mxu0
    %4558 = vdwg.mxu0
    %v4561 = vcombine.high %v4551, %v4551
    %v4563 = vunpack.c.l.s4 1966171168
    %v4564 = vunpack.c.0.s8 %v4563
    %v4565 = vlaneseq
    %v4566 = vshrl.u32 %v4565, 7
    %v4567 = vsub.s32 %v4564, %v4566
    %v4568 = vrot.slane %v4551, %v4567
    %v4570 = vunpack.c.l.s4 1966171168
    %v4571 = vunpack.c.0.s8 %v4570
    %v4572 = vlaneseq
    %v4573 = vshrl.u32 %v4572, 7
    %v4574 = vsub.s32 %v4571, %v4573
    %v4575 = vrot.slane %v4561, %v4574
    %v4576 = vcombine.high %v4568, %v4568
    %v4577 = vcombine.high %v4575, %v4575
    %v4579 = vunpack.c.l.s4 1966171168
    %v4580 = vunpack.c.0.s8 %v4579
    %v4581 = vlaneseq
    %v4582 = vshrl.u32 %v4581, 7
    %v4583 = vsub.s32 %v4580, %v4582
    %v4584 = vrot.slane %v4568, %v4583
    %v4586 = vunpack.c.l.s4 1966171168
    %v4587 = vunpack.c.0.s8 %v4586
    %v4588 = vlaneseq
    %v4589 = vshrl.u32 %v4588, 7
    %v4590 = vsub.s32 %v4587, %v4589
    %v4591 = vrot.slane %v4575, %v4590
    %v4593 = vunpack.c.l.s4 1966171168
    %v4594 = vunpack.c.0.s8 %v4593
    %v4595 = vlaneseq
    %v4596 = vshrl.u32 %v4595, 7
    %v4597 = vsub.s32 %v4594, %v4596
    %v4598 = vrot.slane %v4576, %v4597
    %v4600 = vunpack.c.l.s4 1966171168
    %v4601 = vunpack.c.0.s8 %v4600
    %v4602 = vlaneseq
    %v4603 = vshrl.u32 %v4602, 7
    %v4604 = vsub.s32 %v4601, %v4603
    %v4605 = vrot.slane %v4577, %v4604
    %v4606 = vcombine.high %v4584, %v4584
    %v4607 = vcombine.high %v4591, %v4591
    %v4608 = vcombine.high %v4598, %v4598
    %v4609 = vcombine.high %v4605, %v4605
    %v4610 = vcombine.high %v4556, %v4556
    %v4612 = vunpack.c.l.s4 1966171168
    %v4613 = vunpack.c.0.s8 %v4612
    %v4614 = vlaneseq
    %v4615 = vshrl.u32 %v4614, 7
    %v4616 = vsub.s32 %v4613, %v4615
    %v4617 = vrot.slane %v4556, %v4616
    %v4619 = vunpack.c.l.s4 1966171168
    %v4620 = vunpack.c.0.s8 %v4619
    %v4621 = vlaneseq
    %v4622 = vshrl.u32 %v4621, 7
    %v4623 = vsub.s32 %v4620, %v4622
    %v4624 = vrot.slane %v4610, %v4623
    %v4625 = vcombine.high %v4617, %v4617
    %v4626 = vcombine.high %v4624, %v4624
    %v4628 = vunpack.c.l.s4 1966171168
    %v4629 = vunpack.c.0.s8 %v4628
    %v4630 = vlaneseq
    %v4631 = vshrl.u32 %v4630, 7
    %v4632 = vsub.s32 %v4629, %v4631
    %v4633 = vrot.slane %v4617, %v4632
    %v4635 = vunpack.c.l.s4 1966171168
    %v4636 = vunpack.c.0.s8 %v4635
    %v4637 = vlaneseq
    %v4638 = vshrl.u32 %v4637, 7
    %v4639 = vsub.s32 %v4636, %v4638
    %v4640 = vrot.slane %v4624, %v4639
    %v4642 = vunpack.c.l.s4 1966171168
    %v4643 = vunpack.c.0.s8 %v4642
    %v4644 = vlaneseq
    %v4645 = vshrl.u32 %v4644, 7
    %v4646 = vsub.s32 %v4643, %v4645
    %v4647 = vrot.slane %v4625, %v4646
    %v4649 = vunpack.c.l.s4 1966171168
    %v4650 = vunpack.c.0.s8 %v4649
    %v4651 = vlaneseq
    %v4652 = vshrl.u32 %v4651, 7
    %v4653 = vsub.s32 %v4650, %v4652
    %v4654 = vrot.slane %v4626, %v4653
    %v4655 = vcombine.high %v4633, %v4633
    %v4656 = vcombine.high %v4640, %v4640
    %v4657 = vcombine.high %v4647, %v4647
    %v4658 = vcombine.high %v4654, %v4654
    %v4659 = vlaneseq
    %v4660 = vshrl.u32 %v4659, 7
    %v4661 = vsub.s32 0, %v4660
    %v4662 = vrot.slane %v4584, %v4661
    %v4663 = vlaneseq
    %v4664 = vshrl.u32 %v4663, 7
    %v4665 = vsub.s32 0, %v4664
    %v4666 = vrot.slane %v4598, %v4665
    %v4667 = vlaneseq
    %v4668 = vshrl.u32 %v4667, 7
    %v4669 = vsub.s32 0, %v4668
    %v4670 = vrot.slane %v4606, %v4669
    %v4671 = vlaneseq
    %v4672 = vshrl.u32 %v4671, 7
    %v4673 = vsub.s32 0, %v4672
    %v4674 = vrot.slane %v4608, %v4673
    %v4675 = vlaneseq
    %v4676 = vshrl.u32 %v4675, 7
    %v4677 = vsub.s32 0, %v4676
    %v4678 = vrot.slane %v4591, %v4677
    %v4679 = vlaneseq
    %v4680 = vshrl.u32 %v4679, 7
    %v4681 = vsub.s32 0, %v4680
    %v4682 = vrot.slane %v4605, %v4681
    %v4683 = vlaneseq
    %v4684 = vshrl.u32 %v4683, 7
    %v4685 = vsub.s32 0, %v4684
    %v4686 = vrot.slane %v4607, %v4685
    %v4687 = vlaneseq
    %v4688 = vshrl.u32 %v4687, 7
    %v4689 = vsub.s32 0, %v4688
    %v4690 = vrot.slane %v4609, %v4689
    %v4691 = vlaneseq
    %v4692 = vshrl.u32 %v4691, 7
    %v4693 = vsub.s32 0, %v4692
    %v4694 = vrot.slane %v4633, %v4693
    %v4695 = vlaneseq
    %v4696 = vshrl.u32 %v4695, 7
    %v4697 = vsub.s32 0, %v4696
    %v4698 = vrot.slane %v4647, %v4697
    %v4699 = vlaneseq
    %v4700 = vshrl.u32 %v4699, 7
    %v4701 = vsub.s32 0, %v4700
    %v4702 = vrot.slane %v4655, %v4701
    %v4703 = vlaneseq
    %v4704 = vshrl.u32 %v4703, 7
    %v4705 = vsub.s32 0, %v4704
    %v4706 = vrot.slane %v4657, %v4705
    %v4707 = vlaneseq
    %v4708 = vshrl.u32 %v4707, 7
    %v4709 = vsub.s32 0, %v4708
    %v4710 = vrot.slane %v4640, %v4709
    %v4711 = vlaneseq
    %v4712 = vshrl.u32 %v4711, 7
    %v4713 = vsub.s32 0, %v4712
    %v4714 = vrot.slane %v4654, %v4713
    %v4715 = vlaneseq
    %v4716 = vshrl.u32 %v4715, 7
    %v4717 = vsub.s32 0, %v4716
    %v4718 = vrot.slane %v4656, %v4717
    %v4719 = vlaneseq
    %v4720 = vshrl.u32 %v4719, 7
    %v4721 = vsub.s32 0, %v4720
    %v4722 = vrot.slane %v4658, %v4721
    %4739 = vrot.lane.b32.xlu0 %v4551, 96
    %v4740 = vpop.permute.xlu0 %4739
    %4741 = vrot.lane.b32.xlu0 %v4556, 96
    %v4742 = vpop.permute.xlu0 %4741
    %v4745 = vadd.f32 %v4662, %v4740
    %v4746 = vadd.f32 %v4666, %v4740
    %v4747 = vadd.f32 %v4670, %v4740
    %v4748 = vadd.f32 %v4674, %v4740
    %v4749 = vadd.f32 %v4678, %v4740
    %v4750 = vadd.f32 %v4682, %v4740
    %v4751 = vadd.f32 %v4686, %v4740
    %v4752 = vadd.f32 %v4690, %v4740
    %v4753 = vadd.f32 %v4694, %v4742
    %v4754 = vadd.f32 %v4698, %v4742
    %v4755 = vadd.f32 %v4702, %v4742
    %v4756 = vadd.f32 %v4706, %v4742
    %v4757 = vadd.f32 %v4710, %v4742
    %v4758 = vadd.f32 %v4714, %v4742
    %v4759 = vadd.f32 %v4718, %v4742
    %v4760 = vadd.f32 %v4722, %v4742
    %v4761 = vlaneseq
    %v4762 = vshrl.u32 %v4761, 7
    %v4763 = vsub.s32 0, %v4762
    %v4764 = vrot.slane %v154, %v4763
    %v4765 = vmul.f32 %v4251, %v4764
    %v4766 = vmul.f32 %v4254, %v4764
    %v4767 = vmul.f32 %v4257, %v4764
    %v4768 = vmul.f32 %v4260, %v4764
    %v4769 = vmul.f32 %v4263, %v4764
    %v4770 = vmul.f32 %v4266, %v4764
    %v4771 = vmul.f32 %v4269, %v4764
    %v4772 = vmul.f32 %v4272, %v4764
    %v4773 = vmul.f32 %v4275, %v4764
    %v4774 = vmul.f32 %v4278, %v4764
    %v4775 = vmul.f32 %v4281, %v4764
    %v4776 = vmul.f32 %v4284, %v4764
    %v4777 = vmul.f32 %v4287, %v4764
    %v4778 = vmul.f32 %v4290, %v4764
    %v4779 = vmul.f32 %v4293, %v4764
    %v4780 = vmul.f32 %v4296, %v4764
    %v4781 = vadd.f32 %v4745, %v4765
    %v4782 = vadd.f32 %v4746, %v4766
    %v4783 = vadd.f32 %v4747, %v4767
    %v4784 = vadd.f32 %v4748, %v4768
    %v4785 = vadd.f32 %v4749, %v4769
    %v4786 = vadd.f32 %v4750, %v4770
    %v4787 = vadd.f32 %v4751, %v4771
    %v4788 = vadd.f32 %v4752, %v4772
    %v4789 = vadd.f32 %v4753, %v4773
    %v4790 = vadd.f32 %v4754, %v4774
    %v4791 = vadd.f32 %v4755, %v4775
    %v4792 = vadd.f32 %v4756, %v4776
    %v4793 = vadd.f32 %v4757, %v4777
    %v4794 = vadd.f32 %v4758, %v4778
    %v4795 = vadd.f32 %v4759, %v4779
    %v4796 = vadd.f32 %v4760, %v4780
    %v4797 = vlaneseq
    %v4798 = vshrl.u32 %v4797, 7
    %v4799 = vsub.s32 1, %v4798
    %v4800 = vrot.slane %v154, %v4799
    %v4801 = vmul.f32 %v372, %v4800
    %v4802 = vmul.f32 %v375, %v4800
    %v4803 = vmul.f32 %v378, %v4800
    %v4804 = vmul.f32 %v381, %v4800
    %v4805 = vmul.f32 %v384, %v4800
    %v4806 = vmul.f32 %v387, %v4800
    %v4807 = vmul.f32 %v390, %v4800
    %v4808 = vmul.f32 %v393, %v4800
    %v4809 = vmul.f32 %v396, %v4800
    %v4810 = vmul.f32 %v399, %v4800
    %v4811 = vmul.f32 %v402, %v4800
    %v4812 = vmul.f32 %v405, %v4800
    %v4813 = vmul.f32 %v408, %v4800
    %v4814 = vmul.f32 %v411, %v4800
    %v4815 = vmul.f32 %v414, %v4800
    %v4816 = vmul.f32 %v417, %v4800
    %v4817 = vadd.f32 %v4781, %v4801
    %v4818 = vadd.f32 %v4782, %v4802
    %v4819 = vadd.f32 %v4783, %v4803
    %v4820 = vadd.f32 %v4784, %v4804
    %v4821 = vadd.f32 %v4785, %v4805
    %v4822 = vadd.f32 %v4786, %v4806
    %v4823 = vadd.f32 %v4787, %v4807
    %v4824 = vadd.f32 %v4788, %v4808
    %v4825 = vadd.f32 %v4789, %v4809
    %v4826 = vadd.f32 %v4790, %v4810
    %v4827 = vadd.f32 %v4791, %v4811
    %v4828 = vadd.f32 %v4792, %v4812
    %v4829 = vadd.f32 %v4793, %v4813
    %v4830 = vadd.f32 %v4794, %v4814
    %v4831 = vadd.f32 %v4795, %v4815
    %v4832 = vadd.f32 %v4796, %v4816
    %v4833 = vlaneseq
    %v4834 = vshrl.u32 %v4833, 7
    %v4835 = vsub.s32 2, %v4834
    %v4836 = vrot.slane %v154, %v4835
    %v4837 = vadd.f32 %v4817, %v4836
    %v4838 = vadd.f32 %v4818, %v4836
    %v4839 = vadd.f32 %v4819, %v4836
    %v4840 = vadd.f32 %v4820, %v4836
    %v4841 = vadd.f32 %v4821, %v4836
    %v4842 = vadd.f32 %v4822, %v4836
    %v4843 = vadd.f32 %v4823, %v4836
    %v4844 = vadd.f32 %v4824, %v4836
    %v4845 = vadd.f32 %v4825, %v4836
    %v4846 = vadd.f32 %v4826, %v4836
    %v4847 = vadd.f32 %v4827, %v4836
    %v4848 = vadd.f32 %v4828, %v4836
    %v4849 = vadd.f32 %v4829, %v4836
    %v4850 = vadd.f32 %v4830, %v4836
    %v4851 = vadd.f32 %v4831, %v4836
    %v4852 = vadd.f32 %v4832, %v4836
    %v4853 = vmul.f32 %v4837, 0.5
    %v4854 = vmul.f32 %v4838, 0.5
    %v4855 = vmul.f32 %v4839, 0.5
    %v4856 = vmul.f32 %v4840, 0.5
    %v4857 = vmul.f32 %v4841, 0.5
    %v4858 = vmul.f32 %v4842, 0.5
    %v4859 = vmul.f32 %v4843, 0.5
    %v4860 = vmul.f32 %v4844, 0.5
    %v4861 = vmul.f32 %v4845, 0.5
    %v4862 = vmul.f32 %v4846, 0.5
    %v4863 = vmul.f32 %v4847, 0.5
    %v4864 = vmul.f32 %v4848, 0.5
    %v4865 = vmul.f32 %v4849, 0.5
    %v4866 = vmul.f32 %v4850, 0.5
    %v4867 = vmul.f32 %v4851, 0.5
    %v4868 = vmul.f32 %v4852, 0.5
    %v4869 = vtanh.pop %v4853
    %v4870 = vtanh.pop %v4854
    %v4871 = vtanh.pop %v4855
    %v4872 = vtanh.pop %v4856
    %v4873 = vtanh.pop %v4857
    %v4874 = vtanh.pop %v4858
    %v4875 = vtanh.pop %v4859
    %v4876 = vtanh.pop %v4860
    %v4877 = vtanh.pop %v4861
    %v4878 = vtanh.pop %v4862
    %v4879 = vtanh.pop %v4863
    %v4880 = vtanh.pop %v4864
    %v4881 = vtanh.pop %v4865
    %v4882 = vtanh.pop %v4866
    %v4883 = vtanh.pop %v4867
    %v4884 = vtanh.pop %v4868
    %v4885 = vadd.f32 %v4869, 1.0
    %v4886 = vadd.f32 %v4870, 1.0
    %v4887 = vadd.f32 %v4871, 1.0
    %v4888 = vadd.f32 %v4872, 1.0
    %v4889 = vadd.f32 %v4873, 1.0
    %v4890 = vadd.f32 %v4874, 1.0
    %v4891 = vadd.f32 %v4875, 1.0
    %v4892 = vadd.f32 %v4876, 1.0
    %v4893 = vadd.f32 %v4877, 1.0
    %v4894 = vadd.f32 %v4878, 1.0
    %v4895 = vadd.f32 %v4879, 1.0
    %v4896 = vadd.f32 %v4880, 1.0
    %v4897 = vadd.f32 %v4881, 1.0
    %v4898 = vadd.f32 %v4882, 1.0
    %v4899 = vadd.f32 %v4883, 1.0
    %v4900 = vadd.f32 %v4884, 1.0
    %v4901 = vmul.f32 %v4885, 0.5
    %v4902 = vmul.f32 %v4886, 0.5
    %v4903 = vmul.f32 %v4887, 0.5
    %v4904 = vmul.f32 %v4888, 0.5
    %v4905 = vmul.f32 %v4889, 0.5
    %v4906 = vmul.f32 %v4890, 0.5
    %v4907 = vmul.f32 %v4891, 0.5
    %v4908 = vmul.f32 %v4892, 0.5
    %v4909 = vmul.f32 %v4893, 0.5
    %v4910 = vmul.f32 %v4894, 0.5
    %v4911 = vmul.f32 %v4895, 0.5
    %v4912 = vmul.f32 %v4896, 0.5
    %v4913 = vmul.f32 %v4897, 0.5
    %v4914 = vmul.f32 %v4898, 0.5
    %v4915 = vmul.f32 %v4899, 0.5
    %v4916 = vmul.f32 %v4900, 0.5
    %v4917 = vmul.f32 %v4837, %v4901
    %v4918 = vmul.f32 %v4838, %v4902
    %v4919 = vmul.f32 %v4839, %v4903
    %v4920 = vmul.f32 %v4840, %v4904
    %v4921 = vmul.f32 %v4841, %v4905
    %v4922 = vmul.f32 %v4842, %v4906
    %v4923 = vmul.f32 %v4843, %v4907
    %v4924 = vmul.f32 %v4844, %v4908
    %v4925 = vmul.f32 %v4845, %v4909
    %v4926 = vmul.f32 %v4846, %v4910
    %v4927 = vmul.f32 %v4847, %v4911
    %v4928 = vmul.f32 %v4848, %v4912
    %v4929 = vmul.f32 %v4849, %v4913
    %v4930 = vmul.f32 %v4850, %v4914
    %v4931 = vmul.f32 %v4851, %v4915
    %v4932 = vmul.f32 %v4852, %v4916
    %s4933 = scalar_lea.vmem %s6, 64
    %v4934 = vld [vmem:[%s4933] sm:$0xff]
    %v4935 = vld [vmem:[%s4933 + $0x8] sm:$0xff]
    %v4936 = vld [vmem:[%s4933 + $0x10] sm:$0xff]
    %v4937 = vld [vmem:[%s4933 + $0x18] sm:$0xff]
    %v4938 = vlaneseq
    %v4939 = vshrl.u32 %v4938, 7
    %v4940 = vsub.s32 3, %v4939
    %v4941 = vrot.slane %v154, %v4940
    %v4943 = vsel %vm685, %v4917, 0
    %v4946 = vsel %vm685, %v4918, 0
    %v4949 = vsel %vm685, %v4919, 0
    %v4952 = vsel %vm685, %v4920, 0
    %v4955 = vsel %vm685, %v4921, 0
    %v4958 = vsel %vm685, %v4922, 0
    %v4961 = vsel %vm685, %v4923, 0
    %v4964 = vsel %vm685, %v4924, 0
    %v4967 = vsel %vm685, %v4925, 0
    %v4970 = vsel %vm685, %v4926, 0
    %v4973 = vsel %vm685, %v4927, 0
    %v4976 = vsel %vm685, %v4928, 0
    %v4979 = vsel %vm685, %v4929, 0
    %v4982 = vsel %vm685, %v4930, 0
    %v4985 = vsel %vm685, %v4931, 0
    %v4988 = vsel %vm685, %v4932, 0
    %4990 = vmatprep.subr.mxu0 0.0
    %4991 = vmatpush1.msra.mxu0 0.0
    %4992 = vmatprep.subr.mxu0 0.0
    %4993 = vmatpush1.msra.mxu0 0.0
    %4994 = vmatprep.subr.mxu0 0.0
    %4995 = vmatpush1.msra.mxu0 0.0
    %4996 = vmatprep.subr.mxu0 0.0
    %4997 = vmatpush1.msra.mxu0 0.0
    %4998 = vmatprep.subr.mxu0 0.0
    %4999 = vmatpush1.msra.mxu0 0.0
    %5000 = vmatprep.subr.mxu0 0.0
    %5001 = vmatpush1.msra.mxu0 0.0
    %5002 = vmatprep.subr.mxu0 0.0
    %5003 = vmatpush1.msra.mxu0 0.0
    %5004 = vmatprep.subr.mxu0 0.0
    %5005 = vmatpush1.msra.mxu0 0.0
    %5006 = vmatprep.subr.mxu0 0.0
    %5007 = vmatpush1.msra.mxu0 0.0
    %5008 = vmatprep.subr.mxu0 0.0
    %5009 = vmatpush1.msra.mxu0 0.0
    %5010 = vmatprep.subr.mxu0 0.0
    %5011 = vmatpush1.msra.mxu0 0.0
    %5012 = vmatprep.subr.mxu0 0.0
    %5013 = vmatpush1.msra.mxu0 0.0
    %5014 = vmatprep.subr.mxu0 0.0
    %5015 = vmatpush1.msra.mxu0 %v4937
    %5016 = vmatprep.subr.mxu0 0.0
    %5017 = vmatpush1.msra.mxu0 %v4936
    %5018 = vmatprep.subr.mxu0 0.0
    %5019 = vmatpush1.msra.mxu0 %v4935
    %5020 = vmatprep.subr.mxu0 0.0
    %5021 = vmatpush1.msra.mxu0 %v4934
    %5022 = vmatprep.subr.mxu0 0.0
    %5023 = vmatpush2.msra.mxu0 0.0
    %5024 = vmatprep.subr.mxu0 0.0
    %5025 = vmatpush2.msra.mxu0 0.0
    %5026 = vmatprep.subr.mxu0 0.0
    %5027 = vmatpush2.msra.mxu0 0.0
    %5028 = vmatprep.subr.mxu0 0.0
    %5029 = vmatpush2.msra.mxu0 0.0
    %5030 = vmatprep.subr.mxu0 0.0
    %5031 = vmatpush2.msra.mxu0 0.0
    %5032 = vmatprep.subr.mxu0 0.0
    %5033 = vmatpush2.msra.mxu0 0.0
    %5034 = vmatprep.subr.mxu0 0.0
    %5035 = vmatpush2.msra.mxu0 0.0
    %5036 = vmatprep.subr.mxu0 0.0
    %5037 = vmatpush2.msra.mxu0 0.0
    %5038 = vmatprep.subr.mxu0 0.0
    %5039 = vmatpush2.msra.mxu0 0.0
    %5040 = vmatprep.subr.mxu0 0.0
    %5041 = vmatpush2.msra.mxu0 0.0
    %5042 = vmatprep.subr.mxu0 0.0
    %5043 = vmatpush2.msra.mxu0 0.0
    %5044 = vmatprep.subr.mxu0 0.0
    %5045 = vmatpush2.msra.mxu0 0.0
    %5046 = vmatprep.subr.mxu0 0.0
    %5047 = vmatpush2.msra.mxu0 0.0
    %5048 = vmatprep.subr.mxu0 0.0
    %5049 = vmatpush2.msra.mxu0 0.0
    %5050 = vmatprep.subr.mxu0 0.0
    %5051 = vmatpush2.msra.mxu0 0.0
    %5052 = vmatprep.subr.mxu0 0.0
    %5053 = vmatpush2.msra.mxu0 0.0
    %5054 = vmatprep.mubr.f32.mxu0 0.0
    %5055 = vmatmul.mubr.f32.gmra.mxu0 %v4943
    %v5056 = vpop.f32.mrf.mxu0
    %v5057 = vadd.f32 %v4941, %v5056
    %v5058 = vpop.f32.mrf.mxu0
    %5059 = vmatprep.mubr.f32.mxu0 0.0
    %5060 = vmatmul.mubr.f32.gmra.mxu0 %v4946
    %v5061 = vpop.f32.mrf.mxu0
    %v5062 = vadd.f32 %v4941, %v5061
    %v5063 = vpop.f32.mrf.mxu0
    %5064 = vmatprep.mubr.f32.mxu0 0.0
    %5065 = vmatmul.mubr.f32.gmra.mxu0 %v4949
    %v5066 = vpop.f32.mrf.mxu0
    %v5067 = vadd.f32 %v4941, %v5066
    %v5068 = vpop.f32.mrf.mxu0
    %5069 = vmatprep.mubr.f32.mxu0 0.0
    %5070 = vmatmul.mubr.f32.gmra.mxu0 %v4952
    %v5071 = vpop.f32.mrf.mxu0
    %v5072 = vadd.f32 %v4941, %v5071
    %v5073 = vpop.f32.mrf.mxu0
    %5074 = vmatprep.mubr.f32.mxu0 0.0
    %5075 = vmatmul.mubr.f32.gmra.mxu0 %v4955
    %v5076 = vpop.f32.mrf.mxu0
    %v5077 = vadd.f32 %v4941, %v5076
    %v5078 = vpop.f32.mrf.mxu0
    %5079 = vmatprep.mubr.f32.mxu0 0.0
    %5080 = vmatmul.mubr.f32.gmra.mxu0 %v4958
    %v5081 = vpop.f32.mrf.mxu0
    %v5082 = vadd.f32 %v4941, %v5081
    %v5083 = vpop.f32.mrf.mxu0
    %5084 = vmatprep.mubr.f32.mxu0 0.0
    %5085 = vmatmul.mubr.f32.gmra.mxu0 %v4961
    %v5086 = vpop.f32.mrf.mxu0
    %v5087 = vadd.f32 %v4941, %v5086
    %v5088 = vpop.f32.mrf.mxu0
    %5089 = vmatprep.mubr.f32.mxu0 0.0
    %5090 = vmatmul.mubr.f32.gmra.mxu0 %v4964
    %v5091 = vpop.f32.mrf.mxu0
    %v5092 = vadd.f32 %v4941, %v5091
    %v5093 = vpop.f32.mrf.mxu0
    %5094 = vmatprep.mubr.f32.mxu0 0.0
    %5095 = vmatmul.mubr.f32.gmra.mxu0 %v4967
    %v5096 = vpop.f32.mrf.mxu0
    %v5097 = vadd.f32 %v4941, %v5096
    %v5098 = vpop.f32.mrf.mxu0
    %5099 = vmatprep.mubr.f32.mxu0 0.0
    %5100 = vmatmul.mubr.f32.gmra.mxu0 %v4970
    %v5101 = vpop.f32.mrf.mxu0
    %v5102 = vadd.f32 %v4941, %v5101
    %v5103 = vpop.f32.mrf.mxu0
    %5104 = vmatprep.mubr.f32.mxu0 0.0
    %5105 = vmatmul.mubr.f32.gmra.mxu0 %v4973
    %v5106 = vpop.f32.mrf.mxu0
    %v5107 = vadd.f32 %v4941, %v5106
    %v5108 = vpop.f32.mrf.mxu0
    %5109 = vmatprep.mubr.f32.mxu0 0.0
    %5110 = vmatmul.mubr.f32.gmra.mxu0 %v4976
    %v5111 = vpop.f32.mrf.mxu0
    %v5112 = vadd.f32 %v4941, %v5111
    %v5113 = vpop.f32.mrf.mxu0
    %5114 = vmatprep.mubr.f32.mxu0 0.0
    %5115 = vmatmul.mubr.f32.gmra.mxu0 %v4979
    %v5116 = vpop.f32.mrf.mxu0
    %v5117 = vadd.f32 %v4941, %v5116
    %v5118 = vpop.f32.mrf.mxu0
    %5119 = vmatprep.mubr.f32.mxu0 0.0
    %5120 = vmatmul.mubr.f32.gmra.mxu0 %v4982
    %v5121 = vpop.f32.mrf.mxu0
    %v5122 = vadd.f32 %v4941, %v5121
    %v5123 = vpop.f32.mrf.mxu0
    %5124 = vmatprep.mubr.f32.mxu0 0.0
    %5125 = vmatmul.mubr.f32.gmra.mxu0 %v4985
    %v5126 = vpop.f32.mrf.mxu0
    %v5127 = vadd.f32 %v4941, %v5126
    %v5128 = vpop.f32.mrf.mxu0
    %5129 = vmatprep.mubr.f32.mxu0 0.0
    %5130 = vmatmul.mubr.f32.gmra.mxu0 %v4988
    %v5131 = vpop.f32.mrf.mxu0
    %v5132 = vadd.f32 %v4941, %v5131
    %v5133 = vpop.f32.mrf.mxu0
    %5134 = vdwg.mxu0
    %v5135 = vmul.f32 %v5057, 0.5
    %v5136 = vmul.f32 %v5062, 0.5
    %v5137 = vmul.f32 %v5067, 0.5
    %v5138 = vmul.f32 %v5072, 0.5
    %v5139 = vmul.f32 %v5077, 0.5
    %v5140 = vmul.f32 %v5082, 0.5
    %v5141 = vmul.f32 %v5087, 0.5
    %v5142 = vmul.f32 %v5092, 0.5
    %v5143 = vmul.f32 %v5097, 0.5
    %v5144 = vmul.f32 %v5102, 0.5
    %v5145 = vmul.f32 %v5107, 0.5
    %v5146 = vmul.f32 %v5112, 0.5
    %v5147 = vmul.f32 %v5117, 0.5
    %v5148 = vmul.f32 %v5122, 0.5
    %v5149 = vmul.f32 %v5127, 0.5
    %v5150 = vmul.f32 %v5132, 0.5
    %v5151 = vtanh.pop %v5135
    %v5152 = vtanh.pop %v5136
    %v5153 = vtanh.pop %v5137
    %v5154 = vtanh.pop %v5138
    %v5155 = vtanh.pop %v5139
    %v5156 = vtanh.pop %v5140
    %v5157 = vtanh.pop %v5141
    %v5158 = vtanh.pop %v5142
    %v5159 = vtanh.pop %v5143
    %v5160 = vtanh.pop %v5144
    %v5161 = vtanh.pop %v5145
    %v5162 = vtanh.pop %v5146
    %v5163 = vtanh.pop %v5147
    %v5164 = vtanh.pop %v5148
    %v5165 = vtanh.pop %v5149
    %v5166 = vtanh.pop %v5150
    %v5167 = vadd.f32 %v5151, 1.0
    %v5168 = vadd.f32 %v5152, 1.0
    %v5169 = vadd.f32 %v5153, 1.0
    %v5170 = vadd.f32 %v5154, 1.0
    %v5171 = vadd.f32 %v5155, 1.0
    %v5172 = vadd.f32 %v5156, 1.0
    %v5173 = vadd.f32 %v5157, 1.0
    %v5174 = vadd.f32 %v5158, 1.0
    %v5175 = vadd.f32 %v5159, 1.0
    %v5176 = vadd.f32 %v5160, 1.0
    %v5177 = vadd.f32 %v5161, 1.0
    %v5178 = vadd.f32 %v5162, 1.0
    %v5179 = vadd.f32 %v5163, 1.0
    %v5180 = vadd.f32 %v5164, 1.0
    %v5181 = vadd.f32 %v5165, 1.0
    %v5182 = vadd.f32 %v5166, 1.0
    %v5183 = vmul.f32 %v5167, 0.5
    %v5184 = vmul.f32 %v5168, 0.5
    %v5185 = vmul.f32 %v5169, 0.5
    %v5186 = vmul.f32 %v5170, 0.5
    %v5187 = vmul.f32 %v5171, 0.5
    %v5188 = vmul.f32 %v5172, 0.5
    %v5189 = vmul.f32 %v5173, 0.5
    %v5190 = vmul.f32 %v5174, 0.5
    %v5191 = vmul.f32 %v5175, 0.5
    %v5192 = vmul.f32 %v5176, 0.5
    %v5193 = vmul.f32 %v5177, 0.5
    %v5194 = vmul.f32 %v5178, 0.5
    %v5195 = vmul.f32 %v5179, 0.5
    %v5196 = vmul.f32 %v5180, 0.5
    %v5197 = vmul.f32 %v5181, 0.5
    %v5198 = vmul.f32 %v5182, 0.5
    %v5199 = vmul.f32 %v5057, %v5183
    %v5200 = vmul.f32 %v5062, %v5184
    %v5201 = vmul.f32 %v5067, %v5185
    %v5202 = vmul.f32 %v5072, %v5186
    %v5203 = vmul.f32 %v5077, %v5187
    %v5204 = vmul.f32 %v5082, %v5188
    %v5205 = vmul.f32 %v5087, %v5189
    %v5206 = vmul.f32 %v5092, %v5190
    %v5207 = vmul.f32 %v5097, %v5191
    %v5208 = vmul.f32 %v5102, %v5192
    %v5209 = vmul.f32 %v5107, %v5193
    %v5210 = vmul.f32 %v5112, %v5194
    %v5211 = vmul.f32 %v5117, %v5195
    %v5212 = vmul.f32 %v5122, %v5196
    %v5213 = vmul.f32 %v5127, %v5197
    %v5214 = vmul.f32 %v5132, %v5198
    %v5215 = vmul.f32 %v5199, %v1425
    %v5216 = vmul.f32 %v5200, %v1430
    %v5217 = vmul.f32 %v5201, %v1435
    %v5218 = vmul.f32 %v5202, %v1440
    %v5219 = vmul.f32 %v5203, %v1445
    %v5220 = vmul.f32 %v5204, %v1450
    %v5221 = vmul.f32 %v5205, %v1455
    %v5222 = vmul.f32 %v5206, %v1460
    %v5223 = vmul.f32 %v5207, %v1465
    %v5224 = vmul.f32 %v5208, %v1470
    %v5225 = vmul.f32 %v5209, %v1475
    %v5226 = vmul.f32 %v5210, %v1480
    %v5227 = vmul.f32 %v5211, %v1485
    %v5228 = vmul.f32 %v5212, %v1490
    %v5229 = vmul.f32 %v5213, %v1495
    %v5230 = vmul.f32 %v5214, %v1500
    %v5231 = vsel %vm685, %v5215, 0.0
    %v5232 = vrot.slane %v5231, 4
    %v5233 = vadd.f32 %v5231, %v5232
    %v5234 = vrot.slane %v5233, 2
    %v5235 = vadd.f32 %v5233, %v5234
    %v5236 = vrot.slane %v5235, 1
    %v5237 = vadd.f32 %v5235, %v5236
    %v5238 = vsel %vm685, %v5216, 0.0
    %v5239 = vrot.slane %v5238, 4
    %v5240 = vadd.f32 %v5238, %v5239
    %v5241 = vrot.slane %v5240, 2
    %v5242 = vadd.f32 %v5240, %v5241
    %v5243 = vrot.slane %v5242, 1
    %v5244 = vadd.f32 %v5242, %v5243
    %v5245 = vsel %vm685, %v5217, 0.0
    %v5246 = vrot.slane %v5245, 4
    %v5247 = vadd.f32 %v5245, %v5246
    %v5248 = vrot.slane %v5247, 2
    %v5249 = vadd.f32 %v5247, %v5248
    %v5250 = vrot.slane %v5249, 1
    %v5251 = vadd.f32 %v5249, %v5250
    %v5252 = vsel %vm685, %v5218, 0.0
    %v5253 = vrot.slane %v5252, 4
    %v5254 = vadd.f32 %v5252, %v5253
    %v5255 = vrot.slane %v5254, 2
    %v5256 = vadd.f32 %v5254, %v5255
    %v5257 = vrot.slane %v5256, 1
    %v5258 = vadd.f32 %v5256, %v5257
    %v5259 = vsel %vm685, %v5219, 0.0
    %v5260 = vrot.slane %v5259, 4
    %v5261 = vadd.f32 %v5259, %v5260
    %v5262 = vrot.slane %v5261, 2
    %v5263 = vadd.f32 %v5261, %v5262
    %v5264 = vrot.slane %v5263, 1
    %v5265 = vadd.f32 %v5263, %v5264
    %v5266 = vsel %vm685, %v5220, 0.0
    %v5267 = vrot.slane %v5266, 4
    %v5268 = vadd.f32 %v5266, %v5267
    %v5269 = vrot.slane %v5268, 2
    %v5270 = vadd.f32 %v5268, %v5269
    %v5271 = vrot.slane %v5270, 1
    %v5272 = vadd.f32 %v5270, %v5271
    %v5273 = vsel %vm685, %v5221, 0.0
    %v5274 = vrot.slane %v5273, 4
    %v5275 = vadd.f32 %v5273, %v5274
    %v5276 = vrot.slane %v5275, 2
    %v5277 = vadd.f32 %v5275, %v5276
    %v5278 = vrot.slane %v5277, 1
    %v5279 = vadd.f32 %v5277, %v5278
    %v5280 = vsel %vm685, %v5222, 0.0
    %v5281 = vrot.slane %v5280, 4
    %v5282 = vadd.f32 %v5280, %v5281
    %v5283 = vrot.slane %v5282, 2
    %v5284 = vadd.f32 %v5282, %v5283
    %v5285 = vrot.slane %v5284, 1
    %v5286 = vadd.f32 %v5284, %v5285
    %v5287 = vsel %vm685, %v5223, 0.0
    %v5288 = vrot.slane %v5287, 4
    %v5289 = vadd.f32 %v5287, %v5288
    %v5290 = vrot.slane %v5289, 2
    %v5291 = vadd.f32 %v5289, %v5290
    %v5292 = vrot.slane %v5291, 1
    %v5293 = vadd.f32 %v5291, %v5292
    %v5294 = vsel %vm685, %v5224, 0.0
    %v5295 = vrot.slane %v5294, 4
    %v5296 = vadd.f32 %v5294, %v5295
    %v5297 = vrot.slane %v5296, 2
    %v5298 = vadd.f32 %v5296, %v5297
    %v5299 = vrot.slane %v5298, 1
    %v5300 = vadd.f32 %v5298, %v5299
    %v5301 = vsel %vm685, %v5225, 0.0
    %v5302 = vrot.slane %v5301, 4
    %v5303 = vadd.f32 %v5301, %v5302
    %v5304 = vrot.slane %v5303, 2
    %v5305 = vadd.f32 %v5303, %v5304
    %v5306 = vrot.slane %v5305, 1
    %v5307 = vadd.f32 %v5305, %v5306
    %v5308 = vsel %vm685, %v5226, 0.0
    %v5309 = vrot.slane %v5308, 4
    %v5310 = vadd.f32 %v5308, %v5309
    %v5311 = vrot.slane %v5310, 2
    %v5312 = vadd.f32 %v5310, %v5311
    %v5313 = vrot.slane %v5312, 1
    %v5314 = vadd.f32 %v5312, %v5313
    %v5315 = vsel %vm685, %v5227, 0.0
    %v5316 = vrot.slane %v5315, 4
    %v5317 = vadd.f32 %v5315, %v5316
    %v5318 = vrot.slane %v5317, 2
    %v5319 = vadd.f32 %v5317, %v5318
    %v5320 = vrot.slane %v5319, 1
    %v5321 = vadd.f32 %v5319, %v5320
    %v5322 = vsel %vm685, %v5228, 0.0
    %v5323 = vrot.slane %v5322, 4
    %v5324 = vadd.f32 %v5322, %v5323
    %v5325 = vrot.slane %v5324, 2
    %v5326 = vadd.f32 %v5324, %v5325
    %v5327 = vrot.slane %v5326, 1
    %v5328 = vadd.f32 %v5326, %v5327
    %v5329 = vsel %vm685, %v5229, 0.0
    %v5330 = vrot.slane %v5329, 4
    %v5331 = vadd.f32 %v5329, %v5330
    %v5332 = vrot.slane %v5331, 2
    %v5333 = vadd.f32 %v5331, %v5332
    %v5334 = vrot.slane %v5333, 1
    %v5335 = vadd.f32 %v5333, %v5334
    %v5336 = vsel %vm685, %v5230, 0.0
    %v5337 = vrot.slane %v5336, 4
    %v5338 = vadd.f32 %v5336, %v5337
    %v5339 = vrot.slane %v5338, 2
    %v5340 = vadd.f32 %v5338, %v5339
    %v5341 = vrot.slane %v5340, 1
    %v5342 = vadd.f32 %v5340, %v5341
    %v5343 = vmul.f32 %v5237, 0.01
    %v5344 = vmul.f32 %v5244, 0.01
    %v5345 = vmul.f32 %v5251, 0.01
    %v5346 = vmul.f32 %v5258, 0.01
    %v5347 = vmul.f32 %v5265, 0.01
    %v5348 = vmul.f32 %v5272, 0.01
    %v5349 = vmul.f32 %v5279, 0.01
    %v5350 = vmul.f32 %v5286, 0.01
    %v5351 = vmul.f32 %v5293, 0.01
    %v5352 = vmul.f32 %v5300, 0.01
    %v5353 = vmul.f32 %v5307, 0.01
    %v5354 = vmul.f32 %v5314, 0.01
    %v5355 = vmul.f32 %v5321, 0.01
    %v5356 = vmul.f32 %v5328, 0.01
    %v5357 = vmul.f32 %v5335, 0.01
    %v5358 = vmul.f32 %v5342, 0.01
    %s5359 = scalar_lea.vmem [#allocation4], 64
    %v5360 = vld [vmem:[%s5359] sm:$0xff]
    %v5361 = vld [vmem:[%s5359 + $0x8] sm:$0xff]
    %v5362 = vld [vmem:[%s5359 + $0x10] sm:$0xff]
    %v5363 = vld [vmem:[%s5359 + $0x18] sm:$0xff]
    %v5380 = vsel %vm1666, %v5344, %v5343
    %v5381 = vsel %vm1668, %v5345, %v5380
    %v5382 = vsel %vm1670, %v5346, %v5381
    %v5383 = vsel %vm1672, %v5347, %v5382
    %v5384 = vsel %vm1674, %v5348, %v5383
    %v5385 = vsel %vm1676, %v5349, %v5384
    %v5386 = vsel %vm1678, %v5350, %v5385
    %v5387 = vsel %vm1666, %v5352, %v5351
    %v5388 = vsel %vm1668, %v5353, %v5387
    %v5389 = vsel %vm1670, %v5354, %v5388
    %v5390 = vsel %vm1672, %v5355, %v5389
    %v5391 = vsel %vm1674, %v5356, %v5390
    %v5392 = vsel %vm1676, %v5357, %v5391
    %v5393 = vsel %vm1678, %v5358, %v5392
    %v5394 = vsel %vm685, %v5386, 0
    %v5396 = vsel %vm685, %v5393, 0
    %5398 = vmatprep.subr.mxu0 0.0
    %5399 = vmatpush1.msra.mxu0 0.0
    %5400 = vmatprep.subr.mxu0 0.0
    %5401 = vmatpush1.msra.mxu0 0.0
    %5402 = vmatprep.subr.mxu0 0.0
    %5403 = vmatpush1.msra.mxu0 0.0
    %5404 = vmatprep.subr.mxu0 0.0
    %5405 = vmatpush1.msra.mxu0 0.0
    %5406 = vmatprep.subr.mxu0 0.0
    %5407 = vmatpush1.msra.mxu0 0.0
    %5408 = vmatprep.subr.mxu0 0.0
    %5409 = vmatpush1.msra.mxu0 0.0
    %5410 = vmatprep.subr.mxu0 0.0
    %5411 = vmatpush1.msra.mxu0 0.0
    %5412 = vmatprep.subr.mxu0 0.0
    %5413 = vmatpush1.msra.mxu0 0.0
    %5414 = vmatprep.subr.mxu0 0.0
    %5415 = vmatpush1.msra.mxu0 0.0
    %5416 = vmatprep.subr.mxu0 0.0
    %5417 = vmatpush1.msra.mxu0 0.0
    %5418 = vmatprep.subr.mxu0 0.0
    %5419 = vmatpush1.msra.mxu0 0.0
    %5420 = vmatprep.subr.mxu0 0.0
    %5421 = vmatpush1.msra.mxu0 0.0
    %5422 = vmatprep.subr.mxu0 0.0
    %5423 = vmatpush1.msra.mxu0 %v5363
    %5424 = vmatprep.subr.mxu0 0.0
    %5425 = vmatpush1.msra.mxu0 %v5362
    %5426 = vmatprep.subr.mxu0 0.0
    %5427 = vmatpush1.msra.mxu0 %v5361
    %5428 = vmatprep.subr.mxu0 0.0
    %5429 = vmatpush1.msra.mxu0 %v5360
    %5430 = vmatprep.subr.mxu0 0.0
    %5431 = vmatpush2.msra.mxu0 0.0
    %5432 = vmatprep.subr.mxu0 0.0
    %5433 = vmatpush2.msra.mxu0 0.0
    %5434 = vmatprep.subr.mxu0 0.0
    %5435 = vmatpush2.msra.mxu0 0.0
    %5436 = vmatprep.subr.mxu0 0.0
    %5437 = vmatpush2.msra.mxu0 0.0
    %5438 = vmatprep.subr.mxu0 0.0
    %5439 = vmatpush2.msra.mxu0 0.0
    %5440 = vmatprep.subr.mxu0 0.0
    %5441 = vmatpush2.msra.mxu0 0.0
    %5442 = vmatprep.subr.mxu0 0.0
    %5443 = vmatpush2.msra.mxu0 0.0
    %5444 = vmatprep.subr.mxu0 0.0
    %5445 = vmatpush2.msra.mxu0 0.0
    %5446 = vmatprep.subr.mxu0 0.0
    %5447 = vmatpush2.msra.mxu0 0.0
    %5448 = vmatprep.subr.mxu0 0.0
    %5449 = vmatpush2.msra.mxu0 0.0
    %5450 = vmatprep.subr.mxu0 0.0
    %5451 = vmatpush2.msra.mxu0 0.0
    %5452 = vmatprep.subr.mxu0 0.0
    %5453 = vmatpush2.msra.mxu0 0.0
    %5454 = vmatprep.subr.mxu0 0.0
    %5455 = vmatpush2.msra.mxu0 0.0
    %5456 = vmatprep.subr.mxu0 0.0
    %5457 = vmatpush2.msra.mxu0 0.0
    %5458 = vmatprep.subr.mxu0 0.0
    %5459 = vmatpush2.msra.mxu0 0.0
    %5460 = vmatprep.subr.mxu0 0.0
    %5461 = vmatpush2.msra.mxu0 0.0
    %5462 = vmatprep.mubr.f32.mxu0 0.0
    %5463 = vmatmul.mubr.f32.gmra.mxu0 %v5394
    %v5464 = vpop.f32.mrf.mxu0
    %v5465 = vadd.f32 0.0, %v5464
    %v5466 = vpop.f32.mrf.mxu0
    %5467 = vmatprep.mubr.f32.mxu0 0.0
    %5468 = vmatmul.mubr.f32.gmra.mxu0 %v5396
    %v5469 = vpop.f32.mrf.mxu0
    %v5470 = vadd.f32 0.0, %v5469
    %v5471 = vpop.f32.mrf.mxu0
    %5472 = vdwg.mxu0
    %5475 = vrot.lane.b32.xlu0 %v5465, 64
    %v5476 = vpop.permute.xlu0 %5475
    %5477 = vrot.lane.b32.xlu0 %v5470, 64
    %v5478 = vpop.permute.xlu0 %5477
    %v5481 = vadd.f32 %v4551, %v5476
    %v5482 = vadd.f32 %v4556, %v5478
    %v5483 = vlaneseq
    %v5484 = vshrl.u32 %v5483, 7
    %v5485 = vsub.s32 4, %v5484
    %v5486 = vrot.slane %v154, %v5485
    %5488 = vrot.lane.b32.xlu0 %v5486, 64
    %v5489 = vpop.permute.xlu0 %5488
    %v5491 = vadd.f32 %v5481, %v5489
    %v5492 = vadd.f32 %v5482, %v5489
    %v5493 = vmul.f32 %v5491, 0.5
    %v5494 = vmul.f32 %v5492, 0.5
    %v5495 = vtanh.pop %v5493
    %v5496 = vtanh.pop %v5494
    %v5497 = vadd.f32 %v5495, 1.0
    %v5498 = vadd.f32 %v5496, 1.0
    %v5499 = vmul.f32 %v5497, 0.5
    %v5500 = vmul.f32 %v5498, 0.5
    %v5501 = vmul.f32 %v5491, %v5499
    %v5502 = vmul.f32 %v5492, %v5500
    %s5503 = scalar_lea.vmem [#allocation6], 64
    %v5504 = vld [vmem:[%s5503] sm:$0xff]
    %v5505 = vld [vmem:[%s5503 + $0x8] sm:$0xff]
    %v5506 = vld [vmem:[%s5503 + $0x10] sm:$0xff]
    %v5507 = vld [vmem:[%s5503 + $0x18] sm:$0xff]
    %v5508 = vlaneseq
    %v5509 = vshrl.u32 %v5508, 7
    %v5510 = vsub.s32 5, %v5509
    %v5511 = vrot.slane %v154, %v5510
    %5514 = vrot.lane.b32.xlu0 %v5501, 64
    %v5515 = vpop.permute.xlu0 %5514
    %5516 = vrot.lane.b32.xlu0 %v5502, 64
    %v5517 = vpop.permute.xlu0 %5516
    %v5518 = vsel %vm685, %v5515, 0
    %v5520 = vsel %vm685, %v5517, 0
    %5522 = vmatprep.subr.mxu0 0.0
    %5523 = vmatpush1.msra.mxu0 0.0
    %5524 = vmatprep.subr.mxu0 0.0
    %5525 = vmatpush1.msra.mxu0 0.0
    %5526 = vmatprep.subr.mxu0 0.0
    %5527 = vmatpush1.msra.mxu0 0.0
    %5528 = vmatprep.subr.mxu0 0.0
    %5529 = vmatpush1.msra.mxu0 0.0
    %5530 = vmatprep.subr.mxu0 0.0
    %5531 = vmatpush1.msra.mxu0 0.0
    %5532 = vmatprep.subr.mxu0 0.0
    %5533 = vmatpush1.msra.mxu0 0.0
    %5534 = vmatprep.subr.mxu0 0.0
    %5535 = vmatpush1.msra.mxu0 0.0
    %5536 = vmatprep.subr.mxu0 0.0
    %5537 = vmatpush1.msra.mxu0 0.0
    %5538 = vmatprep.subr.mxu0 0.0
    %5539 = vmatpush1.msra.mxu0 0.0
    %5540 = vmatprep.subr.mxu0 0.0
    %5541 = vmatpush1.msra.mxu0 0.0
    %5542 = vmatprep.subr.mxu0 0.0
    %5543 = vmatpush1.msra.mxu0 0.0
    %5544 = vmatprep.subr.mxu0 0.0
    %5545 = vmatpush1.msra.mxu0 0.0
    %5546 = vmatprep.subr.mxu0 0.0
    %5547 = vmatpush1.msra.mxu0 %v5507
    %5548 = vmatprep.subr.mxu0 0.0
    %5549 = vmatpush1.msra.mxu0 %v5506
    %5550 = vmatprep.subr.mxu0 0.0
    %5551 = vmatpush1.msra.mxu0 %v5505
    %5552 = vmatprep.subr.mxu0 0.0
    %5553 = vmatpush1.msra.mxu0 %v5504
    %5554 = vmatprep.subr.mxu0 0.0
    %5555 = vmatpush2.msra.mxu0 0.0
    %5556 = vmatprep.subr.mxu0 0.0
    %5557 = vmatpush2.msra.mxu0 0.0
    %5558 = vmatprep.subr.mxu0 0.0
    %5559 = vmatpush2.msra.mxu0 0.0
    %5560 = vmatprep.subr.mxu0 0.0
    %5561 = vmatpush2.msra.mxu0 0.0
    %5562 = vmatprep.subr.mxu0 0.0
    %5563 = vmatpush2.msra.mxu0 0.0
    %5564 = vmatprep.subr.mxu0 0.0
    %5565 = vmatpush2.msra.mxu0 0.0
    %5566 = vmatprep.subr.mxu0 0.0
    %5567 = vmatpush2.msra.mxu0 0.0
    %5568 = vmatprep.subr.mxu0 0.0
    %5569 = vmatpush2.msra.mxu0 0.0
    %5570 = vmatprep.subr.mxu0 0.0
    %5571 = vmatpush2.msra.mxu0 0.0
    %5572 = vmatprep.subr.mxu0 0.0
    %5573 = vmatpush2.msra.mxu0 0.0
    %5574 = vmatprep.subr.mxu0 0.0
    %5575 = vmatpush2.msra.mxu0 0.0
    %5576 = vmatprep.subr.mxu0 0.0
    %5577 = vmatpush2.msra.mxu0 0.0
    %5578 = vmatprep.subr.mxu0 0.0
    %5579 = vmatpush2.msra.mxu0 0.0
    %5580 = vmatprep.subr.mxu0 0.0
    %5581 = vmatpush2.msra.mxu0 0.0
    %5582 = vmatprep.subr.mxu0 0.0
    %5583 = vmatpush2.msra.mxu0 0.0
    %5584 = vmatprep.subr.mxu0 0.0
    %5585 = vmatpush2.msra.mxu0 0.0
    %5586 = vmatprep.mubr.f32.mxu0 0.0
    %5587 = vmatmul.mubr.f32.gmra.mxu0 %v5518
    %v5588 = vpop.f32.mrf.mxu0
    %v5589 = vadd.f32 %v5511, %v5588
    %v5590 = vpop.f32.mrf.mxu0
    %5591 = vmatprep.mubr.f32.mxu0 0.0
    %5592 = vmatmul.mubr.f32.gmra.mxu0 %v5520
    %v5593 = vpop.f32.mrf.mxu0
    %v5594 = vadd.f32 %v5511, %v5593
    %v5595 = vpop.f32.mrf.mxu0
    %5596 = vdwg.mxu0
    %v5597 = vadd.f32 %v4035, %v5589
    %v5598 = vadd.f32 %v4036, %v5594
    %v5599 = vmul.f32 %v5597, %v1894
    %v5600 = vmul.f32 %v5598, %v1899
    %s5601 = scalar_lea.vmem %s5, 96
    %v5602 = vld [vmem:[%s5601] sm:$0xff]
    %v5603 = vld [vmem:[%s5601 + $0x8] sm:$0xff]
    %v5604 = vld [vmem:[%s5601 + $0x10] sm:$0xff]
    %v5605 = vld [vmem:[%s5601 + $0x18] sm:$0xff]
    %v5607 = vsel %vm685, %v5599, 0
    %v5610 = vsel %vm685, %v5600, 0
    %5612 = vmatprep.subr.mxu0 0.0
    %5613 = vmatpush1.msra.mxu0 0.0
    %5614 = vmatprep.subr.mxu0 0.0
    %5615 = vmatpush1.msra.mxu0 0.0
    %5616 = vmatprep.subr.mxu0 0.0
    %5617 = vmatpush1.msra.mxu0 0.0
    %5618 = vmatprep.subr.mxu0 0.0
    %5619 = vmatpush1.msra.mxu0 0.0
    %5620 = vmatprep.subr.mxu0 0.0
    %5621 = vmatpush1.msra.mxu0 0.0
    %5622 = vmatprep.subr.mxu0 0.0
    %5623 = vmatpush1.msra.mxu0 0.0
    %5624 = vmatprep.subr.mxu0 0.0
    %5625 = vmatpush1.msra.mxu0 0.0
    %5626 = vmatprep.subr.mxu0 0.0
    %5627 = vmatpush1.msra.mxu0 0.0
    %5628 = vmatprep.subr.mxu0 0.0
    %5629 = vmatpush1.msra.mxu0 0.0
    %5630 = vmatprep.subr.mxu0 0.0
    %5631 = vmatpush1.msra.mxu0 0.0
    %5632 = vmatprep.subr.mxu0 0.0
    %5633 = vmatpush1.msra.mxu0 0.0
    %5634 = vmatprep.subr.mxu0 0.0
    %5635 = vmatpush1.msra.mxu0 0.0
    %5636 = vmatprep.subr.mxu0 0.0
    %5637 = vmatpush1.msra.mxu0 %v5605
    %5638 = vmatprep.subr.mxu0 0.0
    %5639 = vmatpush1.msra.mxu0 %v5604
    %5640 = vmatprep.subr.mxu0 0.0
    %5641 = vmatpush1.msra.mxu0 %v5603
    %5642 = vmatprep.subr.mxu0 0.0
    %5643 = vmatpush1.msra.mxu0 %v5602
    %5644 = vmatprep.subr.mxu0 0.0
    %5645 = vmatpush2.msra.mxu0 0.0
    %5646 = vmatprep.subr.mxu0 0.0
    %5647 = vmatpush2.msra.mxu0 0.0
    %5648 = vmatprep.subr.mxu0 0.0
    %5649 = vmatpush2.msra.mxu0 0.0
    %5650 = vmatprep.subr.mxu0 0.0
    %5651 = vmatpush2.msra.mxu0 0.0
    %5652 = vmatprep.subr.mxu0 0.0
    %5653 = vmatpush2.msra.mxu0 0.0
    %5654 = vmatprep.subr.mxu0 0.0
    %5655 = vmatpush2.msra.mxu0 0.0
    %5656 = vmatprep.subr.mxu0 0.0
    %5657 = vmatpush2.msra.mxu0 0.0
    %5658 = vmatprep.subr.mxu0 0.0
    %5659 = vmatpush2.msra.mxu0 0.0
    %5660 = vmatprep.subr.mxu0 0.0
    %5661 = vmatpush2.msra.mxu0 0.0
    %5662 = vmatprep.subr.mxu0 0.0
    %5663 = vmatpush2.msra.mxu0 0.0
    %5664 = vmatprep.subr.mxu0 0.0
    %5665 = vmatpush2.msra.mxu0 0.0
    %5666 = vmatprep.subr.mxu0 0.0
    %5667 = vmatpush2.msra.mxu0 0.0
    %5668 = vmatprep.subr.mxu0 0.0
    %5669 = vmatpush2.msra.mxu0 0.0
    %5670 = vmatprep.subr.mxu0 0.0
    %5671 = vmatpush2.msra.mxu0 0.0
    %5672 = vmatprep.subr.mxu0 0.0
    %5673 = vmatpush2.msra.mxu0 0.0
    %5674 = vmatprep.subr.mxu0 0.0
    %5675 = vmatpush2.msra.mxu0 0.0
    %5676 = vmatprep.mubr.f32.mxu0 0.0
    %5677 = vmatmul.mubr.f32.gmra.mxu0 %v5607
    %v5678 = vpop.f32.mrf.mxu0
    %v5679 = vadd.f32 0.0, %v5678
    %v5680 = vpop.f32.mrf.mxu0
    %5681 = vmatprep.mubr.f32.mxu0 0.0
    %5682 = vmatmul.mubr.f32.gmra.mxu0 %v5610
    %v5683 = vpop.f32.mrf.mxu0
    %v5684 = vadd.f32 0.0, %v5683
    %v5685 = vpop.f32.mrf.mxu0
    %5686 = vdwg.mxu0
    %v5689 = vcombine.high %v5679, %v5679
    %v5691 = vunpack.c.l.s4 1966171168
    %v5692 = vunpack.c.0.s8 %v5691
    %v5693 = vlaneseq
    %v5694 = vshrl.u32 %v5693, 7
    %v5695 = vsub.s32 %v5692, %v5694
    %v5696 = vrot.slane %v5679, %v5695
    %v5698 = vunpack.c.l.s4 1966171168
    %v5699 = vunpack.c.0.s8 %v5698
    %v5700 = vlaneseq
    %v5701 = vshrl.u32 %v5700, 7
    %v5702 = vsub.s32 %v5699, %v5701
    %v5703 = vrot.slane %v5689, %v5702
    %v5704 = vcombine.high %v5696, %v5696
    %v5705 = vcombine.high %v5703, %v5703
    %v5707 = vunpack.c.l.s4 1966171168
    %v5708 = vunpack.c.0.s8 %v5707
    %v5709 = vlaneseq
    %v5710 = vshrl.u32 %v5709, 7
    %v5711 = vsub.s32 %v5708, %v5710
    %v5712 = vrot.slane %v5696, %v5711
    %v5714 = vunpack.c.l.s4 1966171168
    %v5715 = vunpack.c.0.s8 %v5714
    %v5716 = vlaneseq
    %v5717 = vshrl.u32 %v5716, 7
    %v5718 = vsub.s32 %v5715, %v5717
    %v5719 = vrot.slane %v5703, %v5718
    %v5721 = vunpack.c.l.s4 1966171168
    %v5722 = vunpack.c.0.s8 %v5721
    %v5723 = vlaneseq
    %v5724 = vshrl.u32 %v5723, 7
    %v5725 = vsub.s32 %v5722, %v5724
    %v5726 = vrot.slane %v5704, %v5725
    %v5728 = vunpack.c.l.s4 1966171168
    %v5729 = vunpack.c.0.s8 %v5728
    %v5730 = vlaneseq
    %v5731 = vshrl.u32 %v5730, 7
    %v5732 = vsub.s32 %v5729, %v5731
    %v5733 = vrot.slane %v5705, %v5732
    %v5734 = vcombine.high %v5712, %v5712
    %v5735 = vcombine.high %v5719, %v5719
    %v5736 = vcombine.high %v5726, %v5726
    %v5737 = vcombine.high %v5733, %v5733
    %v5738 = vcombine.high %v5684, %v5684
    %v5740 = vunpack.c.l.s4 1966171168
    %v5741 = vunpack.c.0.s8 %v5740
    %v5742 = vlaneseq
    %v5743 = vshrl.u32 %v5742, 7
    %v5744 = vsub.s32 %v5741, %v5743
    %v5745 = vrot.slane %v5684, %v5744
    %v5747 = vunpack.c.l.s4 1966171168
    %v5748 = vunpack.c.0.s8 %v5747
    %v5749 = vlaneseq
    %v5750 = vshrl.u32 %v5749, 7
    %v5751 = vsub.s32 %v5748, %v5750
    %v5752 = vrot.slane %v5738, %v5751
    %v5753 = vcombine.high %v5745, %v5745
    %v5754 = vcombine.high %v5752, %v5752
    %v5756 = vunpack.c.l.s4 1966171168
    %v5757 = vunpack.c.0.s8 %v5756
    %v5758 = vlaneseq
    %v5759 = vshrl.u32 %v5758, 7
    %v5760 = vsub.s32 %v5757, %v5759
    %v5761 = vrot.slane %v5745, %v5760
    %v5763 = vunpack.c.l.s4 1966171168
    %v5764 = vunpack.c.0.s8 %v5763
    %v5765 = vlaneseq
    %v5766 = vshrl.u32 %v5765, 7
    %v5767 = vsub.s32 %v5764, %v5766
    %v5768 = vrot.slane %v5752, %v5767
    %v5770 = vunpack.c.l.s4 1966171168
    %v5771 = vunpack.c.0.s8 %v5770
    %v5772 = vlaneseq
    %v5773 = vshrl.u32 %v5772, 7
    %v5774 = vsub.s32 %v5771, %v5773
    %v5775 = vrot.slane %v5753, %v5774
    %v5777 = vunpack.c.l.s4 1966171168
    %v5778 = vunpack.c.0.s8 %v5777
    %v5779 = vlaneseq
    %v5780 = vshrl.u32 %v5779, 7
    %v5781 = vsub.s32 %v5778, %v5780
    %v5782 = vrot.slane %v5754, %v5781
    %v5783 = vcombine.high %v5761, %v5761
    %v5784 = vcombine.high %v5768, %v5768
    %v5785 = vcombine.high %v5775, %v5775
    %v5786 = vcombine.high %v5782, %v5782
    %v5787 = vlaneseq
    %v5788 = vshrl.u32 %v5787, 7
    %v5789 = vsub.s32 0, %v5788
    %v5790 = vrot.slane %v5712, %v5789
    %v5791 = vlaneseq
    %v5792 = vshrl.u32 %v5791, 7
    %v5793 = vsub.s32 0, %v5792
    %v5794 = vrot.slane %v5726, %v5793
    %v5795 = vlaneseq
    %v5796 = vshrl.u32 %v5795, 7
    %v5797 = vsub.s32 0, %v5796
    %v5798 = vrot.slane %v5734, %v5797
    %v5799 = vlaneseq
    %v5800 = vshrl.u32 %v5799, 7
    %v5801 = vsub.s32 0, %v5800
    %v5802 = vrot.slane %v5736, %v5801
    %v5803 = vlaneseq
    %v5804 = vshrl.u32 %v5803, 7
    %v5805 = vsub.s32 0, %v5804
    %v5806 = vrot.slane %v5719, %v5805
    %v5807 = vlaneseq
    %v5808 = vshrl.u32 %v5807, 7
    %v5809 = vsub.s32 0, %v5808
    %v5810 = vrot.slane %v5733, %v5809
    %v5811 = vlaneseq
    %v5812 = vshrl.u32 %v5811, 7
    %v5813 = vsub.s32 0, %v5812
    %v5814 = vrot.slane %v5735, %v5813
    %v5815 = vlaneseq
    %v5816 = vshrl.u32 %v5815, 7
    %v5817 = vsub.s32 0, %v5816
    %v5818 = vrot.slane %v5737, %v5817
    %v5819 = vlaneseq
    %v5820 = vshrl.u32 %v5819, 7
    %v5821 = vsub.s32 0, %v5820
    %v5822 = vrot.slane %v5761, %v5821
    %v5823 = vlaneseq
    %v5824 = vshrl.u32 %v5823, 7
    %v5825 = vsub.s32 0, %v5824
    %v5826 = vrot.slane %v5775, %v5825
    %v5827 = vlaneseq
    %v5828 = vshrl.u32 %v5827, 7
    %v5829 = vsub.s32 0, %v5828
    %v5830 = vrot.slane %v5783, %v5829
    %v5831 = vlaneseq
    %v5832 = vshrl.u32 %v5831, 7
    %v5833 = vsub.s32 0, %v5832
    %v5834 = vrot.slane %v5785, %v5833
    %v5835 = vlaneseq
    %v5836 = vshrl.u32 %v5835, 7
    %v5837 = vsub.s32 0, %v5836
    %v5838 = vrot.slane %v5768, %v5837
    %v5839 = vlaneseq
    %v5840 = vshrl.u32 %v5839, 7
    %v5841 = vsub.s32 0, %v5840
    %v5842 = vrot.slane %v5782, %v5841
    %v5843 = vlaneseq
    %v5844 = vshrl.u32 %v5843, 7
    %v5845 = vsub.s32 0, %v5844
    %v5846 = vrot.slane %v5784, %v5845
    %v5847 = vlaneseq
    %v5848 = vshrl.u32 %v5847, 7
    %v5849 = vsub.s32 0, %v5848
    %v5850 = vrot.slane %v5786, %v5849
    %5867 = vrot.lane.b32.xlu0 %v5679, 96
    %v5868 = vpop.permute.xlu0 %5867
    %5869 = vrot.lane.b32.xlu0 %v5684, 96
    %v5870 = vpop.permute.xlu0 %5869
    %v5873 = vadd.f32 %v5790, %v5868
    %v5874 = vadd.f32 %v5794, %v5868
    %v5875 = vadd.f32 %v5798, %v5868
    %v5876 = vadd.f32 %v5802, %v5868
    %v5877 = vadd.f32 %v5806, %v5868
    %v5878 = vadd.f32 %v5810, %v5868
    %v5879 = vadd.f32 %v5814, %v5868
    %v5880 = vadd.f32 %v5818, %v5868
    %v5881 = vadd.f32 %v5822, %v5870
    %v5882 = vadd.f32 %v5826, %v5870
    %v5883 = vadd.f32 %v5830, %v5870
    %v5884 = vadd.f32 %v5834, %v5870
    %v5885 = vadd.f32 %v5838, %v5870
    %v5886 = vadd.f32 %v5842, %v5870
    %v5887 = vadd.f32 %v5846, %v5870
    %v5888 = vadd.f32 %v5850, %v5870
    %v5889 = vlaneseq
    %v5890 = vshrl.u32 %v5889, 7
    %v5891 = vsub.s32 6, %v5890
    %v5892 = vrot.slane %v154, %v5891
    %v5893 = vmul.f32 %v4251, %v5892
    %v5894 = vmul.f32 %v4254, %v5892
    %v5895 = vmul.f32 %v4257, %v5892
    %v5896 = vmul.f32 %v4260, %v5892
    %v5897 = vmul.f32 %v4263, %v5892
    %v5898 = vmul.f32 %v4266, %v5892
    %v5899 = vmul.f32 %v4269, %v5892
    %v5900 = vmul.f32 %v4272, %v5892
    %v5901 = vmul.f32 %v4275, %v5892
    %v5902 = vmul.f32 %v4278, %v5892
    %v5903 = vmul.f32 %v4281, %v5892
    %v5904 = vmul.f32 %v4284, %v5892
    %v5905 = vmul.f32 %v4287, %v5892
    %v5906 = vmul.f32 %v4290, %v5892
    %v5907 = vmul.f32 %v4293, %v5892
    %v5908 = vmul.f32 %v4296, %v5892
    %v5909 = vadd.f32 %v5873, %v5893
    %v5910 = vadd.f32 %v5874, %v5894
    %v5911 = vadd.f32 %v5875, %v5895
    %v5912 = vadd.f32 %v5876, %v5896
    %v5913 = vadd.f32 %v5877, %v5897
    %v5914 = vadd.f32 %v5878, %v5898
    %v5915 = vadd.f32 %v5879, %v5899
    %v5916 = vadd.f32 %v5880, %v5900
    %v5917 = vadd.f32 %v5881, %v5901
    %v5918 = vadd.f32 %v5882, %v5902
    %v5919 = vadd.f32 %v5883, %v5903
    %v5920 = vadd.f32 %v5884, %v5904
    %v5921 = vadd.f32 %v5885, %v5905
    %v5922 = vadd.f32 %v5886, %v5906
    %v5923 = vadd.f32 %v5887, %v5907
    %v5924 = vadd.f32 %v5888, %v5908
    %v5925 = vlaneseq
    %v5926 = vshrl.u32 %v5925, 7
    %v5927 = vsub.s32 7, %v5926
    %v5928 = vrot.slane %v154, %v5927
    %v5929 = vmul.f32 %v372, %v5928
    %v5930 = vmul.f32 %v375, %v5928
    %v5931 = vmul.f32 %v378, %v5928
    %v5932 = vmul.f32 %v381, %v5928
    %v5933 = vmul.f32 %v384, %v5928
    %v5934 = vmul.f32 %v387, %v5928
    %v5935 = vmul.f32 %v390, %v5928
    %v5936 = vmul.f32 %v393, %v5928
    %v5937 = vmul.f32 %v396, %v5928
    %v5938 = vmul.f32 %v399, %v5928
    %v5939 = vmul.f32 %v402, %v5928
    %v5940 = vmul.f32 %v405, %v5928
    %v5941 = vmul.f32 %v408, %v5928
    %v5942 = vmul.f32 %v411, %v5928
    %v5943 = vmul.f32 %v414, %v5928
    %v5944 = vmul.f32 %v417, %v5928
    %v5945 = vadd.f32 %v5909, %v5929
    %v5946 = vadd.f32 %v5910, %v5930
    %v5947 = vadd.f32 %v5911, %v5931
    %v5948 = vadd.f32 %v5912, %v5932
    %v5949 = vadd.f32 %v5913, %v5933
    %v5950 = vadd.f32 %v5914, %v5934
    %v5951 = vadd.f32 %v5915, %v5935
    %v5952 = vadd.f32 %v5916, %v5936
    %v5953 = vadd.f32 %v5917, %v5937
    %v5954 = vadd.f32 %v5918, %v5938
    %v5955 = vadd.f32 %v5919, %v5939
    %v5956 = vadd.f32 %v5920, %v5940
    %v5957 = vadd.f32 %v5921, %v5941
    %v5958 = vadd.f32 %v5922, %v5942
    %v5959 = vadd.f32 %v5923, %v5943
    %v5960 = vadd.f32 %v5924, %v5944
    %v5961 = vlaneseq
    %v5962 = vshrl.u32 %v5961, 7
    %v5963 = vsub.s32 0, %v5962
    %v5964 = vrot.slane %v155, %v5963
    %v5965 = vadd.f32 %v5945, %v5964
    %v5966 = vadd.f32 %v5946, %v5964
    %v5967 = vadd.f32 %v5947, %v5964
    %v5968 = vadd.f32 %v5948, %v5964
    %v5969 = vadd.f32 %v5949, %v5964
    %v5970 = vadd.f32 %v5950, %v5964
    %v5971 = vadd.f32 %v5951, %v5964
    %v5972 = vadd.f32 %v5952, %v5964
    %v5973 = vadd.f32 %v5953, %v5964
    %v5974 = vadd.f32 %v5954, %v5964
    %v5975 = vadd.f32 %v5955, %v5964
    %v5976 = vadd.f32 %v5956, %v5964
    %v5977 = vadd.f32 %v5957, %v5964
    %v5978 = vadd.f32 %v5958, %v5964
    %v5979 = vadd.f32 %v5959, %v5964
    %v5980 = vadd.f32 %v5960, %v5964
    %v5981 = vmul.f32 %v5965, 0.5
    %v5982 = vmul.f32 %v5966, 0.5
    %v5983 = vmul.f32 %v5967, 0.5
    %v5984 = vmul.f32 %v5968, 0.5
    %v5985 = vmul.f32 %v5969, 0.5
    %v5986 = vmul.f32 %v5970, 0.5
    %v5987 = vmul.f32 %v5971, 0.5
    %v5988 = vmul.f32 %v5972, 0.5
    %v5989 = vmul.f32 %v5973, 0.5
    %v5990 = vmul.f32 %v5974, 0.5
    %v5991 = vmul.f32 %v5975, 0.5
    %v5992 = vmul.f32 %v5976, 0.5
    %v5993 = vmul.f32 %v5977, 0.5
    %v5994 = vmul.f32 %v5978, 0.5
    %v5995 = vmul.f32 %v5979, 0.5
    %v5996 = vmul.f32 %v5980, 0.5
    %v5997 = vtanh.pop %v5981
    %v5998 = vtanh.pop %v5982
    %v5999 = vtanh.pop %v5983
    %v6000 = vtanh.pop %v5984
    %v6001 = vtanh.pop %v5985
    %v6002 = vtanh.pop %v5986
    %v6003 = vtanh.pop %v5987
    %v6004 = vtanh.pop %v5988
    %v6005 = vtanh.pop %v5989
    %v6006 = vtanh.pop %v5990
    %v6007 = vtanh.pop %v5991
    %v6008 = vtanh.pop %v5992
    %v6009 = vtanh.pop %v5993
    %v6010 = vtanh.pop %v5994
    %v6011 = vtanh.pop %v5995
    %v6012 = vtanh.pop %v5996
    %v6013 = vadd.f32 %v5997, 1.0
    %v6014 = vadd.f32 %v5998, 1.0
    %v6015 = vadd.f32 %v5999, 1.0
    %v6016 = vadd.f32 %v6000, 1.0
    %v6017 = vadd.f32 %v6001, 1.0
    %v6018 = vadd.f32 %v6002, 1.0
    %v6019 = vadd.f32 %v6003, 1.0
    %v6020 = vadd.f32 %v6004, 1.0
    %v6021 = vadd.f32 %v6005, 1.0
    %v6022 = vadd.f32 %v6006, 1.0
    %v6023 = vadd.f32 %v6007, 1.0
    %v6024 = vadd.f32 %v6008, 1.0
    %v6025 = vadd.f32 %v6009, 1.0
    %v6026 = vadd.f32 %v6010, 1.0
    %v6027 = vadd.f32 %v6011, 1.0
    %v6028 = vadd.f32 %v6012, 1.0
    %v6029 = vmul.f32 %v6013, 0.5
    %v6030 = vmul.f32 %v6014, 0.5
    %v6031 = vmul.f32 %v6015, 0.5
    %v6032 = vmul.f32 %v6016, 0.5
    %v6033 = vmul.f32 %v6017, 0.5
    %v6034 = vmul.f32 %v6018, 0.5
    %v6035 = vmul.f32 %v6019, 0.5
    %v6036 = vmul.f32 %v6020, 0.5
    %v6037 = vmul.f32 %v6021, 0.5
    %v6038 = vmul.f32 %v6022, 0.5
    %v6039 = vmul.f32 %v6023, 0.5
    %v6040 = vmul.f32 %v6024, 0.5
    %v6041 = vmul.f32 %v6025, 0.5
    %v6042 = vmul.f32 %v6026, 0.5
    %v6043 = vmul.f32 %v6027, 0.5
    %v6044 = vmul.f32 %v6028, 0.5
    %v6045 = vmul.f32 %v5965, %v6029
    %v6046 = vmul.f32 %v5966, %v6030
    %v6047 = vmul.f32 %v5967, %v6031
    %v6048 = vmul.f32 %v5968, %v6032
    %v6049 = vmul.f32 %v5969, %v6033
    %v6050 = vmul.f32 %v5970, %v6034
    %v6051 = vmul.f32 %v5971, %v6035
    %v6052 = vmul.f32 %v5972, %v6036
    %v6053 = vmul.f32 %v5973, %v6037
    %v6054 = vmul.f32 %v5974, %v6038
    %v6055 = vmul.f32 %v5975, %v6039
    %v6056 = vmul.f32 %v5976, %v6040
    %v6057 = vmul.f32 %v5977, %v6041
    %v6058 = vmul.f32 %v5978, %v6042
    %v6059 = vmul.f32 %v5979, %v6043
    %v6060 = vmul.f32 %v5980, %v6044
    %s6061 = scalar_lea.vmem %s6, 96
    %v6062 = vld [vmem:[%s6061] sm:$0xff]
    %v6063 = vld [vmem:[%s6061 + $0x8] sm:$0xff]
    %v6064 = vld [vmem:[%s6061 + $0x10] sm:$0xff]
    %v6065 = vld [vmem:[%s6061 + $0x18] sm:$0xff]
    %v6066 = vlaneseq
    %v6067 = vshrl.u32 %v6066, 7
    %v6068 = vsub.s32 1, %v6067
    %v6069 = vrot.slane %v155, %v6068
    %v6071 = vsel %vm685, %v6045, 0
    %v6074 = vsel %vm685, %v6046, 0
    %v6077 = vsel %vm685, %v6047, 0
    %v6080 = vsel %vm685, %v6048, 0
    %v6083 = vsel %vm685, %v6049, 0
    %v6086 = vsel %vm685, %v6050, 0
    %v6089 = vsel %vm685, %v6051, 0
    %v6092 = vsel %vm685, %v6052, 0
    %v6095 = vsel %vm685, %v6053, 0
    %v6098 = vsel %vm685, %v6054, 0
    %v6101 = vsel %vm685, %v6055, 0
    %v6104 = vsel %vm685, %v6056, 0
    %v6107 = vsel %vm685, %v6057, 0
    %v6110 = vsel %vm685, %v6058, 0
    %v6113 = vsel %vm685, %v6059, 0
    %v6116 = vsel %vm685, %v6060, 0
    %6118 = vmatprep.subr.mxu0 0.0
    %6119 = vmatpush1.msra.mxu0 0.0
    %6120 = vmatprep.subr.mxu0 0.0
    %6121 = vmatpush1.msra.mxu0 0.0
    %6122 = vmatprep.subr.mxu0 0.0
    %6123 = vmatpush1.msra.mxu0 0.0
    %6124 = vmatprep.subr.mxu0 0.0
    %6125 = vmatpush1.msra.mxu0 0.0
    %6126 = vmatprep.subr.mxu0 0.0
    %6127 = vmatpush1.msra.mxu0 0.0
    %6128 = vmatprep.subr.mxu0 0.0
    %6129 = vmatpush1.msra.mxu0 0.0
    %6130 = vmatprep.subr.mxu0 0.0
    %6131 = vmatpush1.msra.mxu0 0.0
    %6132 = vmatprep.subr.mxu0 0.0
    %6133 = vmatpush1.msra.mxu0 0.0
    %6134 = vmatprep.subr.mxu0 0.0
    %6135 = vmatpush1.msra.mxu0 0.0
    %6136 = vmatprep.subr.mxu0 0.0
    %6137 = vmatpush1.msra.mxu0 0.0
    %6138 = vmatprep.subr.mxu0 0.0
    %6139 = vmatpush1.msra.mxu0 0.0
    %6140 = vmatprep.subr.mxu0 0.0
    %6141 = vmatpush1.msra.mxu0 0.0
    %6142 = vmatprep.subr.mxu0 0.0
    %6143 = vmatpush1.msra.mxu0 %v6065
    %6144 = vmatprep.subr.mxu0 0.0
    %6145 = vmatpush1.msra.mxu0 %v6064
    %6146 = vmatprep.subr.mxu0 0.0
    %6147 = vmatpush1.msra.mxu0 %v6063
    %6148 = vmatprep.subr.mxu0 0.0
    %6149 = vmatpush1.msra.mxu0 %v6062
    %6150 = vmatprep.subr.mxu0 0.0
    %6151 = vmatpush2.msra.mxu0 0.0
    %6152 = vmatprep.subr.mxu0 0.0
    %6153 = vmatpush2.msra.mxu0 0.0
    %6154 = vmatprep.subr.mxu0 0.0
    %6155 = vmatpush2.msra.mxu0 0.0
    %6156 = vmatprep.subr.mxu0 0.0
    %6157 = vmatpush2.msra.mxu0 0.0
    %6158 = vmatprep.subr.mxu0 0.0
    %6159 = vmatpush2.msra.mxu0 0.0
    %6160 = vmatprep.subr.mxu0 0.0
    %6161 = vmatpush2.msra.mxu0 0.0
    %6162 = vmatprep.subr.mxu0 0.0
    %6163 = vmatpush2.msra.mxu0 0.0
    %6164 = vmatprep.subr.mxu0 0.0
    %6165 = vmatpush2.msra.mxu0 0.0
    %6166 = vmatprep.subr.mxu0 0.0
    %6167 = vmatpush2.msra.mxu0 0.0
    %6168 = vmatprep.subr.mxu0 0.0
    %6169 = vmatpush2.msra.mxu0 0.0
    %6170 = vmatprep.subr.mxu0 0.0
    %6171 = vmatpush2.msra.mxu0 0.0
    %6172 = vmatprep.subr.mxu0 0.0
    %6173 = vmatpush2.msra.mxu0 0.0
    %6174 = vmatprep.subr.mxu0 0.0
    %6175 = vmatpush2.msra.mxu0 0.0
    %6176 = vmatprep.subr.mxu0 0.0
    %6177 = vmatpush2.msra.mxu0 0.0
    %6178 = vmatprep.subr.mxu0 0.0
    %6179 = vmatpush2.msra.mxu0 0.0
    %6180 = vmatprep.subr.mxu0 0.0
    %6181 = vmatpush2.msra.mxu0 0.0
    %6182 = vmatprep.mubr.f32.mxu0 0.0
    %6183 = vmatmul.mubr.f32.gmra.mxu0 %v6071
    %v6184 = vpop.f32.mrf.mxu0
    %v6185 = vadd.f32 %v6069, %v6184
    %v6186 = vpop.f32.mrf.mxu0
    %6187 = vmatprep.mubr.f32.mxu0 0.0
    %6188 = vmatmul.mubr.f32.gmra.mxu0 %v6074
    %v6189 = vpop.f32.mrf.mxu0
    %v6190 = vadd.f32 %v6069, %v6189
    %v6191 = vpop.f32.mrf.mxu0
    %6192 = vmatprep.mubr.f32.mxu0 0.0
    %6193 = vmatmul.mubr.f32.gmra.mxu0 %v6077
    %v6194 = vpop.f32.mrf.mxu0
    %v6195 = vadd.f32 %v6069, %v6194
    %v6196 = vpop.f32.mrf.mxu0
    %6197 = vmatprep.mubr.f32.mxu0 0.0
    %6198 = vmatmul.mubr.f32.gmra.mxu0 %v6080
    %v6199 = vpop.f32.mrf.mxu0
    %v6200 = vadd.f32 %v6069, %v6199
    %v6201 = vpop.f32.mrf.mxu0
    %6202 = vmatprep.mubr.f32.mxu0 0.0
    %6203 = vmatmul.mubr.f32.gmra.mxu0 %v6083
    %v6204 = vpop.f32.mrf.mxu0
    %v6205 = vadd.f32 %v6069, %v6204
    %v6206 = vpop.f32.mrf.mxu0
    %6207 = vmatprep.mubr.f32.mxu0 0.0
    %6208 = vmatmul.mubr.f32.gmra.mxu0 %v6086
    %v6209 = vpop.f32.mrf.mxu0
    %v6210 = vadd.f32 %v6069, %v6209
    %v6211 = vpop.f32.mrf.mxu0
    %6212 = vmatprep.mubr.f32.mxu0 0.0
    %6213 = vmatmul.mubr.f32.gmra.mxu0 %v6089
    %v6214 = vpop.f32.mrf.mxu0
    %v6215 = vadd.f32 %v6069, %v6214
    %v6216 = vpop.f32.mrf.mxu0
    %6217 = vmatprep.mubr.f32.mxu0 0.0
    %6218 = vmatmul.mubr.f32.gmra.mxu0 %v6092
    %v6219 = vpop.f32.mrf.mxu0
    %v6220 = vadd.f32 %v6069, %v6219
    %v6221 = vpop.f32.mrf.mxu0
    %6222 = vmatprep.mubr.f32.mxu0 0.0
    %6223 = vmatmul.mubr.f32.gmra.mxu0 %v6095
    %v6224 = vpop.f32.mrf.mxu0
    %v6225 = vadd.f32 %v6069, %v6224
    %v6226 = vpop.f32.mrf.mxu0
    %6227 = vmatprep.mubr.f32.mxu0 0.0
    %6228 = vmatmul.mubr.f32.gmra.mxu0 %v6098
    %v6229 = vpop.f32.mrf.mxu0
    %v6230 = vadd.f32 %v6069, %v6229
    %v6231 = vpop.f32.mrf.mxu0
    %6232 = vmatprep.mubr.f32.mxu0 0.0
    %6233 = vmatmul.mubr.f32.gmra.mxu0 %v6101
    %v6234 = vpop.f32.mrf.mxu0
    %v6235 = vadd.f32 %v6069, %v6234
    %v6236 = vpop.f32.mrf.mxu0
    %6237 = vmatprep.mubr.f32.mxu0 0.0
    %6238 = vmatmul.mubr.f32.gmra.mxu0 %v6104
    %v6239 = vpop.f32.mrf.mxu0
    %v6240 = vadd.f32 %v6069, %v6239
    %v6241 = vpop.f32.mrf.mxu0
    %6242 = vmatprep.mubr.f32.mxu0 0.0
    %6243 = vmatmul.mubr.f32.gmra.mxu0 %v6107
    %v6244 = vpop.f32.mrf.mxu0
    %v6245 = vadd.f32 %v6069, %v6244
    %v6246 = vpop.f32.mrf.mxu0
    %6247 = vmatprep.mubr.f32.mxu0 0.0
    %6248 = vmatmul.mubr.f32.gmra.mxu0 %v6110
    %v6249 = vpop.f32.mrf.mxu0
    %v6250 = vadd.f32 %v6069, %v6249
    %v6251 = vpop.f32.mrf.mxu0
    %6252 = vmatprep.mubr.f32.mxu0 0.0
    %6253 = vmatmul.mubr.f32.gmra.mxu0 %v6113
    %v6254 = vpop.f32.mrf.mxu0
    %v6255 = vadd.f32 %v6069, %v6254
    %v6256 = vpop.f32.mrf.mxu0
    %6257 = vmatprep.mubr.f32.mxu0 0.0
    %6258 = vmatmul.mubr.f32.gmra.mxu0 %v6116
    %v6259 = vpop.f32.mrf.mxu0
    %v6260 = vadd.f32 %v6069, %v6259
    %v6261 = vpop.f32.mrf.mxu0
    %6262 = vdwg.mxu0
    %v6263 = vmul.f32 %v6185, 0.5
    %v6264 = vmul.f32 %v6190, 0.5
    %v6265 = vmul.f32 %v6195, 0.5
    %v6266 = vmul.f32 %v6200, 0.5
    %v6267 = vmul.f32 %v6205, 0.5
    %v6268 = vmul.f32 %v6210, 0.5
    %v6269 = vmul.f32 %v6215, 0.5
    %v6270 = vmul.f32 %v6220, 0.5
    %v6271 = vmul.f32 %v6225, 0.5
    %v6272 = vmul.f32 %v6230, 0.5
    %v6273 = vmul.f32 %v6235, 0.5
    %v6274 = vmul.f32 %v6240, 0.5
    %v6275 = vmul.f32 %v6245, 0.5
    %v6276 = vmul.f32 %v6250, 0.5
    %v6277 = vmul.f32 %v6255, 0.5
    %v6278 = vmul.f32 %v6260, 0.5
    %v6279 = vtanh.pop %v6263
    %v6280 = vtanh.pop %v6264
    %v6281 = vtanh.pop %v6265
    %v6282 = vtanh.pop %v6266
    %v6283 = vtanh.pop %v6267
    %v6284 = vtanh.pop %v6268
    %v6285 = vtanh.pop %v6269
    %v6286 = vtanh.pop %v6270
    %v6287 = vtanh.pop %v6271
    %v6288 = vtanh.pop %v6272
    %v6289 = vtanh.pop %v6273
    %v6290 = vtanh.pop %v6274
    %v6291 = vtanh.pop %v6275
    %v6292 = vtanh.pop %v6276
    %v6293 = vtanh.pop %v6277
    %v6294 = vtanh.pop %v6278
    %v6295 = vadd.f32 %v6279, 1.0
    %v6296 = vadd.f32 %v6280, 1.0
    %v6297 = vadd.f32 %v6281, 1.0
    %v6298 = vadd.f32 %v6282, 1.0
    %v6299 = vadd.f32 %v6283, 1.0
    %v6300 = vadd.f32 %v6284, 1.0
    %v6301 = vadd.f32 %v6285, 1.0
    %v6302 = vadd.f32 %v6286, 1.0
    %v6303 = vadd.f32 %v6287, 1.0
    %v6304 = vadd.f32 %v6288, 1.0
    %v6305 = vadd.f32 %v6289, 1.0
    %v6306 = vadd.f32 %v6290, 1.0
    %v6307 = vadd.f32 %v6291, 1.0
    %v6308 = vadd.f32 %v6292, 1.0
    %v6309 = vadd.f32 %v6293, 1.0
    %v6310 = vadd.f32 %v6294, 1.0
    %v6311 = vmul.f32 %v6295, 0.5
    %v6312 = vmul.f32 %v6296, 0.5
    %v6313 = vmul.f32 %v6297, 0.5
    %v6314 = vmul.f32 %v6298, 0.5
    %v6315 = vmul.f32 %v6299, 0.5
    %v6316 = vmul.f32 %v6300, 0.5
    %v6317 = vmul.f32 %v6301, 0.5
    %v6318 = vmul.f32 %v6302, 0.5
    %v6319 = vmul.f32 %v6303, 0.5
    %v6320 = vmul.f32 %v6304, 0.5
    %v6321 = vmul.f32 %v6305, 0.5
    %v6322 = vmul.f32 %v6306, 0.5
    %v6323 = vmul.f32 %v6307, 0.5
    %v6324 = vmul.f32 %v6308, 0.5
    %v6325 = vmul.f32 %v6309, 0.5
    %v6326 = vmul.f32 %v6310, 0.5
    %v6327 = vmul.f32 %v6185, %v6311
    %v6328 = vmul.f32 %v6190, %v6312
    %v6329 = vmul.f32 %v6195, %v6313
    %v6330 = vmul.f32 %v6200, %v6314
    %v6331 = vmul.f32 %v6205, %v6315
    %v6332 = vmul.f32 %v6210, %v6316
    %v6333 = vmul.f32 %v6215, %v6317
    %v6334 = vmul.f32 %v6220, %v6318
    %v6335 = vmul.f32 %v6225, %v6319
    %v6336 = vmul.f32 %v6230, %v6320
    %v6337 = vmul.f32 %v6235, %v6321
    %v6338 = vmul.f32 %v6240, %v6322
    %v6339 = vmul.f32 %v6245, %v6323
    %v6340 = vmul.f32 %v6250, %v6324
    %v6341 = vmul.f32 %v6255, %v6325
    %v6342 = vmul.f32 %v6260, %v6326
    %v6343 = vmul.f32 %v6327, %v1425
    %v6344 = vmul.f32 %v6328, %v1430
    %v6345 = vmul.f32 %v6329, %v1435
    %v6346 = vmul.f32 %v6330, %v1440
    %v6347 = vmul.f32 %v6331, %v1445
    %v6348 = vmul.f32 %v6332, %v1450
    %v6349 = vmul.f32 %v6333, %v1455
    %v6350 = vmul.f32 %v6334, %v1460
    %v6351 = vmul.f32 %v6335, %v1465
    %v6352 = vmul.f32 %v6336, %v1470
    %v6353 = vmul.f32 %v6337, %v1475
    %v6354 = vmul.f32 %v6338, %v1480
    %v6355 = vmul.f32 %v6339, %v1485
    %v6356 = vmul.f32 %v6340, %v1490
    %v6357 = vmul.f32 %v6341, %v1495
    %v6358 = vmul.f32 %v6342, %v1500
    %v6359 = vsel %vm685, %v6343, 0.0
    %v6360 = vrot.slane %v6359, 4
    %v6361 = vadd.f32 %v6359, %v6360
    %v6362 = vrot.slane %v6361, 2
    %v6363 = vadd.f32 %v6361, %v6362
    %v6364 = vrot.slane %v6363, 1
    %v6365 = vadd.f32 %v6363, %v6364
    %v6366 = vsel %vm685, %v6344, 0.0
    %v6367 = vrot.slane %v6366, 4
    %v6368 = vadd.f32 %v6366, %v6367
    %v6369 = vrot.slane %v6368, 2
    %v6370 = vadd.f32 %v6368, %v6369
    %v6371 = vrot.slane %v6370, 1
    %v6372 = vadd.f32 %v6370, %v6371
    %v6373 = vsel %vm685, %v6345, 0.0
    %v6374 = vrot.slane %v6373, 4
    %v6375 = vadd.f32 %v6373, %v6374
    %v6376 = vrot.slane %v6375, 2
    %v6377 = vadd.f32 %v6375, %v6376
    %v6378 = vrot.slane %v6377, 1
    %v6379 = vadd.f32 %v6377, %v6378
    %v6380 = vsel %vm685, %v6346, 0.0
    %v6381 = vrot.slane %v6380, 4
    %v6382 = vadd.f32 %v6380, %v6381
    %v6383 = vrot.slane %v6382, 2
    %v6384 = vadd.f32 %v6382, %v6383
    %v6385 = vrot.slane %v6384, 1
    %v6386 = vadd.f32 %v6384, %v6385
    %v6387 = vsel %vm685, %v6347, 0.0
    %v6388 = vrot.slane %v6387, 4
    %v6389 = vadd.f32 %v6387, %v6388
    %v6390 = vrot.slane %v6389, 2
    %v6391 = vadd.f32 %v6389, %v6390
    %v6392 = vrot.slane %v6391, 1
    %v6393 = vadd.f32 %v6391, %v6392
    %v6394 = vsel %vm685, %v6348, 0.0
    %v6395 = vrot.slane %v6394, 4
    %v6396 = vadd.f32 %v6394, %v6395
    %v6397 = vrot.slane %v6396, 2
    %v6398 = vadd.f32 %v6396, %v6397
    %v6399 = vrot.slane %v6398, 1
    %v6400 = vadd.f32 %v6398, %v6399
    %v6401 = vsel %vm685, %v6349, 0.0
    %v6402 = vrot.slane %v6401, 4
    %v6403 = vadd.f32 %v6401, %v6402
    %v6404 = vrot.slane %v6403, 2
    %v6405 = vadd.f32 %v6403, %v6404
    %v6406 = vrot.slane %v6405, 1
    %v6407 = vadd.f32 %v6405, %v6406
    %v6408 = vsel %vm685, %v6350, 0.0
    %v6409 = vrot.slane %v6408, 4
    %v6410 = vadd.f32 %v6408, %v6409
    %v6411 = vrot.slane %v6410, 2
    %v6412 = vadd.f32 %v6410, %v6411
    %v6413 = vrot.slane %v6412, 1
    %v6414 = vadd.f32 %v6412, %v6413
    %v6415 = vsel %vm685, %v6351, 0.0
    %v6416 = vrot.slane %v6415, 4
    %v6417 = vadd.f32 %v6415, %v6416
    %v6418 = vrot.slane %v6417, 2
    %v6419 = vadd.f32 %v6417, %v6418
    %v6420 = vrot.slane %v6419, 1
    %v6421 = vadd.f32 %v6419, %v6420
    %v6422 = vsel %vm685, %v6352, 0.0
    %v6423 = vrot.slane %v6422, 4
    %v6424 = vadd.f32 %v6422, %v6423
    %v6425 = vrot.slane %v6424, 2
    %v6426 = vadd.f32 %v6424, %v6425
    %v6427 = vrot.slane %v6426, 1
    %v6428 = vadd.f32 %v6426, %v6427
    %v6429 = vsel %vm685, %v6353, 0.0
    %v6430 = vrot.slane %v6429, 4
    %v6431 = vadd.f32 %v6429, %v6430
    %v6432 = vrot.slane %v6431, 2
    %v6433 = vadd.f32 %v6431, %v6432
    %v6434 = vrot.slane %v6433, 1
    %v6435 = vadd.f32 %v6433, %v6434
    %v6436 = vsel %vm685, %v6354, 0.0
    %v6437 = vrot.slane %v6436, 4
    %v6438 = vadd.f32 %v6436, %v6437
    %v6439 = vrot.slane %v6438, 2
    %v6440 = vadd.f32 %v6438, %v6439
    %v6441 = vrot.slane %v6440, 1
    %v6442 = vadd.f32 %v6440, %v6441
    %v6443 = vsel %vm685, %v6355, 0.0
    %v6444 = vrot.slane %v6443, 4
    %v6445 = vadd.f32 %v6443, %v6444
    %v6446 = vrot.slane %v6445, 2
    %v6447 = vadd.f32 %v6445, %v6446
    %v6448 = vrot.slane %v6447, 1
    %v6449 = vadd.f32 %v6447, %v6448
    %v6450 = vsel %vm685, %v6356, 0.0
    %v6451 = vrot.slane %v6450, 4
    %v6452 = vadd.f32 %v6450, %v6451
    %v6453 = vrot.slane %v6452, 2
    %v6454 = vadd.f32 %v6452, %v6453
    %v6455 = vrot.slane %v6454, 1
    %v6456 = vadd.f32 %v6454, %v6455
    %v6457 = vsel %vm685, %v6357, 0.0
    %v6458 = vrot.slane %v6457, 4
    %v6459 = vadd.f32 %v6457, %v6458
    %v6460 = vrot.slane %v6459, 2
    %v6461 = vadd.f32 %v6459, %v6460
    %v6462 = vrot.slane %v6461, 1
    %v6463 = vadd.f32 %v6461, %v6462
    %v6464 = vsel %vm685, %v6358, 0.0
    %v6465 = vrot.slane %v6464, 4
    %v6466 = vadd.f32 %v6464, %v6465
    %v6467 = vrot.slane %v6466, 2
    %v6468 = vadd.f32 %v6466, %v6467
    %v6469 = vrot.slane %v6468, 1
    %v6470 = vadd.f32 %v6468, %v6469
    %v6471 = vmul.f32 %v6365, 0.01
    %v6472 = vmul.f32 %v6372, 0.01
    %v6473 = vmul.f32 %v6379, 0.01
    %v6474 = vmul.f32 %v6386, 0.01
    %v6475 = vmul.f32 %v6393, 0.01
    %v6476 = vmul.f32 %v6400, 0.01
    %v6477 = vmul.f32 %v6407, 0.01
    %v6478 = vmul.f32 %v6414, 0.01
    %v6479 = vmul.f32 %v6421, 0.01
    %v6480 = vmul.f32 %v6428, 0.01
    %v6481 = vmul.f32 %v6435, 0.01
    %v6482 = vmul.f32 %v6442, 0.01
    %v6483 = vmul.f32 %v6449, 0.01
    %v6484 = vmul.f32 %v6456, 0.01
    %v6485 = vmul.f32 %v6463, 0.01
    %v6486 = vmul.f32 %v6470, 0.01
    %s6487 = scalar_lea.vmem [#allocation4], 96
    %v6488 = vld [vmem:[%s6487] sm:$0xff]
    %v6489 = vld [vmem:[%s6487 + $0x8] sm:$0xff]
    %v6490 = vld [vmem:[%s6487 + $0x10] sm:$0xff]
    %v6491 = vld [vmem:[%s6487 + $0x18] sm:$0xff]
    %v6508 = vsel %vm1666, %v6472, %v6471
    %v6509 = vsel %vm1668, %v6473, %v6508
    %v6510 = vsel %vm1670, %v6474, %v6509
    %v6511 = vsel %vm1672, %v6475, %v6510
    %v6512 = vsel %vm1674, %v6476, %v6511
    %v6513 = vsel %vm1676, %v6477, %v6512
    %v6514 = vsel %vm1678, %v6478, %v6513
    %v6515 = vsel %vm1666, %v6480, %v6479
    %v6516 = vsel %vm1668, %v6481, %v6515
    %v6517 = vsel %vm1670, %v6482, %v6516
    %v6518 = vsel %vm1672, %v6483, %v6517
    %v6519 = vsel %vm1674, %v6484, %v6518
    %v6520 = vsel %vm1676, %v6485, %v6519
    %v6521 = vsel %vm1678, %v6486, %v6520
    %v6522 = vsel %vm685, %v6514, 0
    %v6524 = vsel %vm685, %v6521, 0
    %6526 = vmatprep.subr.mxu0 0.0
    %6527 = vmatpush1.msra.mxu0 0.0
    %6528 = vmatprep.subr.mxu0 0.0
    %6529 = vmatpush1.msra.mxu0 0.0
    %6530 = vmatprep.subr.mxu0 0.0
    %6531 = vmatpush1.msra.mxu0 0.0
    %6532 = vmatprep.subr.mxu0 0.0
    %6533 = vmatpush1.msra.mxu0 0.0
    %6534 = vmatprep.subr.mxu0 0.0
    %6535 = vmatpush1.msra.mxu0 0.0
    %6536 = vmatprep.subr.mxu0 0.0
    %6537 = vmatpush1.msra.mxu0 0.0
    %6538 = vmatprep.subr.mxu0 0.0
    %6539 = vmatpush1.msra.mxu0 0.0
    %6540 = vmatprep.subr.mxu0 0.0
    %6541 = vmatpush1.msra.mxu0 0.0
    %6542 = vmatprep.subr.mxu0 0.0
    %6543 = vmatpush1.msra.mxu0 0.0
    %6544 = vmatprep.subr.mxu0 0.0
    %6545 = vmatpush1.msra.mxu0 0.0
    %6546 = vmatprep.subr.mxu0 0.0
    %6547 = vmatpush1.msra.mxu0 0.0
    %6548 = vmatprep.subr.mxu0 0.0
    %6549 = vmatpush1.msra.mxu0 0.0
    %6550 = vmatprep.subr.mxu0 0.0
    %6551 = vmatpush1.msra.mxu0 %v6491
    %6552 = vmatprep.subr.mxu0 0.0
    %6553 = vmatpush1.msra.mxu0 %v6490
    %6554 = vmatprep.subr.mxu0 0.0
    %6555 = vmatpush1.msra.mxu0 %v6489
    %6556 = vmatprep.subr.mxu0 0.0
    %6557 = vmatpush1.msra.mxu0 %v6488
    %6558 = vmatprep.subr.mxu0 0.0
    %6559 = vmatpush2.msra.mxu0 0.0
    %6560 = vmatprep.subr.mxu0 0.0
    %6561 = vmatpush2.msra.mxu0 0.0
    %6562 = vmatprep.subr.mxu0 0.0
    %6563 = vmatpush2.msra.mxu0 0.0
    %6564 = vmatprep.subr.mxu0 0.0
    %6565 = vmatpush2.msra.mxu0 0.0
    %6566 = vmatprep.subr.mxu0 0.0
    %6567 = vmatpush2.msra.mxu0 0.0
    %6568 = vmatprep.subr.mxu0 0.0
    %6569 = vmatpush2.msra.mxu0 0.0
    %6570 = vmatprep.subr.mxu0 0.0
    %6571 = vmatpush2.msra.mxu0 0.0
    %6572 = vmatprep.subr.mxu0 0.0
    %6573 = vmatpush2.msra.mxu0 0.0
    %6574 = vmatprep.subr.mxu0 0.0
    %6575 = vmatpush2.msra.mxu0 0.0
    %6576 = vmatprep.subr.mxu0 0.0
    %6577 = vmatpush2.msra.mxu0 0.0
    %6578 = vmatprep.subr.mxu0 0.0
    %6579 = vmatpush2.msra.mxu0 0.0
    %6580 = vmatprep.subr.mxu0 0.0
    %6581 = vmatpush2.msra.mxu0 0.0
    %6582 = vmatprep.subr.mxu0 0.0
    %6583 = vmatpush2.msra.mxu0 0.0
    %6584 = vmatprep.subr.mxu0 0.0
    %6585 = vmatpush2.msra.mxu0 0.0
    %6586 = vmatprep.subr.mxu0 0.0
    %6587 = vmatpush2.msra.mxu0 0.0
    %6588 = vmatprep.subr.mxu0 0.0
    %6589 = vmatpush2.msra.mxu0 0.0
    %6590 = vmatprep.mubr.f32.mxu0 0.0
    %6591 = vmatmul.mubr.f32.gmra.mxu0 %v6522
    %v6592 = vpop.f32.mrf.mxu0
    %v6593 = vadd.f32 0.0, %v6592
    %v6594 = vpop.f32.mrf.mxu0
    %6595 = vmatprep.mubr.f32.mxu0 0.0
    %6596 = vmatmul.mubr.f32.gmra.mxu0 %v6524
    %v6597 = vpop.f32.mrf.mxu0
    %v6598 = vadd.f32 0.0, %v6597
    %v6599 = vpop.f32.mrf.mxu0
    %6600 = vdwg.mxu0
    %6603 = vrot.lane.b32.xlu0 %v6593, 64
    %v6604 = vpop.permute.xlu0 %6603
    %6605 = vrot.lane.b32.xlu0 %v6598, 64
    %v6606 = vpop.permute.xlu0 %6605
    %v6609 = vadd.f32 %v5679, %v6604
    %v6610 = vadd.f32 %v5684, %v6606
    %v6611 = vlaneseq
    %v6612 = vshrl.u32 %v6611, 7
    %v6613 = vsub.s32 2, %v6612
    %v6614 = vrot.slane %v155, %v6613
    %6616 = vrot.lane.b32.xlu0 %v6614, 64
    %v6617 = vpop.permute.xlu0 %6616
    %v6619 = vadd.f32 %v6609, %v6617
    %v6620 = vadd.f32 %v6610, %v6617
    %v6621 = vmul.f32 %v6619, 0.5
    %v6622 = vmul.f32 %v6620, 0.5
    %v6623 = vtanh.pop %v6621
    %v6624 = vtanh.pop %v6622
    %v6625 = vadd.f32 %v6623, 1.0
    %v6626 = vadd.f32 %v6624, 1.0
    %v6627 = vmul.f32 %v6625, 0.5
    %v6628 = vmul.f32 %v6626, 0.5
    %v6629 = vmul.f32 %v6619, %v6627
    %v6630 = vmul.f32 %v6620, %v6628
    %s6631 = scalar_lea.vmem [#allocation6], 96
    %v6632 = vld [vmem:[%s6631] sm:$0xff]
    %v6633 = vld [vmem:[%s6631 + $0x8] sm:$0xff]
    %v6634 = vld [vmem:[%s6631 + $0x10] sm:$0xff]
    %v6635 = vld [vmem:[%s6631 + $0x18] sm:$0xff]
    %v6636 = vlaneseq
    %v6637 = vshrl.u32 %v6636, 7
    %v6638 = vsub.s32 3, %v6637
    %v6639 = vrot.slane %v155, %v6638
    %6642 = vrot.lane.b32.xlu0 %v6629, 64
    %v6643 = vpop.permute.xlu0 %6642
    %6644 = vrot.lane.b32.xlu0 %v6630, 64
    %v6645 = vpop.permute.xlu0 %6644
    %v6646 = vsel %vm685, %v6643, 0
    %v6648 = vsel %vm685, %v6645, 0
    %6650 = vmatprep.subr.mxu0 0.0
    %6651 = vmatpush1.msra.mxu0 0.0
    %6652 = vmatprep.subr.mxu0 0.0
    %6653 = vmatpush1.msra.mxu0 0.0
    %6654 = vmatprep.subr.mxu0 0.0
    %6655 = vmatpush1.msra.mxu0 0.0
    %6656 = vmatprep.subr.mxu0 0.0
    %6657 = vmatpush1.msra.mxu0 0.0
    %6658 = vmatprep.subr.mxu0 0.0
    %6659 = vmatpush1.msra.mxu0 0.0
    %6660 = vmatprep.subr.mxu0 0.0
    %6661 = vmatpush1.msra.mxu0 0.0
    %6662 = vmatprep.subr.mxu0 0.0
    %6663 = vmatpush1.msra.mxu0 0.0
    %6664 = vmatprep.subr.mxu0 0.0
    %6665 = vmatpush1.msra.mxu0 0.0
    %6666 = vmatprep.subr.mxu0 0.0
    %6667 = vmatpush1.msra.mxu0 0.0
    %6668 = vmatprep.subr.mxu0 0.0
    %6669 = vmatpush1.msra.mxu0 0.0
    %6670 = vmatprep.subr.mxu0 0.0
    %6671 = vmatpush1.msra.mxu0 0.0
    %6672 = vmatprep.subr.mxu0 0.0
    %6673 = vmatpush1.msra.mxu0 0.0
    %6674 = vmatprep.subr.mxu0 0.0
    %6675 = vmatpush1.msra.mxu0 %v6635
    %6676 = vmatprep.subr.mxu0 0.0
    %6677 = vmatpush1.msra.mxu0 %v6634
    %6678 = vmatprep.subr.mxu0 0.0
    %6679 = vmatpush1.msra.mxu0 %v6633
    %6680 = vmatprep.subr.mxu0 0.0
    %6681 = vmatpush1.msra.mxu0 %v6632
    %6682 = vmatprep.subr.mxu0 0.0
    %6683 = vmatpush2.msra.mxu0 0.0
    %6684 = vmatprep.subr.mxu0 0.0
    %6685 = vmatpush2.msra.mxu0 0.0
    %6686 = vmatprep.subr.mxu0 0.0
    %6687 = vmatpush2.msra.mxu0 0.0
    %6688 = vmatprep.subr.mxu0 0.0
    %6689 = vmatpush2.msra.mxu0 0.0
    %6690 = vmatprep.subr.mxu0 0.0
    %6691 = vmatpush2.msra.mxu0 0.0
    %6692 = vmatprep.subr.mxu0 0.0
    %6693 = vmatpush2.msra.mxu0 0.0
    %6694 = vmatprep.subr.mxu0 0.0
    %6695 = vmatpush2.msra.mxu0 0.0
    %6696 = vmatprep.subr.mxu0 0.0
    %6697 = vmatpush2.msra.mxu0 0.0
    %6698 = vmatprep.subr.mxu0 0.0
    %6699 = vmatpush2.msra.mxu0 0.0
    %6700 = vmatprep.subr.mxu0 0.0
    %6701 = vmatpush2.msra.mxu0 0.0
    %6702 = vmatprep.subr.mxu0 0.0
    %6703 = vmatpush2.msra.mxu0 0.0
    %6704 = vmatprep.subr.mxu0 0.0
    %6705 = vmatpush2.msra.mxu0 0.0
    %6706 = vmatprep.subr.mxu0 0.0
    %6707 = vmatpush2.msra.mxu0 0.0
    %6708 = vmatprep.subr.mxu0 0.0
    %6709 = vmatpush2.msra.mxu0 0.0
    %6710 = vmatprep.subr.mxu0 0.0
    %6711 = vmatpush2.msra.mxu0 0.0
    %6712 = vmatprep.subr.mxu0 0.0
    %6713 = vmatpush2.msra.mxu0 0.0
    %6714 = vmatprep.mubr.f32.mxu0 0.0
    %6715 = vmatmul.mubr.f32.gmra.mxu0 %v6646
    %v6716 = vpop.f32.mrf.mxu0
    %v6717 = vadd.f32 %v6639, %v6716
    %v6718 = vpop.f32.mrf.mxu0
    %6719 = vmatprep.mubr.f32.mxu0 0.0
    %6720 = vmatmul.mubr.f32.gmra.mxu0 %v6648
    %v6721 = vpop.f32.mrf.mxu0
    %v6722 = vadd.f32 %v6639, %v6721
    %v6723 = vpop.f32.mrf.mxu0
    %6724 = vdwg.mxu0
    %v6725 = vadd.f32 %v5599, %v6717
    %v6726 = vadd.f32 %v5600, %v6722
    %v6727 = vmul.f32 %v6725, %v1894
    %v6728 = vmul.f32 %v6726, %v1899
    %s6729 = scalar_lea.vmem [#allocation7], 32
    %v6730 = vld [vmem:[%s6729] sm:$0xff]
    %v6731 = vld [vmem:[%s6729 + $0x8] sm:$0xff]
    %v6732 = vld [vmem:[%s6729 + $0x10] sm:$0xff]
    %v6733 = vld [vmem:[%s6729 + $0x18] sm:$0xff]
    %v6735 = vsel %vm685, %v6727, 0
    %v6738 = vsel %vm685, %v6728, 0
    %6740 = vmatprep.subr.mxu0 0.0
    %6741 = vmatpush1.msra.mxu0 0.0
    %6742 = vmatprep.subr.mxu0 0.0
    %6743 = vmatpush1.msra.mxu0 0.0
    %6744 = vmatprep.subr.mxu0 0.0
    %6745 = vmatpush1.msra.mxu0 0.0
    %6746 = vmatprep.subr.mxu0 0.0
    %6747 = vmatpush1.msra.mxu0 0.0
    %6748 = vmatprep.subr.mxu0 0.0
    %6749 = vmatpush1.msra.mxu0 0.0
    %6750 = vmatprep.subr.mxu0 0.0
    %6751 = vmatpush1.msra.mxu0 0.0
    %6752 = vmatprep.subr.mxu0 0.0
    %6753 = vmatpush1.msra.mxu0 0.0
    %6754 = vmatprep.subr.mxu0 0.0
    %6755 = vmatpush1.msra.mxu0 0.0
    %6756 = vmatprep.subr.mxu0 0.0
    %6757 = vmatpush1.msra.mxu0 0.0
    %6758 = vmatprep.subr.mxu0 0.0
    %6759 = vmatpush1.msra.mxu0 0.0
    %6760 = vmatprep.subr.mxu0 0.0
    %6761 = vmatpush1.msra.mxu0 0.0
    %6762 = vmatprep.subr.mxu0 0.0
    %6763 = vmatpush1.msra.mxu0 0.0
    %6764 = vmatprep.subr.mxu0 0.0
    %6765 = vmatpush1.msra.mxu0 %v6733
    %6766 = vmatprep.subr.mxu0 0.0
    %6767 = vmatpush1.msra.mxu0 %v6732
    %6768 = vmatprep.subr.mxu0 0.0
    %6769 = vmatpush1.msra.mxu0 %v6731
    %6770 = vmatprep.subr.mxu0 0.0
    %6771 = vmatpush1.msra.mxu0 %v6730
    %6772 = vmatprep.subr.mxu0 0.0
    %6773 = vmatpush2.msra.mxu0 0.0
    %6774 = vmatprep.subr.mxu0 0.0
    %6775 = vmatpush2.msra.mxu0 0.0
    %6776 = vmatprep.subr.mxu0 0.0
    %6777 = vmatpush2.msra.mxu0 0.0
    %6778 = vmatprep.subr.mxu0 0.0
    %6779 = vmatpush2.msra.mxu0 0.0
    %6780 = vmatprep.subr.mxu0 0.0
    %6781 = vmatpush2.msra.mxu0 0.0
    %6782 = vmatprep.subr.mxu0 0.0
    %6783 = vmatpush2.msra.mxu0 0.0
    %6784 = vmatprep.subr.mxu0 0.0
    %6785 = vmatpush2.msra.mxu0 0.0
    %6786 = vmatprep.subr.mxu0 0.0
    %6787 = vmatpush2.msra.mxu0 0.0
    %6788 = vmatprep.subr.mxu0 0.0
    %6789 = vmatpush2.msra.mxu0 0.0
    %6790 = vmatprep.subr.mxu0 0.0
    %6791 = vmatpush2.msra.mxu0 0.0
    %6792 = vmatprep.subr.mxu0 0.0
    %6793 = vmatpush2.msra.mxu0 0.0
    %6794 = vmatprep.subr.mxu0 0.0
    %6795 = vmatpush2.msra.mxu0 0.0
    %6796 = vmatprep.subr.mxu0 0.0
    %6797 = vmatpush2.msra.mxu0 0.0
    %6798 = vmatprep.subr.mxu0 0.0
    %6799 = vmatpush2.msra.mxu0 0.0
    %6800 = vmatprep.subr.mxu0 0.0
    %6801 = vmatpush2.msra.mxu0 0.0
    %6802 = vmatprep.subr.mxu0 0.0
    %6803 = vmatpush2.msra.mxu0 0.0
    %6804 = vmatprep.mubr.f32.mxu0 0.0
    %6805 = vmatmul.mubr.f32.gmra.mxu0 %v6735
    %v6806 = vpop.f32.mrf.mxu0
    %v6807 = vadd.f32 0.0, %v6806
    %v6808 = vpop.f32.mrf.mxu0
    %6809 = vmatprep.mubr.f32.mxu0 0.0
    %6810 = vmatmul.mubr.f32.gmra.mxu0 %v6738
    %v6811 = vpop.f32.mrf.mxu0
    %v6812 = vadd.f32 0.0, %v6811
    %v6813 = vpop.f32.mrf.mxu0
    %6814 = vdwg.mxu0
    %v6817 = vcombine.high %v6807, %v6807
    %v6819 = vunpack.c.l.s4 1966171168
    %v6820 = vunpack.c.0.s8 %v6819
    %v6821 = vlaneseq
    %v6822 = vshrl.u32 %v6821, 7
    %v6823 = vsub.s32 %v6820, %v6822
    %v6824 = vrot.slane %v6807, %v6823
    %v6826 = vunpack.c.l.s4 1966171168
    %v6827 = vunpack.c.0.s8 %v6826
    %v6828 = vlaneseq
    %v6829 = vshrl.u32 %v6828, 7
    %v6830 = vsub.s32 %v6827, %v6829
    %v6831 = vrot.slane %v6817, %v6830
    %v6832 = vcombine.high %v6824, %v6824
    %v6833 = vcombine.high %v6831, %v6831
    %v6835 = vunpack.c.l.s4 1966171168
    %v6836 = vunpack.c.0.s8 %v6835
    %v6837 = vlaneseq
    %v6838 = vshrl.u32 %v6837, 7
    %v6839 = vsub.s32 %v6836, %v6838
    %v6840 = vrot.slane %v6824, %v6839
    %v6842 = vunpack.c.l.s4 1966171168
    %v6843 = vunpack.c.0.s8 %v6842
    %v6844 = vlaneseq
    %v6845 = vshrl.u32 %v6844, 7
    %v6846 = vsub.s32 %v6843, %v6845
    %v6847 = vrot.slane %v6831, %v6846
    %v6849 = vunpack.c.l.s4 1966171168
    %v6850 = vunpack.c.0.s8 %v6849
    %v6851 = vlaneseq
    %v6852 = vshrl.u32 %v6851, 7
    %v6853 = vsub.s32 %v6850, %v6852
    %v6854 = vrot.slane %v6832, %v6853
    %v6856 = vunpack.c.l.s4 1966171168
    %v6857 = vunpack.c.0.s8 %v6856
    %v6858 = vlaneseq
    %v6859 = vshrl.u32 %v6858, 7
    %v6860 = vsub.s32 %v6857, %v6859
    %v6861 = vrot.slane %v6833, %v6860
    %v6862 = vcombine.high %v6840, %v6840
    %v6863 = vcombine.high %v6847, %v6847
    %v6864 = vcombine.high %v6854, %v6854
    %v6865 = vcombine.high %v6861, %v6861
    %v6866 = vcombine.high %v6812, %v6812
    %v6868 = vunpack.c.l.s4 1966171168
    %v6869 = vunpack.c.0.s8 %v6868
    %v6870 = vlaneseq
    %v6871 = vshrl.u32 %v6870, 7
    %v6872 = vsub.s32 %v6869, %v6871
    %v6873 = vrot.slane %v6812, %v6872
    %v6875 = vunpack.c.l.s4 1966171168
    %v6876 = vunpack.c.0.s8 %v6875
    %v6877 = vlaneseq
    %v6878 = vshrl.u32 %v6877, 7
    %v6879 = vsub.s32 %v6876, %v6878
    %v6880 = vrot.slane %v6866, %v6879
    %v6881 = vcombine.high %v6873, %v6873
    %v6882 = vcombine.high %v6880, %v6880
    %v6884 = vunpack.c.l.s4 1966171168
    %v6885 = vunpack.c.0.s8 %v6884
    %v6886 = vlaneseq
    %v6887 = vshrl.u32 %v6886, 7
    %v6888 = vsub.s32 %v6885, %v6887
    %v6889 = vrot.slane %v6873, %v6888
    %v6891 = vunpack.c.l.s4 1966171168
    %v6892 = vunpack.c.0.s8 %v6891
    %v6893 = vlaneseq
    %v6894 = vshrl.u32 %v6893, 7
    %v6895 = vsub.s32 %v6892, %v6894
    %v6896 = vrot.slane %v6880, %v6895
    %v6898 = vunpack.c.l.s4 1966171168
    %v6899 = vunpack.c.0.s8 %v6898
    %v6900 = vlaneseq
    %v6901 = vshrl.u32 %v6900, 7
    %v6902 = vsub.s32 %v6899, %v6901
    %v6903 = vrot.slane %v6881, %v6902
    %v6905 = vunpack.c.l.s4 1966171168
    %v6906 = vunpack.c.0.s8 %v6905
    %v6907 = vlaneseq
    %v6908 = vshrl.u32 %v6907, 7
    %v6909 = vsub.s32 %v6906, %v6908
    %v6910 = vrot.slane %v6882, %v6909
    %v6911 = vcombine.high %v6889, %v6889
    %v6912 = vcombine.high %v6896, %v6896
    %v6913 = vcombine.high %v6903, %v6903
    %v6914 = vcombine.high %v6910, %v6910
    %v6915 = vlaneseq
    %v6916 = vshrl.u32 %v6915, 7
    %v6917 = vsub.s32 0, %v6916
    %v6918 = vrot.slane %v6840, %v6917
    %v6919 = vlaneseq
    %v6920 = vshrl.u32 %v6919, 7
    %v6921 = vsub.s32 0, %v6920
    %v6922 = vrot.slane %v6854, %v6921
    %v6923 = vlaneseq
    %v6924 = vshrl.u32 %v6923, 7
    %v6925 = vsub.s32 0, %v6924
    %v6926 = vrot.slane %v6862, %v6925
    %v6927 = vlaneseq
    %v6928 = vshrl.u32 %v6927, 7
    %v6929 = vsub.s32 0, %v6928
    %v6930 = vrot.slane %v6864, %v6929
    %v6931 = vlaneseq
    %v6932 = vshrl.u32 %v6931, 7
    %v6933 = vsub.s32 0, %v6932
    %v6934 = vrot.slane %v6847, %v6933
    %v6935 = vlaneseq
    %v6936 = vshrl.u32 %v6935, 7
    %v6937 = vsub.s32 0, %v6936
    %v6938 = vrot.slane %v6861, %v6937
    %v6939 = vlaneseq
    %v6940 = vshrl.u32 %v6939, 7
    %v6941 = vsub.s32 0, %v6940
    %v6942 = vrot.slane %v6863, %v6941
    %v6943 = vlaneseq
    %v6944 = vshrl.u32 %v6943, 7
    %v6945 = vsub.s32 0, %v6944
    %v6946 = vrot.slane %v6865, %v6945
    %v6947 = vlaneseq
    %v6948 = vshrl.u32 %v6947, 7
    %v6949 = vsub.s32 0, %v6948
    %v6950 = vrot.slane %v6889, %v6949
    %v6951 = vlaneseq
    %v6952 = vshrl.u32 %v6951, 7
    %v6953 = vsub.s32 0, %v6952
    %v6954 = vrot.slane %v6903, %v6953
    %v6955 = vlaneseq
    %v6956 = vshrl.u32 %v6955, 7
    %v6957 = vsub.s32 0, %v6956
    %v6958 = vrot.slane %v6911, %v6957
    %v6959 = vlaneseq
    %v6960 = vshrl.u32 %v6959, 7
    %v6961 = vsub.s32 0, %v6960
    %v6962 = vrot.slane %v6913, %v6961
    %v6963 = vlaneseq
    %v6964 = vshrl.u32 %v6963, 7
    %v6965 = vsub.s32 0, %v6964
    %v6966 = vrot.slane %v6896, %v6965
    %v6967 = vlaneseq
    %v6968 = vshrl.u32 %v6967, 7
    %v6969 = vsub.s32 0, %v6968
    %v6970 = vrot.slane %v6910, %v6969
    %v6971 = vlaneseq
    %v6972 = vshrl.u32 %v6971, 7
    %v6973 = vsub.s32 0, %v6972
    %v6974 = vrot.slane %v6912, %v6973
    %v6975 = vlaneseq
    %v6976 = vshrl.u32 %v6975, 7
    %v6977 = vsub.s32 0, %v6976
    %v6978 = vrot.slane %v6914, %v6977
    %6995 = vrot.lane.b32.xlu0 %v6807, 96
    %v6996 = vpop.permute.xlu0 %6995
    %6997 = vrot.lane.b32.xlu0 %v6812, 96
    %v6998 = vpop.permute.xlu0 %6997
    %v7001 = vadd.f32 %v6918, %v6996
    %v7002 = vadd.f32 %v6922, %v6996
    %v7003 = vadd.f32 %v6926, %v6996
    %v7004 = vadd.f32 %v6930, %v6996
    %v7005 = vadd.f32 %v6934, %v6996
    %v7006 = vadd.f32 %v6938, %v6996
    %v7007 = vadd.f32 %v6942, %v6996
    %v7008 = vadd.f32 %v6946, %v6996
    %v7009 = vadd.f32 %v6950, %v6998
    %v7010 = vadd.f32 %v6954, %v6998
    %v7011 = vadd.f32 %v6958, %v6998
    %v7012 = vadd.f32 %v6962, %v6998
    %v7013 = vadd.f32 %v6966, %v6998
    %v7014 = vadd.f32 %v6970, %v6998
    %v7015 = vadd.f32 %v6974, %v6998
    %v7016 = vadd.f32 %v6978, %v6998
    %v7017 = vlaneseq
    %v7018 = vshrl.u32 %v7017, 7
    %v7019 = vsub.s32 1, %v7018
    %v7020 = vrot.slane %v156, %v7019
    %v7021 = vmul.f32 %v4251, %v7020
    %v7022 = vmul.f32 %v4254, %v7020
    %v7023 = vmul.f32 %v4257, %v7020
    %v7024 = vmul.f32 %v4260, %v7020
    %v7025 = vmul.f32 %v4263, %v7020
    %v7026 = vmul.f32 %v4266, %v7020
    %v7027 = vmul.f32 %v4269, %v7020
    %v7028 = vmul.f32 %v4272, %v7020
    %v7029 = vmul.f32 %v4275, %v7020
    %v7030 = vmul.f32 %v4278, %v7020
    %v7031 = vmul.f32 %v4281, %v7020
    %v7032 = vmul.f32 %v4284, %v7020
    %v7033 = vmul.f32 %v4287, %v7020
    %v7034 = vmul.f32 %v4290, %v7020
    %v7035 = vmul.f32 %v4293, %v7020
    %v7036 = vmul.f32 %v4296, %v7020
    %v7037 = vadd.f32 %v7001, %v7021
    %v7038 = vadd.f32 %v7002, %v7022
    %v7039 = vadd.f32 %v7003, %v7023
    %v7040 = vadd.f32 %v7004, %v7024
    %v7041 = vadd.f32 %v7005, %v7025
    %v7042 = vadd.f32 %v7006, %v7026
    %v7043 = vadd.f32 %v7007, %v7027
    %v7044 = vadd.f32 %v7008, %v7028
    %v7045 = vadd.f32 %v7009, %v7029
    %v7046 = vadd.f32 %v7010, %v7030
    %v7047 = vadd.f32 %v7011, %v7031
    %v7048 = vadd.f32 %v7012, %v7032
    %v7049 = vadd.f32 %v7013, %v7033
    %v7050 = vadd.f32 %v7014, %v7034
    %v7051 = vadd.f32 %v7015, %v7035
    %v7052 = vadd.f32 %v7016, %v7036
    %v7053 = vlaneseq
    %v7054 = vshrl.u32 %v7053, 7
    %v7055 = vsub.s32 2, %v7054
    %v7056 = vrot.slane %v156, %v7055
    %v7057 = vmul.f32 %v372, %v7056
    %v7058 = vmul.f32 %v375, %v7056
    %v7059 = vmul.f32 %v378, %v7056
    %v7060 = vmul.f32 %v381, %v7056
    %v7061 = vmul.f32 %v384, %v7056
    %v7062 = vmul.f32 %v387, %v7056
    %v7063 = vmul.f32 %v390, %v7056
    %v7064 = vmul.f32 %v393, %v7056
    %v7065 = vmul.f32 %v396, %v7056
    %v7066 = vmul.f32 %v399, %v7056
    %v7067 = vmul.f32 %v402, %v7056
    %v7068 = vmul.f32 %v405, %v7056
    %v7069 = vmul.f32 %v408, %v7056
    %v7070 = vmul.f32 %v411, %v7056
    %v7071 = vmul.f32 %v414, %v7056
    %v7072 = vmul.f32 %v417, %v7056
    %v7073 = vadd.f32 %v7037, %v7057
    %v7074 = vadd.f32 %v7038, %v7058
    %v7075 = vadd.f32 %v7039, %v7059
    %v7076 = vadd.f32 %v7040, %v7060
    %v7077 = vadd.f32 %v7041, %v7061
    %v7078 = vadd.f32 %v7042, %v7062
    %v7079 = vadd.f32 %v7043, %v7063
    %v7080 = vadd.f32 %v7044, %v7064
    %v7081 = vadd.f32 %v7045, %v7065
    %v7082 = vadd.f32 %v7046, %v7066
    %v7083 = vadd.f32 %v7047, %v7067
    %v7084 = vadd.f32 %v7048, %v7068
    %v7085 = vadd.f32 %v7049, %v7069
    %v7086 = vadd.f32 %v7050, %v7070
    %v7087 = vadd.f32 %v7051, %v7071
    %v7088 = vadd.f32 %v7052, %v7072
    %v7089 = vlaneseq
    %v7090 = vshrl.u32 %v7089, 7
    %v7091 = vsub.s32 3, %v7090
    %v7092 = vrot.slane %v156, %v7091
    %v7093 = vadd.f32 %v7073, %v7092
    %v7094 = vadd.f32 %v7074, %v7092
    %v7095 = vadd.f32 %v7075, %v7092
    %v7096 = vadd.f32 %v7076, %v7092
    %v7097 = vadd.f32 %v7077, %v7092
    %v7098 = vadd.f32 %v7078, %v7092
    %v7099 = vadd.f32 %v7079, %v7092
    %v7100 = vadd.f32 %v7080, %v7092
    %v7101 = vadd.f32 %v7081, %v7092
    %v7102 = vadd.f32 %v7082, %v7092
    %v7103 = vadd.f32 %v7083, %v7092
    %v7104 = vadd.f32 %v7084, %v7092
    %v7105 = vadd.f32 %v7085, %v7092
    %v7106 = vadd.f32 %v7086, %v7092
    %v7107 = vadd.f32 %v7087, %v7092
    %v7108 = vadd.f32 %v7088, %v7092
    %v7109 = vmul.f32 %v7093, 0.5
    %v7110 = vmul.f32 %v7094, 0.5
    %v7111 = vmul.f32 %v7095, 0.5
    %v7112 = vmul.f32 %v7096, 0.5
    %v7113 = vmul.f32 %v7097, 0.5
    %v7114 = vmul.f32 %v7098, 0.5
    %v7115 = vmul.f32 %v7099, 0.5
    %v7116 = vmul.f32 %v7100, 0.5
    %v7117 = vmul.f32 %v7101, 0.5
    %v7118 = vmul.f32 %v7102, 0.5
    %v7119 = vmul.f32 %v7103, 0.5
    %v7120 = vmul.f32 %v7104, 0.5
    %v7121 = vmul.f32 %v7105, 0.5
    %v7122 = vmul.f32 %v7106, 0.5
    %v7123 = vmul.f32 %v7107, 0.5
    %v7124 = vmul.f32 %v7108, 0.5
    %v7125 = vtanh.pop %v7109
    %v7126 = vtanh.pop %v7110
    %v7127 = vtanh.pop %v7111
    %v7128 = vtanh.pop %v7112
    %v7129 = vtanh.pop %v7113
    %v7130 = vtanh.pop %v7114
    %v7131 = vtanh.pop %v7115
    %v7132 = vtanh.pop %v7116
    %v7133 = vtanh.pop %v7117
    %v7134 = vtanh.pop %v7118
    %v7135 = vtanh.pop %v7119
    %v7136 = vtanh.pop %v7120
    %v7137 = vtanh.pop %v7121
    %v7138 = vtanh.pop %v7122
    %v7139 = vtanh.pop %v7123
    %v7140 = vtanh.pop %v7124
    %v7141 = vadd.f32 %v7125, 1.0
    %v7142 = vadd.f32 %v7126, 1.0
    %v7143 = vadd.f32 %v7127, 1.0
    %v7144 = vadd.f32 %v7128, 1.0
    %v7145 = vadd.f32 %v7129, 1.0
    %v7146 = vadd.f32 %v7130, 1.0
    %v7147 = vadd.f32 %v7131, 1.0
    %v7148 = vadd.f32 %v7132, 1.0
    %v7149 = vadd.f32 %v7133, 1.0
    %v7150 = vadd.f32 %v7134, 1.0
    %v7151 = vadd.f32 %v7135, 1.0
    %v7152 = vadd.f32 %v7136, 1.0
    %v7153 = vadd.f32 %v7137, 1.0
    %v7154 = vadd.f32 %v7138, 1.0
    %v7155 = vadd.f32 %v7139, 1.0
    %v7156 = vadd.f32 %v7140, 1.0
    %v7157 = vmul.f32 %v7141, 0.5
    %v7158 = vmul.f32 %v7142, 0.5
    %v7159 = vmul.f32 %v7143, 0.5
    %v7160 = vmul.f32 %v7144, 0.5
    %v7161 = vmul.f32 %v7145, 0.5
    %v7162 = vmul.f32 %v7146, 0.5
    %v7163 = vmul.f32 %v7147, 0.5
    %v7164 = vmul.f32 %v7148, 0.5
    %v7165 = vmul.f32 %v7149, 0.5
    %v7166 = vmul.f32 %v7150, 0.5
    %v7167 = vmul.f32 %v7151, 0.5
    %v7168 = vmul.f32 %v7152, 0.5
    %v7169 = vmul.f32 %v7153, 0.5
    %v7170 = vmul.f32 %v7154, 0.5
    %v7171 = vmul.f32 %v7155, 0.5
    %v7172 = vmul.f32 %v7156, 0.5
    %v7173 = vmul.f32 %v7093, %v7157
    %v7174 = vmul.f32 %v7094, %v7158
    %v7175 = vmul.f32 %v7095, %v7159
    %v7176 = vmul.f32 %v7096, %v7160
    %v7177 = vmul.f32 %v7097, %v7161
    %v7178 = vmul.f32 %v7098, %v7162
    %v7179 = vmul.f32 %v7099, %v7163
    %v7180 = vmul.f32 %v7100, %v7164
    %v7181 = vmul.f32 %v7101, %v7165
    %v7182 = vmul.f32 %v7102, %v7166
    %v7183 = vmul.f32 %v7103, %v7167
    %v7184 = vmul.f32 %v7104, %v7168
    %v7185 = vmul.f32 %v7105, %v7169
    %v7186 = vmul.f32 %v7106, %v7170
    %v7187 = vmul.f32 %v7107, %v7171
    %v7188 = vmul.f32 %v7108, %v7172
    %s7189 = scalar_lea.vmem %s10, 32
    %v7190 = vld [vmem:[%s7189] sm:$0xff]
    %v7191 = vld [vmem:[%s7189 + $0x8] sm:$0xff]
    %v7192 = vld [vmem:[%s7189 + $0x10] sm:$0xff]
    %v7193 = vld [vmem:[%s7189 + $0x18] sm:$0xff]
    %v7194 = vlaneseq
    %v7195 = vshrl.u32 %v7194, 7
    %v7196 = vsub.s32 4, %v7195
    %v7197 = vrot.slane %v156, %v7196
    %v7199 = vsel %vm685, %v7173, 0
    %v7202 = vsel %vm685, %v7174, 0
    %v7205 = vsel %vm685, %v7175, 0
    %v7208 = vsel %vm685, %v7176, 0
    %v7211 = vsel %vm685, %v7177, 0
    %v7214 = vsel %vm685, %v7178, 0
    %v7217 = vsel %vm685, %v7179, 0
    %v7220 = vsel %vm685, %v7180, 0
    %v7223 = vsel %vm685, %v7181, 0
    %v7226 = vsel %vm685, %v7182, 0
    %v7229 = vsel %vm685, %v7183, 0
    %v7232 = vsel %vm685, %v7184, 0
    %v7235 = vsel %vm685, %v7185, 0
    %v7238 = vsel %vm685, %v7186, 0
    %v7241 = vsel %vm685, %v7187, 0
    %v7244 = vsel %vm685, %v7188, 0
    %7246 = vmatprep.subr.mxu0 0.0
    %7247 = vmatpush1.msra.mxu0 0.0
    %7248 = vmatprep.subr.mxu0 0.0
    %7249 = vmatpush1.msra.mxu0 0.0
    %7250 = vmatprep.subr.mxu0 0.0
    %7251 = vmatpush1.msra.mxu0 0.0
    %7252 = vmatprep.subr.mxu0 0.0
    %7253 = vmatpush1.msra.mxu0 0.0
    %7254 = vmatprep.subr.mxu0 0.0
    %7255 = vmatpush1.msra.mxu0 0.0
    %7256 = vmatprep.subr.mxu0 0.0
    %7257 = vmatpush1.msra.mxu0 0.0
    %7258 = vmatprep.subr.mxu0 0.0
    %7259 = vmatpush1.msra.mxu0 0.0
    %7260 = vmatprep.subr.mxu0 0.0
    %7261 = vmatpush1.msra.mxu0 0.0
    %7262 = vmatprep.subr.mxu0 0.0
    %7263 = vmatpush1.msra.mxu0 0.0
    %7264 = vmatprep.subr.mxu0 0.0
    %7265 = vmatpush1.msra.mxu0 0.0
    %7266 = vmatprep.subr.mxu0 0.0
    %7267 = vmatpush1.msra.mxu0 0.0
    %7268 = vmatprep.subr.mxu0 0.0
    %7269 = vmatpush1.msra.mxu0 0.0
    %7270 = vmatprep.subr.mxu0 0.0
    %7271 = vmatpush1.msra.mxu0 %v7193
    %7272 = vmatprep.subr.mxu0 0.0
    %7273 = vmatpush1.msra.mxu0 %v7192
    %7274 = vmatprep.subr.mxu0 0.0
    %7275 = vmatpush1.msra.mxu0 %v7191
    %7276 = vmatprep.subr.mxu0 0.0
    %7277 = vmatpush1.msra.mxu0 %v7190
    %7278 = vmatprep.subr.mxu0 0.0
    %7279 = vmatpush2.msra.mxu0 0.0
    %7280 = vmatprep.subr.mxu0 0.0
    %7281 = vmatpush2.msra.mxu0 0.0
    %7282 = vmatprep.subr.mxu0 0.0
    %7283 = vmatpush2.msra.mxu0 0.0
    %7284 = vmatprep.subr.mxu0 0.0
    %7285 = vmatpush2.msra.mxu0 0.0
    %7286 = vmatprep.subr.mxu0 0.0
    %7287 = vmatpush2.msra.mxu0 0.0
    %7288 = vmatprep.subr.mxu0 0.0
    %7289 = vmatpush2.msra.mxu0 0.0
    %7290 = vmatprep.subr.mxu0 0.0
    %7291 = vmatpush2.msra.mxu0 0.0
    %7292 = vmatprep.subr.mxu0 0.0
    %7293 = vmatpush2.msra.mxu0 0.0
    %7294 = vmatprep.subr.mxu0 0.0
    %7295 = vmatpush2.msra.mxu0 0.0
    %7296 = vmatprep.subr.mxu0 0.0
    %7297 = vmatpush2.msra.mxu0 0.0
    %7298 = vmatprep.subr.mxu0 0.0
    %7299 = vmatpush2.msra.mxu0 0.0
    %7300 = vmatprep.subr.mxu0 0.0
    %7301 = vmatpush2.msra.mxu0 0.0
    %7302 = vmatprep.subr.mxu0 0.0
    %7303 = vmatpush2.msra.mxu0 0.0
    %7304 = vmatprep.subr.mxu0 0.0
    %7305 = vmatpush2.msra.mxu0 0.0
    %7306 = vmatprep.subr.mxu0 0.0
    %7307 = vmatpush2.msra.mxu0 0.0
    %7308 = vmatprep.subr.mxu0 0.0
    %7309 = vmatpush2.msra.mxu0 0.0
    %7310 = vmatprep.mubr.f32.mxu0 0.0
    %7311 = vmatmul.mubr.f32.gmra.mxu0 %v7199
    %v7312 = vpop.f32.mrf.mxu0
    %v7313 = vadd.f32 %v7197, %v7312
    %v7314 = vpop.f32.mrf.mxu0
    %7315 = vmatprep.mubr.f32.mxu0 0.0
    %7316 = vmatmul.mubr.f32.gmra.mxu0 %v7202
    %v7317 = vpop.f32.mrf.mxu0
    %v7318 = vadd.f32 %v7197, %v7317
    %v7319 = vpop.f32.mrf.mxu0
    %7320 = vmatprep.mubr.f32.mxu0 0.0
    %7321 = vmatmul.mubr.f32.gmra.mxu0 %v7205
    %v7322 = vpop.f32.mrf.mxu0
    %v7323 = vadd.f32 %v7197, %v7322
    %v7324 = vpop.f32.mrf.mxu0
    %7325 = vmatprep.mubr.f32.mxu0 0.0
    %7326 = vmatmul.mubr.f32.gmra.mxu0 %v7208
    %v7327 = vpop.f32.mrf.mxu0
    %v7328 = vadd.f32 %v7197, %v7327
    %v7329 = vpop.f32.mrf.mxu0
    %7330 = vmatprep.mubr.f32.mxu0 0.0
    %7331 = vmatmul.mubr.f32.gmra.mxu0 %v7211
    %v7332 = vpop.f32.mrf.mxu0
    %v7333 = vadd.f32 %v7197, %v7332
    %v7334 = vpop.f32.mrf.mxu0
    %7335 = vmatprep.mubr.f32.mxu0 0.0
    %7336 = vmatmul.mubr.f32.gmra.mxu0 %v7214
    %v7337 = vpop.f32.mrf.mxu0
    %v7338 = vadd.f32 %v7197, %v7337
    %v7339 = vpop.f32.mrf.mxu0
    %7340 = vmatprep.mubr.f32.mxu0 0.0
    %7341 = vmatmul.mubr.f32.gmra.mxu0 %v7217
    %v7342 = vpop.f32.mrf.mxu0
    %v7343 = vadd.f32 %v7197, %v7342
    %v7344 = vpop.f32.mrf.mxu0
    %7345 = vmatprep.mubr.f32.mxu0 0.0
    %7346 = vmatmul.mubr.f32.gmra.mxu0 %v7220
    %v7347 = vpop.f32.mrf.mxu0
    %v7348 = vadd.f32 %v7197, %v7347
    %v7349 = vpop.f32.mrf.mxu0
    %7350 = vmatprep.mubr.f32.mxu0 0.0
    %7351 = vmatmul.mubr.f32.gmra.mxu0 %v7223
    %v7352 = vpop.f32.mrf.mxu0
    %v7353 = vadd.f32 %v7197, %v7352
    %v7354 = vpop.f32.mrf.mxu0
    %7355 = vmatprep.mubr.f32.mxu0 0.0
    %7356 = vmatmul.mubr.f32.gmra.mxu0 %v7226
    %v7357 = vpop.f32.mrf.mxu0
    %v7358 = vadd.f32 %v7197, %v7357
    %v7359 = vpop.f32.mrf.mxu0
    %7360 = vmatprep.mubr.f32.mxu0 0.0
    %7361 = vmatmul.mubr.f32.gmra.mxu0 %v7229
    %v7362 = vpop.f32.mrf.mxu0
    %v7363 = vadd.f32 %v7197, %v7362
    %v7364 = vpop.f32.mrf.mxu0
    %7365 = vmatprep.mubr.f32.mxu0 0.0
    %7366 = vmatmul.mubr.f32.gmra.mxu0 %v7232
    %v7367 = vpop.f32.mrf.mxu0
    %v7368 = vadd.f32 %v7197, %v7367
    %v7369 = vpop.f32.mrf.mxu0
    %7370 = vmatprep.mubr.f32.mxu0 0.0
    %7371 = vmatmul.mubr.f32.gmra.mxu0 %v7235
    %v7372 = vpop.f32.mrf.mxu0
    %v7373 = vadd.f32 %v7197, %v7372
    %v7374 = vpop.f32.mrf.mxu0
    %7375 = vmatprep.mubr.f32.mxu0 0.0
    %7376 = vmatmul.mubr.f32.gmra.mxu0 %v7238
    %v7377 = vpop.f32.mrf.mxu0
    %v7378 = vadd.f32 %v7197, %v7377
    %v7379 = vpop.f32.mrf.mxu0
    %7380 = vmatprep.mubr.f32.mxu0 0.0
    %7381 = vmatmul.mubr.f32.gmra.mxu0 %v7241
    %v7382 = vpop.f32.mrf.mxu0
    %v7383 = vadd.f32 %v7197, %v7382
    %v7384 = vpop.f32.mrf.mxu0
    %7385 = vmatprep.mubr.f32.mxu0 0.0
    %7386 = vmatmul.mubr.f32.gmra.mxu0 %v7244
    %v7387 = vpop.f32.mrf.mxu0
    %v7388 = vadd.f32 %v7197, %v7387
    %v7389 = vpop.f32.mrf.mxu0
    %7390 = vdwg.mxu0
    %v7391 = vmul.f32 %v7313, 0.5
    %v7392 = vmul.f32 %v7318, 0.5
    %v7393 = vmul.f32 %v7323, 0.5
    %v7394 = vmul.f32 %v7328, 0.5
    %v7395 = vmul.f32 %v7333, 0.5
    %v7396 = vmul.f32 %v7338, 0.5
    %v7397 = vmul.f32 %v7343, 0.5
    %v7398 = vmul.f32 %v7348, 0.5
    %v7399 = vmul.f32 %v7353, 0.5
    %v7400 = vmul.f32 %v7358, 0.5
    %v7401 = vmul.f32 %v7363, 0.5
    %v7402 = vmul.f32 %v7368, 0.5
    %v7403 = vmul.f32 %v7373, 0.5
    %v7404 = vmul.f32 %v7378, 0.5
    %v7405 = vmul.f32 %v7383, 0.5
    %v7406 = vmul.f32 %v7388, 0.5
    %v7407 = vtanh.pop %v7391
    %v7408 = vtanh.pop %v7392
    %v7409 = vtanh.pop %v7393
    %v7410 = vtanh.pop %v7394
    %v7411 = vtanh.pop %v7395
    %v7412 = vtanh.pop %v7396
    %v7413 = vtanh.pop %v7397
    %v7414 = vtanh.pop %v7398
    %v7415 = vtanh.pop %v7399
    %v7416 = vtanh.pop %v7400
    %v7417 = vtanh.pop %v7401
    %v7418 = vtanh.pop %v7402
    %v7419 = vtanh.pop %v7403
    %v7420 = vtanh.pop %v7404
    %v7421 = vtanh.pop %v7405
    %v7422 = vtanh.pop %v7406
    %v7423 = vadd.f32 %v7407, 1.0
    %v7424 = vadd.f32 %v7408, 1.0
    %v7425 = vadd.f32 %v7409, 1.0
    %v7426 = vadd.f32 %v7410, 1.0
    %v7427 = vadd.f32 %v7411, 1.0
    %v7428 = vadd.f32 %v7412, 1.0
    %v7429 = vadd.f32 %v7413, 1.0
    %v7430 = vadd.f32 %v7414, 1.0
    %v7431 = vadd.f32 %v7415, 1.0
    %v7432 = vadd.f32 %v7416, 1.0
    %v7433 = vadd.f32 %v7417, 1.0
    %v7434 = vadd.f32 %v7418, 1.0
    %v7435 = vadd.f32 %v7419, 1.0
    %v7436 = vadd.f32 %v7420, 1.0
    %v7437 = vadd.f32 %v7421, 1.0
    %v7438 = vadd.f32 %v7422, 1.0
    %v7439 = vmul.f32 %v7423, 0.5
    %v7440 = vmul.f32 %v7424, 0.5
    %v7441 = vmul.f32 %v7425, 0.5
    %v7442 = vmul.f32 %v7426, 0.5
    %v7443 = vmul.f32 %v7427, 0.5
    %v7444 = vmul.f32 %v7428, 0.5
    %v7445 = vmul.f32 %v7429, 0.5
    %v7446 = vmul.f32 %v7430, 0.5
    %v7447 = vmul.f32 %v7431, 0.5
    %v7448 = vmul.f32 %v7432, 0.5
    %v7449 = vmul.f32 %v7433, 0.5
    %v7450 = vmul.f32 %v7434, 0.5
    %v7451 = vmul.f32 %v7435, 0.5
    %v7452 = vmul.f32 %v7436, 0.5
    %v7453 = vmul.f32 %v7437, 0.5
    %v7454 = vmul.f32 %v7438, 0.5
    %v7455 = vmul.f32 %v7313, %v7439
    %v7456 = vmul.f32 %v7318, %v7440
    %v7457 = vmul.f32 %v7323, %v7441
    %v7458 = vmul.f32 %v7328, %v7442
    %v7459 = vmul.f32 %v7333, %v7443
    %v7460 = vmul.f32 %v7338, %v7444
    %v7461 = vmul.f32 %v7343, %v7445
    %v7462 = vmul.f32 %v7348, %v7446
    %v7463 = vmul.f32 %v7353, %v7447
    %v7464 = vmul.f32 %v7358, %v7448
    %v7465 = vmul.f32 %v7363, %v7449
    %v7466 = vmul.f32 %v7368, %v7450
    %v7467 = vmul.f32 %v7373, %v7451
    %v7468 = vmul.f32 %v7378, %v7452
    %v7469 = vmul.f32 %v7383, %v7453
    %v7470 = vmul.f32 %v7388, %v7454
    %v7471 = vlaneseq
    %v7472 = vshrl.u32 %v7471, 7
    %v7473 = vsub.s32 5, %v7472
    %v7474 = vrot.slane %v156, %v7473
    %v7475 = vmul.f32 %v7455, %v7474
    %v7476 = vmul.f32 %v7456, %v7474
    %v7477 = vmul.f32 %v7457, %v7474
    %v7478 = vmul.f32 %v7458, %v7474
    %v7479 = vmul.f32 %v7459, %v7474
    %v7480 = vmul.f32 %v7460, %v7474
    %v7481 = vmul.f32 %v7461, %v7474
    %v7482 = vmul.f32 %v7462, %v7474
    %v7483 = vmul.f32 %v7463, %v7474
    %v7484 = vmul.f32 %v7464, %v7474
    %v7485 = vmul.f32 %v7465, %v7474
    %v7486 = vmul.f32 %v7466, %v7474
    %v7487 = vmul.f32 %v7467, %v7474
    %v7488 = vmul.f32 %v7468, %v7474
    %v7489 = vmul.f32 %v7469, %v7474
    %v7490 = vmul.f32 %v7470, %v7474
    %v7491 = vsel %vm685, %v7475, 0.0
    %7492 = vadd.xlane.f32.xlu0 %v7491
    %v7493 = vpop.xlane.xlu0 %7492
    %v7494 = vsel %vm685, %v7476, 0.0
    %7495 = vadd.xlane.f32.xlu0 %v7494
    %v7496 = vpop.xlane.xlu0 %7495
    %v7497 = vsel %vm685, %v7477, 0.0
    %7498 = vadd.xlane.f32.xlu0 %v7497
    %v7499 = vpop.xlane.xlu0 %7498
    %v7500 = vsel %vm685, %v7478, 0.0
    %7501 = vadd.xlane.f32.xlu0 %v7500
    %v7502 = vpop.xlane.xlu0 %7501
    %v7503 = vsel %vm685, %v7479, 0.0
    %7504 = vadd.xlane.f32.xlu0 %v7503
    %v7505 = vpop.xlane.xlu0 %7504
    %v7506 = vsel %vm685, %v7480, 0.0
    %7507 = vadd.xlane.f32.xlu0 %v7506
    %v7508 = vpop.xlane.xlu0 %7507
    %v7509 = vsel %vm685, %v7481, 0.0
    %7510 = vadd.xlane.f32.xlu0 %v7509
    %v7511 = vpop.xlane.xlu0 %7510
    %v7512 = vsel %vm685, %v7482, 0.0
    %7513 = vadd.xlane.f32.xlu0 %v7512
    %v7514 = vpop.xlane.xlu0 %7513
    %v7515 = vsel %vm685, %v7483, 0.0
    %7516 = vadd.xlane.f32.xlu0 %v7515
    %v7517 = vpop.xlane.xlu0 %7516
    %v7518 = vsel %vm685, %v7484, 0.0
    %7519 = vadd.xlane.f32.xlu0 %v7518
    %v7520 = vpop.xlane.xlu0 %7519
    %v7521 = vsel %vm685, %v7485, 0.0
    %7522 = vadd.xlane.f32.xlu0 %v7521
    %v7523 = vpop.xlane.xlu0 %7522
    %v7524 = vsel %vm685, %v7486, 0.0
    %7525 = vadd.xlane.f32.xlu0 %v7524
    %v7526 = vpop.xlane.xlu0 %7525
    %v7527 = vsel %vm685, %v7487, 0.0
    %7528 = vadd.xlane.f32.xlu0 %v7527
    %v7529 = vpop.xlane.xlu0 %7528
    %v7530 = vsel %vm685, %v7488, 0.0
    %7531 = vadd.xlane.f32.xlu0 %v7530
    %v7532 = vpop.xlane.xlu0 %7531
    %v7533 = vsel %vm685, %v7489, 0.0
    %7534 = vadd.xlane.f32.xlu0 %v7533
    %v7535 = vpop.xlane.xlu0 %7534
    %v7536 = vsel %vm685, %v7490, 0.0
    %7537 = vadd.xlane.f32.xlu0 %v7536
    %v7538 = vpop.xlane.xlu0 %7537
    %v7539 = vmul.f32 %v4442, %v7493
    %v7540 = vmul.f32 %v4444, %v7496
    %v7541 = vmul.f32 %v4446, %v7499
    %v7542 = vmul.f32 %v4448, %v7502
    %v7543 = vmul.f32 %v4450, %v7505
    %v7544 = vmul.f32 %v4452, %v7508
    %v7545 = vmul.f32 %v4454, %v7511
    %v7546 = vmul.f32 %v4456, %v7514
    %v7547 = vmul.f32 %v4458, %v7517
    %v7548 = vmul.f32 %v4460, %v7520
    %v7549 = vmul.f32 %v4462, %v7523
    %v7550 = vmul.f32 %v4464, %v7526
    %v7551 = vmul.f32 %v4466, %v7529
    %v7552 = vmul.f32 %v4468, %v7532
    %v7553 = vmul.f32 %v4470, %v7535
    %v7554 = vmul.f32 %v4472, %v7538
    %v7555 = vmul.f32 %v7539, %v1425
    %v7556 = vmul.f32 %v7540, %v1430
    %v7557 = vmul.f32 %v7541, %v1435
    %v7558 = vmul.f32 %v7542, %v1440
    %v7559 = vmul.f32 %v7543, %v1445
    %v7560 = vmul.f32 %v7544, %v1450
    %v7561 = vmul.f32 %v7545, %v1455
    %v7562 = vmul.f32 %v7546, %v1460
    %v7563 = vmul.f32 %v7547, %v1465
    %v7564 = vmul.f32 %v7548, %v1470
    %v7565 = vmul.f32 %v7549, %v1475
    %v7566 = vmul.f32 %v7550, %v1480
    %v7567 = vmul.f32 %v7551, %v1485
    %v7568 = vmul.f32 %v7552, %v1490
    %v7569 = vmul.f32 %v7553, %v1495
    %v7570 = vmul.f32 %v7554, %v1500
    %v7571 = vsel %vm369, %v7555, 0.0
    %v7572 = vrot.slane %v7571, 4
    %v7573 = vadd.f32 %v7571, %v7572
    %v7574 = vrot.slane %v7573, 2
    %v7575 = vadd.f32 %v7573, %v7574
    %v7576 = vrot.slane %v7575, 1
    %v7577 = vadd.f32 %v7575, %v7576
    %v7578 = vsel %vm369, %v7556, 0.0
    %v7579 = vrot.slane %v7578, 4
    %v7580 = vadd.f32 %v7578, %v7579
    %v7581 = vrot.slane %v7580, 2
    %v7582 = vadd.f32 %v7580, %v7581
    %v7583 = vrot.slane %v7582, 1
    %v7584 = vadd.f32 %v7582, %v7583
    %v7585 = vsel %vm369, %v7557, 0.0
    %v7586 = vrot.slane %v7585, 4
    %v7587 = vadd.f32 %v7585, %v7586
    %v7588 = vrot.slane %v7587, 2
    %v7589 = vadd.f32 %v7587, %v7588
    %v7590 = vrot.slane %v7589, 1
    %v7591 = vadd.f32 %v7589, %v7590
    %v7592 = vsel %vm369, %v7558, 0.0
    %v7593 = vrot.slane %v7592, 4
    %v7594 = vadd.f32 %v7592, %v7593
    %v7595 = vrot.slane %v7594, 2
    %v7596 = vadd.f32 %v7594, %v7595
    %v7597 = vrot.slane %v7596, 1
    %v7598 = vadd.f32 %v7596, %v7597
    %v7599 = vsel %vm369, %v7559, 0.0
    %v7600 = vrot.slane %v7599, 4
    %v7601 = vadd.f32 %v7599, %v7600
    %v7602 = vrot.slane %v7601, 2
    %v7603 = vadd.f32 %v7601, %v7602
    %v7604 = vrot.slane %v7603, 1
    %v7605 = vadd.f32 %v7603, %v7604
    %v7606 = vsel %vm369, %v7560, 0.0
    %v7607 = vrot.slane %v7606, 4
    %v7608 = vadd.f32 %v7606, %v7607
    %v7609 = vrot.slane %v7608, 2
    %v7610 = vadd.f32 %v7608, %v7609
    %v7611 = vrot.slane %v7610, 1
    %v7612 = vadd.f32 %v7610, %v7611
    %v7613 = vsel %vm369, %v7561, 0.0
    %v7614 = vrot.slane %v7613, 4
    %v7615 = vadd.f32 %v7613, %v7614
    %v7616 = vrot.slane %v7615, 2
    %v7617 = vadd.f32 %v7615, %v7616
    %v7618 = vrot.slane %v7617, 1
    %v7619 = vadd.f32 %v7617, %v7618
    %v7620 = vsel %vm369, %v7562, 0.0
    %v7621 = vrot.slane %v7620, 4
    %v7622 = vadd.f32 %v7620, %v7621
    %v7623 = vrot.slane %v7622, 2
    %v7624 = vadd.f32 %v7622, %v7623
    %v7625 = vrot.slane %v7624, 1
    %v7626 = vadd.f32 %v7624, %v7625
    %v7627 = vsel %vm369, %v7563, 0.0
    %v7628 = vrot.slane %v7627, 4
    %v7629 = vadd.f32 %v7627, %v7628
    %v7630 = vrot.slane %v7629, 2
    %v7631 = vadd.f32 %v7629, %v7630
    %v7632 = vrot.slane %v7631, 1
    %v7633 = vadd.f32 %v7631, %v7632
    %v7634 = vsel %vm369, %v7564, 0.0
    %v7635 = vrot.slane %v7634, 4
    %v7636 = vadd.f32 %v7634, %v7635
    %v7637 = vrot.slane %v7636, 2
    %v7638 = vadd.f32 %v7636, %v7637
    %v7639 = vrot.slane %v7638, 1
    %v7640 = vadd.f32 %v7638, %v7639
    %v7641 = vsel %vm369, %v7565, 0.0
    %v7642 = vrot.slane %v7641, 4
    %v7643 = vadd.f32 %v7641, %v7642
    %v7644 = vrot.slane %v7643, 2
    %v7645 = vadd.f32 %v7643, %v7644
    %v7646 = vrot.slane %v7645, 1
    %v7647 = vadd.f32 %v7645, %v7646
    %v7648 = vsel %vm369, %v7566, 0.0
    %v7649 = vrot.slane %v7648, 4
    %v7650 = vadd.f32 %v7648, %v7649
    %v7651 = vrot.slane %v7650, 2
    %v7652 = vadd.f32 %v7650, %v7651
    %v7653 = vrot.slane %v7652, 1
    %v7654 = vadd.f32 %v7652, %v7653
    %v7655 = vsel %vm369, %v7567, 0.0
    %v7656 = vrot.slane %v7655, 4
    %v7657 = vadd.f32 %v7655, %v7656
    %v7658 = vrot.slane %v7657, 2
    %v7659 = vadd.f32 %v7657, %v7658
    %v7660 = vrot.slane %v7659, 1
    %v7661 = vadd.f32 %v7659, %v7660
    %v7662 = vsel %vm369, %v7568, 0.0
    %v7663 = vrot.slane %v7662, 4
    %v7664 = vadd.f32 %v7662, %v7663
    %v7665 = vrot.slane %v7664, 2
    %v7666 = vadd.f32 %v7664, %v7665
    %v7667 = vrot.slane %v7666, 1
    %v7668 = vadd.f32 %v7666, %v7667
    %v7669 = vsel %vm369, %v7569, 0.0
    %v7670 = vrot.slane %v7669, 4
    %v7671 = vadd.f32 %v7669, %v7670
    %v7672 = vrot.slane %v7671, 2
    %v7673 = vadd.f32 %v7671, %v7672
    %v7674 = vrot.slane %v7673, 1
    %v7675 = vadd.f32 %v7673, %v7674
    %v7676 = vsel %vm369, %v7570, 0.0
    %v7677 = vrot.slane %v7676, 4
    %v7678 = vadd.f32 %v7676, %v7677
    %v7679 = vrot.slane %v7678, 2
    %v7680 = vadd.f32 %v7678, %v7679
    %v7681 = vrot.slane %v7680, 1
    %v7682 = vadd.f32 %v7680, %v7681
    %v7683 = vmul.f32 %v7577, 0.01
    %v7684 = vmul.f32 %v7584, 0.01
    %v7685 = vmul.f32 %v7591, 0.01
    %v7686 = vmul.f32 %v7598, 0.01
    %v7687 = vmul.f32 %v7605, 0.01
    %v7688 = vmul.f32 %v7612, 0.01
    %v7689 = vmul.f32 %v7619, 0.01
    %v7690 = vmul.f32 %v7626, 0.01
    %v7691 = vmul.f32 %v7633, 0.01
    %v7692 = vmul.f32 %v7640, 0.01
    %v7693 = vmul.f32 %v7647, 0.01
    %v7694 = vmul.f32 %v7654, 0.01
    %v7695 = vmul.f32 %v7661, 0.01
    %v7696 = vmul.f32 %v7668, 0.01
    %v7697 = vmul.f32 %v7675, 0.01
    %v7698 = vmul.f32 %v7682, 0.01
    %v7715 = vsel %vm1666, %v7684, %v7683
    %v7716 = vsel %vm1668, %v7685, %v7715
    %v7717 = vsel %vm1670, %v7686, %v7716
    %v7718 = vsel %vm1672, %v7687, %v7717
    %v7719 = vsel %vm1674, %v7688, %v7718
    %v7720 = vsel %vm1676, %v7689, %v7719
    %v7721 = vsel %vm1678, %v7690, %v7720
    %v7722 = vsel %vm1666, %v7692, %v7691
    %v7723 = vsel %vm1668, %v7693, %v7722
    %v7724 = vsel %vm1670, %v7694, %v7723
    %v7725 = vsel %vm1672, %v7695, %v7724
    %v7726 = vsel %vm1674, %v7696, %v7725
    %v7727 = vsel %vm1676, %v7697, %v7726
    %v7728 = vsel %vm1678, %v7698, %v7727
    %v7731 = vadd.f32 %v4033, %v7721
    %v7732 = vadd.f32 %v4034, %v7728
    %v7733 = vmul.f32 %v7731, %v1894
    %v7734 = vmul.f32 %v7732, %v1899
    %v7735 = vmul.f32 %v6727, %v1894
    %v7736 = vmul.f32 %v6728, %v1899
    %v7737 = vld [vmem:[#allocation9] sm:$0xff]
    %v7738 = vld [vmem:[#allocation9 + $0x8] sm:$0xff]
    %v7739 = vld [vmem:[#allocation9 + $0x10] sm:$0xff]
    %v7740 = vld [vmem:[#allocation9 + $0x18] sm:$0xff]
    %v7741 = vlaneseq
    %v7742 = vshrl.u32 %v7741, 7
    %v7743 = vsub.s32 1, %v7742
    %v7744 = vrot.slane %v152, %v7743
    %v7746 = vsel %vm685, %v7735, 0
    %v7749 = vsel %vm685, %v7736, 0
    %7751 = vmatprep.subr.mxu0 0.0
    %7752 = vmatpush1.msra.mxu0 0.0
    %7753 = vmatprep.subr.mxu0 0.0
    %7754 = vmatpush1.msra.mxu0 0.0
    %7755 = vmatprep.subr.mxu0 0.0
    %7756 = vmatpush1.msra.mxu0 0.0
    %7757 = vmatprep.subr.mxu0 0.0
    %7758 = vmatpush1.msra.mxu0 0.0
    %7759 = vmatprep.subr.mxu0 0.0
    %7760 = vmatpush1.msra.mxu0 0.0
    %7761 = vmatprep.subr.mxu0 0.0
    %7762 = vmatpush1.msra.mxu0 0.0
    %7763 = vmatprep.subr.mxu0 0.0
    %7764 = vmatpush1.msra.mxu0 0.0
    %7765 = vmatprep.subr.mxu0 0.0
    %7766 = vmatpush1.msra.mxu0 0.0
    %7767 = vmatprep.subr.mxu0 0.0
    %7768 = vmatpush1.msra.mxu0 0.0
    %7769 = vmatprep.subr.mxu0 0.0
    %7770 = vmatpush1.msra.mxu0 0.0
    %7771 = vmatprep.subr.mxu0 0.0
    %7772 = vmatpush1.msra.mxu0 0.0
    %7773 = vmatprep.subr.mxu0 0.0
    %7774 = vmatpush1.msra.mxu0 0.0
    %7775 = vmatprep.subr.mxu0 0.0
    %7776 = vmatpush1.msra.mxu0 %v7740
    %7777 = vmatprep.subr.mxu0 0.0
    %7778 = vmatpush1.msra.mxu0 %v7739
    %7779 = vmatprep.subr.mxu0 0.0
    %7780 = vmatpush1.msra.mxu0 %v7738
    %7781 = vmatprep.subr.mxu0 0.0
    %7782 = vmatpush1.msra.mxu0 %v7737
    %7783 = vmatprep.subr.mxu0 0.0
    %7784 = vmatpush2.msra.mxu0 0.0
    %7785 = vmatprep.subr.mxu0 0.0
    %7786 = vmatpush2.msra.mxu0 0.0
    %7787 = vmatprep.subr.mxu0 0.0
    %7788 = vmatpush2.msra.mxu0 0.0
    %7789 = vmatprep.subr.mxu0 0.0
    %7790 = vmatpush2.msra.mxu0 0.0
    %7791 = vmatprep.subr.mxu0 0.0
    %7792 = vmatpush2.msra.mxu0 0.0
    %7793 = vmatprep.subr.mxu0 0.0
    %7794 = vmatpush2.msra.mxu0 0.0
    %7795 = vmatprep.subr.mxu0 0.0
    %7796 = vmatpush2.msra.mxu0 0.0
    %7797 = vmatprep.subr.mxu0 0.0
    %7798 = vmatpush2.msra.mxu0 0.0
    %7799 = vmatprep.subr.mxu0 0.0
    %7800 = vmatpush2.msra.mxu0 0.0
    %7801 = vmatprep.subr.mxu0 0.0
    %7802 = vmatpush2.msra.mxu0 0.0
    %7803 = vmatprep.subr.mxu0 0.0
    %7804 = vmatpush2.msra.mxu0 0.0
    %7805 = vmatprep.subr.mxu0 0.0
    %7806 = vmatpush2.msra.mxu0 0.0
    %7807 = vmatprep.subr.mxu0 0.0
    %7808 = vmatpush2.msra.mxu0 0.0
    %7809 = vmatprep.subr.mxu0 0.0
    %7810 = vmatpush2.msra.mxu0 0.0
    %7811 = vmatprep.subr.mxu0 0.0
    %7812 = vmatpush2.msra.mxu0 0.0
    %7813 = vmatprep.subr.mxu0 0.0
    %7814 = vmatpush2.msra.mxu0 0.0
    %7815 = vmatprep.mubr.f32.mxu0 0.0
    %7816 = vmatmul.mubr.f32.gmra.mxu0 %v7746
    %v7817 = vpop.f32.mrf.mxu0
    %v7818 = vadd.f32 %v7744, %v7817
    %v7819 = vpop.f32.mrf.mxu0
    %7820 = vmatprep.mubr.f32.mxu0 0.0
    %7821 = vmatmul.mubr.f32.gmra.mxu0 %v7749
    %v7822 = vpop.f32.mrf.mxu0
    %v7823 = vadd.f32 %v7744, %v7822
    %v7824 = vpop.f32.mrf.mxu0
    %7825 = vdwg.mxu0
    %v7826 = vmul.f32 %v7818, %v1894
    %v7827 = vmul.f32 %v7823, %v1899
    %v7828 = vld [vmem:[#allocation10] sm:$0xff]
    %v7829 = vld [vmem:[#allocation10 + $0x8] sm:$0xff]
    %v7830 = vld [vmem:[#allocation10 + $0x10] sm:$0xff]
    %v7831 = vld [vmem:[#allocation10 + $0x18] sm:$0xff]
    %v7832 = vlaneseq
    %v7833 = vshrl.u32 %v7832, 7
    %v7834 = vsub.s32 2, %v7833
    %v7835 = vrot.slane %v152, %v7834
    %v7837 = vsel %vm685, %v7826, 0
    %v7840 = vsel %vm685, %v7827, 0
    %7842 = vmatprep.subr.mxu0 0.0
    %7843 = vmatpush1.msra.mxu0 0.0
    %7844 = vmatprep.subr.mxu0 0.0
    %7845 = vmatpush1.msra.mxu0 0.0
    %7846 = vmatprep.subr.mxu0 0.0
    %7847 = vmatpush1.msra.mxu0 0.0
    %7848 = vmatprep.subr.mxu0 0.0
    %7849 = vmatpush1.msra.mxu0 0.0
    %7850 = vmatprep.subr.mxu0 0.0
    %7851 = vmatpush1.msra.mxu0 0.0
    %7852 = vmatprep.subr.mxu0 0.0
    %7853 = vmatpush1.msra.mxu0 0.0
    %7854 = vmatprep.subr.mxu0 0.0
    %7855 = vmatpush1.msra.mxu0 0.0
    %7856 = vmatprep.subr.mxu0 0.0
    %7857 = vmatpush1.msra.mxu0 0.0
    %7858 = vmatprep.subr.mxu0 0.0
    %7859 = vmatpush1.msra.mxu0 0.0
    %7860 = vmatprep.subr.mxu0 0.0
    %7861 = vmatpush1.msra.mxu0 0.0
    %7862 = vmatprep.subr.mxu0 0.0
    %7863 = vmatpush1.msra.mxu0 0.0
    %7864 = vmatprep.subr.mxu0 0.0
    %7865 = vmatpush1.msra.mxu0 0.0
    %7866 = vmatprep.subr.mxu0 0.0
    %7867 = vmatpush1.msra.mxu0 %v7831
    %7868 = vmatprep.subr.mxu0 0.0
    %7869 = vmatpush1.msra.mxu0 %v7830
    %7870 = vmatprep.subr.mxu0 0.0
    %7871 = vmatpush1.msra.mxu0 %v7829
    %7872 = vmatprep.subr.mxu0 0.0
    %7873 = vmatpush1.msra.mxu0 %v7828
    %7874 = vmatprep.subr.mxu0 0.0
    %7875 = vmatpush2.msra.mxu0 0.0
    %7876 = vmatprep.subr.mxu0 0.0
    %7877 = vmatpush2.msra.mxu0 0.0
    %7878 = vmatprep.subr.mxu0 0.0
    %7879 = vmatpush2.msra.mxu0 0.0
    %7880 = vmatprep.subr.mxu0 0.0
    %7881 = vmatpush2.msra.mxu0 0.0
    %7882 = vmatprep.subr.mxu0 0.0
    %7883 = vmatpush2.msra.mxu0 0.0
    %7884 = vmatprep.subr.mxu0 0.0
    %7885 = vmatpush2.msra.mxu0 0.0
    %7886 = vmatprep.subr.mxu0 0.0
    %7887 = vmatpush2.msra.mxu0 0.0
    %7888 = vmatprep.subr.mxu0 0.0
    %7889 = vmatpush2.msra.mxu0 0.0
    %7890 = vmatprep.subr.mxu0 0.0
    %7891 = vmatpush2.msra.mxu0 0.0
    %7892 = vmatprep.subr.mxu0 0.0
    %7893 = vmatpush2.msra.mxu0 0.0
    %7894 = vmatprep.subr.mxu0 0.0
    %7895 = vmatpush2.msra.mxu0 0.0
    %7896 = vmatprep.subr.mxu0 0.0
    %7897 = vmatpush2.msra.mxu0 0.0
    %7898 = vmatprep.subr.mxu0 0.0
    %7899 = vmatpush2.msra.mxu0 0.0
    %7900 = vmatprep.subr.mxu0 0.0
    %7901 = vmatpush2.msra.mxu0 0.0
    %7902 = vmatprep.subr.mxu0 0.0
    %7903 = vmatpush2.msra.mxu0 0.0
    %7904 = vmatprep.subr.mxu0 0.0
    %7905 = vmatpush2.msra.mxu0 0.0
    %7906 = vmatprep.mubr.f32.mxu0 0.0
    %7907 = vmatmul.mubr.f32.gmra.mxu0 %v7837
    %v7908 = vpop.f32.mrf.mxu0
    %v7909 = vadd.f32 %v7835, %v7908
    %v7910 = vpop.f32.mrf.mxu0
    %7911 = vmatprep.mubr.f32.mxu0 0.0
    %7912 = vmatmul.mubr.f32.gmra.mxu0 %v7840
    %v7913 = vpop.f32.mrf.mxu0
    %v7914 = vadd.f32 %v7835, %v7913
    %v7915 = vpop.f32.mrf.mxu0
    %7916 = vdwg.mxu0
    %v7917 = vmul.f32 %v7909, 0.5
    %v7918 = vmul.f32 %v7914, 0.5
    %v7919 = vtanh.pop %v7917
    %v7920 = vtanh.pop %v7918
    %v7921 = vadd.f32 %v7919, 1.0
    %v7922 = vadd.f32 %v7920, 1.0
    %v7923 = vmul.f32 %v7921, 0.5
    %v7924 = vmul.f32 %v7922, 0.5
    %v7925 = vmul.f32 %v7909, %v7923
    %v7926 = vmul.f32 %v7914, %v7924
    %v7927 = vld [vmem:[%s13] sm:$0xff]
    %v7928 = vld [vmem:[%s13 + $0x8] sm:$0xff]
    %v7929 = vld [vmem:[%s13 + $0x10] sm:$0xff]
    %v7930 = vld [vmem:[%s13 + $0x18] sm:$0xff]
    %v7931 = vlaneseq
    %v7932 = vshrl.u32 %v7931, 7
    %v7933 = vsub.s32 3, %v7932
    %v7934 = vrot.slane %v152, %v7933
    %v7936 = vsel %vm685, %v7925, 0
    %v7939 = vsel %vm685, %v7926, 0
    %7941 = vmatprep.subr.mxu0 0.0
    %7942 = vmatpush1.msra.mxu0 0.0
    %7943 = vmatprep.subr.mxu0 0.0
    %7944 = vmatpush1.msra.mxu0 0.0
    %7945 = vmatprep.subr.mxu0 0.0
    %7946 = vmatpush1.msra.mxu0 0.0
    %7947 = vmatprep.subr.mxu0 0.0
    %7948 = vmatpush1.msra.mxu0 0.0
    %7949 = vmatprep.subr.mxu0 0.0
    %7950 = vmatpush1.msra.mxu0 0.0
    %7951 = vmatprep.subr.mxu0 0.0
    %7952 = vmatpush1.msra.mxu0 0.0
    %7953 = vmatprep.subr.mxu0 0.0
    %7954 = vmatpush1.msra.mxu0 0.0
    %7955 = vmatprep.subr.mxu0 0.0
    %7956 = vmatpush1.msra.mxu0 0.0
    %7957 = vmatprep.subr.mxu0 0.0
    %7958 = vmatpush1.msra.mxu0 0.0
    %7959 = vmatprep.subr.mxu0 0.0
    %7960 = vmatpush1.msra.mxu0 0.0
    %7961 = vmatprep.subr.mxu0 0.0
    %7962 = vmatpush1.msra.mxu0 0.0
    %7963 = vmatprep.subr.mxu0 0.0
    %7964 = vmatpush1.msra.mxu0 0.0
    %7965 = vmatprep.subr.mxu0 0.0
    %7966 = vmatpush1.msra.mxu0 %v7930
    %7967 = vmatprep.subr.mxu0 0.0
    %7968 = vmatpush1.msra.mxu0 %v7929
    %7969 = vmatprep.subr.mxu0 0.0
    %7970 = vmatpush1.msra.mxu0 %v7928
    %7971 = vmatprep.subr.mxu0 0.0
    %7972 = vmatpush1.msra.mxu0 %v7927
    %7973 = vmatprep.subr.mxu0 0.0
    %7974 = vmatpush2.msra.mxu0 0.0
    %7975 = vmatprep.subr.mxu0 0.0
    %7976 = vmatpush2.msra.mxu0 0.0
    %7977 = vmatprep.subr.mxu0 0.0
    %7978 = vmatpush2.msra.mxu0 0.0
    %7979 = vmatprep.subr.mxu0 0.0
    %7980 = vmatpush2.msra.mxu0 0.0
    %7981 = vmatprep.subr.mxu0 0.0
    %7982 = vmatpush2.msra.mxu0 0.0
    %7983 = vmatprep.subr.mxu0 0.0
    %7984 = vmatpush2.msra.mxu0 0.0
    %7985 = vmatprep.subr.mxu0 0.0
    %7986 = vmatpush2.msra.mxu0 0.0
    %7987 = vmatprep.subr.mxu0 0.0
    %7988 = vmatpush2.msra.mxu0 0.0
    %7989 = vmatprep.subr.mxu0 0.0
    %7990 = vmatpush2.msra.mxu0 0.0
    %7991 = vmatprep.subr.mxu0 0.0
    %7992 = vmatpush2.msra.mxu0 0.0
    %7993 = vmatprep.subr.mxu0 0.0
    %7994 = vmatpush2.msra.mxu0 0.0
    %7995 = vmatprep.subr.mxu0 0.0
    %7996 = vmatpush2.msra.mxu0 0.0
    %7997 = vmatprep.subr.mxu0 0.0
    %7998 = vmatpush2.msra.mxu0 0.0
    %7999 = vmatprep.subr.mxu0 0.0
    %8000 = vmatpush2.msra.mxu0 0.0
    %8001 = vmatprep.subr.mxu0 0.0
    %8002 = vmatpush2.msra.mxu0 0.0
    %8003 = vmatprep.subr.mxu0 0.0
    %8004 = vmatpush2.msra.mxu0 0.0
    %8005 = vmatprep.mubr.f32.mxu0 0.0
    %8006 = vmatmul.mubr.f32.gmra.mxu0 %v7936
    %v8007 = vpop.f32.mrf.mxu0
    %v8008 = vadd.f32 %v7934, %v8007
    %v8009 = vpop.f32.mrf.mxu0
    %8010 = vmatprep.mubr.f32.mxu0 0.0
    %8011 = vmatmul.mubr.f32.gmra.mxu0 %v7939
    %v8012 = vpop.f32.mrf.mxu0
    %v8013 = vadd.f32 %v7934, %v8012
    %v8014 = vpop.f32.mrf.mxu0
    %8015 = vdwg.mxu0
    %v8016 = vmul.f32 %v8008, %v1894
    %v8017 = vmul.f32 %v8013, %v1899
    %8020 = vrot.lane.b32.xlu0 %v8016, 3
    %v8021 = vpop.permute.xlu0 %8020
    %8022 = vrot.lane.b32.xlu0 %v8017, 3
    %v8023 = vpop.permute.xlu0 %8022
    %v8026 = vsel %vm369, %v7733, %v8021
    %v8027 = vsel %vm369, %v7734, %v8023
    %8028 = vst.msk [vmem:[%s15] sm:$0xff] %vm423, %v8026
    %8029 = vst.msk [vmem:[%s15 + $0x8] sm:$0xff] %vm423, %v8027
    // Predicated region
    $region86: #{tpu_custom_call.1} parent=1 // pred_check
      _
    $region87: #{tpu_custom_call.1} parent=1 // pred_check_branch
      %8031 = sbr.rel (0) target = $region89
    $region88: #{tpu_custom_call.1} parent=1 // pred_region
      _
    $region89: #{tpu_custom_call.1} parent=1 // pred_fallthru
      _
    // Predicated region
    $region90: #{tpu_custom_call.1} parent=1 // pred_check
      _
    $region91: #{tpu_custom_call.1} parent=1 // pred_check_branch
      %8033 = sbr.rel (0) target = $region93
    $region92: #{tpu_custom_call.1} parent=1 // pred_region
      _
    $region93: #{tpu_custom_call.1} parent=1 // pred_fallthru
      _
    %8034 = vsyncpa [#allocation3], 1
    %8035 = vsyncpa [#allocation5], 1
    %8036 = vsyncpa [#allocation8], 1
    %8037 = vsyncpa [#allocation11], 1

</llo_original>
